<compile_context>
chip_gen: v7x
topology: tpu7x:2x2x1
jax: 0.10.0
libtpu: 0.0.40
codegen_flags: <defaults>
</compile_context>

<pallas_src>
import numpy as np
import jax
import jax.numpy as jnp
from jax.experimental import pallas as pl
from jax.experimental.pallas import tpu as pltpu

# ----------------------------- architecture constants -----------------------------
B = 2                      # batch
H = W = 16                 # input spatial size
C0, C1, C2 = 3, 16, 32     # channels: input, conv1, conv2
HID, NCLS = 64, 3          # MLP head
H2S = H // 2               # 8   (after pool1)
H3S = H2S // 2             # 4   (after pool2)
N1 = B * H * W             # 512 conv1 pixel rows
N2 = B * H2S * H2S         # 128 conv2 pixel rows
N3 = B * H3S * H3S         # 32  pooled rows feeding the head
FEAT = C2 * H3S * H3S      # 512 flattened features
PAD1 = 24                  # 8-aligned zero row margin for conv1 tap windows (need >=17)
PAD2 = 16                  # 8-aligned zero row margin for conv2 tap windows (need >=9)

OFFSETS = [(dy, dx) for dy in range(3) for dx in range(3)]


# ----------------------------- trace-time constants -------------------------------
def _tap_masks(b, s):
    """(b*s*s, 9) validity mask for 3x3 same-padding taps over an s x s grid."""
    m = np.zeros((b, s, s, 9), np.float32)
    for k, (dy, dx) in enumerate(OFFSETS):
        hv = np.arange(s) + dy - 1
        wv = np.arange(s) + dx - 1
        valid = ((hv >= 0) & (hv < s))[:, None] & ((wv >= 0) & (wv < s))[None, :]
        m[:, :, :, k] = valid[None, :, :].astype(np.float32)
    return m.reshape(b * s * s, 9)


def _pool_select(b, s):
    """(4*b*(s//2)^2, b*s*s) stacked-quadrant row-selection matrix for 2x2 max-pool."""
    so = s // 2
    rows = b * so * so
    sel = np.zeros((4 * rows, b * s * s), np.float32)
    r = 0
    for qy in range(2):
        for qx in range(2):
            for bb in range(b):
                for i in range(so):
                    for j in range(so):
                        sel[r, bb * s * s + (2 * i + qy) * s + (2 * j + qx)] = 1.0
                        r += 1
    return sel


def _flatten_mask(b, p, c):
    """(b*p, p*c) block mask: row (b, pp) keeps only lane block pp (flatten placement)."""
    m = np.zeros((b * p, p * c), np.float32)
    for r in range(b * p):
        pp = r % p
        m[r, pp * c:(pp + 1) * c] = 1.0
    return m


def _batch_sum(b, p):
    """(b, b*p) per-batch row summation matrix."""
    s = np.zeros((b, b * p), np.float32)
    for bb in range(b):
        s[bb, bb * p:(bb + 1) * p] = 1.0
    return s


_MASK1 = _tap_masks(B, H)          # (512, 9)
_SEL1 = _pool_select(B, H)         # (512, 512)
_MASK2 = _tap_masks(B, H2S)        # (128, 9)
_SEL2 = _pool_select(B, H2S)       # (128, 128)
_MFLAT = _flatten_mask(B, H3S * H3S, C2)   # (32, 512)
_SUMB = _batch_sum(B, H3S * H3S)           # (2, 32)


def _full_spec(shape):
    # Whole-array block (block_shape == array dims waives the (8,128) divisibility rule).
    nd = len(shape)
    return pl.BlockSpec(shape, lambda i: (0,) * nd)


# --------------------------------- fused kernel -----------------------------------
def _im2col_taps(src_ref, margin, row_stride, n_rows, mask_ref):
    """Build the (n_rows, 9*C) im2col matrix from static row-window slices + masks."""
    taps = []
    for k, (dy, dx) in enumerate(OFFSETS):
        d = (dy - 1) * row_stride + (dx - 1)
        t = src_ref[margin + d: margin + d + n_rows, :]      # static-offset row window
        if (dy, dx) != (1, 1):                               # center tap is always valid
            t = t * mask_ref[:, k:k + 1]                     # zero wrapped / padded taps
        taps.append(t)
    return jnp.concatenate(taps, axis=1)


def _covidnet_kernel(xp_ref, m1_ref, w1_ref, b1_ref, s1_ref,
                     m2_ref, w2_ref, b2_ref, s2_ref,
                     mflat_ref, sumb_ref, fc1w_ref, fc1b_ref, fc2w_ref, fc2b_ref,
                     o_ref, h1pad_ref):
    f32, bf16 = jnp.float32, jnp.bfloat16

    # ---- conv1: in-kernel im2col -> single MXU matmul, bias + ReLU (f32 epilogue) ----
    patches1 = _im2col_taps(xp_ref, PAD1, W, N1, m1_ref).astype(bf16)        # (512, 27)
    a1 = jnp.dot(patches1, w1_ref[...], preferred_element_type=f32)          # (512, 16)
    a1 = jnp.maximum(a1 + b1_ref[...], 0.0)

    # ---- pool1: one stacked quadrant-selection matmul + max over 4 aligned slabs ----
    q1 = jnp.dot(s1_ref[...], a1.astype(bf16), preferred_element_type=f32)   # (512, 16)
    h1 = jnp.maximum(jnp.maximum(q1[0 * N2:1 * N2], q1[1 * N2:2 * N2]),
                     jnp.maximum(q1[2 * N2:3 * N2], q1[3 * N2:4 * N2]))      # (128, 16)

    # ---- conv2: stash pooled activations into a zero-margined VMEM scratch, slice taps
    h1pad_ref[...] = jnp.zeros_like(h1pad_ref)
    h1pad_ref[PAD2:PAD2 + N2, :] = h1
    patches2 = _im2col_taps(h1pad_ref, PAD2, H2S, N2, m2_ref).astype(bf16)   # (128, 144)
    a2 = jnp.dot(patches2, w2_ref[...], preferred_element_type=f32)          # (128, 32)
    a2 = jnp.maximum(a2 + b2_ref[...], 0.0)

    # ---- pool2 ----
    q2 = jnp.dot(s2_ref[...], a2.astype(bf16), preferred_element_type=f32)   # (128, 32)
    h2 = jnp.maximum(jnp.maximum(q2[0 * N3:1 * N3], q2[1 * N3:2 * N3]),
                     jnp.maximum(q2[2 * N3:3 * N3], q2[3 * N3:4 * N3]))      # (32, 32)

    # ---- flatten (lane-tile + block mask + per-batch row-sum matmul) + MLP head ----
    h2_tiled = jnp.concatenate([h2] * (H3S * H3S), axis=1)                   # (32, 512)
    e = h2_tiled * mflat_ref[...]                                            # place block p
    flat = jnp.dot(sumb_ref[...], e, preferred_element_type=f32)             # (2, 512)
    z = jnp.dot(flat.astype(bf16), fc1w_ref[...], preferred_element_type=f32)
    z = jnp.maximum(z + fc1b_ref[...], 0.0)                                  # (2, 64) f32
    o_ref[...] = jnp.dot(z, fc2w_ref[...], preferred_element_type=f32) + fc2b_ref[...]


# ------------------------------ parameters & forward -------------------------------
def init_params(key):
    ks = jax.random.split(key, 8)
    p = {}
    p["conv1_w"] = 0.1 * jax.random.normal(ks[0], (C1, C0, 3, 3), jnp.float32)   # OIHW
    p["conv1_b"] = 0.01 * jax.random.normal(ks[1], (C1,), jnp.float32)
    p["conv2_w"] = 0.1 * jax.random.normal(ks[2], (C2, C1, 3, 3), jnp.float32)   # OIHW
    p["conv2_b"] = 0.01 * jax.random.normal(ks[3], (C2,), jnp.float32)
    # Linear weights stored as [in, out] (transposed w.r.t. PyTorch's [out, in]);
    # fc1 "in" index follows PyTorch's NCHW flatten order (c*16 + spatial).
    p["fc1_w"] = 0.05 * jax.random.normal(ks[4], (FEAT, HID), jnp.float32)
    p["fc1_b"] = 0.01 * jax.random.normal(ks[5], (HID,), jnp.float32)
    p["fc2_w"] = 0.05 * jax.random.normal(ks[6], (HID, NCLS), jnp.float32)
    p["fc2_b"] = 0.01 * jax.random.normal(ks[7], (NCLS,), jnp.float32)
    return p


@jax.jit
def covidnet_forward(x_nchw, params):
    # Input layout prep only: NCHW -> NHWC -> flat pixel rows, plus an 8-aligned zero
    # row margin so every conv1 tap is a plain static window of the operand.
    x = jnp.transpose(x_nchw.astype(jnp.float32), (0, 2, 3, 1)).reshape(N1, C0)
    xp = jnp.pad(x, ((PAD1, PAD1), (0, 0)))                                   # (560, 3)

    # One-time weight layout transforms (trace-time, no per-activation runtime cost).
    w1 = jnp.transpose(params["conv1_w"], (2, 3, 1, 0)).reshape(9 * C0, C1).astype(jnp.bfloat16)
    b1 = params["conv1_b"].reshape(1, C1).astype(jnp.float32)
    w2 = jnp.transpose(params["conv2_w"], (2, 3, 1, 0)).reshape(9 * C1, C2).astype(jnp.bfloat16)
    b2 = params["conv2_b"].reshape(1, C2).astype(jnp.float32)
    # Permute fc1 rows once so the kernel's (spatial-major, channel-minor) flatten
    # reproduces PyTorch's NCHW flatten semantics with no runtime transpose.
    fc1w = (params["fc1_w"].reshape(C2, H3S * H3S, HID)
            .transpose(1, 0, 2).reshape(FEAT, HID).astype(jnp.bfloat16))
    fc1b = params["fc1_b"].reshape(1, HID).astype(jnp.float32)
    fc2w = params["fc2_w"].astype(jnp.float32)
    fc2b = params["fc2_b"].reshape(1, NCLS).astype(jnp.float32)

    m1 = jnp.asarray(_MASK1, jnp.float32)
    s1 = jnp.asarray(_SEL1, jnp.bfloat16)
    m2 = jnp.asarray(_MASK2, jnp.float32)
    s2 = jnp.asarray(_SEL2, jnp.bfloat16)
    mflat = jnp.asarray(_MFLAT, jnp.float32)
    sumb = jnp.asarray(_SUMB, jnp.float32)

    args = (xp, m1, w1, b1, s1, m2, w2, b2, s2, mflat, sumb, fc1w, fc1b, fc2w, fc2b)
    return pl.pallas_call(
        _covidnet_kernel,
        out_shape=jax.ShapeDtypeStruct((B, NCLS), jnp.float32),
        grid=(1,),
        in_specs=[_full_spec(a.shape) for a in args],
        out_specs=_full_spec((B, NCLS)),
        scratch_shapes=[pltpu.VMEM((PAD2 + N2 + PAD2, C1), jnp.float32)],
        compiler_params=pltpu.CompilerParams(dimension_semantics=("arbitrary",)),
    )(*args)


if __name__ == "__main__":
    key = jax.random.PRNGKey(0)
    k_x, k_p = jax.random.split(key)
    x = jax.random.normal(k_x, (B, C0, H, W), jnp.float32)   # NCHW, like PyTorch
    params = init_params(k_p)

    logits = jax.block_until_ready(covidnet_forward(x, params))
    assert logits.shape == (B, NCLS)
    assert bool(jnp.all(jnp.isfinite(logits)))
    print("KERNEL_OK")
</pallas_src>

<mosaic_0001>
module attributes {stable_mosaic.version = 11 : i64} {
  func.func @_covidnet_kernel(%arg0: i32, %arg1: memref<560x3xf32, #tpu.memory_space<vmem>>, %arg2: memref<512x9xf32, #tpu.memory_space<vmem>>, %arg3: memref<27x16xbf16, #tpu.memory_space<vmem>>, %arg4: memref<1x16xf32, #tpu.memory_space<vmem>>, %arg5: memref<512x512xbf16, #tpu.memory_space<vmem>>, %arg6: memref<128x9xf32, #tpu.memory_space<vmem>>, %arg7: memref<144x32xbf16, #tpu.memory_space<vmem>>, %arg8: memref<1x32xf32, #tpu.memory_space<vmem>>, %arg9: memref<128x128xbf16, #tpu.memory_space<vmem>>, %arg10: memref<32x512xf32, #tpu.memory_space<vmem>>, %arg11: memref<2x32xf32, #tpu.memory_space<vmem>>, %arg12: memref<512x64xbf16, #tpu.memory_space<vmem>>, %arg13: memref<1x64xf32, #tpu.memory_space<vmem>>, %arg14: memref<64x3xf32, #tpu.memory_space<vmem>>, %arg15: memref<1x3xf32, #tpu.memory_space<vmem>>, %arg16: memref<2x3xf32, #tpu.memory_space<vmem>>, %arg17: memref<160x16xf32, #tpu.memory_space<vmem>>) attributes {dimension_semantics = [#tpu.dimension_semantics<arbitrary>], iteration_bounds = array<i64: 1>, scalar_prefetch = 0 : i64, scratch_operands = 1 : i64, tpu.core_type = #tpu.core_type<tc>, window_params = [{pipeline_mode = #tpu.pipeline_mode<synchronous>, transform_indices = @transform_0, window_bounds = array<i64: 560, 3>}, {pipeline_mode = #tpu.pipeline_mode<synchronous>, transform_indices = @transform_1, window_bounds = array<i64: 512, 9>}, {pipeline_mode = #tpu.pipeline_mode<synchronous>, transform_indices = @transform_2, window_bounds = array<i64: 27, 16>}, {pipeline_mode = #tpu.pipeline_mode<synchronous>, transform_indices = @transform_3, window_bounds = array<i64: 1, 16>}, {pipeline_mode = #tpu.pipeline_mode<synchronous>, transform_indices = @transform_4, window_bounds = array<i64: 512, 512>}, {pipeline_mode = #tpu.pipeline_mode<synchronous>, transform_indices = @transform_5, window_bounds = array<i64: 128, 9>}, {pipeline_mode = #tpu.pipeline_mode<synchronous>, transform_indices = @transform_6, window_bounds = array<i64: 144, 32>}, {pipeline_mode = #tpu.pipeline_mode<synchronous>, transform_indices = @transform_7, window_bounds = array<i64: 1, 32>}, {pipeline_mode = #tpu.pipeline_mode<synchronous>, transform_indices = @transform_8, window_bounds = array<i64: 128, 128>}, {pipeline_mode = #tpu.pipeline_mode<synchronous>, transform_indices = @transform_9, window_bounds = array<i64: 32, 512>}, {pipeline_mode = #tpu.pipeline_mode<synchronous>, transform_indices = @transform_10, window_bounds = array<i64: 2, 32>}, {pipeline_mode = #tpu.pipeline_mode<synchronous>, transform_indices = @transform_11, window_bounds = array<i64: 512, 64>}, {pipeline_mode = #tpu.pipeline_mode<synchronous>, transform_indices = @transform_12, window_bounds = array<i64: 1, 64>}, {pipeline_mode = #tpu.pipeline_mode<synchronous>, transform_indices = @transform_13, window_bounds = array<i64: 64, 3>}, {pipeline_mode = #tpu.pipeline_mode<synchronous>, transform_indices = @transform_14, window_bounds = array<i64: 1, 3>}, {pipeline_mode = #tpu.pipeline_mode<synchronous>, transform_indices = @transform_15, window_bounds = array<i64: 2, 3>}]} {
    %c7 = arith.constant 7 : index
    %c0 = arith.constant 0 : index
    %0 = vector.load %arg1[%c7, %c0] : memref<560x3xf32, #tpu.memory_space<vmem>>, vector<512x3xf32>
    %c0_0 = arith.constant 0 : index
    %c0_1 = arith.constant 0 : index
    %1 = vector.load %arg2[%c0_0, %c0_1] : memref<512x9xf32, #tpu.memory_space<vmem>>, vector<512x1xf32>
    %2 = vector.broadcast %1 : vector<512x1xf32> to vector<512x3xf32>
    %3 = arith.mulf %0, %2 : vector<512x3xf32>
    %c8 = arith.constant 8 : index
    %c0_2 = arith.constant 0 : index
    %4 = vector.load %arg1[%c8, %c0_2] : memref<560x3xf32, #tpu.memory_space<vmem>>, vector<512x3xf32>
    %c0_3 = arith.constant 0 : index
    %c1 = arith.constant 1 : index
    %5 = vector.load %arg2[%c0_3, %c1] : memref<512x9xf32, #tpu.memory_space<vmem>>, vector<512x1xf32>
    %6 = vector.broadcast %5 : vector<512x1xf32> to vector<512x3xf32>
    %7 = arith.mulf %4, %6 : vector<512x3xf32>
    %c9 = arith.constant 9 : index
    %c0_4 = arith.constant 0 : index
    %8 = vector.load %arg1[%c9, %c0_4] : memref<560x3xf32, #tpu.memory_space<vmem>>, vector<512x3xf32>
    %c0_5 = arith.constant 0 : index
    %c2 = arith.constant 2 : index
    %9 = vector.load %arg2[%c0_5, %c2] : memref<512x9xf32, #tpu.memory_space<vmem>>, vector<512x1xf32>
    %10 = vector.broadcast %9 : vector<512x1xf32> to vector<512x3xf32>
    %11 = arith.mulf %8, %10 : vector<512x3xf32>
    %c23 = arith.constant 23 : index
    %c0_6 = arith.constant 0 : index
    %12 = vector.load %arg1[%c23, %c0_6] : memref<560x3xf32, #tpu.memory_space<vmem>>, vector<512x3xf32>
    %c0_7 = arith.constant 0 : index
    %c3 = arith.constant 3 : index
    %13 = vector.load %arg2[%c0_7, %c3] : memref<512x9xf32, #tpu.memory_space<vmem>>, vector<512x1xf32>
    %14 = vector.broadcast %13 : vector<512x1xf32> to vector<512x3xf32>
    %15 = arith.mulf %12, %14 : vector<512x3xf32>
    %c24 = arith.constant 24 : index
    %c0_8 = arith.constant 0 : index
    %16 = vector.load %arg1[%c24, %c0_8] : memref<560x3xf32, #tpu.memory_space<vmem>>, vector<512x3xf32>
    %c25 = arith.constant 25 : index
    %c0_9 = arith.constant 0 : index
    %17 = vector.load %arg1[%c25, %c0_9] : memref<560x3xf32, #tpu.memory_space<vmem>>, vector<512x3xf32>
    %c0_10 = arith.constant 0 : index
    %c5 = arith.constant 5 : index
    %18 = vector.load %arg2[%c0_10, %c5] : memref<512x9xf32, #tpu.memory_space<vmem>>, vector<512x1xf32>
    %19 = vector.broadcast %18 : vector<512x1xf32> to vector<512x3xf32>
    %20 = arith.mulf %17, %19 : vector<512x3xf32>
    %c39 = arith.constant 39 : index
    %c0_11 = arith.constant 0 : index
    %21 = vector.load %arg1[%c39, %c0_11] : memref<560x3xf32, #tpu.memory_space<vmem>>, vector<512x3xf32>
    %c0_12 = arith.constant 0 : index
    %c6 = arith.constant 6 : index
    %22 = vector.load %arg2[%c0_12, %c6] : memref<512x9xf32, #tpu.memory_space<vmem>>, vector<512x1xf32>
    %23 = vector.broadcast %22 : vector<512x1xf32> to vector<512x3xf32>
    %24 = arith.mulf %21, %23 : vector<512x3xf32>
    %c40 = arith.constant 40 : index
    %c0_13 = arith.constant 0 : index
    %25 = vector.load %arg1[%c40, %c0_13] : memref<560x3xf32, #tpu.memory_space<vmem>>, vector<512x3xf32>
    %c0_14 = arith.constant 0 : index
    %c7_15 = arith.constant 7 : index
    %26 = vector.load %arg2[%c0_14, %c7_15] : memref<512x9xf32, #tpu.memory_space<vmem>>, vector<512x1xf32>
    %27 = vector.broadcast %26 : vector<512x1xf32> to vector<512x3xf32>
    %28 = arith.mulf %25, %27 : vector<512x3xf32>
    %c41 = arith.constant 41 : index
    %c0_16 = arith.constant 0 : index
    %29 = vector.load %arg1[%c41, %c0_16] : memref<560x3xf32, #tpu.memory_space<vmem>>, vector<512x3xf32>
    %c0_17 = arith.constant 0 : index
    %c8_18 = arith.constant 8 : index
    %30 = vector.load %arg2[%c0_17, %c8_18] : memref<512x9xf32, #tpu.memory_space<vmem>>, vector<512x1xf32>
    %31 = vector.broadcast %30 : vector<512x1xf32> to vector<512x3xf32>
    %32 = arith.mulf %29, %31 : vector<512x3xf32>
    %33 = tpu.concatenate %3, %7, %11, %15, %16, %20, %24, %28, %32 in 1 : vector<512x3xf32>, vector<512x3xf32>, vector<512x3xf32>, vector<512x3xf32>, vector<512x3xf32>, vector<512x3xf32>, vector<512x3xf32>, vector<512x3xf32>, vector<512x3xf32> -> vector<512x27xf32>
    %34 = arith.truncf %33 : vector<512x27xf32> to vector<512x27xbf16>
    %c0_19 = arith.constant 0 : index
    %c0_20 = arith.constant 0 : index
    %35 = vector.load %arg3[%c0_19, %c0_20] : memref<27x16xbf16, #tpu.memory_space<vmem>>, vector<27x16xbf16>
    %cst = arith.constant dense<0.000000e+00> : vector<512x16xf32>
    %36 = tpu.matmul %34, %35, %cst {dimension_numbers = #tpu.dot_dimension_numbers<[1], [0], [0], [1], [0, 0, 1, 1], [], []>} : vector<512x27xbf16>, vector<27x16xbf16>, vector<512x16xf32> -> vector<512x16xf32>
    %c0_21 = arith.constant 0 : index
    %c0_22 = arith.constant 0 : index
    %37 = vector.load %arg4[%c0_21, %c0_22] : memref<1x16xf32, #tpu.memory_space<vmem>>, vector<1x16xf32>
    %38 = vector.broadcast %37 : vector<1x16xf32> to vector<512x16xf32>
    %39 = arith.addf %36, %38 : vector<512x16xf32>
    %cst_23 = arith.constant 0.000000e+00 : f32
    %40 = vector.broadcast %cst_23 : f32 to vector<512x16xf32>
    %41 = arith.maximumf %39, %40 : vector<512x16xf32>
    %c0_24 = arith.constant 0 : index
    %c0_25 = arith.constant 0 : index
    %42 = vector.load %arg5[%c0_24, %c0_25] : memref<512x512xbf16, #tpu.memory_space<vmem>>, vector<512x512xbf16>
    %43 = arith.truncf %41 : vector<512x16xf32> to vector<512x16xbf16>
    %cst_26 = arith.constant dense<0.000000e+00> : vector<512x16xf32>
    %44 = tpu.matmul %42, %43, %cst_26 {dimension_numbers = #tpu.dot_dimension_numbers<[1], [0], [0], [1], [0, 0, 1, 1], [], []>} : vector<512x512xbf16>, vector<512x16xbf16>, vector<512x16xf32> -> vector<512x16xf32>
    %45 = vector.extract_strided_slice %44 {offsets = [0, 0], sizes = [128, 16], strides = [1, 1]} : vector<512x16xf32> to vector<128x16xf32>
    %46 = vector.extract_strided_slice %44 {offsets = [128, 0], sizes = [128, 16], strides = [1, 1]} : vector<512x16xf32> to vector<128x16xf32>
    %47 = arith.maximumf %45, %46 : vector<128x16xf32>
    %48 = vector.extract_strided_slice %44 {offsets = [256, 0], sizes = [128, 16], strides = [1, 1]} : vector<512x16xf32> to vector<128x16xf32>
    %49 = vector.extract_strided_slice %44 {offsets = [384, 0], sizes = [128, 16], strides = [1, 1]} : vector<512x16xf32> to vector<128x16xf32>
    %50 = arith.maximumf %48, %49 : vector<128x16xf32>
    %51 = arith.maximumf %47, %50 : vector<128x16xf32>
    %cst_27 = arith.constant 0.000000e+00 : f32
    %52 = vector.broadcast %cst_27 : f32 to vector<160x16xf32>
    %c0_28 = arith.constant 0 : index
    %c0_29 = arith.constant 0 : index
    %53 = vector.load %arg17[%c0_28, %c0_29] : memref<160x16xf32, #tpu.memory_space<vmem>>, vector<160x16xf32>
    tpu.vector_store %arg17[%c0_28, %c0_29], %52 {strides = array<i32>} : memref<160x16xf32, #tpu.memory_space<vmem>>, vector<160x16xf32>,
    %c16 = arith.constant 16 : index
    %c0_30 = arith.constant 0 : index
    %54 = vector.load %arg17[%c16, %c0_30] : memref<160x16xf32, #tpu.memory_space<vmem>>, vector<128x16xf32>
    tpu.vector_store %arg17[%c16, %c0_30], %51 {strides = array<i32>} : memref<160x16xf32, #tpu.memory_space<vmem>>, vector<128x16xf32>,
    %c7_31 = arith.constant 7 : index
    %c0_32 = arith.constant 0 : index
    %55 = vector.load %arg17[%c7_31, %c0_32] : memref<160x16xf32, #tpu.memory_space<vmem>>, vector<128x16xf32>
    %c0_33 = arith.constant 0 : index
    %c0_34 = arith.constant 0 : index
    %56 = vector.load %arg6[%c0_33, %c0_34] : memref<128x9xf32, #tpu.memory_space<vmem>>, vector<128x1xf32>
    %57 = vector.broadcast %56 : vector<128x1xf32> to vector<128x16xf32>
    %58 = arith.mulf %55, %57 : vector<128x16xf32>
    %c8_35 = arith.constant 8 : index
    %c0_36 = arith.constant 0 : index
    %59 = vector.load %arg17[%c8_35, %c0_36] : memref<160x16xf32, #tpu.memory_space<vmem>>, vector<128x16xf32>
    %c0_37 = arith.constant 0 : index
    %c1_38 = arith.constant 1 : index
    %60 = vector.load %arg6[%c0_37, %c1_38] : memref<128x9xf32, #tpu.memory_space<vmem>>, vector<128x1xf32>
    %61 = vector.broadcast %60 : vector<128x1xf32> to vector<128x16xf32>
    %62 = arith.mulf %59, %61 : vector<128x16xf32>
    %c9_39 = arith.constant 9 : index
    %c0_40 = arith.constant 0 : index
    %63 = vector.load %arg17[%c9_39, %c0_40] : memref<160x16xf32, #tpu.memory_space<vmem>>, vector<128x16xf32>
    %c0_41 = arith.constant 0 : index
    %c2_42 = arith.constant 2 : index
    %64 = vector.load %arg6[%c0_41, %c2_42] : memref<128x9xf32, #tpu.memory_space<vmem>>, vector<128x1xf32>
    %65 = vector.broadcast %64 : vector<128x1xf32> to vector<128x16xf32>
    %66 = arith.mulf %63, %65 : vector<128x16xf32>
    %c15 = arith.constant 15 : index
    %c0_43 = arith.constant 0 : index
    %67 = vector.load %arg17[%c15, %c0_43] : memref<160x16xf32, #tpu.memory_space<vmem>>, vector<128x16xf32>
    %c0_44 = arith.constant 0 : index
    %c3_45 = arith.constant 3 : index
    %68 = vector.load %arg6[%c0_44, %c3_45] : memref<128x9xf32, #tpu.memory_space<vmem>>, vector<128x1xf32>
    %69 = vector.broadcast %68 : vector<128x1xf32> to vector<128x16xf32>
    %70 = arith.mulf %67, %69 : vector<128x16xf32>
    %c16_46 = arith.constant 16 : index
    %c0_47 = arith.constant 0 : index
    %71 = vector.load %arg17[%c16_46, %c0_47] : memref<160x16xf32, #tpu.memory_space<vmem>>, vector<128x16xf32>
    %c17 = arith.constant 17 : index
    %c0_48 = arith.constant 0 : index
    %72 = vector.load %arg17[%c17, %c0_48] : memref<160x16xf32, #tpu.memory_space<vmem>>, vector<128x16xf32>
    %c0_49 = arith.constant 0 : index
    %c5_50 = arith.constant 5 : index
    %73 = vector.load %arg6[%c0_49, %c5_50] : memref<128x9xf32, #tpu.memory_space<vmem>>, vector<128x1xf32>
    %74 = vector.broadcast %73 : vector<128x1xf32> to vector<128x16xf32>
    %75 = arith.mulf %72, %74 : vector<128x16xf32>
    %c23_51 = arith.constant 23 : index
    %c0_52 = arith.constant 0 : index
    %76 = vector.load %arg17[%c23_51, %c0_52] : memref<160x16xf32, #tpu.memory_space<vmem>>, vector<128x16xf32>
    %c0_53 = arith.constant 0 : index
    %c6_54 = arith.constant 6 : index
    %77 = vector.load %arg6[%c0_53, %c6_54] : memref<128x9xf32, #tpu.memory_space<vmem>>, vector<128x1xf32>
    %78 = vector.broadcast %77 : vector<128x1xf32> to vector<128x16xf32>
    %79 = arith.mulf %76, %78 : vector<128x16xf32>
    %c24_55 = arith.constant 24 : index
    %c0_56 = arith.constant 0 : index
    %80 = vector.load %arg17[%c24_55, %c0_56] : memref<160x16xf32, #tpu.memory_space<vmem>>, vector<128x16xf32>
    %c0_57 = arith.constant 0 : index
    %c7_58 = arith.constant 7 : index
    %81 = vector.load %arg6[%c0_57, %c7_58] : memref<128x9xf32, #tpu.memory_space<vmem>>, vector<128x1xf32>
    %82 = vector.broadcast %81 : vector<128x1xf32> to vector<128x16xf32>
    %83 = arith.mulf %80, %82 : vector<128x16xf32>
    %c25_59 = arith.constant 25 : index
    %c0_60 = arith.constant 0 : index
    %84 = vector.load %arg17[%c25_59, %c0_60] : memref<160x16xf32, #tpu.memory_space<vmem>>, vector<128x16xf32>
    %c0_61 = arith.constant 0 : index
    %c8_62 = arith.constant 8 : index
    %85 = vector.load %arg6[%c0_61, %c8_62] : memref<128x9xf32, #tpu.memory_space<vmem>>, vector<128x1xf32>
    %86 = vector.broadcast %85 : vector<128x1xf32> to vector<128x16xf32>
    %87 = arith.mulf %84, %86 : vector<128x16xf32>
    %88 = tpu.concatenate %58, %62, %66, %70, %71, %75, %79, %83, %87 in 1 : vector<128x16xf32>, vector<128x16xf32>, vector<128x16xf32>, vector<128x16xf32>, vector<128x16xf32>, vector<128x16xf32>, vector<128x16xf32>, vector<128x16xf32>, vector<128x16xf32> -> vector<128x144xf32>
    %89 = arith.truncf %88 : vector<128x144xf32> to vector<128x144xbf16>
    %c0_63 = arith.constant 0 : index
    %c0_64 = arith.constant 0 : index
    %90 = vector.load %arg7[%c0_63, %c0_64] : memref<144x32xbf16, #tpu.memory_space<vmem>>, vector<144x32xbf16>
    %cst_65 = arith.constant dense<0.000000e+00> : vector<128x32xf32>
    %91 = tpu.matmul %89, %90, %cst_65 {dimension_numbers = #tpu.dot_dimension_numbers<[1], [0], [0], [1], [0, 0, 1, 1], [], []>} : vector<128x144xbf16>, vector<144x32xbf16>, vector<128x32xf32> -> vector<128x32xf32>
    %c0_66 = arith.constant 0 : index
    %c0_67 = arith.constant 0 : index
    %92 = vector.load %arg8[%c0_66, %c0_67] : memref<1x32xf32, #tpu.memory_space<vmem>>, vector<1x32xf32>
    %93 = vector.broadcast %92 : vector<1x32xf32> to vector<128x32xf32>
    %94 = arith.addf %91, %93 : vector<128x32xf32>
    %cst_68 = arith.constant 0.000000e+00 : f32
    %95 = vector.broadcast %cst_68 : f32 to vector<128x32xf32>
    %96 = arith.maximumf %94, %95 : vector<128x32xf32>
    %c0_69 = arith.constant 0 : index
    %c0_70 = arith.constant 0 : index
    %97 = vector.load %arg9[%c0_69, %c0_70] : memref<128x128xbf16, #tpu.memory_space<vmem>>, vector<128x128xbf16>
    %98 = arith.truncf %96 : vector<128x32xf32> to vector<128x32xbf16>
    %cst_71 = arith.constant dense<0.000000e+00> : vector<128x32xf32>
    %99 = tpu.matmul %97, %98, %cst_71 {dimension_numbers = #tpu.dot_dimension_numbers<[1], [0], [0], [1], [0, 0, 1, 1], [], []>} : vector<128x128xbf16>, vector<128x32xbf16>, vector<128x32xf32> -> vector<128x32xf32>
    %100 = vector.extract_strided_slice %99 {offsets = [0, 0], sizes = [32, 32], strides = [1, 1]} : vector<128x32xf32> to vector<32x32xf32>
    %101 = vector.extract_strided_slice %99 {offsets = [32, 0], sizes = [32, 32], strides = [1, 1]} : vector<128x32xf32> to vector<32x32xf32>
    %102 = arith.maximumf %100, %101 : vector<32x32xf32>
    %103 = vector.extract_strided_slice %99 {offsets = [64, 0], sizes = [32, 32], strides = [1, 1]} : vector<128x32xf32> to vector<32x32xf32>
    %104 = vector.extract_strided_slice %99 {offsets = [96, 0], sizes = [32, 32], strides = [1, 1]} : vector<128x32xf32> to vector<32x32xf32>
    %105 = arith.maximumf %103, %104 : vector<32x32xf32>
    %106 = arith.maximumf %102, %105 : vector<32x32xf32>
    %107 = tpu.concatenate %106, %106, %106, %106, %106, %106, %106, %106, %106, %106, %106, %106, %106, %106, %106, %106 in 1 : vector<32x32xf32>, vector<32x32xf32>, vector<32x32xf32>, vector<32x32xf32>, vector<32x32xf32>, vector<32x32xf32>, vector<32x32xf32>, vector<32x32xf32>, vector<32x32xf32>, vector<32x32xf32>, vector<32x32xf32>, vector<32x32xf32>, vector<32x32xf32>, vector<32x32xf32>, vector<32x32xf32>, vector<32x32xf32> -> vector<32x512xf32>
    %c0_72 = arith.constant 0 : index
    %c0_73 = arith.constant 0 : index
    %108 = vector.load %arg10[%c0_72, %c0_73] : memref<32x512xf32, #tpu.memory_space<vmem>>, vector<32x512xf32>
    %109 = arith.mulf %107, %108 : vector<32x512xf32>
    %c0_74 = arith.constant 0 : index
    %c0_75 = arith.constant 0 : index
    %110 = vector.load %arg11[%c0_74, %c0_75] : memref<2x32xf32, #tpu.memory_space<vmem>>, vector<2x32xf32>
    %cst_76 = arith.constant dense<0.000000e+00> : vector<2x512xf32>
    %111 = tpu.matmul %110, %109, %cst_76 {dimension_numbers = #tpu.dot_dimension_numbers<[1], [0], [0], [1], [0, 0, 1, 1], [], []>} : vector<2x32xf32>, vector<32x512xf32>, vector<2x512xf32> -> vector<2x512xf32>
    %112 = arith.truncf %111 : vector<2x512xf32> to vector<2x512xbf16>
    %c0_77 = arith.constant 0 : index
    %c0_78 = arith.constant 0 : index
    %113 = vector.load %arg12[%c0_77, %c0_78] : memref<512x64xbf16, #tpu.memory_space<vmem>>, vector<512x64xbf16>
    %cst_79 = arith.constant dense<0.000000e+00> : vector<2x64xf32>
    %114 = tpu.matmul %112, %113, %cst_79 {dimension_numbers = #tpu.dot_dimension_numbers<[1], [0], [0], [1], [0, 0, 1, 1], [], []>} : vector<2x512xbf16>, vector<512x64xbf16>, vector<2x64xf32> -> vector<2x64xf32>
    %c0_80 = arith.constant 0 : index
    %c0_81 = arith.constant 0 : index
    %115 = vector.load %arg13[%c0_80, %c0_81] : memref<1x64xf32, #tpu.memory_space<vmem>>, vector<1x64xf32>
    %116 = vector.broadcast %115 : vector<1x64xf32> to vector<2x64xf32>
    %117 = arith.addf %114, %116 : vector<2x64xf32>
    %cst_82 = arith.constant 0.000000e+00 : f32
    %118 = vector.broadcast %cst_82 : f32 to vector<2x64xf32>
    %119 = arith.maximumf %117, %118 : vector<2x64xf32>
    %c0_83 = arith.constant 0 : index
    %c0_84 = arith.constant 0 : index
    %120 = vector.load %arg14[%c0_83, %c0_84] : memref<64x3xf32, #tpu.memory_space<vmem>>, vector<64x3xf32>
    %cst_85 = arith.constant dense<0.000000e+00> : vector<2x3xf32>
    %121 = tpu.matmul %119, %120, %cst_85 {dimension_numbers = #tpu.dot_dimension_numbers<[1], [0], [0], [1], [0, 0, 1, 1], [], []>} : vector<2x64xf32>, vector<64x3xf32>, vector<2x3xf32> -> vector<2x3xf32>
    %c0_86 = arith.constant 0 : index
    %c0_87 = arith.constant 0 : index
    %122 = vector.load %arg15[%c0_86, %c0_87] : memref<1x3xf32, #tpu.memory_space<vmem>>, vector<1x3xf32>
    %123 = vector.broadcast %122 : vector<1x3xf32> to vector<2x3xf32>
    %124 = arith.addf %121, %123 : vector<2x3xf32>
    %c0_88 = arith.constant 0 : index
    %c0_89 = arith.constant 0 : index
    %125 = vector.load %arg16[%c0_88, %c0_89] : memref<2x3xf32, #tpu.memory_space<vmem>>, vector<2x3xf32>
    tpu.vector_store %arg16[%c0_88, %c0_89], %124 {strides = array<i32>} : memref<2x3xf32, #tpu.memory_space<vmem>>, vector<2x3xf32>,
    return
  }
  func.func @transform_0(%arg0: i32) -> (i32, i32) {
    %c0_i32 = arith.constant 0 : i32
    %c0_i32_0 = arith.constant 0 : i32
    %c0_i32_1 = arith.constant 0 : i32
    return %c0_i32, %c0_i32_0 : i32, i32
  }
  func.func @transform_1(%arg0: i32) -> (i32, i32) {
    %c0_i32 = arith.constant 0 : i32
    %c0_i32_0 = arith.constant 0 : i32
    %c0_i32_1 = arith.constant 0 : i32
    return %c0_i32, %c0_i32_0 : i32, i32
  }
  func.func @transform_2(%arg0: i32) -> (i32, i32) {
    %c0_i32 = arith.constant 0 : i32
    %c0_i32_0 = arith.constant 0 : i32
    %c0_i32_1 = arith.constant 0 : i32
    return %c0_i32, %c0_i32_0 : i32, i32
  }
  func.func @transform_3(%arg0: i32) -> (i32, i32) {
    %c0_i32 = arith.constant 0 : i32
    %c0_i32_0 = arith.constant 0 : i32
    %c0_i32_1 = arith.constant 0 : i32
    return %c0_i32, %c0_i32_0 : i32, i32
  }
  func.func @transform_4(%arg0: i32) -> (i32, i32) {
    %c0_i32 = arith.constant 0 : i32
    %c0_i32_0 = arith.constant 0 : i32
    %c0_i32_1 = arith.constant 0 : i32
    return %c0_i32, %c0_i32_0 : i32, i32
  }
  func.func @transform_5(%arg0: i32) -> (i32, i32) {
    %c0_i32 = arith.constant 0 : i32
    %c0_i32_0 = arith.constant 0 : i32
    %c0_i32_1 = arith.constant 0 : i32
    return %c0_i32, %c0_i32_0 : i32, i32
  }
  func.func @transform_6(%arg0: i32) -> (i32, i32) {
    %c0_i32 = arith.constant 0 : i32
    %c0_i32_0 = arith.constant 0 : i32
    %c0_i32_1 = arith.constant 0 : i32
    return %c0_i32, %c0_i32_0 : i32, i32
  }
  func.func @transform_7(%arg0: i32) -> (i32, i32) {
    %c0_i32 = arith.constant 0 : i32
    %c0_i32_0 = arith.constant 0 : i32
    %c0_i32_1 = arith.constant 0 : i32
    return %c0_i32, %c0_i32_0 : i32, i32
  }
  func.func @transform_8(%arg0: i32) -> (i32, i32) {
    %c0_i32 = arith.constant 0 : i32
    %c0_i32_0 = arith.constant 0 : i32
    %c0_i32_1 = arith.constant 0 : i32
    return %c0_i32, %c0_i32_0 : i32, i32
  }
  func.func @transform_9(%arg0: i32) -> (i32, i32) {
    %c0_i32 = arith.constant 0 : i32
    %c0_i32_0 = arith.constant 0 : i32
    %c0_i32_1 = arith.constant 0 : i32
    return %c0_i32, %c0_i32_0 : i32, i32
  }
  func.func @transform_10(%arg0: i32) -> (i32, i32) {
    %c0_i32 = arith.constant 0 : i32
    %c0_i32_0 = arith.constant 0 : i32
    %c0_i32_1 = arith.constant 0 : i32
    return %c0_i32, %c0_i32_0 : i32, i32
  }
  func.func @transform_11(%arg0: i32) -> (i32, i32) {
    %c0_i32 = arith.constant 0 : i32
    %c0_i32_0 = arith.constant 0 : i32
    %c0_i32_1 = arith.constant 0 : i32
    return %c0_i32, %c0_i32_0 : i32, i32
  }
  func.func @transform_12(%arg0: i32) -> (i32, i32) {
    %c0_i32 = arith.constant 0 : i32
    %c0_i32_0 = arith.constant 0 : i32
    %c0_i32_1 = arith.constant 0 : i32
    return %c0_i32, %c0_i32_0 : i32, i32
  }
  func.func @transform_13(%arg0: i32) -> (i32, i32) {
    %c0_i32 = arith.constant 0 : i32
    %c0_i32_0 = arith.constant 0 : i32
    %c0_i32_1 = arith.constant 0 : i32
    return %c0_i32, %c0_i32_0 : i32, i32
  }
  func.func @transform_14(%arg0: i32) -> (i32, i32) {
    %c0_i32 = arith.constant 0 : i32
    %c0_i32_0 = arith.constant 0 : i32
    %c0_i32_1 = arith.constant 0 : i32
    return %c0_i32, %c0_i32_0 : i32, i32
  }
  func.func @transform_15(%arg0: i32) -> (i32, i32) {
    %c0_i32 = arith.constant 0 : i32
    %c0_i32_0 = arith.constant 0 : i32
    %c0_i32_1 = arith.constant 0 : i32
    return %c0_i32, %c0_i32_0 : i32, i32
  }
}

</mosaic_0001>

<llo_original>
// kernel: covidnet_forward.1
$region0: #{covidnet_forward.1}
  #allocation0 [shape = 'u32[]', space=smem, size = 0x4, offset = 0x4, fixed_abs, tag = 'smem constant byte address 0x4 - core index']
  #allocation1 [shape = 'u32[144,128]{1,0:T(1,128)}', space=vmem, size = 0x12000, scoped, tag = 'internal scratch']
  #allocation2 [shape = 'f32[160,16]{1,0:T(8,128)}', space=vmem, size = 0x14000, scoped, tag = 'scratch operand']
  %s0 = inlined_call_operand.vmem [shape: f32[560,3], index: 0, kind: input, shape index: {}]
  %s1 = inlined_call_operand.vmem [shape: f32[512,9], index: 1, kind: input, shape index: {}]
  %s2 = inlined_call_operand.vmem [shape: bf16[27,16], index: 2, kind: input, shape index: {}]
  %s3 = inlined_call_operand.vmem [shape: f32[1,16], index: 3, kind: input, shape index: {}]
  %s4 = inlined_call_operand.vmem [shape: bf16[512,512], index: 4, kind: input, shape index: {}]
  %s5 = inlined_call_operand.vmem [shape: f32[128,9], index: 5, kind: input, shape index: {}]
  %s6 = inlined_call_operand.vmem [shape: bf16[144,32], index: 6, kind: input, shape index: {}]
  %s7 = inlined_call_operand.vmem [shape: f32[1,32], index: 7, kind: input, shape index: {}]
  %s8 = inlined_call_operand.vmem [shape: bf16[128,128], index: 8, kind: input, shape index: {}]
  %s9 = inlined_call_operand.vmem [shape: f32[32,512], index: 9, kind: input, shape index: {}]
  %s10 = inlined_call_operand.vmem [shape: f32[2,32], index: 10, kind: input, shape index: {}]
  %s11 = inlined_call_operand.vmem [shape: bf16[512,64], index: 11, kind: input, shape index: {}]
  %s12 = inlined_call_operand.vmem [shape: f32[1,64], index: 12, kind: input, shape index: {}]
  %s13 = inlined_call_operand.vmem [shape: f32[64,3], index: 13, kind: input, shape index: {}]
  %s14 = inlined_call_operand.vmem [shape: f32[1,3], index: 14, kind: input, shape index: {}]
  %s15 = inlined_call_operand.hbm [shape: f32[2,3], index: 15, kind: output, shape index: {}]
  %s16 = sld [smem:[#allocation0]]
  $region70: #{covidnet_forward.1} parent=0
    _
  %s18 = ssub.s32 1, %s16
  %s19 = scalar_select 0, %s18, %s16
  $region1: #{covidnet_forward.1} parent=0
    #allocation3 [shape = 'u8[1024]{0}', space=vmem, size = 0x400, scoped, tag = 'output window, operand 0, single buffered']
    #allocation4 [shape = 's32[1]{0}', space=sflag, size = 0x4, scoped, tag = 'scoped memory for covidnet_forward.1']
    %20 = vsyncpa [#allocation4], 0
    // Predicated region
    $region2: #{covidnet_forward.1} parent=1 // pred_check
      _
    $region3: #{covidnet_forward.1} parent=1 // pred_check_branch
      %22 = sbr.rel (0) target = $region5
    $region4: #{covidnet_forward.1} parent=1 // pred_region
      _
    $region5: #{covidnet_forward.1} parent=1 // pred_fallthru
      _
    // Predicated region
    $region6: #{covidnet_forward.1} parent=1 // pred_check
      _
    $region7: #{covidnet_forward.1} parent=1 // pred_check_branch
      %24 = sbr.rel (0) target = $region9
    $region8: #{covidnet_forward.1} parent=1 // pred_region
      _
    $region9: #{covidnet_forward.1} parent=1 // pred_fallthru
      _
    // Predicated region
    $region10: #{covidnet_forward.1} parent=1 // pred_check
      _
    $region11: #{covidnet_forward.1} parent=1 // pred_check_branch
      %26 = sbr.rel (0) target = $region13
    $region12: #{covidnet_forward.1} parent=1 // pred_region
      _
    $region13: #{covidnet_forward.1} parent=1 // pred_fallthru
      _
    // Predicated region
    $region14: #{covidnet_forward.1} parent=1 // pred_check
      _
    $region15: #{covidnet_forward.1} parent=1 // pred_check_branch
      %28 = sbr.rel (0) target = $region17
    $region16: #{covidnet_forward.1} parent=1 // pred_region
      _
    $region17: #{covidnet_forward.1} parent=1 // pred_fallthru
      _
    // Predicated region
    $region18: #{covidnet_forward.1} parent=1 // pred_check
      _
    $region19: #{covidnet_forward.1} parent=1 // pred_check_branch
      %30 = sbr.rel (0) target = $region21
    $region20: #{covidnet_forward.1} parent=1 // pred_region
      _
    $region21: #{covidnet_forward.1} parent=1 // pred_fallthru
      _
    // Predicated region
    $region22: #{covidnet_forward.1} parent=1 // pred_check
      _
    $region23: #{covidnet_forward.1} parent=1 // pred_check_branch
      %32 = sbr.rel (0) target = $region25
    $region24: #{covidnet_forward.1} parent=1 // pred_region
      _
    $region25: #{covidnet_forward.1} parent=1 // pred_fallthru
      _
    // Predicated region
    $region26: #{covidnet_forward.1} parent=1 // pred_check
      _
    $region27: #{covidnet_forward.1} parent=1 // pred_check_branch
      %34 = sbr.rel (0) target = $region29
    $region28: #{covidnet_forward.1} parent=1 // pred_region
      _
    $region29: #{covidnet_forward.1} parent=1 // pred_fallthru
      _
    // Predicated region
    $region30: #{covidnet_forward.1} parent=1 // pred_check
      _
    $region31: #{covidnet_forward.1} parent=1 // pred_check_branch
      %36 = sbr.rel (0) target = $region33
    $region32: #{covidnet_forward.1} parent=1 // pred_region
      _
    $region33: #{covidnet_forward.1} parent=1 // pred_fallthru
      _
    // Predicated region
    $region34: #{covidnet_forward.1} parent=1 // pred_check
      _
    $region35: #{covidnet_forward.1} parent=1 // pred_check_branch
      %38 = sbr.rel (0) target = $region37
    $region36: #{covidnet_forward.1} parent=1 // pred_region
      _
    $region37: #{covidnet_forward.1} parent=1 // pred_fallthru
      _
    // Predicated region
    $region38: #{covidnet_forward.1} parent=1 // pred_check
      _
    $region39: #{covidnet_forward.1} parent=1 // pred_check_branch
      %40 = sbr.rel (0) target = $region41
    $region40: #{covidnet_forward.1} parent=1 // pred_region
      _
    $region41: #{covidnet_forward.1} parent=1 // pred_fallthru
      _
    // Predicated region
    $region42: #{covidnet_forward.1} parent=1 // pred_check
      _
    $region43: #{covidnet_forward.1} parent=1 // pred_check_branch
      %42 = sbr.rel (0) target = $region45
    $region44: #{covidnet_forward.1} parent=1 // pred_region
      _
    $region45: #{covidnet_forward.1} parent=1 // pred_fallthru
      _
    // Predicated region
    $region46: #{covidnet_forward.1} parent=1 // pred_check
      _
    $region47: #{covidnet_forward.1} parent=1 // pred_check_branch
      %44 = sbr.rel (0) target = $region49
    $region48: #{covidnet_forward.1} parent=1 // pred_region
      _
    $region49: #{covidnet_forward.1} parent=1 // pred_fallthru
      _
    // Predicated region
    $region50: #{covidnet_forward.1} parent=1 // pred_check
      _
    $region51: #{covidnet_forward.1} parent=1 // pred_check_branch
      %46 = sbr.rel (0) target = $region53
    $region52: #{covidnet_forward.1} parent=1 // pred_region
      _
    $region53: #{covidnet_forward.1} parent=1 // pred_fallthru
      _
    // Predicated region
    $region54: #{covidnet_forward.1} parent=1 // pred_check
      _
    $region55: #{covidnet_forward.1} parent=1 // pred_check_branch
      %48 = sbr.rel (0) target = $region57
    $region56: #{covidnet_forward.1} parent=1 // pred_region
      _
    $region57: #{covidnet_forward.1} parent=1 // pred_fallthru
      _
    // Predicated region
    $region58: #{covidnet_forward.1} parent=1 // pred_check
      _
    $region59: #{covidnet_forward.1} parent=1 // pred_check_branch
      %50 = sbr.rel (0) target = $region61
    $region60: #{covidnet_forward.1} parent=1 // pred_region
      _
    $region61: #{covidnet_forward.1} parent=1 // pred_fallthru
      _
    %v52 = vld [vmem:[%s0 + $0x7] sm:$0xff]
    %v53 = vld [vmem:[%s0 + $0xf] sm:$0xff]
    %v54 = vld [vmem:[%s0 + $0x17] sm:$0xff]
    %v55 = vld [vmem:[%s0 + $0x1f] sm:$0xff]
    %v56 = vld [vmem:[%s0 + $0x27] sm:$0xff]
    %v57 = vld [vmem:[%s0 + $0x2f] sm:$0xff]
    %v58 = vld [vmem:[%s0 + $0x37] sm:$0xff]
    %v59 = vld [vmem:[%s0 + $0x3f] sm:$0xff]
    %v60 = vld [vmem:[%s0 + $0x47] sm:$0xff]
    %v61 = vld [vmem:[%s0 + $0x4f] sm:$0xff]
    %v62 = vld [vmem:[%s0 + $0x57] sm:$0xff]
    %v63 = vld [vmem:[%s0 + $0x5f] sm:$0xff]
    %v64 = vld [vmem:[%s0 + $0x67] sm:$0xff]
    %v65 = vld [vmem:[%s0 + $0x6f] sm:$0xff]
    %v66 = vld [vmem:[%s0 + $0x77] sm:$0xff]
    %v67 = vld [vmem:[%s0 + $0x7f] sm:$0xff]
    %v68 = vld [vmem:[%s0 + $0x87] sm:$0xff]
    %v69 = vld [vmem:[%s0 + $0x8f] sm:$0xff]
    %v70 = vld [vmem:[%s0 + $0x97] sm:$0xff]
    %v71 = vld [vmem:[%s0 + $0x9f] sm:$0xff]
    %v72 = vld [vmem:[%s0 + $0xa7] sm:$0xff]
    %v73 = vld [vmem:[%s0 + $0xaf] sm:$0xff]
    %v74 = vld [vmem:[%s0 + $0xb7] sm:$0xff]
    %v75 = vld [vmem:[%s0 + $0xbf] sm:$0xff]
    %v76 = vld [vmem:[%s0 + $0xc7] sm:$0xff]
    %v77 = vld [vmem:[%s0 + $0xcf] sm:$0xff]
    %v78 = vld [vmem:[%s0 + $0xd7] sm:$0xff]
    %v79 = vld [vmem:[%s0 + $0xdf] sm:$0xff]
    %v80 = vld [vmem:[%s0 + $0xe7] sm:$0xff]
    %v81 = vld [vmem:[%s0 + $0xef] sm:$0xff]
    %v82 = vld [vmem:[%s0 + $0xf7] sm:$0xff]
    %v83 = vld [vmem:[%s0 + $0xff] sm:$0xff]
    %v84 = vld [vmem:[%s0 + $0x107] sm:$0xff]
    %v85 = vld [vmem:[%s0 + $0x10f] sm:$0xff]
    %v86 = vld [vmem:[%s0 + $0x117] sm:$0xff]
    %v87 = vld [vmem:[%s0 + $0x11f] sm:$0xff]
    %v88 = vld [vmem:[%s0 + $0x127] sm:$0xff]
    %v89 = vld [vmem:[%s0 + $0x12f] sm:$0xff]
    %v90 = vld [vmem:[%s0 + $0x137] sm:$0xff]
    %v91 = vld [vmem:[%s0 + $0x13f] sm:$0xff]
    %v92 = vld [vmem:[%s0 + $0x147] sm:$0xff]
    %v93 = vld [vmem:[%s0 + $0x14f] sm:$0xff]
    %v94 = vld [vmem:[%s0 + $0x157] sm:$0xff]
    %v95 = vld [vmem:[%s0 + $0x15f] sm:$0xff]
    %v96 = vld [vmem:[%s0 + $0x167] sm:$0xff]
    %v97 = vld [vmem:[%s0 + $0x16f] sm:$0xff]
    %v98 = vld [vmem:[%s0 + $0x177] sm:$0xff]
    %v99 = vld [vmem:[%s0 + $0x17f] sm:$0xff]
    %v100 = vld [vmem:[%s0 + $0x187] sm:$0xff]
    %v101 = vld [vmem:[%s0 + $0x18f] sm:$0xff]
    %v102 = vld [vmem:[%s0 + $0x197] sm:$0xff]
    %v103 = vld [vmem:[%s0 + $0x19f] sm:$0xff]
    %v104 = vld [vmem:[%s0 + $0x1a7] sm:$0xff]
    %v105 = vld [vmem:[%s0 + $0x1af] sm:$0xff]
    %v106 = vld [vmem:[%s0 + $0x1b7] sm:$0xff]
    %v107 = vld [vmem:[%s0 + $0x1bf] sm:$0xff]
    %v108 = vld [vmem:[%s0 + $0x1c7] sm:$0xff]
    %v109 = vld [vmem:[%s0 + $0x1cf] sm:$0xff]
    %v110 = vld [vmem:[%s0 + $0x1d7] sm:$0xff]
    %v111 = vld [vmem:[%s0 + $0x1df] sm:$0xff]
    %v112 = vld [vmem:[%s0 + $0x1e7] sm:$0xff]
    %v113 = vld [vmem:[%s0 + $0x1ef] sm:$0xff]
    %v114 = vld [vmem:[%s0 + $0x1f7] sm:$0xff]
    %v115 = vld [vmem:[%s0 + $0x1ff] sm:$0xff]
    %v116 = vld [vmem:[%s1] sm:$0xff]
    %v117 = vld [vmem:[%s1 + $0x8] sm:$0xff]
    %v118 = vld [vmem:[%s1 + $0x10] sm:$0xff]
    %v119 = vld [vmem:[%s1 + $0x18] sm:$0xff]
    %v120 = vld [vmem:[%s1 + $0x20] sm:$0xff]
    %v121 = vld [vmem:[%s1 + $0x28] sm:$0xff]
    %v122 = vld [vmem:[%s1 + $0x30] sm:$0xff]
    %v123 = vld [vmem:[%s1 + $0x38] sm:$0xff]
    %v124 = vld [vmem:[%s1 + $0x40] sm:$0xff]
    %v125 = vld [vmem:[%s1 + $0x48] sm:$0xff]
    %v126 = vld [vmem:[%s1 + $0x50] sm:$0xff]
    %v127 = vld [vmem:[%s1 + $0x58] sm:$0xff]
    %v128 = vld [vmem:[%s1 + $0x60] sm:$0xff]
    %v129 = vld [vmem:[%s1 + $0x68] sm:$0xff]
    %v130 = vld [vmem:[%s1 + $0x70] sm:$0xff]
    %v131 = vld [vmem:[%s1 + $0x78] sm:$0xff]
    %v132 = vld [vmem:[%s1 + $0x80] sm:$0xff]
    %v133 = vld [vmem:[%s1 + $0x88] sm:$0xff]
    %v134 = vld [vmem:[%s1 + $0x90] sm:$0xff]
    %v135 = vld [vmem:[%s1 + $0x98] sm:$0xff]
    %v136 = vld [vmem:[%s1 + $0xa0] sm:$0xff]
    %v137 = vld [vmem:[%s1 + $0xa8] sm:$0xff]
    %v138 = vld [vmem:[%s1 + $0xb0] sm:$0xff]
    %v139 = vld [vmem:[%s1 + $0xb8] sm:$0xff]
    %v140 = vld [vmem:[%s1 + $0xc0] sm:$0xff]
    %v141 = vld [vmem:[%s1 + $0xc8] sm:$0xff]
    %v142 = vld [vmem:[%s1 + $0xd0] sm:$0xff]
    %v143 = vld [vmem:[%s1 + $0xd8] sm:$0xff]
    %v144 = vld [vmem:[%s1 + $0xe0] sm:$0xff]
    %v145 = vld [vmem:[%s1 + $0xe8] sm:$0xff]
    %v146 = vld [vmem:[%s1 + $0xf0] sm:$0xff]
    %v147 = vld [vmem:[%s1 + $0xf8] sm:$0xff]
    %v148 = vld [vmem:[%s1 + $0x100] sm:$0xff]
    %v149 = vld [vmem:[%s1 + $0x108] sm:$0xff]
    %v150 = vld [vmem:[%s1 + $0x110] sm:$0xff]
    %v151 = vld [vmem:[%s1 + $0x118] sm:$0xff]
    %v152 = vld [vmem:[%s1 + $0x120] sm:$0xff]
    %v153 = vld [vmem:[%s1 + $0x128] sm:$0xff]
    %v154 = vld [vmem:[%s1 + $0x130] sm:$0xff]
    %v155 = vld [vmem:[%s1 + $0x138] sm:$0xff]
    %v156 = vld [vmem:[%s1 + $0x140] sm:$0xff]
    %v157 = vld [vmem:[%s1 + $0x148] sm:$0xff]
    %v158 = vld [vmem:[%s1 + $0x150] sm:$0xff]
    %v159 = vld [vmem:[%s1 + $0x158] sm:$0xff]
    %v160 = vld [vmem:[%s1 + $0x160] sm:$0xff]
    %v161 = vld [vmem:[%s1 + $0x168] sm:$0xff]
    %v162 = vld [vmem:[%s1 + $0x170] sm:$0xff]
    %v163 = vld [vmem:[%s1 + $0x178] sm:$0xff]
    %v164 = vld [vmem:[%s1 + $0x180] sm:$0xff]
    %v165 = vld [vmem:[%s1 + $0x188] sm:$0xff]
    %v166 = vld [vmem:[%s1 + $0x190] sm:$0xff]
    %v167 = vld [vmem:[%s1 + $0x198] sm:$0xff]
    %v168 = vld [vmem:[%s1 + $0x1a0] sm:$0xff]
    %v169 = vld [vmem:[%s1 + $0x1a8] sm:$0xff]
    %v170 = vld [vmem:[%s1 + $0x1b0] sm:$0xff]
    %v171 = vld [vmem:[%s1 + $0x1b8] sm:$0xff]
    %v172 = vld [vmem:[%s1 + $0x1c0] sm:$0xff]
    %v173 = vld [vmem:[%s1 + $0x1c8] sm:$0xff]
    %v174 = vld [vmem:[%s1 + $0x1d0] sm:$0xff]
    %v175 = vld [vmem:[%s1 + $0x1d8] sm:$0xff]
    %v176 = vld [vmem:[%s1 + $0x1e0] sm:$0xff]
    %v177 = vld [vmem:[%s1 + $0x1e8] sm:$0xff]
    %v178 = vld [vmem:[%s1 + $0x1f0] sm:$0xff]
    %v179 = vld [vmem:[%s1 + $0x1f8] sm:$0xff]
    %181 = vset.pattern.permute.xlu0 0
    %182 = vperm.xlu0 %181, %v116
    %v183 = vpop.permute.xlu0 %182
    %186 = vset.pattern.permute.xlu0 0
    %187 = vperm.xlu0 %186, %v117
    %v188 = vpop.permute.xlu0 %187
    %191 = vset.pattern.permute.xlu0 0
    %192 = vperm.xlu0 %191, %v118
    %v193 = vpop.permute.xlu0 %192
    %196 = vset.pattern.permute.xlu0 0
    %197 = vperm.xlu0 %196, %v119
    %v198 = vpop.permute.xlu0 %197
    %201 = vset.pattern.permute.xlu0 0
    %202 = vperm.xlu0 %201, %v120
    %v203 = vpop.permute.xlu0 %202
    %206 = vset.pattern.permute.xlu0 0
    %207 = vperm.xlu0 %206, %v121
    %v208 = vpop.permute.xlu0 %207
    %211 = vset.pattern.permute.xlu0 0
    %212 = vperm.xlu0 %211, %v122
    %v213 = vpop.permute.xlu0 %212
    %216 = vset.pattern.permute.xlu0 0
    %217 = vperm.xlu0 %216, %v123
    %v218 = vpop.permute.xlu0 %217
    %221 = vset.pattern.permute.xlu0 0
    %222 = vperm.xlu0 %221, %v124
    %v223 = vpop.permute.xlu0 %222
    %226 = vset.pattern.permute.xlu0 0
    %227 = vperm.xlu0 %226, %v125
    %v228 = vpop.permute.xlu0 %227
    %231 = vset.pattern.permute.xlu0 0
    %232 = vperm.xlu0 %231, %v126
    %v233 = vpop.permute.xlu0 %232
    %236 = vset.pattern.permute.xlu0 0
    %237 = vperm.xlu0 %236, %v127
    %v238 = vpop.permute.xlu0 %237
    %241 = vset.pattern.permute.xlu0 0
    %242 = vperm.xlu0 %241, %v128
    %v243 = vpop.permute.xlu0 %242
    %246 = vset.pattern.permute.xlu0 0
    %247 = vperm.xlu0 %246, %v129
    %v248 = vpop.permute.xlu0 %247
    %251 = vset.pattern.permute.xlu0 0
    %252 = vperm.xlu0 %251, %v130
    %v253 = vpop.permute.xlu0 %252
    %256 = vset.pattern.permute.xlu0 0
    %257 = vperm.xlu0 %256, %v131
    %v258 = vpop.permute.xlu0 %257
    %261 = vset.pattern.permute.xlu0 0
    %262 = vperm.xlu0 %261, %v132
    %v263 = vpop.permute.xlu0 %262
    %266 = vset.pattern.permute.xlu0 0
    %267 = vperm.xlu0 %266, %v133
    %v268 = vpop.permute.xlu0 %267
    %271 = vset.pattern.permute.xlu0 0
    %272 = vperm.xlu0 %271, %v134
    %v273 = vpop.permute.xlu0 %272
    %276 = vset.pattern.permute.xlu0 0
    %277 = vperm.xlu0 %276, %v135
    %v278 = vpop.permute.xlu0 %277
    %281 = vset.pattern.permute.xlu0 0
    %282 = vperm.xlu0 %281, %v136
    %v283 = vpop.permute.xlu0 %282
    %286 = vset.pattern.permute.xlu0 0
    %287 = vperm.xlu0 %286, %v137
    %v288 = vpop.permute.xlu0 %287
    %291 = vset.pattern.permute.xlu0 0
    %292 = vperm.xlu0 %291, %v138
    %v293 = vpop.permute.xlu0 %292
    %296 = vset.pattern.permute.xlu0 0
    %297 = vperm.xlu0 %296, %v139
    %v298 = vpop.permute.xlu0 %297
    %301 = vset.pattern.permute.xlu0 0
    %302 = vperm.xlu0 %301, %v140
    %v303 = vpop.permute.xlu0 %302
    %306 = vset.pattern.permute.xlu0 0
    %307 = vperm.xlu0 %306, %v141
    %v308 = vpop.permute.xlu0 %307
    %311 = vset.pattern.permute.xlu0 0
    %312 = vperm.xlu0 %311, %v142
    %v313 = vpop.permute.xlu0 %312
    %316 = vset.pattern.permute.xlu0 0
    %317 = vperm.xlu0 %316, %v143
    %v318 = vpop.permute.xlu0 %317
    %321 = vset.pattern.permute.xlu0 0
    %322 = vperm.xlu0 %321, %v144
    %v323 = vpop.permute.xlu0 %322
    %326 = vset.pattern.permute.xlu0 0
    %327 = vperm.xlu0 %326, %v145
    %v328 = vpop.permute.xlu0 %327
    %331 = vset.pattern.permute.xlu0 0
    %332 = vperm.xlu0 %331, %v146
    %v333 = vpop.permute.xlu0 %332
    %336 = vset.pattern.permute.xlu0 0
    %337 = vperm.xlu0 %336, %v147
    %v338 = vpop.permute.xlu0 %337
    %341 = vset.pattern.permute.xlu0 0
    %342 = vperm.xlu0 %341, %v148
    %v343 = vpop.permute.xlu0 %342
    %346 = vset.pattern.permute.xlu0 0
    %347 = vperm.xlu0 %346, %v149
    %v348 = vpop.permute.xlu0 %347
    %351 = vset.pattern.permute.xlu0 0
    %352 = vperm.xlu0 %351, %v150
    %v353 = vpop.permute.xlu0 %352
    %356 = vset.pattern.permute.xlu0 0
    %357 = vperm.xlu0 %356, %v151
    %v358 = vpop.permute.xlu0 %357
    %361 = vset.pattern.permute.xlu0 0
    %362 = vperm.xlu0 %361, %v152
    %v363 = vpop.permute.xlu0 %362
    %366 = vset.pattern.permute.xlu0 0
    %367 = vperm.xlu0 %366, %v153
    %v368 = vpop.permute.xlu0 %367
    %371 = vset.pattern.permute.xlu0 0
    %372 = vperm.xlu0 %371, %v154
    %v373 = vpop.permute.xlu0 %372
    %376 = vset.pattern.permute.xlu0 0
    %377 = vperm.xlu0 %376, %v155
    %v378 = vpop.permute.xlu0 %377
    %381 = vset.pattern.permute.xlu0 0
    %382 = vperm.xlu0 %381, %v156
    %v383 = vpop.permute.xlu0 %382
    %386 = vset.pattern.permute.xlu0 0
    %387 = vperm.xlu0 %386, %v157
    %v388 = vpop.permute.xlu0 %387
    %391 = vset.pattern.permute.xlu0 0
    %392 = vperm.xlu0 %391, %v158
    %v393 = vpop.permute.xlu0 %392
    %396 = vset.pattern.permute.xlu0 0
    %397 = vperm.xlu0 %396, %v159
    %v398 = vpop.permute.xlu0 %397
    %401 = vset.pattern.permute.xlu0 0
    %402 = vperm.xlu0 %401, %v160
    %v403 = vpop.permute.xlu0 %402
    %406 = vset.pattern.permute.xlu0 0
    %407 = vperm.xlu0 %406, %v161
    %v408 = vpop.permute.xlu0 %407
    %411 = vset.pattern.permute.xlu0 0
    %412 = vperm.xlu0 %411, %v162
    %v413 = vpop.permute.xlu0 %412
    %416 = vset.pattern.permute.xlu0 0
    %417 = vperm.xlu0 %416, %v163
    %v418 = vpop.permute.xlu0 %417
    %421 = vset.pattern.permute.xlu0 0
    %422 = vperm.xlu0 %421, %v164
    %v423 = vpop.permute.xlu0 %422
    %426 = vset.pattern.permute.xlu0 0
    %427 = vperm.xlu0 %426, %v165
    %v428 = vpop.permute.xlu0 %427
    %431 = vset.pattern.permute.xlu0 0
    %432 = vperm.xlu0 %431, %v166
    %v433 = vpop.permute.xlu0 %432
    %436 = vset.pattern.permute.xlu0 0
    %437 = vperm.xlu0 %436, %v167
    %v438 = vpop.permute.xlu0 %437
    %441 = vset.pattern.permute.xlu0 0
    %442 = vperm.xlu0 %441, %v168
    %v443 = vpop.permute.xlu0 %442
    %446 = vset.pattern.permute.xlu0 0
    %447 = vperm.xlu0 %446, %v169
    %v448 = vpop.permute.xlu0 %447
    %451 = vset.pattern.permute.xlu0 0
    %452 = vperm.xlu0 %451, %v170
    %v453 = vpop.permute.xlu0 %452
    %456 = vset.pattern.permute.xlu0 0
    %457 = vperm.xlu0 %456, %v171
    %v458 = vpop.permute.xlu0 %457
    %461 = vset.pattern.permute.xlu0 0
    %462 = vperm.xlu0 %461, %v172
    %v463 = vpop.permute.xlu0 %462
    %466 = vset.pattern.permute.xlu0 0
    %467 = vperm.xlu0 %466, %v173
    %v468 = vpop.permute.xlu0 %467
    %471 = vset.pattern.permute.xlu0 0
    %472 = vperm.xlu0 %471, %v174
    %v473 = vpop.permute.xlu0 %472
    %476 = vset.pattern.permute.xlu0 0
    %477 = vperm.xlu0 %476, %v175
    %v478 = vpop.permute.xlu0 %477
    %481 = vset.pattern.permute.xlu0 0
    %482 = vperm.xlu0 %481, %v176
    %v483 = vpop.permute.xlu0 %482
    %486 = vset.pattern.permute.xlu0 0
    %487 = vperm.xlu0 %486, %v177
    %v488 = vpop.permute.xlu0 %487
    %491 = vset.pattern.permute.xlu0 0
    %492 = vperm.xlu0 %491, %v178
    %v493 = vpop.permute.xlu0 %492
    %496 = vset.pattern.permute.xlu0 0
    %497 = vperm.xlu0 %496, %v179
    %v498 = vpop.permute.xlu0 %497
    %v500 = vmul.f32 %v52, %v183
    %v501 = vmul.f32 %v53, %v188
    %v502 = vmul.f32 %v54, %v193
    %v503 = vmul.f32 %v55, %v198
    %v504 = vmul.f32 %v56, %v203
    %v505 = vmul.f32 %v57, %v208
    %v506 = vmul.f32 %v58, %v213
    %v507 = vmul.f32 %v59, %v218
    %v508 = vmul.f32 %v60, %v223
    %v509 = vmul.f32 %v61, %v228
    %v510 = vmul.f32 %v62, %v233
    %v511 = vmul.f32 %v63, %v238
    %v512 = vmul.f32 %v64, %v243
    %v513 = vmul.f32 %v65, %v248
    %v514 = vmul.f32 %v66, %v253
    %v515 = vmul.f32 %v67, %v258
    %v516 = vmul.f32 %v68, %v263
    %v517 = vmul.f32 %v69, %v268
    %v518 = vmul.f32 %v70, %v273
    %v519 = vmul.f32 %v71, %v278
    %v520 = vmul.f32 %v72, %v283
    %v521 = vmul.f32 %v73, %v288
    %v522 = vmul.f32 %v74, %v293
    %v523 = vmul.f32 %v75, %v298
    %v524 = vmul.f32 %v76, %v303
    %v525 = vmul.f32 %v77, %v308
    %v526 = vmul.f32 %v78, %v313
    %v527 = vmul.f32 %v79, %v318
    %v528 = vmul.f32 %v80, %v323
    %v529 = vmul.f32 %v81, %v328
    %v530 = vmul.f32 %v82, %v333
    %v531 = vmul.f32 %v83, %v338
    %v532 = vmul.f32 %v84, %v343
    %v533 = vmul.f32 %v85, %v348
    %v534 = vmul.f32 %v86, %v353
    %v535 = vmul.f32 %v87, %v358
    %v536 = vmul.f32 %v88, %v363
    %v537 = vmul.f32 %v89, %v368
    %v538 = vmul.f32 %v90, %v373
    %v539 = vmul.f32 %v91, %v378
    %v540 = vmul.f32 %v92, %v383
    %v541 = vmul.f32 %v93, %v388
    %v542 = vmul.f32 %v94, %v393
    %v543 = vmul.f32 %v95, %v398
    %v544 = vmul.f32 %v96, %v403
    %v545 = vmul.f32 %v97, %v408
    %v546 = vmul.f32 %v98, %v413
    %v547 = vmul.f32 %v99, %v418
    %v548 = vmul.f32 %v100, %v423
    %v549 = vmul.f32 %v101, %v428
    %v550 = vmul.f32 %v102, %v433
    %v551 = vmul.f32 %v103, %v438
    %v552 = vmul.f32 %v104, %v443
    %v553 = vmul.f32 %v105, %v448
    %v554 = vmul.f32 %v106, %v453
    %v555 = vmul.f32 %v107, %v458
    %v556 = vmul.f32 %v108, %v463
    %v557 = vmul.f32 %v109, %v468
    %v558 = vmul.f32 %v110, %v473
    %v559 = vmul.f32 %v111, %v478
    %v560 = vmul.f32 %v112, %v483
    %v561 = vmul.f32 %v113, %v488
    %v562 = vmul.f32 %v114, %v493
    %v563 = vmul.f32 %v115, %v498
    %v564 = vld [vmem:[%s0 + $0x8] sm:$0xff]
    %v565 = vld [vmem:[%s0 + $0x10] sm:$0xff]
    %v566 = vld [vmem:[%s0 + $0x18] sm:$0xff]
    %v567 = vld [vmem:[%s0 + $0x20] sm:$0xff]
    %v568 = vld [vmem:[%s0 + $0x28] sm:$0xff]
    %v569 = vld [vmem:[%s0 + $0x30] sm:$0xff]
    %v570 = vld [vmem:[%s0 + $0x38] sm:$0xff]
    %v571 = vld [vmem:[%s0 + $0x40] sm:$0xff]
    %v572 = vld [vmem:[%s0 + $0x48] sm:$0xff]
    %v573 = vld [vmem:[%s0 + $0x50] sm:$0xff]
    %v574 = vld [vmem:[%s0 + $0x58] sm:$0xff]
    %v575 = vld [vmem:[%s0 + $0x60] sm:$0xff]
    %v576 = vld [vmem:[%s0 + $0x68] sm:$0xff]
    %v577 = vld [vmem:[%s0 + $0x70] sm:$0xff]
    %v578 = vld [vmem:[%s0 + $0x78] sm:$0xff]
    %v579 = vld [vmem:[%s0 + $0x80] sm:$0xff]
    %v580 = vld [vmem:[%s0 + $0x88] sm:$0xff]
    %v581 = vld [vmem:[%s0 + $0x90] sm:$0xff]
    %v582 = vld [vmem:[%s0 + $0x98] sm:$0xff]
    %v583 = vld [vmem:[%s0 + $0xa0] sm:$0xff]
    %v584 = vld [vmem:[%s0 + $0xa8] sm:$0xff]
    %v585 = vld [vmem:[%s0 + $0xb0] sm:$0xff]
    %v586 = vld [vmem:[%s0 + $0xb8] sm:$0xff]
    %v587 = vld [vmem:[%s0 + $0xc0] sm:$0xff]
    %v588 = vld [vmem:[%s0 + $0xc8] sm:$0xff]
    %v589 = vld [vmem:[%s0 + $0xd0] sm:$0xff]
    %v590 = vld [vmem:[%s0 + $0xd8] sm:$0xff]
    %v591 = vld [vmem:[%s0 + $0xe0] sm:$0xff]
    %v592 = vld [vmem:[%s0 + $0xe8] sm:$0xff]
    %v593 = vld [vmem:[%s0 + $0xf0] sm:$0xff]
    %v594 = vld [vmem:[%s0 + $0xf8] sm:$0xff]
    %v595 = vld [vmem:[%s0 + $0x100] sm:$0xff]
    %v596 = vld [vmem:[%s0 + $0x108] sm:$0xff]
    %v597 = vld [vmem:[%s0 + $0x110] sm:$0xff]
    %v598 = vld [vmem:[%s0 + $0x118] sm:$0xff]
    %v599 = vld [vmem:[%s0 + $0x120] sm:$0xff]
    %v600 = vld [vmem:[%s0 + $0x128] sm:$0xff]
    %v601 = vld [vmem:[%s0 + $0x130] sm:$0xff]
    %v602 = vld [vmem:[%s0 + $0x138] sm:$0xff]
    %v603 = vld [vmem:[%s0 + $0x140] sm:$0xff]
    %v604 = vld [vmem:[%s0 + $0x148] sm:$0xff]
    %v605 = vld [vmem:[%s0 + $0x150] sm:$0xff]
    %v606 = vld [vmem:[%s0 + $0x158] sm:$0xff]
    %v607 = vld [vmem:[%s0 + $0x160] sm:$0xff]
    %v608 = vld [vmem:[%s0 + $0x168] sm:$0xff]
    %v609 = vld [vmem:[%s0 + $0x170] sm:$0xff]
    %v610 = vld [vmem:[%s0 + $0x178] sm:$0xff]
    %v611 = vld [vmem:[%s0 + $0x180] sm:$0xff]
    %v612 = vld [vmem:[%s0 + $0x188] sm:$0xff]
    %v613 = vld [vmem:[%s0 + $0x190] sm:$0xff]
    %v614 = vld [vmem:[%s0 + $0x198] sm:$0xff]
    %v615 = vld [vmem:[%s0 + $0x1a0] sm:$0xff]
    %v616 = vld [vmem:[%s0 + $0x1a8] sm:$0xff]
    %v617 = vld [vmem:[%s0 + $0x1b0] sm:$0xff]
    %v618 = vld [vmem:[%s0 + $0x1b8] sm:$0xff]
    %v619 = vld [vmem:[%s0 + $0x1c0] sm:$0xff]
    %v620 = vld [vmem:[%s0 + $0x1c8] sm:$0xff]
    %v621 = vld [vmem:[%s0 + $0x1d0] sm:$0xff]
    %v622 = vld [vmem:[%s0 + $0x1d8] sm:$0xff]
    %v623 = vld [vmem:[%s0 + $0x1e0] sm:$0xff]
    %v624 = vld [vmem:[%s0 + $0x1e8] sm:$0xff]
    %v625 = vld [vmem:[%s0 + $0x1f0] sm:$0xff]
    %v626 = vld [vmem:[%s0 + $0x1f8] sm:$0xff]
    %v627 = vld [vmem:[%s0 + $0x200] sm:$0xff]
    %628 = vset.pattern.permute.xlu0 1
    %629 = vperm.xlu0 %628, %v116
    %v630 = vpop.permute.xlu0 %629
    %632 = vset.pattern.permute.xlu0 1
    %633 = vperm.xlu0 %632, %v117
    %v634 = vpop.permute.xlu0 %633
    %636 = vset.pattern.permute.xlu0 1
    %637 = vperm.xlu0 %636, %v118
    %v638 = vpop.permute.xlu0 %637
    %640 = vset.pattern.permute.xlu0 1
    %641 = vperm.xlu0 %640, %v119
    %v642 = vpop.permute.xlu0 %641
    %644 = vset.pattern.permute.xlu0 1
    %645 = vperm.xlu0 %644, %v120
    %v646 = vpop.permute.xlu0 %645
    %648 = vset.pattern.permute.xlu0 1
    %649 = vperm.xlu0 %648, %v121
    %v650 = vpop.permute.xlu0 %649
    %652 = vset.pattern.permute.xlu0 1
    %653 = vperm.xlu0 %652, %v122
    %v654 = vpop.permute.xlu0 %653
    %656 = vset.pattern.permute.xlu0 1
    %657 = vperm.xlu0 %656, %v123
    %v658 = vpop.permute.xlu0 %657
    %660 = vset.pattern.permute.xlu0 1
    %661 = vperm.xlu0 %660, %v124
    %v662 = vpop.permute.xlu0 %661
    %664 = vset.pattern.permute.xlu0 1
    %665 = vperm.xlu0 %664, %v125
    %v666 = vpop.permute.xlu0 %665
    %668 = vset.pattern.permute.xlu0 1
    %669 = vperm.xlu0 %668, %v126
    %v670 = vpop.permute.xlu0 %669
    %672 = vset.pattern.permute.xlu0 1
    %673 = vperm.xlu0 %672, %v127
    %v674 = vpop.permute.xlu0 %673
    %676 = vset.pattern.permute.xlu0 1
    %677 = vperm.xlu0 %676, %v128
    %v678 = vpop.permute.xlu0 %677
    %680 = vset.pattern.permute.xlu0 1
    %681 = vperm.xlu0 %680, %v129
    %v682 = vpop.permute.xlu0 %681
    %684 = vset.pattern.permute.xlu0 1
    %685 = vperm.xlu0 %684, %v130
    %v686 = vpop.permute.xlu0 %685
    %688 = vset.pattern.permute.xlu0 1
    %689 = vperm.xlu0 %688, %v131
    %v690 = vpop.permute.xlu0 %689
    %692 = vset.pattern.permute.xlu0 1
    %693 = vperm.xlu0 %692, %v132
    %v694 = vpop.permute.xlu0 %693
    %696 = vset.pattern.permute.xlu0 1
    %697 = vperm.xlu0 %696, %v133
    %v698 = vpop.permute.xlu0 %697
    %700 = vset.pattern.permute.xlu0 1
    %701 = vperm.xlu0 %700, %v134
    %v702 = vpop.permute.xlu0 %701
    %704 = vset.pattern.permute.xlu0 1
    %705 = vperm.xlu0 %704, %v135
    %v706 = vpop.permute.xlu0 %705
    %708 = vset.pattern.permute.xlu0 1
    %709 = vperm.xlu0 %708, %v136
    %v710 = vpop.permute.xlu0 %709
    %712 = vset.pattern.permute.xlu0 1
    %713 = vperm.xlu0 %712, %v137
    %v714 = vpop.permute.xlu0 %713
    %716 = vset.pattern.permute.xlu0 1
    %717 = vperm.xlu0 %716, %v138
    %v718 = vpop.permute.xlu0 %717
    %720 = vset.pattern.permute.xlu0 1
    %721 = vperm.xlu0 %720, %v139
    %v722 = vpop.permute.xlu0 %721
    %724 = vset.pattern.permute.xlu0 1
    %725 = vperm.xlu0 %724, %v140
    %v726 = vpop.permute.xlu0 %725
    %728 = vset.pattern.permute.xlu0 1
    %729 = vperm.xlu0 %728, %v141
    %v730 = vpop.permute.xlu0 %729
    %732 = vset.pattern.permute.xlu0 1
    %733 = vperm.xlu0 %732, %v142
    %v734 = vpop.permute.xlu0 %733
    %736 = vset.pattern.permute.xlu0 1
    %737 = vperm.xlu0 %736, %v143
    %v738 = vpop.permute.xlu0 %737
    %740 = vset.pattern.permute.xlu0 1
    %741 = vperm.xlu0 %740, %v144
    %v742 = vpop.permute.xlu0 %741
    %744 = vset.pattern.permute.xlu0 1
    %745 = vperm.xlu0 %744, %v145
    %v746 = vpop.permute.xlu0 %745
    %748 = vset.pattern.permute.xlu0 1
    %749 = vperm.xlu0 %748, %v146
    %v750 = vpop.permute.xlu0 %749
    %752 = vset.pattern.permute.xlu0 1
    %753 = vperm.xlu0 %752, %v147
    %v754 = vpop.permute.xlu0 %753
    %756 = vset.pattern.permute.xlu0 1
    %757 = vperm.xlu0 %756, %v148
    %v758 = vpop.permute.xlu0 %757
    %760 = vset.pattern.permute.xlu0 1
    %761 = vperm.xlu0 %760, %v149
    %v762 = vpop.permute.xlu0 %761
    %764 = vset.pattern.permute.xlu0 1
    %765 = vperm.xlu0 %764, %v150
    %v766 = vpop.permute.xlu0 %765
    %768 = vset.pattern.permute.xlu0 1
    %769 = vperm.xlu0 %768, %v151
    %v770 = vpop.permute.xlu0 %769
    %772 = vset.pattern.permute.xlu0 1
    %773 = vperm.xlu0 %772, %v152
    %v774 = vpop.permute.xlu0 %773
    %776 = vset.pattern.permute.xlu0 1
    %777 = vperm.xlu0 %776, %v153
    %v778 = vpop.permute.xlu0 %777
    %780 = vset.pattern.permute.xlu0 1
    %781 = vperm.xlu0 %780, %v154
    %v782 = vpop.permute.xlu0 %781
    %784 = vset.pattern.permute.xlu0 1
    %785 = vperm.xlu0 %784, %v155
    %v786 = vpop.permute.xlu0 %785
    %788 = vset.pattern.permute.xlu0 1
    %789 = vperm.xlu0 %788, %v156
    %v790 = vpop.permute.xlu0 %789
    %792 = vset.pattern.permute.xlu0 1
    %793 = vperm.xlu0 %792, %v157
    %v794 = vpop.permute.xlu0 %793
    %796 = vset.pattern.permute.xlu0 1
    %797 = vperm.xlu0 %796, %v158
    %v798 = vpop.permute.xlu0 %797
    %800 = vset.pattern.permute.xlu0 1
    %801 = vperm.xlu0 %800, %v159
    %v802 = vpop.permute.xlu0 %801
    %804 = vset.pattern.permute.xlu0 1
    %805 = vperm.xlu0 %804, %v160
    %v806 = vpop.permute.xlu0 %805
    %808 = vset.pattern.permute.xlu0 1
    %809 = vperm.xlu0 %808, %v161
    %v810 = vpop.permute.xlu0 %809
    %812 = vset.pattern.permute.xlu0 1
    %813 = vperm.xlu0 %812, %v162
    %v814 = vpop.permute.xlu0 %813
    %816 = vset.pattern.permute.xlu0 1
    %817 = vperm.xlu0 %816, %v163
    %v818 = vpop.permute.xlu0 %817
    %820 = vset.pattern.permute.xlu0 1
    %821 = vperm.xlu0 %820, %v164
    %v822 = vpop.permute.xlu0 %821
    %824 = vset.pattern.permute.xlu0 1
    %825 = vperm.xlu0 %824, %v165
    %v826 = vpop.permute.xlu0 %825
    %828 = vset.pattern.permute.xlu0 1
    %829 = vperm.xlu0 %828, %v166
    %v830 = vpop.permute.xlu0 %829
    %832 = vset.pattern.permute.xlu0 1
    %833 = vperm.xlu0 %832, %v167
    %v834 = vpop.permute.xlu0 %833
    %836 = vset.pattern.permute.xlu0 1
    %837 = vperm.xlu0 %836, %v168
    %v838 = vpop.permute.xlu0 %837
    %840 = vset.pattern.permute.xlu0 1
    %841 = vperm.xlu0 %840, %v169
    %v842 = vpop.permute.xlu0 %841
    %844 = vset.pattern.permute.xlu0 1
    %845 = vperm.xlu0 %844, %v170
    %v846 = vpop.permute.xlu0 %845
    %848 = vset.pattern.permute.xlu0 1
    %849 = vperm.xlu0 %848, %v171
    %v850 = vpop.permute.xlu0 %849
    %852 = vset.pattern.permute.xlu0 1
    %853 = vperm.xlu0 %852, %v172
    %v854 = vpop.permute.xlu0 %853
    %856 = vset.pattern.permute.xlu0 1
    %857 = vperm.xlu0 %856, %v173
    %v858 = vpop.permute.xlu0 %857
    %860 = vset.pattern.permute.xlu0 1
    %861 = vperm.xlu0 %860, %v174
    %v862 = vpop.permute.xlu0 %861
    %864 = vset.pattern.permute.xlu0 1
    %865 = vperm.xlu0 %864, %v175
    %v866 = vpop.permute.xlu0 %865
    %868 = vset.pattern.permute.xlu0 1
    %869 = vperm.xlu0 %868, %v176
    %v870 = vpop.permute.xlu0 %869
    %872 = vset.pattern.permute.xlu0 1
    %873 = vperm.xlu0 %872, %v177
    %v874 = vpop.permute.xlu0 %873
    %876 = vset.pattern.permute.xlu0 1
    %877 = vperm.xlu0 %876, %v178
    %v878 = vpop.permute.xlu0 %877
    %880 = vset.pattern.permute.xlu0 1
    %881 = vperm.xlu0 %880, %v179
    %v882 = vpop.permute.xlu0 %881
    %v884 = vmul.f32 %v564, %v630
    %v885 = vmul.f32 %v565, %v634
    %v886 = vmul.f32 %v566, %v638
    %v887 = vmul.f32 %v567, %v642
    %v888 = vmul.f32 %v568, %v646
    %v889 = vmul.f32 %v569, %v650
    %v890 = vmul.f32 %v570, %v654
    %v891 = vmul.f32 %v571, %v658
    %v892 = vmul.f32 %v572, %v662
    %v893 = vmul.f32 %v573, %v666
    %v894 = vmul.f32 %v574, %v670
    %v895 = vmul.f32 %v575, %v674
    %v896 = vmul.f32 %v576, %v678
    %v897 = vmul.f32 %v577, %v682
    %v898 = vmul.f32 %v578, %v686
    %v899 = vmul.f32 %v579, %v690
    %v900 = vmul.f32 %v580, %v694
    %v901 = vmul.f32 %v581, %v698
    %v902 = vmul.f32 %v582, %v702
    %v903 = vmul.f32 %v583, %v706
    %v904 = vmul.f32 %v584, %v710
    %v905 = vmul.f32 %v585, %v714
    %v906 = vmul.f32 %v586, %v718
    %v907 = vmul.f32 %v587, %v722
    %v908 = vmul.f32 %v588, %v726
    %v909 = vmul.f32 %v589, %v730
    %v910 = vmul.f32 %v590, %v734
    %v911 = vmul.f32 %v591, %v738
    %v912 = vmul.f32 %v592, %v742
    %v913 = vmul.f32 %v593, %v746
    %v914 = vmul.f32 %v594, %v750
    %v915 = vmul.f32 %v595, %v754
    %v916 = vmul.f32 %v596, %v758
    %v917 = vmul.f32 %v597, %v762
    %v918 = vmul.f32 %v598, %v766
    %v919 = vmul.f32 %v599, %v770
    %v920 = vmul.f32 %v600, %v774
    %v921 = vmul.f32 %v601, %v778
    %v922 = vmul.f32 %v602, %v782
    %v923 = vmul.f32 %v603, %v786
    %v924 = vmul.f32 %v604, %v790
    %v925 = vmul.f32 %v605, %v794
    %v926 = vmul.f32 %v606, %v798
    %v927 = vmul.f32 %v607, %v802
    %v928 = vmul.f32 %v608, %v806
    %v929 = vmul.f32 %v609, %v810
    %v930 = vmul.f32 %v610, %v814
    %v931 = vmul.f32 %v611, %v818
    %v932 = vmul.f32 %v612, %v822
    %v933 = vmul.f32 %v613, %v826
    %v934 = vmul.f32 %v614, %v830
    %v935 = vmul.f32 %v615, %v834
    %v936 = vmul.f32 %v616, %v838
    %v937 = vmul.f32 %v617, %v842
    %v938 = vmul.f32 %v618, %v846
    %v939 = vmul.f32 %v619, %v850
    %v940 = vmul.f32 %v620, %v854
    %v941 = vmul.f32 %v621, %v858
    %v942 = vmul.f32 %v622, %v862
    %v943 = vmul.f32 %v623, %v866
    %v944 = vmul.f32 %v624, %v870
    %v945 = vmul.f32 %v625, %v874
    %v946 = vmul.f32 %v626, %v878
    %v947 = vmul.f32 %v627, %v882
    %v948 = vld [vmem:[%s0 + $0x9] sm:$0xff]
    %v949 = vld [vmem:[%s0 + $0x11] sm:$0xff]
    %v950 = vld [vmem:[%s0 + $0x19] sm:$0xff]
    %v951 = vld [vmem:[%s0 + $0x21] sm:$0xff]
    %v952 = vld [vmem:[%s0 + $0x29] sm:$0xff]
    %v953 = vld [vmem:[%s0 + $0x31] sm:$0xff]
    %v954 = vld [vmem:[%s0 + $0x39] sm:$0xff]
    %v955 = vld [vmem:[%s0 + $0x41] sm:$0xff]
    %v956 = vld [vmem:[%s0 + $0x49] sm:$0xff]
    %v957 = vld [vmem:[%s0 + $0x51] sm:$0xff]
    %v958 = vld [vmem:[%s0 + $0x59] sm:$0xff]
    %v959 = vld [vmem:[%s0 + $0x61] sm:$0xff]
    %v960 = vld [vmem:[%s0 + $0x69] sm:$0xff]
    %v961 = vld [vmem:[%s0 + $0x71] sm:$0xff]
    %v962 = vld [vmem:[%s0 + $0x79] sm:$0xff]
    %v963 = vld [vmem:[%s0 + $0x81] sm:$0xff]
    %v964 = vld [vmem:[%s0 + $0x89] sm:$0xff]
    %v965 = vld [vmem:[%s0 + $0x91] sm:$0xff]
    %v966 = vld [vmem:[%s0 + $0x99] sm:$0xff]
    %v967 = vld [vmem:[%s0 + $0xa1] sm:$0xff]
    %v968 = vld [vmem:[%s0 + $0xa9] sm:$0xff]
    %v969 = vld [vmem:[%s0 + $0xb1] sm:$0xff]
    %v970 = vld [vmem:[%s0 + $0xb9] sm:$0xff]
    %v971 = vld [vmem:[%s0 + $0xc1] sm:$0xff]
    %v972 = vld [vmem:[%s0 + $0xc9] sm:$0xff]
    %v973 = vld [vmem:[%s0 + $0xd1] sm:$0xff]
    %v974 = vld [vmem:[%s0 + $0xd9] sm:$0xff]
    %v975 = vld [vmem:[%s0 + $0xe1] sm:$0xff]
    %v976 = vld [vmem:[%s0 + $0xe9] sm:$0xff]
    %v977 = vld [vmem:[%s0 + $0xf1] sm:$0xff]
    %v978 = vld [vmem:[%s0 + $0xf9] sm:$0xff]
    %v979 = vld [vmem:[%s0 + $0x101] sm:$0xff]
    %v980 = vld [vmem:[%s0 + $0x109] sm:$0xff]
    %v981 = vld [vmem:[%s0 + $0x111] sm:$0xff]
    %v982 = vld [vmem:[%s0 + $0x119] sm:$0xff]
    %v983 = vld [vmem:[%s0 + $0x121] sm:$0xff]
    %v984 = vld [vmem:[%s0 + $0x129] sm:$0xff]
    %v985 = vld [vmem:[%s0 + $0x131] sm:$0xff]
    %v986 = vld [vmem:[%s0 + $0x139] sm:$0xff]
    %v987 = vld [vmem:[%s0 + $0x141] sm:$0xff]
    %v988 = vld [vmem:[%s0 + $0x149] sm:$0xff]
    %v989 = vld [vmem:[%s0 + $0x151] sm:$0xff]
    %v990 = vld [vmem:[%s0 + $0x159] sm:$0xff]
    %v991 = vld [vmem:[%s0 + $0x161] sm:$0xff]
    %v992 = vld [vmem:[%s0 + $0x169] sm:$0xff]
    %v993 = vld [vmem:[%s0 + $0x171] sm:$0xff]
    %v994 = vld [vmem:[%s0 + $0x179] sm:$0xff]
    %v995 = vld [vmem:[%s0 + $0x181] sm:$0xff]
    %v996 = vld [vmem:[%s0 + $0x189] sm:$0xff]
    %v997 = vld [vmem:[%s0 + $0x191] sm:$0xff]
    %v998 = vld [vmem:[%s0 + $0x199] sm:$0xff]
    %v999 = vld [vmem:[%s0 + $0x1a1] sm:$0xff]
    %v1000 = vld [vmem:[%s0 + $0x1a9] sm:$0xff]
    %v1001 = vld [vmem:[%s0 + $0x1b1] sm:$0xff]
    %v1002 = vld [vmem:[%s0 + $0x1b9] sm:$0xff]
    %v1003 = vld [vmem:[%s0 + $0x1c1] sm:$0xff]
    %v1004 = vld [vmem:[%s0 + $0x1c9] sm:$0xff]
    %v1005 = vld [vmem:[%s0 + $0x1d1] sm:$0xff]
    %v1006 = vld [vmem:[%s0 + $0x1d9] sm:$0xff]
    %v1007 = vld [vmem:[%s0 + $0x1e1] sm:$0xff]
    %v1008 = vld [vmem:[%s0 + $0x1e9] sm:$0xff]
    %v1009 = vld [vmem:[%s0 + $0x1f1] sm:$0xff]
    %v1010 = vld [vmem:[%s0 + $0x1f9] sm:$0xff]
    %v1011 = vld [vmem:[%s0 + $0x201] sm:$0xff]
    %1012 = vset.pattern.permute.xlu0 2
    %1013 = vperm.xlu0 %1012, %v116
    %v1014 = vpop.permute.xlu0 %1013
    %1016 = vset.pattern.permute.xlu0 2
    %1017 = vperm.xlu0 %1016, %v117
    %v1018 = vpop.permute.xlu0 %1017
    %1020 = vset.pattern.permute.xlu0 2
    %1021 = vperm.xlu0 %1020, %v118
    %v1022 = vpop.permute.xlu0 %1021
    %1024 = vset.pattern.permute.xlu0 2
    %1025 = vperm.xlu0 %1024, %v119
    %v1026 = vpop.permute.xlu0 %1025
    %1028 = vset.pattern.permute.xlu0 2
    %1029 = vperm.xlu0 %1028, %v120
    %v1030 = vpop.permute.xlu0 %1029
    %1032 = vset.pattern.permute.xlu0 2
    %1033 = vperm.xlu0 %1032, %v121
    %v1034 = vpop.permute.xlu0 %1033
    %1036 = vset.pattern.permute.xlu0 2
    %1037 = vperm.xlu0 %1036, %v122
    %v1038 = vpop.permute.xlu0 %1037
    %1040 = vset.pattern.permute.xlu0 2
    %1041 = vperm.xlu0 %1040, %v123
    %v1042 = vpop.permute.xlu0 %1041
    %1044 = vset.pattern.permute.xlu0 2
    %1045 = vperm.xlu0 %1044, %v124
    %v1046 = vpop.permute.xlu0 %1045
    %1048 = vset.pattern.permute.xlu0 2
    %1049 = vperm.xlu0 %1048, %v125
    %v1050 = vpop.permute.xlu0 %1049
    %1052 = vset.pattern.permute.xlu0 2
    %1053 = vperm.xlu0 %1052, %v126
    %v1054 = vpop.permute.xlu0 %1053
    %1056 = vset.pattern.permute.xlu0 2
    %1057 = vperm.xlu0 %1056, %v127
    %v1058 = vpop.permute.xlu0 %1057
    %1060 = vset.pattern.permute.xlu0 2
    %1061 = vperm.xlu0 %1060, %v128
    %v1062 = vpop.permute.xlu0 %1061
    %1064 = vset.pattern.permute.xlu0 2
    %1065 = vperm.xlu0 %1064, %v129
    %v1066 = vpop.permute.xlu0 %1065
    %1068 = vset.pattern.permute.xlu0 2
    %1069 = vperm.xlu0 %1068, %v130
    %v1070 = vpop.permute.xlu0 %1069
    %1072 = vset.pattern.permute.xlu0 2
    %1073 = vperm.xlu0 %1072, %v131
    %v1074 = vpop.permute.xlu0 %1073
    %1076 = vset.pattern.permute.xlu0 2
    %1077 = vperm.xlu0 %1076, %v132
    %v1078 = vpop.permute.xlu0 %1077
    %1080 = vset.pattern.permute.xlu0 2
    %1081 = vperm.xlu0 %1080, %v133
    %v1082 = vpop.permute.xlu0 %1081
    %1084 = vset.pattern.permute.xlu0 2
    %1085 = vperm.xlu0 %1084, %v134
    %v1086 = vpop.permute.xlu0 %1085
    %1088 = vset.pattern.permute.xlu0 2
    %1089 = vperm.xlu0 %1088, %v135
    %v1090 = vpop.permute.xlu0 %1089
    %1092 = vset.pattern.permute.xlu0 2
    %1093 = vperm.xlu0 %1092, %v136
    %v1094 = vpop.permute.xlu0 %1093
    %1096 = vset.pattern.permute.xlu0 2
    %1097 = vperm.xlu0 %1096, %v137
    %v1098 = vpop.permute.xlu0 %1097
    %1100 = vset.pattern.permute.xlu0 2
    %1101 = vperm.xlu0 %1100, %v138
    %v1102 = vpop.permute.xlu0 %1101
    %1104 = vset.pattern.permute.xlu0 2
    %1105 = vperm.xlu0 %1104, %v139
    %v1106 = vpop.permute.xlu0 %1105
    %1108 = vset.pattern.permute.xlu0 2
    %1109 = vperm.xlu0 %1108, %v140
    %v1110 = vpop.permute.xlu0 %1109
    %1112 = vset.pattern.permute.xlu0 2
    %1113 = vperm.xlu0 %1112, %v141
    %v1114 = vpop.permute.xlu0 %1113
    %1116 = vset.pattern.permute.xlu0 2
    %1117 = vperm.xlu0 %1116, %v142
    %v1118 = vpop.permute.xlu0 %1117
    %1120 = vset.pattern.permute.xlu0 2
    %1121 = vperm.xlu0 %1120, %v143
    %v1122 = vpop.permute.xlu0 %1121
    %1124 = vset.pattern.permute.xlu0 2
    %1125 = vperm.xlu0 %1124, %v144
    %v1126 = vpop.permute.xlu0 %1125
    %1128 = vset.pattern.permute.xlu0 2
    %1129 = vperm.xlu0 %1128, %v145
    %v1130 = vpop.permute.xlu0 %1129
    %1132 = vset.pattern.permute.xlu0 2
    %1133 = vperm.xlu0 %1132, %v146
    %v1134 = vpop.permute.xlu0 %1133
    %1136 = vset.pattern.permute.xlu0 2
    %1137 = vperm.xlu0 %1136, %v147
    %v1138 = vpop.permute.xlu0 %1137
    %1140 = vset.pattern.permute.xlu0 2
    %1141 = vperm.xlu0 %1140, %v148
    %v1142 = vpop.permute.xlu0 %1141
    %1144 = vset.pattern.permute.xlu0 2
    %1145 = vperm.xlu0 %1144, %v149
    %v1146 = vpop.permute.xlu0 %1145
    %1148 = vset.pattern.permute.xlu0 2
    %1149 = vperm.xlu0 %1148, %v150
    %v1150 = vpop.permute.xlu0 %1149
    %1152 = vset.pattern.permute.xlu0 2
    %1153 = vperm.xlu0 %1152, %v151
    %v1154 = vpop.permute.xlu0 %1153
    %1156 = vset.pattern.permute.xlu0 2
    %1157 = vperm.xlu0 %1156, %v152
    %v1158 = vpop.permute.xlu0 %1157
    %1160 = vset.pattern.permute.xlu0 2
    %1161 = vperm.xlu0 %1160, %v153
    %v1162 = vpop.permute.xlu0 %1161
    %1164 = vset.pattern.permute.xlu0 2
    %1165 = vperm.xlu0 %1164, %v154
    %v1166 = vpop.permute.xlu0 %1165
    %1168 = vset.pattern.permute.xlu0 2
    %1169 = vperm.xlu0 %1168, %v155
    %v1170 = vpop.permute.xlu0 %1169
    %1172 = vset.pattern.permute.xlu0 2
    %1173 = vperm.xlu0 %1172, %v156
    %v1174 = vpop.permute.xlu0 %1173
    %1176 = vset.pattern.permute.xlu0 2
    %1177 = vperm.xlu0 %1176, %v157
    %v1178 = vpop.permute.xlu0 %1177
    %1180 = vset.pattern.permute.xlu0 2
    %1181 = vperm.xlu0 %1180, %v158
    %v1182 = vpop.permute.xlu0 %1181
    %1184 = vset.pattern.permute.xlu0 2
    %1185 = vperm.xlu0 %1184, %v159
    %v1186 = vpop.permute.xlu0 %1185
    %1188 = vset.pattern.permute.xlu0 2
    %1189 = vperm.xlu0 %1188, %v160
    %v1190 = vpop.permute.xlu0 %1189
    %1192 = vset.pattern.permute.xlu0 2
    %1193 = vperm.xlu0 %1192, %v161
    %v1194 = vpop.permute.xlu0 %1193
    %1196 = vset.pattern.permute.xlu0 2
    %1197 = vperm.xlu0 %1196, %v162
    %v1198 = vpop.permute.xlu0 %1197
    %1200 = vset.pattern.permute.xlu0 2
    %1201 = vperm.xlu0 %1200, %v163
    %v1202 = vpop.permute.xlu0 %1201
    %1204 = vset.pattern.permute.xlu0 2
    %1205 = vperm.xlu0 %1204, %v164
    %v1206 = vpop.permute.xlu0 %1205
    %1208 = vset.pattern.permute.xlu0 2
    %1209 = vperm.xlu0 %1208, %v165
    %v1210 = vpop.permute.xlu0 %1209
    %1212 = vset.pattern.permute.xlu0 2
    %1213 = vperm.xlu0 %1212, %v166
    %v1214 = vpop.permute.xlu0 %1213
    %1216 = vset.pattern.permute.xlu0 2
    %1217 = vperm.xlu0 %1216, %v167
    %v1218 = vpop.permute.xlu0 %1217
    %1220 = vset.pattern.permute.xlu0 2
    %1221 = vperm.xlu0 %1220, %v168
    %v1222 = vpop.permute.xlu0 %1221
    %1224 = vset.pattern.permute.xlu0 2
    %1225 = vperm.xlu0 %1224, %v169
    %v1226 = vpop.permute.xlu0 %1225
    %1228 = vset.pattern.permute.xlu0 2
    %1229 = vperm.xlu0 %1228, %v170
    %v1230 = vpop.permute.xlu0 %1229
    %1232 = vset.pattern.permute.xlu0 2
    %1233 = vperm.xlu0 %1232, %v171
    %v1234 = vpop.permute.xlu0 %1233
    %1236 = vset.pattern.permute.xlu0 2
    %1237 = vperm.xlu0 %1236, %v172
    %v1238 = vpop.permute.xlu0 %1237
    %1240 = vset.pattern.permute.xlu0 2
    %1241 = vperm.xlu0 %1240, %v173
    %v1242 = vpop.permute.xlu0 %1241
    %1244 = vset.pattern.permute.xlu0 2
    %1245 = vperm.xlu0 %1244, %v174
    %v1246 = vpop.permute.xlu0 %1245
    %1248 = vset.pattern.permute.xlu0 2
    %1249 = vperm.xlu0 %1248, %v175
    %v1250 = vpop.permute.xlu0 %1249
    %1252 = vset.pattern.permute.xlu0 2
    %1253 = vperm.xlu0 %1252, %v176
    %v1254 = vpop.permute.xlu0 %1253
    %1256 = vset.pattern.permute.xlu0 2
    %1257 = vperm.xlu0 %1256, %v177
    %v1258 = vpop.permute.xlu0 %1257
    %1260 = vset.pattern.permute.xlu0 2
    %1261 = vperm.xlu0 %1260, %v178
    %v1262 = vpop.permute.xlu0 %1261
    %1264 = vset.pattern.permute.xlu0 2
    %1265 = vperm.xlu0 %1264, %v179
    %v1266 = vpop.permute.xlu0 %1265
    %v1268 = vmul.f32 %v948, %v1014
    %v1269 = vmul.f32 %v949, %v1018
    %v1270 = vmul.f32 %v950, %v1022
    %v1271 = vmul.f32 %v951, %v1026
    %v1272 = vmul.f32 %v952, %v1030
    %v1273 = vmul.f32 %v953, %v1034
    %v1274 = vmul.f32 %v954, %v1038
    %v1275 = vmul.f32 %v955, %v1042
    %v1276 = vmul.f32 %v956, %v1046
    %v1277 = vmul.f32 %v957, %v1050
    %v1278 = vmul.f32 %v958, %v1054
    %v1279 = vmul.f32 %v959, %v1058
    %v1280 = vmul.f32 %v960, %v1062
    %v1281 = vmul.f32 %v961, %v1066
    %v1282 = vmul.f32 %v962, %v1070
    %v1283 = vmul.f32 %v963, %v1074
    %v1284 = vmul.f32 %v964, %v1078
    %v1285 = vmul.f32 %v965, %v1082
    %v1286 = vmul.f32 %v966, %v1086
    %v1287 = vmul.f32 %v967, %v1090
    %v1288 = vmul.f32 %v968, %v1094
    %v1289 = vmul.f32 %v969, %v1098
    %v1290 = vmul.f32 %v970, %v1102
    %v1291 = vmul.f32 %v971, %v1106
    %v1292 = vmul.f32 %v972, %v1110
    %v1293 = vmul.f32 %v973, %v1114
    %v1294 = vmul.f32 %v974, %v1118
    %v1295 = vmul.f32 %v975, %v1122
    %v1296 = vmul.f32 %v976, %v1126
    %v1297 = vmul.f32 %v977, %v1130
    %v1298 = vmul.f32 %v978, %v1134
    %v1299 = vmul.f32 %v979, %v1138
    %v1300 = vmul.f32 %v980, %v1142
    %v1301 = vmul.f32 %v981, %v1146
    %v1302 = vmul.f32 %v982, %v1150
    %v1303 = vmul.f32 %v983, %v1154
    %v1304 = vmul.f32 %v984, %v1158
    %v1305 = vmul.f32 %v985, %v1162
    %v1306 = vmul.f32 %v986, %v1166
    %v1307 = vmul.f32 %v987, %v1170
    %v1308 = vmul.f32 %v988, %v1174
    %v1309 = vmul.f32 %v989, %v1178
    %v1310 = vmul.f32 %v990, %v1182
    %v1311 = vmul.f32 %v991, %v1186
    %v1312 = vmul.f32 %v992, %v1190
    %v1313 = vmul.f32 %v993, %v1194
    %v1314 = vmul.f32 %v994, %v1198
    %v1315 = vmul.f32 %v995, %v1202
    %v1316 = vmul.f32 %v996, %v1206
    %v1317 = vmul.f32 %v997, %v1210
    %v1318 = vmul.f32 %v998, %v1214
    %v1319 = vmul.f32 %v999, %v1218
    %v1320 = vmul.f32 %v1000, %v1222
    %v1321 = vmul.f32 %v1001, %v1226
    %v1322 = vmul.f32 %v1002, %v1230
    %v1323 = vmul.f32 %v1003, %v1234
    %v1324 = vmul.f32 %v1004, %v1238
    %v1325 = vmul.f32 %v1005, %v1242
    %v1326 = vmul.f32 %v1006, %v1246
    %v1327 = vmul.f32 %v1007, %v1250
    %v1328 = vmul.f32 %v1008, %v1254
    %v1329 = vmul.f32 %v1009, %v1258
    %v1330 = vmul.f32 %v1010, %v1262
    %v1331 = vmul.f32 %v1011, %v1266
    %v1332 = vld [vmem:[%s0 + $0x17] sm:$0xff]
    %v1333 = vld [vmem:[%s0 + $0x1f] sm:$0xff]
    %v1334 = vld [vmem:[%s0 + $0x27] sm:$0xff]
    %v1335 = vld [vmem:[%s0 + $0x2f] sm:$0xff]
    %v1336 = vld [vmem:[%s0 + $0x37] sm:$0xff]
    %v1337 = vld [vmem:[%s0 + $0x3f] sm:$0xff]
    %v1338 = vld [vmem:[%s0 + $0x47] sm:$0xff]
    %v1339 = vld [vmem:[%s0 + $0x4f] sm:$0xff]
    %v1340 = vld [vmem:[%s0 + $0x57] sm:$0xff]
    %v1341 = vld [vmem:[%s0 + $0x5f] sm:$0xff]
    %v1342 = vld [vmem:[%s0 + $0x67] sm:$0xff]
    %v1343 = vld [vmem:[%s0 + $0x6f] sm:$0xff]
    %v1344 = vld [vmem:[%s0 + $0x77] sm:$0xff]
    %v1345 = vld [vmem:[%s0 + $0x7f] sm:$0xff]
    %v1346 = vld [vmem:[%s0 + $0x87] sm:$0xff]
    %v1347 = vld [vmem:[%s0 + $0x8f] sm:$0xff]
    %v1348 = vld [vmem:[%s0 + $0x97] sm:$0xff]
    %v1349 = vld [vmem:[%s0 + $0x9f] sm:$0xff]
    %v1350 = vld [vmem:[%s0 + $0xa7] sm:$0xff]
    %v1351 = vld [vmem:[%s0 + $0xaf] sm:$0xff]
    %v1352 = vld [vmem:[%s0 + $0xb7] sm:$0xff]
    %v1353 = vld [vmem:[%s0 + $0xbf] sm:$0xff]
    %v1354 = vld [vmem:[%s0 + $0xc7] sm:$0xff]
    %v1355 = vld [vmem:[%s0 + $0xcf] sm:$0xff]
    %v1356 = vld [vmem:[%s0 + $0xd7] sm:$0xff]
    %v1357 = vld [vmem:[%s0 + $0xdf] sm:$0xff]
    %v1358 = vld [vmem:[%s0 + $0xe7] sm:$0xff]
    %v1359 = vld [vmem:[%s0 + $0xef] sm:$0xff]
    %v1360 = vld [vmem:[%s0 + $0xf7] sm:$0xff]
    %v1361 = vld [vmem:[%s0 + $0xff] sm:$0xff]
    %v1362 = vld [vmem:[%s0 + $0x107] sm:$0xff]
    %v1363 = vld [vmem:[%s0 + $0x10f] sm:$0xff]
    %v1364 = vld [vmem:[%s0 + $0x117] sm:$0xff]
    %v1365 = vld [vmem:[%s0 + $0x11f] sm:$0xff]
    %v1366 = vld [vmem:[%s0 + $0x127] sm:$0xff]
    %v1367 = vld [vmem:[%s0 + $0x12f] sm:$0xff]
    %v1368 = vld [vmem:[%s0 + $0x137] sm:$0xff]
    %v1369 = vld [vmem:[%s0 + $0x13f] sm:$0xff]
    %v1370 = vld [vmem:[%s0 + $0x147] sm:$0xff]
    %v1371 = vld [vmem:[%s0 + $0x14f] sm:$0xff]
    %v1372 = vld [vmem:[%s0 + $0x157] sm:$0xff]
    %v1373 = vld [vmem:[%s0 + $0x15f] sm:$0xff]
    %v1374 = vld [vmem:[%s0 + $0x167] sm:$0xff]
    %v1375 = vld [vmem:[%s0 + $0x16f] sm:$0xff]
    %v1376 = vld [vmem:[%s0 + $0x177] sm:$0xff]
    %v1377 = vld [vmem:[%s0 + $0x17f] sm:$0xff]
    %v1378 = vld [vmem:[%s0 + $0x187] sm:$0xff]
    %v1379 = vld [vmem:[%s0 + $0x18f] sm:$0xff]
    %v1380 = vld [vmem:[%s0 + $0x197] sm:$0xff]
    %v1381 = vld [vmem:[%s0 + $0x19f] sm:$0xff]
    %v1382 = vld [vmem:[%s0 + $0x1a7] sm:$0xff]
    %v1383 = vld [vmem:[%s0 + $0x1af] sm:$0xff]
    %v1384 = vld [vmem:[%s0 + $0x1b7] sm:$0xff]
    %v1385 = vld [vmem:[%s0 + $0x1bf] sm:$0xff]
    %v1386 = vld [vmem:[%s0 + $0x1c7] sm:$0xff]
    %v1387 = vld [vmem:[%s0 + $0x1cf] sm:$0xff]
    %v1388 = vld [vmem:[%s0 + $0x1d7] sm:$0xff]
    %v1389 = vld [vmem:[%s0 + $0x1df] sm:$0xff]
    %v1390 = vld [vmem:[%s0 + $0x1e7] sm:$0xff]
    %v1391 = vld [vmem:[%s0 + $0x1ef] sm:$0xff]
    %v1392 = vld [vmem:[%s0 + $0x1f7] sm:$0xff]
    %v1393 = vld [vmem:[%s0 + $0x1ff] sm:$0xff]
    %v1394 = vld [vmem:[%s0 + $0x207] sm:$0xff]
    %v1395 = vld [vmem:[%s0 + $0x20f] sm:$0xff]
    %1396 = vset.pattern.permute.xlu0 3
    %1397 = vperm.xlu0 %1396, %v116
    %v1398 = vpop.permute.xlu0 %1397
    %1400 = vset.pattern.permute.xlu0 3
    %1401 = vperm.xlu0 %1400, %v117
    %v1402 = vpop.permute.xlu0 %1401
    %1404 = vset.pattern.permute.xlu0 3
    %1405 = vperm.xlu0 %1404, %v118
    %v1406 = vpop.permute.xlu0 %1405
    %1408 = vset.pattern.permute.xlu0 3
    %1409 = vperm.xlu0 %1408, %v119
    %v1410 = vpop.permute.xlu0 %1409
    %1412 = vset.pattern.permute.xlu0 3
    %1413 = vperm.xlu0 %1412, %v120
    %v1414 = vpop.permute.xlu0 %1413
    %1416 = vset.pattern.permute.xlu0 3
    %1417 = vperm.xlu0 %1416, %v121
    %v1418 = vpop.permute.xlu0 %1417
    %1420 = vset.pattern.permute.xlu0 3
    %1421 = vperm.xlu0 %1420, %v122
    %v1422 = vpop.permute.xlu0 %1421
    %1424 = vset.pattern.permute.xlu0 3
    %1425 = vperm.xlu0 %1424, %v123
    %v1426 = vpop.permute.xlu0 %1425
    %1428 = vset.pattern.permute.xlu0 3
    %1429 = vperm.xlu0 %1428, %v124
    %v1430 = vpop.permute.xlu0 %1429
    %1432 = vset.pattern.permute.xlu0 3
    %1433 = vperm.xlu0 %1432, %v125
    %v1434 = vpop.permute.xlu0 %1433
    %1436 = vset.pattern.permute.xlu0 3
    %1437 = vperm.xlu0 %1436, %v126
    %v1438 = vpop.permute.xlu0 %1437
    %1440 = vset.pattern.permute.xlu0 3
    %1441 = vperm.xlu0 %1440, %v127
    %v1442 = vpop.permute.xlu0 %1441
    %1444 = vset.pattern.permute.xlu0 3
    %1445 = vperm.xlu0 %1444, %v128
    %v1446 = vpop.permute.xlu0 %1445
    %1448 = vset.pattern.permute.xlu0 3
    %1449 = vperm.xlu0 %1448, %v129
    %v1450 = vpop.permute.xlu0 %1449
    %1452 = vset.pattern.permute.xlu0 3
    %1453 = vperm.xlu0 %1452, %v130
    %v1454 = vpop.permute.xlu0 %1453
    %1456 = vset.pattern.permute.xlu0 3
    %1457 = vperm.xlu0 %1456, %v131
    %v1458 = vpop.permute.xlu0 %1457
    %1460 = vset.pattern.permute.xlu0 3
    %1461 = vperm.xlu0 %1460, %v132
    %v1462 = vpop.permute.xlu0 %1461
    %1464 = vset.pattern.permute.xlu0 3
    %1465 = vperm.xlu0 %1464, %v133
    %v1466 = vpop.permute.xlu0 %1465
    %1468 = vset.pattern.permute.xlu0 3
    %1469 = vperm.xlu0 %1468, %v134
    %v1470 = vpop.permute.xlu0 %1469
    %1472 = vset.pattern.permute.xlu0 3
    %1473 = vperm.xlu0 %1472, %v135
    %v1474 = vpop.permute.xlu0 %1473
    %1476 = vset.pattern.permute.xlu0 3
    %1477 = vperm.xlu0 %1476, %v136
    %v1478 = vpop.permute.xlu0 %1477
    %1480 = vset.pattern.permute.xlu0 3
    %1481 = vperm.xlu0 %1480, %v137
    %v1482 = vpop.permute.xlu0 %1481
    %1484 = vset.pattern.permute.xlu0 3
    %1485 = vperm.xlu0 %1484, %v138
    %v1486 = vpop.permute.xlu0 %1485
    %1488 = vset.pattern.permute.xlu0 3
    %1489 = vperm.xlu0 %1488, %v139
    %v1490 = vpop.permute.xlu0 %1489
    %1492 = vset.pattern.permute.xlu0 3
    %1493 = vperm.xlu0 %1492, %v140
    %v1494 = vpop.permute.xlu0 %1493
    %1496 = vset.pattern.permute.xlu0 3
    %1497 = vperm.xlu0 %1496, %v141
    %v1498 = vpop.permute.xlu0 %1497
    %1500 = vset.pattern.permute.xlu0 3
    %1501 = vperm.xlu0 %1500, %v142
    %v1502 = vpop.permute.xlu0 %1501
    %1504 = vset.pattern.permute.xlu0 3
    %1505 = vperm.xlu0 %1504, %v143
    %v1506 = vpop.permute.xlu0 %1505
    %1508 = vset.pattern.permute.xlu0 3
    %1509 = vperm.xlu0 %1508, %v144
    %v1510 = vpop.permute.xlu0 %1509
    %1512 = vset.pattern.permute.xlu0 3
    %1513 = vperm.xlu0 %1512, %v145
    %v1514 = vpop.permute.xlu0 %1513
    %1516 = vset.pattern.permute.xlu0 3
    %1517 = vperm.xlu0 %1516, %v146
    %v1518 = vpop.permute.xlu0 %1517
    %1520 = vset.pattern.permute.xlu0 3
    %1521 = vperm.xlu0 %1520, %v147
    %v1522 = vpop.permute.xlu0 %1521
    %1524 = vset.pattern.permute.xlu0 3
    %1525 = vperm.xlu0 %1524, %v148
    %v1526 = vpop.permute.xlu0 %1525
    %1528 = vset.pattern.permute.xlu0 3
    %1529 = vperm.xlu0 %1528, %v149
    %v1530 = vpop.permute.xlu0 %1529
    %1532 = vset.pattern.permute.xlu0 3
    %1533 = vperm.xlu0 %1532, %v150
    %v1534 = vpop.permute.xlu0 %1533
    %1536 = vset.pattern.permute.xlu0 3
    %1537 = vperm.xlu0 %1536, %v151
    %v1538 = vpop.permute.xlu0 %1537
    %1540 = vset.pattern.permute.xlu0 3
    %1541 = vperm.xlu0 %1540, %v152
    %v1542 = vpop.permute.xlu0 %1541
    %1544 = vset.pattern.permute.xlu0 3
    %1545 = vperm.xlu0 %1544, %v153
    %v1546 = vpop.permute.xlu0 %1545
    %1548 = vset.pattern.permute.xlu0 3
    %1549 = vperm.xlu0 %1548, %v154
    %v1550 = vpop.permute.xlu0 %1549
    %1552 = vset.pattern.permute.xlu0 3
    %1553 = vperm.xlu0 %1552, %v155
    %v1554 = vpop.permute.xlu0 %1553
    %1556 = vset.pattern.permute.xlu0 3
    %1557 = vperm.xlu0 %1556, %v156
    %v1558 = vpop.permute.xlu0 %1557
    %1560 = vset.pattern.permute.xlu0 3
    %1561 = vperm.xlu0 %1560, %v157
    %v1562 = vpop.permute.xlu0 %1561
    %1564 = vset.pattern.permute.xlu0 3
    %1565 = vperm.xlu0 %1564, %v158
    %v1566 = vpop.permute.xlu0 %1565
    %1568 = vset.pattern.permute.xlu0 3
    %1569 = vperm.xlu0 %1568, %v159
    %v1570 = vpop.permute.xlu0 %1569
    %1572 = vset.pattern.permute.xlu0 3
    %1573 = vperm.xlu0 %1572, %v160
    %v1574 = vpop.permute.xlu0 %1573
    %1576 = vset.pattern.permute.xlu0 3
    %1577 = vperm.xlu0 %1576, %v161
    %v1578 = vpop.permute.xlu0 %1577
    %1580 = vset.pattern.permute.xlu0 3
    %1581 = vperm.xlu0 %1580, %v162
    %v1582 = vpop.permute.xlu0 %1581
    %1584 = vset.pattern.permute.xlu0 3
    %1585 = vperm.xlu0 %1584, %v163
    %v1586 = vpop.permute.xlu0 %1585
    %1588 = vset.pattern.permute.xlu0 3
    %1589 = vperm.xlu0 %1588, %v164
    %v1590 = vpop.permute.xlu0 %1589
    %1592 = vset.pattern.permute.xlu0 3
    %1593 = vperm.xlu0 %1592, %v165
    %v1594 = vpop.permute.xlu0 %1593
    %1596 = vset.pattern.permute.xlu0 3
    %1597 = vperm.xlu0 %1596, %v166
    %v1598 = vpop.permute.xlu0 %1597
    %1600 = vset.pattern.permute.xlu0 3
    %1601 = vperm.xlu0 %1600, %v167
    %v1602 = vpop.permute.xlu0 %1601
    %1604 = vset.pattern.permute.xlu0 3
    %1605 = vperm.xlu0 %1604, %v168
    %v1606 = vpop.permute.xlu0 %1605
    %1608 = vset.pattern.permute.xlu0 3
    %1609 = vperm.xlu0 %1608, %v169
    %v1610 = vpop.permute.xlu0 %1609
    %1612 = vset.pattern.permute.xlu0 3
    %1613 = vperm.xlu0 %1612, %v170
    %v1614 = vpop.permute.xlu0 %1613
    %1616 = vset.pattern.permute.xlu0 3
    %1617 = vperm.xlu0 %1616, %v171
    %v1618 = vpop.permute.xlu0 %1617
    %1620 = vset.pattern.permute.xlu0 3
    %1621 = vperm.xlu0 %1620, %v172
    %v1622 = vpop.permute.xlu0 %1621
    %1624 = vset.pattern.permute.xlu0 3
    %1625 = vperm.xlu0 %1624, %v173
    %v1626 = vpop.permute.xlu0 %1625
    %1628 = vset.pattern.permute.xlu0 3
    %1629 = vperm.xlu0 %1628, %v174
    %v1630 = vpop.permute.xlu0 %1629
    %1632 = vset.pattern.permute.xlu0 3
    %1633 = vperm.xlu0 %1632, %v175
    %v1634 = vpop.permute.xlu0 %1633
    %1636 = vset.pattern.permute.xlu0 3
    %1637 = vperm.xlu0 %1636, %v176
    %v1638 = vpop.permute.xlu0 %1637
    %1640 = vset.pattern.permute.xlu0 3
    %1641 = vperm.xlu0 %1640, %v177
    %v1642 = vpop.permute.xlu0 %1641
    %1644 = vset.pattern.permute.xlu0 3
    %1645 = vperm.xlu0 %1644, %v178
    %v1646 = vpop.permute.xlu0 %1645
    %1648 = vset.pattern.permute.xlu0 3
    %1649 = vperm.xlu0 %1648, %v179
    %v1650 = vpop.permute.xlu0 %1649
    %v1652 = vmul.f32 %v1332, %v1398
    %v1653 = vmul.f32 %v1333, %v1402
    %v1654 = vmul.f32 %v1334, %v1406
    %v1655 = vmul.f32 %v1335, %v1410
    %v1656 = vmul.f32 %v1336, %v1414
    %v1657 = vmul.f32 %v1337, %v1418
    %v1658 = vmul.f32 %v1338, %v1422
    %v1659 = vmul.f32 %v1339, %v1426
    %v1660 = vmul.f32 %v1340, %v1430
    %v1661 = vmul.f32 %v1341, %v1434
    %v1662 = vmul.f32 %v1342, %v1438
    %v1663 = vmul.f32 %v1343, %v1442
    %v1664 = vmul.f32 %v1344, %v1446
    %v1665 = vmul.f32 %v1345, %v1450
    %v1666 = vmul.f32 %v1346, %v1454
    %v1667 = vmul.f32 %v1347, %v1458
    %v1668 = vmul.f32 %v1348, %v1462
    %v1669 = vmul.f32 %v1349, %v1466
    %v1670 = vmul.f32 %v1350, %v1470
    %v1671 = vmul.f32 %v1351, %v1474
    %v1672 = vmul.f32 %v1352, %v1478
    %v1673 = vmul.f32 %v1353, %v1482
    %v1674 = vmul.f32 %v1354, %v1486
    %v1675 = vmul.f32 %v1355, %v1490
    %v1676 = vmul.f32 %v1356, %v1494
    %v1677 = vmul.f32 %v1357, %v1498
    %v1678 = vmul.f32 %v1358, %v1502
    %v1679 = vmul.f32 %v1359, %v1506
    %v1680 = vmul.f32 %v1360, %v1510
    %v1681 = vmul.f32 %v1361, %v1514
    %v1682 = vmul.f32 %v1362, %v1518
    %v1683 = vmul.f32 %v1363, %v1522
    %v1684 = vmul.f32 %v1364, %v1526
    %v1685 = vmul.f32 %v1365, %v1530
    %v1686 = vmul.f32 %v1366, %v1534
    %v1687 = vmul.f32 %v1367, %v1538
    %v1688 = vmul.f32 %v1368, %v1542
    %v1689 = vmul.f32 %v1369, %v1546
    %v1690 = vmul.f32 %v1370, %v1550
    %v1691 = vmul.f32 %v1371, %v1554
    %v1692 = vmul.f32 %v1372, %v1558
    %v1693 = vmul.f32 %v1373, %v1562
    %v1694 = vmul.f32 %v1374, %v1566
    %v1695 = vmul.f32 %v1375, %v1570
    %v1696 = vmul.f32 %v1376, %v1574
    %v1697 = vmul.f32 %v1377, %v1578
    %v1698 = vmul.f32 %v1378, %v1582
    %v1699 = vmul.f32 %v1379, %v1586
    %v1700 = vmul.f32 %v1380, %v1590
    %v1701 = vmul.f32 %v1381, %v1594
    %v1702 = vmul.f32 %v1382, %v1598
    %v1703 = vmul.f32 %v1383, %v1602
    %v1704 = vmul.f32 %v1384, %v1606
    %v1705 = vmul.f32 %v1385, %v1610
    %v1706 = vmul.f32 %v1386, %v1614
    %v1707 = vmul.f32 %v1387, %v1618
    %v1708 = vmul.f32 %v1388, %v1622
    %v1709 = vmul.f32 %v1389, %v1626
    %v1710 = vmul.f32 %v1390, %v1630
    %v1711 = vmul.f32 %v1391, %v1634
    %v1712 = vmul.f32 %v1392, %v1638
    %v1713 = vmul.f32 %v1393, %v1642
    %v1714 = vmul.f32 %v1394, %v1646
    %v1715 = vmul.f32 %v1395, %v1650
    %v1716 = vld [vmem:[%s0 + $0x18] sm:$0xff]
    %v1717 = vld [vmem:[%s0 + $0x20] sm:$0xff]
    %v1718 = vld [vmem:[%s0 + $0x28] sm:$0xff]
    %v1719 = vld [vmem:[%s0 + $0x30] sm:$0xff]
    %v1720 = vld [vmem:[%s0 + $0x38] sm:$0xff]
    %v1721 = vld [vmem:[%s0 + $0x40] sm:$0xff]
    %v1722 = vld [vmem:[%s0 + $0x48] sm:$0xff]
    %v1723 = vld [vmem:[%s0 + $0x50] sm:$0xff]
    %v1724 = vld [vmem:[%s0 + $0x58] sm:$0xff]
    %v1725 = vld [vmem:[%s0 + $0x60] sm:$0xff]
    %v1726 = vld [vmem:[%s0 + $0x68] sm:$0xff]
    %v1727 = vld [vmem:[%s0 + $0x70] sm:$0xff]
    %v1728 = vld [vmem:[%s0 + $0x78] sm:$0xff]
    %v1729 = vld [vmem:[%s0 + $0x80] sm:$0xff]
    %v1730 = vld [vmem:[%s0 + $0x88] sm:$0xff]
    %v1731 = vld [vmem:[%s0 + $0x90] sm:$0xff]
    %v1732 = vld [vmem:[%s0 + $0x98] sm:$0xff]
    %v1733 = vld [vmem:[%s0 + $0xa0] sm:$0xff]
    %v1734 = vld [vmem:[%s0 + $0xa8] sm:$0xff]
    %v1735 = vld [vmem:[%s0 + $0xb0] sm:$0xff]
    %v1736 = vld [vmem:[%s0 + $0xb8] sm:$0xff]
    %v1737 = vld [vmem:[%s0 + $0xc0] sm:$0xff]
    %v1738 = vld [vmem:[%s0 + $0xc8] sm:$0xff]
    %v1739 = vld [vmem:[%s0 + $0xd0] sm:$0xff]
    %v1740 = vld [vmem:[%s0 + $0xd8] sm:$0xff]
    %v1741 = vld [vmem:[%s0 + $0xe0] sm:$0xff]
    %v1742 = vld [vmem:[%s0 + $0xe8] sm:$0xff]
    %v1743 = vld [vmem:[%s0 + $0xf0] sm:$0xff]
    %v1744 = vld [vmem:[%s0 + $0xf8] sm:$0xff]
    %v1745 = vld [vmem:[%s0 + $0x100] sm:$0xff]
    %v1746 = vld [vmem:[%s0 + $0x108] sm:$0xff]
    %v1747 = vld [vmem:[%s0 + $0x110] sm:$0xff]
    %v1748 = vld [vmem:[%s0 + $0x118] sm:$0xff]
    %v1749 = vld [vmem:[%s0 + $0x120] sm:$0xff]
    %v1750 = vld [vmem:[%s0 + $0x128] sm:$0xff]
    %v1751 = vld [vmem:[%s0 + $0x130] sm:$0xff]
    %v1752 = vld [vmem:[%s0 + $0x138] sm:$0xff]
    %v1753 = vld [vmem:[%s0 + $0x140] sm:$0xff]
    %v1754 = vld [vmem:[%s0 + $0x148] sm:$0xff]
    %v1755 = vld [vmem:[%s0 + $0x150] sm:$0xff]
    %v1756 = vld [vmem:[%s0 + $0x158] sm:$0xff]
    %v1757 = vld [vmem:[%s0 + $0x160] sm:$0xff]
    %v1758 = vld [vmem:[%s0 + $0x168] sm:$0xff]
    %v1759 = vld [vmem:[%s0 + $0x170] sm:$0xff]
    %v1760 = vld [vmem:[%s0 + $0x178] sm:$0xff]
    %v1761 = vld [vmem:[%s0 + $0x180] sm:$0xff]
    %v1762 = vld [vmem:[%s0 + $0x188] sm:$0xff]
    %v1763 = vld [vmem:[%s0 + $0x190] sm:$0xff]
    %v1764 = vld [vmem:[%s0 + $0x198] sm:$0xff]
    %v1765 = vld [vmem:[%s0 + $0x1a0] sm:$0xff]
    %v1766 = vld [vmem:[%s0 + $0x1a8] sm:$0xff]
    %v1767 = vld [vmem:[%s0 + $0x1b0] sm:$0xff]
    %v1768 = vld [vmem:[%s0 + $0x1b8] sm:$0xff]
    %v1769 = vld [vmem:[%s0 + $0x1c0] sm:$0xff]
    %v1770 = vld [vmem:[%s0 + $0x1c8] sm:$0xff]
    %v1771 = vld [vmem:[%s0 + $0x1d0] sm:$0xff]
    %v1772 = vld [vmem:[%s0 + $0x1d8] sm:$0xff]
    %v1773 = vld [vmem:[%s0 + $0x1e0] sm:$0xff]
    %v1774 = vld [vmem:[%s0 + $0x1e8] sm:$0xff]
    %v1775 = vld [vmem:[%s0 + $0x1f0] sm:$0xff]
    %v1776 = vld [vmem:[%s0 + $0x1f8] sm:$0xff]
    %v1777 = vld [vmem:[%s0 + $0x200] sm:$0xff]
    %v1778 = vld [vmem:[%s0 + $0x208] sm:$0xff]
    %v1779 = vld [vmem:[%s0 + $0x210] sm:$0xff]
    %v1780 = vld [vmem:[%s0 + $0x19] sm:$0xff]
    %v1781 = vld [vmem:[%s0 + $0x21] sm:$0xff]
    %v1782 = vld [vmem:[%s0 + $0x29] sm:$0xff]
    %v1783 = vld [vmem:[%s0 + $0x31] sm:$0xff]
    %v1784 = vld [vmem:[%s0 + $0x39] sm:$0xff]
    %v1785 = vld [vmem:[%s0 + $0x41] sm:$0xff]
    %v1786 = vld [vmem:[%s0 + $0x49] sm:$0xff]
    %v1787 = vld [vmem:[%s0 + $0x51] sm:$0xff]
    %v1788 = vld [vmem:[%s0 + $0x59] sm:$0xff]
    %v1789 = vld [vmem:[%s0 + $0x61] sm:$0xff]
    %v1790 = vld [vmem:[%s0 + $0x69] sm:$0xff]
    %v1791 = vld [vmem:[%s0 + $0x71] sm:$0xff]
    %v1792 = vld [vmem:[%s0 + $0x79] sm:$0xff]
    %v1793 = vld [vmem:[%s0 + $0x81] sm:$0xff]
    %v1794 = vld [vmem:[%s0 + $0x89] sm:$0xff]
    %v1795 = vld [vmem:[%s0 + $0x91] sm:$0xff]
    %v1796 = vld [vmem:[%s0 + $0x99] sm:$0xff]
    %v1797 = vld [vmem:[%s0 + $0xa1] sm:$0xff]
    %v1798 = vld [vmem:[%s0 + $0xa9] sm:$0xff]
    %v1799 = vld [vmem:[%s0 + $0xb1] sm:$0xff]
    %v1800 = vld [vmem:[%s0 + $0xb9] sm:$0xff]
    %v1801 = vld [vmem:[%s0 + $0xc1] sm:$0xff]
    %v1802 = vld [vmem:[%s0 + $0xc9] sm:$0xff]
    %v1803 = vld [vmem:[%s0 + $0xd1] sm:$0xff]
    %v1804 = vld [vmem:[%s0 + $0xd9] sm:$0xff]
    %v1805 = vld [vmem:[%s0 + $0xe1] sm:$0xff]
    %v1806 = vld [vmem:[%s0 + $0xe9] sm:$0xff]
    %v1807 = vld [vmem:[%s0 + $0xf1] sm:$0xff]
    %v1808 = vld [vmem:[%s0 + $0xf9] sm:$0xff]
    %v1809 = vld [vmem:[%s0 + $0x101] sm:$0xff]
    %v1810 = vld [vmem:[%s0 + $0x109] sm:$0xff]
    %v1811 = vld [vmem:[%s0 + $0x111] sm:$0xff]
    %v1812 = vld [vmem:[%s0 + $0x119] sm:$0xff]
    %v1813 = vld [vmem:[%s0 + $0x121] sm:$0xff]
    %v1814 = vld [vmem:[%s0 + $0x129] sm:$0xff]
    %v1815 = vld [vmem:[%s0 + $0x131] sm:$0xff]
    %v1816 = vld [vmem:[%s0 + $0x139] sm:$0xff]
    %v1817 = vld [vmem:[%s0 + $0x141] sm:$0xff]
    %v1818 = vld [vmem:[%s0 + $0x149] sm:$0xff]
    %v1819 = vld [vmem:[%s0 + $0x151] sm:$0xff]
    %v1820 = vld [vmem:[%s0 + $0x159] sm:$0xff]
    %v1821 = vld [vmem:[%s0 + $0x161] sm:$0xff]
    %v1822 = vld [vmem:[%s0 + $0x169] sm:$0xff]
    %v1823 = vld [vmem:[%s0 + $0x171] sm:$0xff]
    %v1824 = vld [vmem:[%s0 + $0x179] sm:$0xff]
    %v1825 = vld [vmem:[%s0 + $0x181] sm:$0xff]
    %v1826 = vld [vmem:[%s0 + $0x189] sm:$0xff]
    %v1827 = vld [vmem:[%s0 + $0x191] sm:$0xff]
    %v1828 = vld [vmem:[%s0 + $0x199] sm:$0xff]
    %v1829 = vld [vmem:[%s0 + $0x1a1] sm:$0xff]
    %v1830 = vld [vmem:[%s0 + $0x1a9] sm:$0xff]
    %v1831 = vld [vmem:[%s0 + $0x1b1] sm:$0xff]
    %v1832 = vld [vmem:[%s0 + $0x1b9] sm:$0xff]
    %v1833 = vld [vmem:[%s0 + $0x1c1] sm:$0xff]
    %v1834 = vld [vmem:[%s0 + $0x1c9] sm:$0xff]
    %v1835 = vld [vmem:[%s0 + $0x1d1] sm:$0xff]
    %v1836 = vld [vmem:[%s0 + $0x1d9] sm:$0xff]
    %v1837 = vld [vmem:[%s0 + $0x1e1] sm:$0xff]
    %v1838 = vld [vmem:[%s0 + $0x1e9] sm:$0xff]
    %v1839 = vld [vmem:[%s0 + $0x1f1] sm:$0xff]
    %v1840 = vld [vmem:[%s0 + $0x1f9] sm:$0xff]
    %v1841 = vld [vmem:[%s0 + $0x201] sm:$0xff]
    %v1842 = vld [vmem:[%s0 + $0x209] sm:$0xff]
    %v1843 = vld [vmem:[%s0 + $0x211] sm:$0xff]
    %1844 = vset.pattern.permute.xlu0 5
    %1845 = vperm.xlu0 %1844, %v116
    %v1846 = vpop.permute.xlu0 %1845
    %1848 = vset.pattern.permute.xlu0 5
    %1849 = vperm.xlu0 %1848, %v117
    %v1850 = vpop.permute.xlu0 %1849
    %1852 = vset.pattern.permute.xlu0 5
    %1853 = vperm.xlu0 %1852, %v118
    %v1854 = vpop.permute.xlu0 %1853
    %1856 = vset.pattern.permute.xlu0 5
    %1857 = vperm.xlu0 %1856, %v119
    %v1858 = vpop.permute.xlu0 %1857
    %1860 = vset.pattern.permute.xlu0 5
    %1861 = vperm.xlu0 %1860, %v120
    %v1862 = vpop.permute.xlu0 %1861
    %1864 = vset.pattern.permute.xlu0 5
    %1865 = vperm.xlu0 %1864, %v121
    %v1866 = vpop.permute.xlu0 %1865
    %1868 = vset.pattern.permute.xlu0 5
    %1869 = vperm.xlu0 %1868, %v122
    %v1870 = vpop.permute.xlu0 %1869
    %1872 = vset.pattern.permute.xlu0 5
    %1873 = vperm.xlu0 %1872, %v123
    %v1874 = vpop.permute.xlu0 %1873
    %1876 = vset.pattern.permute.xlu0 5
    %1877 = vperm.xlu0 %1876, %v124
    %v1878 = vpop.permute.xlu0 %1877
    %1880 = vset.pattern.permute.xlu0 5
    %1881 = vperm.xlu0 %1880, %v125
    %v1882 = vpop.permute.xlu0 %1881
    %1884 = vset.pattern.permute.xlu0 5
    %1885 = vperm.xlu0 %1884, %v126
    %v1886 = vpop.permute.xlu0 %1885
    %1888 = vset.pattern.permute.xlu0 5
    %1889 = vperm.xlu0 %1888, %v127
    %v1890 = vpop.permute.xlu0 %1889
    %1892 = vset.pattern.permute.xlu0 5
    %1893 = vperm.xlu0 %1892, %v128
    %v1894 = vpop.permute.xlu0 %1893
    %1896 = vset.pattern.permute.xlu0 5
    %1897 = vperm.xlu0 %1896, %v129
    %v1898 = vpop.permute.xlu0 %1897
    %1900 = vset.pattern.permute.xlu0 5
    %1901 = vperm.xlu0 %1900, %v130
    %v1902 = vpop.permute.xlu0 %1901
    %1904 = vset.pattern.permute.xlu0 5
    %1905 = vperm.xlu0 %1904, %v131
    %v1906 = vpop.permute.xlu0 %1905
    %1908 = vset.pattern.permute.xlu0 5
    %1909 = vperm.xlu0 %1908, %v132
    %v1910 = vpop.permute.xlu0 %1909
    %1912 = vset.pattern.permute.xlu0 5
    %1913 = vperm.xlu0 %1912, %v133
    %v1914 = vpop.permute.xlu0 %1913
    %1916 = vset.pattern.permute.xlu0 5
    %1917 = vperm.xlu0 %1916, %v134
    %v1918 = vpop.permute.xlu0 %1917
    %1920 = vset.pattern.permute.xlu0 5
    %1921 = vperm.xlu0 %1920, %v135
    %v1922 = vpop.permute.xlu0 %1921
    %1924 = vset.pattern.permute.xlu0 5
    %1925 = vperm.xlu0 %1924, %v136
    %v1926 = vpop.permute.xlu0 %1925
    %1928 = vset.pattern.permute.xlu0 5
    %1929 = vperm.xlu0 %1928, %v137
    %v1930 = vpop.permute.xlu0 %1929
    %1932 = vset.pattern.permute.xlu0 5
    %1933 = vperm.xlu0 %1932, %v138
    %v1934 = vpop.permute.xlu0 %1933
    %1936 = vset.pattern.permute.xlu0 5
    %1937 = vperm.xlu0 %1936, %v139
    %v1938 = vpop.permute.xlu0 %1937
    %1940 = vset.pattern.permute.xlu0 5
    %1941 = vperm.xlu0 %1940, %v140
    %v1942 = vpop.permute.xlu0 %1941
    %1944 = vset.pattern.permute.xlu0 5
    %1945 = vperm.xlu0 %1944, %v141
    %v1946 = vpop.permute.xlu0 %1945
    %1948 = vset.pattern.permute.xlu0 5
    %1949 = vperm.xlu0 %1948, %v142
    %v1950 = vpop.permute.xlu0 %1949
    %1952 = vset.pattern.permute.xlu0 5
    %1953 = vperm.xlu0 %1952, %v143
    %v1954 = vpop.permute.xlu0 %1953
    %1956 = vset.pattern.permute.xlu0 5
    %1957 = vperm.xlu0 %1956, %v144
    %v1958 = vpop.permute.xlu0 %1957
    %1960 = vset.pattern.permute.xlu0 5
    %1961 = vperm.xlu0 %1960, %v145
    %v1962 = vpop.permute.xlu0 %1961
    %1964 = vset.pattern.permute.xlu0 5
    %1965 = vperm.xlu0 %1964, %v146
    %v1966 = vpop.permute.xlu0 %1965
    %1968 = vset.pattern.permute.xlu0 5
    %1969 = vperm.xlu0 %1968, %v147
    %v1970 = vpop.permute.xlu0 %1969
    %1972 = vset.pattern.permute.xlu0 5
    %1973 = vperm.xlu0 %1972, %v148
    %v1974 = vpop.permute.xlu0 %1973
    %1976 = vset.pattern.permute.xlu0 5
    %1977 = vperm.xlu0 %1976, %v149
    %v1978 = vpop.permute.xlu0 %1977
    %1980 = vset.pattern.permute.xlu0 5
    %1981 = vperm.xlu0 %1980, %v150
    %v1982 = vpop.permute.xlu0 %1981
    %1984 = vset.pattern.permute.xlu0 5
    %1985 = vperm.xlu0 %1984, %v151
    %v1986 = vpop.permute.xlu0 %1985
    %1988 = vset.pattern.permute.xlu0 5
    %1989 = vperm.xlu0 %1988, %v152
    %v1990 = vpop.permute.xlu0 %1989
    %1992 = vset.pattern.permute.xlu0 5
    %1993 = vperm.xlu0 %1992, %v153
    %v1994 = vpop.permute.xlu0 %1993
    %1996 = vset.pattern.permute.xlu0 5
    %1997 = vperm.xlu0 %1996, %v154
    %v1998 = vpop.permute.xlu0 %1997
    %2000 = vset.pattern.permute.xlu0 5
    %2001 = vperm.xlu0 %2000, %v155
    %v2002 = vpop.permute.xlu0 %2001
    %2004 = vset.pattern.permute.xlu0 5
    %2005 = vperm.xlu0 %2004, %v156
    %v2006 = vpop.permute.xlu0 %2005
    %2008 = vset.pattern.permute.xlu0 5
    %2009 = vperm.xlu0 %2008, %v157
    %v2010 = vpop.permute.xlu0 %2009
    %2012 = vset.pattern.permute.xlu0 5
    %2013 = vperm.xlu0 %2012, %v158
    %v2014 = vpop.permute.xlu0 %2013
    %2016 = vset.pattern.permute.xlu0 5
    %2017 = vperm.xlu0 %2016, %v159
    %v2018 = vpop.permute.xlu0 %2017
    %2020 = vset.pattern.permute.xlu0 5
    %2021 = vperm.xlu0 %2020, %v160
    %v2022 = vpop.permute.xlu0 %2021
    %2024 = vset.pattern.permute.xlu0 5
    %2025 = vperm.xlu0 %2024, %v161
    %v2026 = vpop.permute.xlu0 %2025
    %2028 = vset.pattern.permute.xlu0 5
    %2029 = vperm.xlu0 %2028, %v162
    %v2030 = vpop.permute.xlu0 %2029
    %2032 = vset.pattern.permute.xlu0 5
    %2033 = vperm.xlu0 %2032, %v163
    %v2034 = vpop.permute.xlu0 %2033
    %2036 = vset.pattern.permute.xlu0 5
    %2037 = vperm.xlu0 %2036, %v164
    %v2038 = vpop.permute.xlu0 %2037
    %2040 = vset.pattern.permute.xlu0 5
    %2041 = vperm.xlu0 %2040, %v165
    %v2042 = vpop.permute.xlu0 %2041
    %2044 = vset.pattern.permute.xlu0 5
    %2045 = vperm.xlu0 %2044, %v166
    %v2046 = vpop.permute.xlu0 %2045
    %2048 = vset.pattern.permute.xlu0 5
    %2049 = vperm.xlu0 %2048, %v167
    %v2050 = vpop.permute.xlu0 %2049
    %2052 = vset.pattern.permute.xlu0 5
    %2053 = vperm.xlu0 %2052, %v168
    %v2054 = vpop.permute.xlu0 %2053
    %2056 = vset.pattern.permute.xlu0 5
    %2057 = vperm.xlu0 %2056, %v169
    %v2058 = vpop.permute.xlu0 %2057
    %2060 = vset.pattern.permute.xlu0 5
    %2061 = vperm.xlu0 %2060, %v170
    %v2062 = vpop.permute.xlu0 %2061
    %2064 = vset.pattern.permute.xlu0 5
    %2065 = vperm.xlu0 %2064, %v171
    %v2066 = vpop.permute.xlu0 %2065
    %2068 = vset.pattern.permute.xlu0 5
    %2069 = vperm.xlu0 %2068, %v172
    %v2070 = vpop.permute.xlu0 %2069
    %2072 = vset.pattern.permute.xlu0 5
    %2073 = vperm.xlu0 %2072, %v173
    %v2074 = vpop.permute.xlu0 %2073
    %2076 = vset.pattern.permute.xlu0 5
    %2077 = vperm.xlu0 %2076, %v174
    %v2078 = vpop.permute.xlu0 %2077
    %2080 = vset.pattern.permute.xlu0 5
    %2081 = vperm.xlu0 %2080, %v175
    %v2082 = vpop.permute.xlu0 %2081
    %2084 = vset.pattern.permute.xlu0 5
    %2085 = vperm.xlu0 %2084, %v176
    %v2086 = vpop.permute.xlu0 %2085
    %2088 = vset.pattern.permute.xlu0 5
    %2089 = vperm.xlu0 %2088, %v177
    %v2090 = vpop.permute.xlu0 %2089
    %2092 = vset.pattern.permute.xlu0 5
    %2093 = vperm.xlu0 %2092, %v178
    %v2094 = vpop.permute.xlu0 %2093
    %2096 = vset.pattern.permute.xlu0 5
    %2097 = vperm.xlu0 %2096, %v179
    %v2098 = vpop.permute.xlu0 %2097
    %v2100 = vmul.f32 %v1780, %v1846
    %v2101 = vmul.f32 %v1781, %v1850
    %v2102 = vmul.f32 %v1782, %v1854
    %v2103 = vmul.f32 %v1783, %v1858
    %v2104 = vmul.f32 %v1784, %v1862
    %v2105 = vmul.f32 %v1785, %v1866
    %v2106 = vmul.f32 %v1786, %v1870
    %v2107 = vmul.f32 %v1787, %v1874
    %v2108 = vmul.f32 %v1788, %v1878
    %v2109 = vmul.f32 %v1789, %v1882
    %v2110 = vmul.f32 %v1790, %v1886
    %v2111 = vmul.f32 %v1791, %v1890
    %v2112 = vmul.f32 %v1792, %v1894
    %v2113 = vmul.f32 %v1793, %v1898
    %v2114 = vmul.f32 %v1794, %v1902
    %v2115 = vmul.f32 %v1795, %v1906
    %v2116 = vmul.f32 %v1796, %v1910
    %v2117 = vmul.f32 %v1797, %v1914
    %v2118 = vmul.f32 %v1798, %v1918
    %v2119 = vmul.f32 %v1799, %v1922
    %v2120 = vmul.f32 %v1800, %v1926
    %v2121 = vmul.f32 %v1801, %v1930
    %v2122 = vmul.f32 %v1802, %v1934
    %v2123 = vmul.f32 %v1803, %v1938
    %v2124 = vmul.f32 %v1804, %v1942
    %v2125 = vmul.f32 %v1805, %v1946
    %v2126 = vmul.f32 %v1806, %v1950
    %v2127 = vmul.f32 %v1807, %v1954
    %v2128 = vmul.f32 %v1808, %v1958
    %v2129 = vmul.f32 %v1809, %v1962
    %v2130 = vmul.f32 %v1810, %v1966
    %v2131 = vmul.f32 %v1811, %v1970
    %v2132 = vmul.f32 %v1812, %v1974
    %v2133 = vmul.f32 %v1813, %v1978
    %v2134 = vmul.f32 %v1814, %v1982
    %v2135 = vmul.f32 %v1815, %v1986
    %v2136 = vmul.f32 %v1816, %v1990
    %v2137 = vmul.f32 %v1817, %v1994
    %v2138 = vmul.f32 %v1818, %v1998
    %v2139 = vmul.f32 %v1819, %v2002
    %v2140 = vmul.f32 %v1820, %v2006
    %v2141 = vmul.f32 %v1821, %v2010
    %v2142 = vmul.f32 %v1822, %v2014
    %v2143 = vmul.f32 %v1823, %v2018
    %v2144 = vmul.f32 %v1824, %v2022
    %v2145 = vmul.f32 %v1825, %v2026
    %v2146 = vmul.f32 %v1826, %v2030
    %v2147 = vmul.f32 %v1827, %v2034
    %v2148 = vmul.f32 %v1828, %v2038
    %v2149 = vmul.f32 %v1829, %v2042
    %v2150 = vmul.f32 %v1830, %v2046
    %v2151 = vmul.f32 %v1831, %v2050
    %v2152 = vmul.f32 %v1832, %v2054
    %v2153 = vmul.f32 %v1833, %v2058
    %v2154 = vmul.f32 %v1834, %v2062
    %v2155 = vmul.f32 %v1835, %v2066
    %v2156 = vmul.f32 %v1836, %v2070
    %v2157 = vmul.f32 %v1837, %v2074
    %v2158 = vmul.f32 %v1838, %v2078
    %v2159 = vmul.f32 %v1839, %v2082
    %v2160 = vmul.f32 %v1840, %v2086
    %v2161 = vmul.f32 %v1841, %v2090
    %v2162 = vmul.f32 %v1842, %v2094
    %v2163 = vmul.f32 %v1843, %v2098
    %v2164 = vld [vmem:[%s0 + $0x27] sm:$0xff]
    %v2165 = vld [vmem:[%s0 + $0x2f] sm:$0xff]
    %v2166 = vld [vmem:[%s0 + $0x37] sm:$0xff]
    %v2167 = vld [vmem:[%s0 + $0x3f] sm:$0xff]
    %v2168 = vld [vmem:[%s0 + $0x47] sm:$0xff]
    %v2169 = vld [vmem:[%s0 + $0x4f] sm:$0xff]
    %v2170 = vld [vmem:[%s0 + $0x57] sm:$0xff]
    %v2171 = vld [vmem:[%s0 + $0x5f] sm:$0xff]
    %v2172 = vld [vmem:[%s0 + $0x67] sm:$0xff]
    %v2173 = vld [vmem:[%s0 + $0x6f] sm:$0xff]
    %v2174 = vld [vmem:[%s0 + $0x77] sm:$0xff]
    %v2175 = vld [vmem:[%s0 + $0x7f] sm:$0xff]
    %v2176 = vld [vmem:[%s0 + $0x87] sm:$0xff]
    %v2177 = vld [vmem:[%s0 + $0x8f] sm:$0xff]
    %v2178 = vld [vmem:[%s0 + $0x97] sm:$0xff]
    %v2179 = vld [vmem:[%s0 + $0x9f] sm:$0xff]
    %v2180 = vld [vmem:[%s0 + $0xa7] sm:$0xff]
    %v2181 = vld [vmem:[%s0 + $0xaf] sm:$0xff]
    %v2182 = vld [vmem:[%s0 + $0xb7] sm:$0xff]
    %v2183 = vld [vmem:[%s0 + $0xbf] sm:$0xff]
    %v2184 = vld [vmem:[%s0 + $0xc7] sm:$0xff]
    %v2185 = vld [vmem:[%s0 + $0xcf] sm:$0xff]
    %v2186 = vld [vmem:[%s0 + $0xd7] sm:$0xff]
    %v2187 = vld [vmem:[%s0 + $0xdf] sm:$0xff]
    %v2188 = vld [vmem:[%s0 + $0xe7] sm:$0xff]
    %v2189 = vld [vmem:[%s0 + $0xef] sm:$0xff]
    %v2190 = vld [vmem:[%s0 + $0xf7] sm:$0xff]
    %v2191 = vld [vmem:[%s0 + $0xff] sm:$0xff]
    %v2192 = vld [vmem:[%s0 + $0x107] sm:$0xff]
    %v2193 = vld [vmem:[%s0 + $0x10f] sm:$0xff]
    %v2194 = vld [vmem:[%s0 + $0x117] sm:$0xff]
    %v2195 = vld [vmem:[%s0 + $0x11f] sm:$0xff]
    %v2196 = vld [vmem:[%s0 + $0x127] sm:$0xff]
    %v2197 = vld [vmem:[%s0 + $0x12f] sm:$0xff]
    %v2198 = vld [vmem:[%s0 + $0x137] sm:$0xff]
    %v2199 = vld [vmem:[%s0 + $0x13f] sm:$0xff]
    %v2200 = vld [vmem:[%s0 + $0x147] sm:$0xff]
    %v2201 = vld [vmem:[%s0 + $0x14f] sm:$0xff]
    %v2202 = vld [vmem:[%s0 + $0x157] sm:$0xff]
    %v2203 = vld [vmem:[%s0 + $0x15f] sm:$0xff]
    %v2204 = vld [vmem:[%s0 + $0x167] sm:$0xff]
    %v2205 = vld [vmem:[%s0 + $0x16f] sm:$0xff]
    %v2206 = vld [vmem:[%s0 + $0x177] sm:$0xff]
    %v2207 = vld [vmem:[%s0 + $0x17f] sm:$0xff]
    %v2208 = vld [vmem:[%s0 + $0x187] sm:$0xff]
    %v2209 = vld [vmem:[%s0 + $0x18f] sm:$0xff]
    %v2210 = vld [vmem:[%s0 + $0x197] sm:$0xff]
    %v2211 = vld [vmem:[%s0 + $0x19f] sm:$0xff]
    %v2212 = vld [vmem:[%s0 + $0x1a7] sm:$0xff]
    %v2213 = vld [vmem:[%s0 + $0x1af] sm:$0xff]
    %v2214 = vld [vmem:[%s0 + $0x1b7] sm:$0xff]
    %v2215 = vld [vmem:[%s0 + $0x1bf] sm:$0xff]
    %v2216 = vld [vmem:[%s0 + $0x1c7] sm:$0xff]
    %v2217 = vld [vmem:[%s0 + $0x1cf] sm:$0xff]
    %v2218 = vld [vmem:[%s0 + $0x1d7] sm:$0xff]
    %v2219 = vld [vmem:[%s0 + $0x1df] sm:$0xff]
    %v2220 = vld [vmem:[%s0 + $0x1e7] sm:$0xff]
    %v2221 = vld [vmem:[%s0 + $0x1ef] sm:$0xff]
    %v2222 = vld [vmem:[%s0 + $0x1f7] sm:$0xff]
    %v2223 = vld [vmem:[%s0 + $0x1ff] sm:$0xff]
    %v2224 = vld [vmem:[%s0 + $0x207] sm:$0xff]
    %v2225 = vld [vmem:[%s0 + $0x20f] sm:$0xff]
    %v2226 = vld [vmem:[%s0 + $0x217] sm:$0xff]
    %v2227 = vld [vmem:[%s0 + $0x21f] sm:$0xff]
    %2228 = vset.pattern.permute.xlu0 6
    %2229 = vperm.xlu0 %2228, %v116
    %v2230 = vpop.permute.xlu0 %2229
    %2232 = vset.pattern.permute.xlu0 6
    %2233 = vperm.xlu0 %2232, %v117
    %v2234 = vpop.permute.xlu0 %2233
    %2236 = vset.pattern.permute.xlu0 6
    %2237 = vperm.xlu0 %2236, %v118
    %v2238 = vpop.permute.xlu0 %2237
    %2240 = vset.pattern.permute.xlu0 6
    %2241 = vperm.xlu0 %2240, %v119
    %v2242 = vpop.permute.xlu0 %2241
    %2244 = vset.pattern.permute.xlu0 6
    %2245 = vperm.xlu0 %2244, %v120
    %v2246 = vpop.permute.xlu0 %2245
    %2248 = vset.pattern.permute.xlu0 6
    %2249 = vperm.xlu0 %2248, %v121
    %v2250 = vpop.permute.xlu0 %2249
    %2252 = vset.pattern.permute.xlu0 6
    %2253 = vperm.xlu0 %2252, %v122
    %v2254 = vpop.permute.xlu0 %2253
    %2256 = vset.pattern.permute.xlu0 6
    %2257 = vperm.xlu0 %2256, %v123
    %v2258 = vpop.permute.xlu0 %2257
    %2260 = vset.pattern.permute.xlu0 6
    %2261 = vperm.xlu0 %2260, %v124
    %v2262 = vpop.permute.xlu0 %2261
    %2264 = vset.pattern.permute.xlu0 6
    %2265 = vperm.xlu0 %2264, %v125
    %v2266 = vpop.permute.xlu0 %2265
    %2268 = vset.pattern.permute.xlu0 6
    %2269 = vperm.xlu0 %2268, %v126
    %v2270 = vpop.permute.xlu0 %2269
    %2272 = vset.pattern.permute.xlu0 6
    %2273 = vperm.xlu0 %2272, %v127
    %v2274 = vpop.permute.xlu0 %2273
    %2276 = vset.pattern.permute.xlu0 6
    %2277 = vperm.xlu0 %2276, %v128
    %v2278 = vpop.permute.xlu0 %2277
    %2280 = vset.pattern.permute.xlu0 6
    %2281 = vperm.xlu0 %2280, %v129
    %v2282 = vpop.permute.xlu0 %2281
    %2284 = vset.pattern.permute.xlu0 6
    %2285 = vperm.xlu0 %2284, %v130
    %v2286 = vpop.permute.xlu0 %2285
    %2288 = vset.pattern.permute.xlu0 6
    %2289 = vperm.xlu0 %2288, %v131
    %v2290 = vpop.permute.xlu0 %2289
    %2292 = vset.pattern.permute.xlu0 6
    %2293 = vperm.xlu0 %2292, %v132
    %v2294 = vpop.permute.xlu0 %2293
    %2296 = vset.pattern.permute.xlu0 6
    %2297 = vperm.xlu0 %2296, %v133
    %v2298 = vpop.permute.xlu0 %2297
    %2300 = vset.pattern.permute.xlu0 6
    %2301 = vperm.xlu0 %2300, %v134
    %v2302 = vpop.permute.xlu0 %2301
    %2304 = vset.pattern.permute.xlu0 6
    %2305 = vperm.xlu0 %2304, %v135
    %v2306 = vpop.permute.xlu0 %2305
    %2308 = vset.pattern.permute.xlu0 6
    %2309 = vperm.xlu0 %2308, %v136
    %v2310 = vpop.permute.xlu0 %2309
    %2312 = vset.pattern.permute.xlu0 6
    %2313 = vperm.xlu0 %2312, %v137
    %v2314 = vpop.permute.xlu0 %2313
    %2316 = vset.pattern.permute.xlu0 6
    %2317 = vperm.xlu0 %2316, %v138
    %v2318 = vpop.permute.xlu0 %2317
    %2320 = vset.pattern.permute.xlu0 6
    %2321 = vperm.xlu0 %2320, %v139
    %v2322 = vpop.permute.xlu0 %2321
    %2324 = vset.pattern.permute.xlu0 6
    %2325 = vperm.xlu0 %2324, %v140
    %v2326 = vpop.permute.xlu0 %2325
    %2328 = vset.pattern.permute.xlu0 6
    %2329 = vperm.xlu0 %2328, %v141
    %v2330 = vpop.permute.xlu0 %2329
    %2332 = vset.pattern.permute.xlu0 6
    %2333 = vperm.xlu0 %2332, %v142
    %v2334 = vpop.permute.xlu0 %2333
    %2336 = vset.pattern.permute.xlu0 6
    %2337 = vperm.xlu0 %2336, %v143
    %v2338 = vpop.permute.xlu0 %2337
    %2340 = vset.pattern.permute.xlu0 6
    %2341 = vperm.xlu0 %2340, %v144
    %v2342 = vpop.permute.xlu0 %2341
    %2344 = vset.pattern.permute.xlu0 6
    %2345 = vperm.xlu0 %2344, %v145
    %v2346 = vpop.permute.xlu0 %2345
    %2348 = vset.pattern.permute.xlu0 6
    %2349 = vperm.xlu0 %2348, %v146
    %v2350 = vpop.permute.xlu0 %2349
    %2352 = vset.pattern.permute.xlu0 6
    %2353 = vperm.xlu0 %2352, %v147
    %v2354 = vpop.permute.xlu0 %2353
    %2356 = vset.pattern.permute.xlu0 6
    %2357 = vperm.xlu0 %2356, %v148
    %v2358 = vpop.permute.xlu0 %2357
    %2360 = vset.pattern.permute.xlu0 6
    %2361 = vperm.xlu0 %2360, %v149
    %v2362 = vpop.permute.xlu0 %2361
    %2364 = vset.pattern.permute.xlu0 6
    %2365 = vperm.xlu0 %2364, %v150
    %v2366 = vpop.permute.xlu0 %2365
    %2368 = vset.pattern.permute.xlu0 6
    %2369 = vperm.xlu0 %2368, %v151
    %v2370 = vpop.permute.xlu0 %2369
    %2372 = vset.pattern.permute.xlu0 6
    %2373 = vperm.xlu0 %2372, %v152
    %v2374 = vpop.permute.xlu0 %2373
    %2376 = vset.pattern.permute.xlu0 6
    %2377 = vperm.xlu0 %2376, %v153
    %v2378 = vpop.permute.xlu0 %2377
    %2380 = vset.pattern.permute.xlu0 6
    %2381 = vperm.xlu0 %2380, %v154
    %v2382 = vpop.permute.xlu0 %2381
    %2384 = vset.pattern.permute.xlu0 6
    %2385 = vperm.xlu0 %2384, %v155
    %v2386 = vpop.permute.xlu0 %2385
    %2388 = vset.pattern.permute.xlu0 6
    %2389 = vperm.xlu0 %2388, %v156
    %v2390 = vpop.permute.xlu0 %2389
    %2392 = vset.pattern.permute.xlu0 6
    %2393 = vperm.xlu0 %2392, %v157
    %v2394 = vpop.permute.xlu0 %2393
    %2396 = vset.pattern.permute.xlu0 6
    %2397 = vperm.xlu0 %2396, %v158
    %v2398 = vpop.permute.xlu0 %2397
    %2400 = vset.pattern.permute.xlu0 6
    %2401 = vperm.xlu0 %2400, %v159
    %v2402 = vpop.permute.xlu0 %2401
    %2404 = vset.pattern.permute.xlu0 6
    %2405 = vperm.xlu0 %2404, %v160
    %v2406 = vpop.permute.xlu0 %2405
    %2408 = vset.pattern.permute.xlu0 6
    %2409 = vperm.xlu0 %2408, %v161
    %v2410 = vpop.permute.xlu0 %2409
    %2412 = vset.pattern.permute.xlu0 6
    %2413 = vperm.xlu0 %2412, %v162
    %v2414 = vpop.permute.xlu0 %2413
    %2416 = vset.pattern.permute.xlu0 6
    %2417 = vperm.xlu0 %2416, %v163
    %v2418 = vpop.permute.xlu0 %2417
    %2420 = vset.pattern.permute.xlu0 6
    %2421 = vperm.xlu0 %2420, %v164
    %v2422 = vpop.permute.xlu0 %2421
    %2424 = vset.pattern.permute.xlu0 6
    %2425 = vperm.xlu0 %2424, %v165
    %v2426 = vpop.permute.xlu0 %2425
    %2428 = vset.pattern.permute.xlu0 6
    %2429 = vperm.xlu0 %2428, %v166
    %v2430 = vpop.permute.xlu0 %2429
    %2432 = vset.pattern.permute.xlu0 6
    %2433 = vperm.xlu0 %2432, %v167
    %v2434 = vpop.permute.xlu0 %2433
    %2436 = vset.pattern.permute.xlu0 6
    %2437 = vperm.xlu0 %2436, %v168
    %v2438 = vpop.permute.xlu0 %2437
    %2440 = vset.pattern.permute.xlu0 6
    %2441 = vperm.xlu0 %2440, %v169
    %v2442 = vpop.permute.xlu0 %2441
    %2444 = vset.pattern.permute.xlu0 6
    %2445 = vperm.xlu0 %2444, %v170
    %v2446 = vpop.permute.xlu0 %2445
    %2448 = vset.pattern.permute.xlu0 6
    %2449 = vperm.xlu0 %2448, %v171
    %v2450 = vpop.permute.xlu0 %2449
    %2452 = vset.pattern.permute.xlu0 6
    %2453 = vperm.xlu0 %2452, %v172
    %v2454 = vpop.permute.xlu0 %2453
    %2456 = vset.pattern.permute.xlu0 6
    %2457 = vperm.xlu0 %2456, %v173
    %v2458 = vpop.permute.xlu0 %2457
    %2460 = vset.pattern.permute.xlu0 6
    %2461 = vperm.xlu0 %2460, %v174
    %v2462 = vpop.permute.xlu0 %2461
    %2464 = vset.pattern.permute.xlu0 6
    %2465 = vperm.xlu0 %2464, %v175
    %v2466 = vpop.permute.xlu0 %2465
    %2468 = vset.pattern.permute.xlu0 6
    %2469 = vperm.xlu0 %2468, %v176
    %v2470 = vpop.permute.xlu0 %2469
    %2472 = vset.pattern.permute.xlu0 6
    %2473 = vperm.xlu0 %2472, %v177
    %v2474 = vpop.permute.xlu0 %2473
    %2476 = vset.pattern.permute.xlu0 6
    %2477 = vperm.xlu0 %2476, %v178
    %v2478 = vpop.permute.xlu0 %2477
    %2480 = vset.pattern.permute.xlu0 6
    %2481 = vperm.xlu0 %2480, %v179
    %v2482 = vpop.permute.xlu0 %2481
    %v2484 = vmul.f32 %v2164, %v2230
    %v2485 = vmul.f32 %v2165, %v2234
    %v2486 = vmul.f32 %v2166, %v2238
    %v2487 = vmul.f32 %v2167, %v2242
    %v2488 = vmul.f32 %v2168, %v2246
    %v2489 = vmul.f32 %v2169, %v2250
    %v2490 = vmul.f32 %v2170, %v2254
    %v2491 = vmul.f32 %v2171, %v2258
    %v2492 = vmul.f32 %v2172, %v2262
    %v2493 = vmul.f32 %v2173, %v2266
    %v2494 = vmul.f32 %v2174, %v2270
    %v2495 = vmul.f32 %v2175, %v2274
    %v2496 = vmul.f32 %v2176, %v2278
    %v2497 = vmul.f32 %v2177, %v2282
    %v2498 = vmul.f32 %v2178, %v2286
    %v2499 = vmul.f32 %v2179, %v2290
    %v2500 = vmul.f32 %v2180, %v2294
    %v2501 = vmul.f32 %v2181, %v2298
    %v2502 = vmul.f32 %v2182, %v2302
    %v2503 = vmul.f32 %v2183, %v2306
    %v2504 = vmul.f32 %v2184, %v2310
    %v2505 = vmul.f32 %v2185, %v2314
    %v2506 = vmul.f32 %v2186, %v2318
    %v2507 = vmul.f32 %v2187, %v2322
    %v2508 = vmul.f32 %v2188, %v2326
    %v2509 = vmul.f32 %v2189, %v2330
    %v2510 = vmul.f32 %v2190, %v2334
    %v2511 = vmul.f32 %v2191, %v2338
    %v2512 = vmul.f32 %v2192, %v2342
    %v2513 = vmul.f32 %v2193, %v2346
    %v2514 = vmul.f32 %v2194, %v2350
    %v2515 = vmul.f32 %v2195, %v2354
    %v2516 = vmul.f32 %v2196, %v2358
    %v2517 = vmul.f32 %v2197, %v2362
    %v2518 = vmul.f32 %v2198, %v2366
    %v2519 = vmul.f32 %v2199, %v2370
    %v2520 = vmul.f32 %v2200, %v2374
    %v2521 = vmul.f32 %v2201, %v2378
    %v2522 = vmul.f32 %v2202, %v2382
    %v2523 = vmul.f32 %v2203, %v2386
    %v2524 = vmul.f32 %v2204, %v2390
    %v2525 = vmul.f32 %v2205, %v2394
    %v2526 = vmul.f32 %v2206, %v2398
    %v2527 = vmul.f32 %v2207, %v2402
    %v2528 = vmul.f32 %v2208, %v2406
    %v2529 = vmul.f32 %v2209, %v2410
    %v2530 = vmul.f32 %v2210, %v2414
    %v2531 = vmul.f32 %v2211, %v2418
    %v2532 = vmul.f32 %v2212, %v2422
    %v2533 = vmul.f32 %v2213, %v2426
    %v2534 = vmul.f32 %v2214, %v2430
    %v2535 = vmul.f32 %v2215, %v2434
    %v2536 = vmul.f32 %v2216, %v2438
    %v2537 = vmul.f32 %v2217, %v2442
    %v2538 = vmul.f32 %v2218, %v2446
    %v2539 = vmul.f32 %v2219, %v2450
    %v2540 = vmul.f32 %v2220, %v2454
    %v2541 = vmul.f32 %v2221, %v2458
    %v2542 = vmul.f32 %v2222, %v2462
    %v2543 = vmul.f32 %v2223, %v2466
    %v2544 = vmul.f32 %v2224, %v2470
    %v2545 = vmul.f32 %v2225, %v2474
    %v2546 = vmul.f32 %v2226, %v2478
    %v2547 = vmul.f32 %v2227, %v2482
    %v2548 = vld [vmem:[%s0 + $0x28] sm:$0xff]
    %v2549 = vld [vmem:[%s0 + $0x30] sm:$0xff]
    %v2550 = vld [vmem:[%s0 + $0x38] sm:$0xff]
    %v2551 = vld [vmem:[%s0 + $0x40] sm:$0xff]
    %v2552 = vld [vmem:[%s0 + $0x48] sm:$0xff]
    %v2553 = vld [vmem:[%s0 + $0x50] sm:$0xff]
    %v2554 = vld [vmem:[%s0 + $0x58] sm:$0xff]
    %v2555 = vld [vmem:[%s0 + $0x60] sm:$0xff]
    %v2556 = vld [vmem:[%s0 + $0x68] sm:$0xff]
    %v2557 = vld [vmem:[%s0 + $0x70] sm:$0xff]
    %v2558 = vld [vmem:[%s0 + $0x78] sm:$0xff]
    %v2559 = vld [vmem:[%s0 + $0x80] sm:$0xff]
    %v2560 = vld [vmem:[%s0 + $0x88] sm:$0xff]
    %v2561 = vld [vmem:[%s0 + $0x90] sm:$0xff]
    %v2562 = vld [vmem:[%s0 + $0x98] sm:$0xff]
    %v2563 = vld [vmem:[%s0 + $0xa0] sm:$0xff]
    %v2564 = vld [vmem:[%s0 + $0xa8] sm:$0xff]
    %v2565 = vld [vmem:[%s0 + $0xb0] sm:$0xff]
    %v2566 = vld [vmem:[%s0 + $0xb8] sm:$0xff]
    %v2567 = vld [vmem:[%s0 + $0xc0] sm:$0xff]
    %v2568 = vld [vmem:[%s0 + $0xc8] sm:$0xff]
    %v2569 = vld [vmem:[%s0 + $0xd0] sm:$0xff]
    %v2570 = vld [vmem:[%s0 + $0xd8] sm:$0xff]
    %v2571 = vld [vmem:[%s0 + $0xe0] sm:$0xff]
    %v2572 = vld [vmem:[%s0 + $0xe8] sm:$0xff]
    %v2573 = vld [vmem:[%s0 + $0xf0] sm:$0xff]
    %v2574 = vld [vmem:[%s0 + $0xf8] sm:$0xff]
    %v2575 = vld [vmem:[%s0 + $0x100] sm:$0xff]
    %v2576 = vld [vmem:[%s0 + $0x108] sm:$0xff]
    %v2577 = vld [vmem:[%s0 + $0x110] sm:$0xff]
    %v2578 = vld [vmem:[%s0 + $0x118] sm:$0xff]
    %v2579 = vld [vmem:[%s0 + $0x120] sm:$0xff]
    %v2580 = vld [vmem:[%s0 + $0x128] sm:$0xff]
    %v2581 = vld [vmem:[%s0 + $0x130] sm:$0xff]
    %v2582 = vld [vmem:[%s0 + $0x138] sm:$0xff]
    %v2583 = vld [vmem:[%s0 + $0x140] sm:$0xff]
    %v2584 = vld [vmem:[%s0 + $0x148] sm:$0xff]
    %v2585 = vld [vmem:[%s0 + $0x150] sm:$0xff]
    %v2586 = vld [vmem:[%s0 + $0x158] sm:$0xff]
    %v2587 = vld [vmem:[%s0 + $0x160] sm:$0xff]
    %v2588 = vld [vmem:[%s0 + $0x168] sm:$0xff]
    %v2589 = vld [vmem:[%s0 + $0x170] sm:$0xff]
    %v2590 = vld [vmem:[%s0 + $0x178] sm:$0xff]
    %v2591 = vld [vmem:[%s0 + $0x180] sm:$0xff]
    %v2592 = vld [vmem:[%s0 + $0x188] sm:$0xff]
    %v2593 = vld [vmem:[%s0 + $0x190] sm:$0xff]
    %v2594 = vld [vmem:[%s0 + $0x198] sm:$0xff]
    %v2595 = vld [vmem:[%s0 + $0x1a0] sm:$0xff]
    %v2596 = vld [vmem:[%s0 + $0x1a8] sm:$0xff]
    %v2597 = vld [vmem:[%s0 + $0x1b0] sm:$0xff]
    %v2598 = vld [vmem:[%s0 + $0x1b8] sm:$0xff]
    %v2599 = vld [vmem:[%s0 + $0x1c0] sm:$0xff]
    %v2600 = vld [vmem:[%s0 + $0x1c8] sm:$0xff]
    %v2601 = vld [vmem:[%s0 + $0x1d0] sm:$0xff]
    %v2602 = vld [vmem:[%s0 + $0x1d8] sm:$0xff]
    %v2603 = vld [vmem:[%s0 + $0x1e0] sm:$0xff]
    %v2604 = vld [vmem:[%s0 + $0x1e8] sm:$0xff]
    %v2605 = vld [vmem:[%s0 + $0x1f0] sm:$0xff]
    %v2606 = vld [vmem:[%s0 + $0x1f8] sm:$0xff]
    %v2607 = vld [vmem:[%s0 + $0x200] sm:$0xff]
    %v2608 = vld [vmem:[%s0 + $0x208] sm:$0xff]
    %v2609 = vld [vmem:[%s0 + $0x210] sm:$0xff]
    %v2610 = vld [vmem:[%s0 + $0x218] sm:$0xff]
    %v2611 = vld [vmem:[%s0 + $0x220] sm:$0xff]
    %2612 = vset.pattern.permute.xlu0 7
    %2613 = vperm.xlu0 %2612, %v116
    %v2614 = vpop.permute.xlu0 %2613
    %2616 = vset.pattern.permute.xlu0 7
    %2617 = vperm.xlu0 %2616, %v117
    %v2618 = vpop.permute.xlu0 %2617
    %2620 = vset.pattern.permute.xlu0 7
    %2621 = vperm.xlu0 %2620, %v118
    %v2622 = vpop.permute.xlu0 %2621
    %2624 = vset.pattern.permute.xlu0 7
    %2625 = vperm.xlu0 %2624, %v119
    %v2626 = vpop.permute.xlu0 %2625
    %2628 = vset.pattern.permute.xlu0 7
    %2629 = vperm.xlu0 %2628, %v120
    %v2630 = vpop.permute.xlu0 %2629
    %2632 = vset.pattern.permute.xlu0 7
    %2633 = vperm.xlu0 %2632, %v121
    %v2634 = vpop.permute.xlu0 %2633
    %2636 = vset.pattern.permute.xlu0 7
    %2637 = vperm.xlu0 %2636, %v122
    %v2638 = vpop.permute.xlu0 %2637
    %2640 = vset.pattern.permute.xlu0 7
    %2641 = vperm.xlu0 %2640, %v123
    %v2642 = vpop.permute.xlu0 %2641
    %2644 = vset.pattern.permute.xlu0 7
    %2645 = vperm.xlu0 %2644, %v124
    %v2646 = vpop.permute.xlu0 %2645
    %2648 = vset.pattern.permute.xlu0 7
    %2649 = vperm.xlu0 %2648, %v125
    %v2650 = vpop.permute.xlu0 %2649
    %2652 = vset.pattern.permute.xlu0 7
    %2653 = vperm.xlu0 %2652, %v126
    %v2654 = vpop.permute.xlu0 %2653
    %2656 = vset.pattern.permute.xlu0 7
    %2657 = vperm.xlu0 %2656, %v127
    %v2658 = vpop.permute.xlu0 %2657
    %2660 = vset.pattern.permute.xlu0 7
    %2661 = vperm.xlu0 %2660, %v128
    %v2662 = vpop.permute.xlu0 %2661
    %2664 = vset.pattern.permute.xlu0 7
    %2665 = vperm.xlu0 %2664, %v129
    %v2666 = vpop.permute.xlu0 %2665
    %2668 = vset.pattern.permute.xlu0 7
    %2669 = vperm.xlu0 %2668, %v130
    %v2670 = vpop.permute.xlu0 %2669
    %2672 = vset.pattern.permute.xlu0 7
    %2673 = vperm.xlu0 %2672, %v131
    %v2674 = vpop.permute.xlu0 %2673
    %2676 = vset.pattern.permute.xlu0 7
    %2677 = vperm.xlu0 %2676, %v132
    %v2678 = vpop.permute.xlu0 %2677
    %2680 = vset.pattern.permute.xlu0 7
    %2681 = vperm.xlu0 %2680, %v133
    %v2682 = vpop.permute.xlu0 %2681
    %2684 = vset.pattern.permute.xlu0 7
    %2685 = vperm.xlu0 %2684, %v134
    %v2686 = vpop.permute.xlu0 %2685
    %2688 = vset.pattern.permute.xlu0 7
    %2689 = vperm.xlu0 %2688, %v135
    %v2690 = vpop.permute.xlu0 %2689
    %2692 = vset.pattern.permute.xlu0 7
    %2693 = vperm.xlu0 %2692, %v136
    %v2694 = vpop.permute.xlu0 %2693
    %2696 = vset.pattern.permute.xlu0 7
    %2697 = vperm.xlu0 %2696, %v137
    %v2698 = vpop.permute.xlu0 %2697
    %2700 = vset.pattern.permute.xlu0 7
    %2701 = vperm.xlu0 %2700, %v138
    %v2702 = vpop.permute.xlu0 %2701
    %2704 = vset.pattern.permute.xlu0 7
    %2705 = vperm.xlu0 %2704, %v139
    %v2706 = vpop.permute.xlu0 %2705
    %2708 = vset.pattern.permute.xlu0 7
    %2709 = vperm.xlu0 %2708, %v140
    %v2710 = vpop.permute.xlu0 %2709
    %2712 = vset.pattern.permute.xlu0 7
    %2713 = vperm.xlu0 %2712, %v141
    %v2714 = vpop.permute.xlu0 %2713
    %2716 = vset.pattern.permute.xlu0 7
    %2717 = vperm.xlu0 %2716, %v142
    %v2718 = vpop.permute.xlu0 %2717
    %2720 = vset.pattern.permute.xlu0 7
    %2721 = vperm.xlu0 %2720, %v143
    %v2722 = vpop.permute.xlu0 %2721
    %2724 = vset.pattern.permute.xlu0 7
    %2725 = vperm.xlu0 %2724, %v144
    %v2726 = vpop.permute.xlu0 %2725
    %2728 = vset.pattern.permute.xlu0 7
    %2729 = vperm.xlu0 %2728, %v145
    %v2730 = vpop.permute.xlu0 %2729
    %2732 = vset.pattern.permute.xlu0 7
    %2733 = vperm.xlu0 %2732, %v146
    %v2734 = vpop.permute.xlu0 %2733
    %2736 = vset.pattern.permute.xlu0 7
    %2737 = vperm.xlu0 %2736, %v147
    %v2738 = vpop.permute.xlu0 %2737
    %2740 = vset.pattern.permute.xlu0 7
    %2741 = vperm.xlu0 %2740, %v148
    %v2742 = vpop.permute.xlu0 %2741
    %2744 = vset.pattern.permute.xlu0 7
    %2745 = vperm.xlu0 %2744, %v149
    %v2746 = vpop.permute.xlu0 %2745
    %2748 = vset.pattern.permute.xlu0 7
    %2749 = vperm.xlu0 %2748, %v150
    %v2750 = vpop.permute.xlu0 %2749
    %2752 = vset.pattern.permute.xlu0 7
    %2753 = vperm.xlu0 %2752, %v151
    %v2754 = vpop.permute.xlu0 %2753
    %2756 = vset.pattern.permute.xlu0 7
    %2757 = vperm.xlu0 %2756, %v152
    %v2758 = vpop.permute.xlu0 %2757
    %2760 = vset.pattern.permute.xlu0 7
    %2761 = vperm.xlu0 %2760, %v153
    %v2762 = vpop.permute.xlu0 %2761
    %2764 = vset.pattern.permute.xlu0 7
    %2765 = vperm.xlu0 %2764, %v154
    %v2766 = vpop.permute.xlu0 %2765
    %2768 = vset.pattern.permute.xlu0 7
    %2769 = vperm.xlu0 %2768, %v155
    %v2770 = vpop.permute.xlu0 %2769
    %2772 = vset.pattern.permute.xlu0 7
    %2773 = vperm.xlu0 %2772, %v156
    %v2774 = vpop.permute.xlu0 %2773
    %2776 = vset.pattern.permute.xlu0 7
    %2777 = vperm.xlu0 %2776, %v157
    %v2778 = vpop.permute.xlu0 %2777
    %2780 = vset.pattern.permute.xlu0 7
    %2781 = vperm.xlu0 %2780, %v158
    %v2782 = vpop.permute.xlu0 %2781
    %2784 = vset.pattern.permute.xlu0 7
    %2785 = vperm.xlu0 %2784, %v159
    %v2786 = vpop.permute.xlu0 %2785
    %2788 = vset.pattern.permute.xlu0 7
    %2789 = vperm.xlu0 %2788, %v160
    %v2790 = vpop.permute.xlu0 %2789
    %2792 = vset.pattern.permute.xlu0 7
    %2793 = vperm.xlu0 %2792, %v161
    %v2794 = vpop.permute.xlu0 %2793
    %2796 = vset.pattern.permute.xlu0 7
    %2797 = vperm.xlu0 %2796, %v162
    %v2798 = vpop.permute.xlu0 %2797
    %2800 = vset.pattern.permute.xlu0 7
    %2801 = vperm.xlu0 %2800, %v163
    %v2802 = vpop.permute.xlu0 %2801
    %2804 = vset.pattern.permute.xlu0 7
    %2805 = vperm.xlu0 %2804, %v164
    %v2806 = vpop.permute.xlu0 %2805
    %2808 = vset.pattern.permute.xlu0 7
    %2809 = vperm.xlu0 %2808, %v165
    %v2810 = vpop.permute.xlu0 %2809
    %2812 = vset.pattern.permute.xlu0 7
    %2813 = vperm.xlu0 %2812, %v166
    %v2814 = vpop.permute.xlu0 %2813
    %2816 = vset.pattern.permute.xlu0 7
    %2817 = vperm.xlu0 %2816, %v167
    %v2818 = vpop.permute.xlu0 %2817
    %2820 = vset.pattern.permute.xlu0 7
    %2821 = vperm.xlu0 %2820, %v168
    %v2822 = vpop.permute.xlu0 %2821
    %2824 = vset.pattern.permute.xlu0 7
    %2825 = vperm.xlu0 %2824, %v169
    %v2826 = vpop.permute.xlu0 %2825
    %2828 = vset.pattern.permute.xlu0 7
    %2829 = vperm.xlu0 %2828, %v170
    %v2830 = vpop.permute.xlu0 %2829
    %2832 = vset.pattern.permute.xlu0 7
    %2833 = vperm.xlu0 %2832, %v171
    %v2834 = vpop.permute.xlu0 %2833
    %2836 = vset.pattern.permute.xlu0 7
    %2837 = vperm.xlu0 %2836, %v172
    %v2838 = vpop.permute.xlu0 %2837
    %2840 = vset.pattern.permute.xlu0 7
    %2841 = vperm.xlu0 %2840, %v173
    %v2842 = vpop.permute.xlu0 %2841
    %2844 = vset.pattern.permute.xlu0 7
    %2845 = vperm.xlu0 %2844, %v174
    %v2846 = vpop.permute.xlu0 %2845
    %2848 = vset.pattern.permute.xlu0 7
    %2849 = vperm.xlu0 %2848, %v175
    %v2850 = vpop.permute.xlu0 %2849
    %2852 = vset.pattern.permute.xlu0 7
    %2853 = vperm.xlu0 %2852, %v176
    %v2854 = vpop.permute.xlu0 %2853
    %2856 = vset.pattern.permute.xlu0 7
    %2857 = vperm.xlu0 %2856, %v177
    %v2858 = vpop.permute.xlu0 %2857
    %2860 = vset.pattern.permute.xlu0 7
    %2861 = vperm.xlu0 %2860, %v178
    %v2862 = vpop.permute.xlu0 %2861
    %2864 = vset.pattern.permute.xlu0 7
    %2865 = vperm.xlu0 %2864, %v179
    %v2866 = vpop.permute.xlu0 %2865
    %v2868 = vmul.f32 %v2548, %v2614
    %v2869 = vmul.f32 %v2549, %v2618
    %v2870 = vmul.f32 %v2550, %v2622
    %v2871 = vmul.f32 %v2551, %v2626
    %v2872 = vmul.f32 %v2552, %v2630
    %v2873 = vmul.f32 %v2553, %v2634
    %v2874 = vmul.f32 %v2554, %v2638
    %v2875 = vmul.f32 %v2555, %v2642
    %v2876 = vmul.f32 %v2556, %v2646
    %v2877 = vmul.f32 %v2557, %v2650
    %v2878 = vmul.f32 %v2558, %v2654
    %v2879 = vmul.f32 %v2559, %v2658
    %v2880 = vmul.f32 %v2560, %v2662
    %v2881 = vmul.f32 %v2561, %v2666
    %v2882 = vmul.f32 %v2562, %v2670
    %v2883 = vmul.f32 %v2563, %v2674
    %v2884 = vmul.f32 %v2564, %v2678
    %v2885 = vmul.f32 %v2565, %v2682
    %v2886 = vmul.f32 %v2566, %v2686
    %v2887 = vmul.f32 %v2567, %v2690
    %v2888 = vmul.f32 %v2568, %v2694
    %v2889 = vmul.f32 %v2569, %v2698
    %v2890 = vmul.f32 %v2570, %v2702
    %v2891 = vmul.f32 %v2571, %v2706
    %v2892 = vmul.f32 %v2572, %v2710
    %v2893 = vmul.f32 %v2573, %v2714
    %v2894 = vmul.f32 %v2574, %v2718
    %v2895 = vmul.f32 %v2575, %v2722
    %v2896 = vmul.f32 %v2576, %v2726
    %v2897 = vmul.f32 %v2577, %v2730
    %v2898 = vmul.f32 %v2578, %v2734
    %v2899 = vmul.f32 %v2579, %v2738
    %v2900 = vmul.f32 %v2580, %v2742
    %v2901 = vmul.f32 %v2581, %v2746
    %v2902 = vmul.f32 %v2582, %v2750
    %v2903 = vmul.f32 %v2583, %v2754
    %v2904 = vmul.f32 %v2584, %v2758
    %v2905 = vmul.f32 %v2585, %v2762
    %v2906 = vmul.f32 %v2586, %v2766
    %v2907 = vmul.f32 %v2587, %v2770
    %v2908 = vmul.f32 %v2588, %v2774
    %v2909 = vmul.f32 %v2589, %v2778
    %v2910 = vmul.f32 %v2590, %v2782
    %v2911 = vmul.f32 %v2591, %v2786
    %v2912 = vmul.f32 %v2592, %v2790
    %v2913 = vmul.f32 %v2593, %v2794
    %v2914 = vmul.f32 %v2594, %v2798
    %v2915 = vmul.f32 %v2595, %v2802
    %v2916 = vmul.f32 %v2596, %v2806
    %v2917 = vmul.f32 %v2597, %v2810
    %v2918 = vmul.f32 %v2598, %v2814
    %v2919 = vmul.f32 %v2599, %v2818
    %v2920 = vmul.f32 %v2600, %v2822
    %v2921 = vmul.f32 %v2601, %v2826
    %v2922 = vmul.f32 %v2602, %v2830
    %v2923 = vmul.f32 %v2603, %v2834
    %v2924 = vmul.f32 %v2604, %v2838
    %v2925 = vmul.f32 %v2605, %v2842
    %v2926 = vmul.f32 %v2606, %v2846
    %v2927 = vmul.f32 %v2607, %v2850
    %v2928 = vmul.f32 %v2608, %v2854
    %v2929 = vmul.f32 %v2609, %v2858
    %v2930 = vmul.f32 %v2610, %v2862
    %v2931 = vmul.f32 %v2611, %v2866
    %v2932 = vld [vmem:[%s0 + $0x29] sm:$0xff]
    %v2933 = vld [vmem:[%s0 + $0x31] sm:$0xff]
    %v2934 = vld [vmem:[%s0 + $0x39] sm:$0xff]
    %v2935 = vld [vmem:[%s0 + $0x41] sm:$0xff]
    %v2936 = vld [vmem:[%s0 + $0x49] sm:$0xff]
    %v2937 = vld [vmem:[%s0 + $0x51] sm:$0xff]
    %v2938 = vld [vmem:[%s0 + $0x59] sm:$0xff]
    %v2939 = vld [vmem:[%s0 + $0x61] sm:$0xff]
    %v2940 = vld [vmem:[%s0 + $0x69] sm:$0xff]
    %v2941 = vld [vmem:[%s0 + $0x71] sm:$0xff]
    %v2942 = vld [vmem:[%s0 + $0x79] sm:$0xff]
    %v2943 = vld [vmem:[%s0 + $0x81] sm:$0xff]
    %v2944 = vld [vmem:[%s0 + $0x89] sm:$0xff]
    %v2945 = vld [vmem:[%s0 + $0x91] sm:$0xff]
    %v2946 = vld [vmem:[%s0 + $0x99] sm:$0xff]
    %v2947 = vld [vmem:[%s0 + $0xa1] sm:$0xff]
    %v2948 = vld [vmem:[%s0 + $0xa9] sm:$0xff]
    %v2949 = vld [vmem:[%s0 + $0xb1] sm:$0xff]
    %v2950 = vld [vmem:[%s0 + $0xb9] sm:$0xff]
    %v2951 = vld [vmem:[%s0 + $0xc1] sm:$0xff]
    %v2952 = vld [vmem:[%s0 + $0xc9] sm:$0xff]
    %v2953 = vld [vmem:[%s0 + $0xd1] sm:$0xff]
    %v2954 = vld [vmem:[%s0 + $0xd9] sm:$0xff]
    %v2955 = vld [vmem:[%s0 + $0xe1] sm:$0xff]
    %v2956 = vld [vmem:[%s0 + $0xe9] sm:$0xff]
    %v2957 = vld [vmem:[%s0 + $0xf1] sm:$0xff]
    %v2958 = vld [vmem:[%s0 + $0xf9] sm:$0xff]
    %v2959 = vld [vmem:[%s0 + $0x101] sm:$0xff]
    %v2960 = vld [vmem:[%s0 + $0x109] sm:$0xff]
    %v2961 = vld [vmem:[%s0 + $0x111] sm:$0xff]
    %v2962 = vld [vmem:[%s0 + $0x119] sm:$0xff]
    %v2963 = vld [vmem:[%s0 + $0x121] sm:$0xff]
    %v2964 = vld [vmem:[%s0 + $0x129] sm:$0xff]
    %v2965 = vld [vmem:[%s0 + $0x131] sm:$0xff]
    %v2966 = vld [vmem:[%s0 + $0x139] sm:$0xff]
    %v2967 = vld [vmem:[%s0 + $0x141] sm:$0xff]
    %v2968 = vld [vmem:[%s0 + $0x149] sm:$0xff]
    %v2969 = vld [vmem:[%s0 + $0x151] sm:$0xff]
    %v2970 = vld [vmem:[%s0 + $0x159] sm:$0xff]
    %v2971 = vld [vmem:[%s0 + $0x161] sm:$0xff]
    %v2972 = vld [vmem:[%s0 + $0x169] sm:$0xff]
    %v2973 = vld [vmem:[%s0 + $0x171] sm:$0xff]
    %v2974 = vld [vmem:[%s0 + $0x179] sm:$0xff]
    %v2975 = vld [vmem:[%s0 + $0x181] sm:$0xff]
    %v2976 = vld [vmem:[%s0 + $0x189] sm:$0xff]
    %v2977 = vld [vmem:[%s0 + $0x191] sm:$0xff]
    %v2978 = vld [vmem:[%s0 + $0x199] sm:$0xff]
    %v2979 = vld [vmem:[%s0 + $0x1a1] sm:$0xff]
    %v2980 = vld [vmem:[%s0 + $0x1a9] sm:$0xff]
    %v2981 = vld [vmem:[%s0 + $0x1b1] sm:$0xff]
    %v2982 = vld [vmem:[%s0 + $0x1b9] sm:$0xff]
    %v2983 = vld [vmem:[%s0 + $0x1c1] sm:$0xff]
    %v2984 = vld [vmem:[%s0 + $0x1c9] sm:$0xff]
    %v2985 = vld [vmem:[%s0 + $0x1d1] sm:$0xff]
    %v2986 = vld [vmem:[%s0 + $0x1d9] sm:$0xff]
    %v2987 = vld [vmem:[%s0 + $0x1e1] sm:$0xff]
    %v2988 = vld [vmem:[%s0 + $0x1e9] sm:$0xff]
    %v2989 = vld [vmem:[%s0 + $0x1f1] sm:$0xff]
    %v2990 = vld [vmem:[%s0 + $0x1f9] sm:$0xff]
    %v2991 = vld [vmem:[%s0 + $0x201] sm:$0xff]
    %v2992 = vld [vmem:[%s0 + $0x209] sm:$0xff]
    %v2993 = vld [vmem:[%s0 + $0x211] sm:$0xff]
    %v2994 = vld [vmem:[%s0 + $0x219] sm:$0xff]
    %v2995 = vld [vmem:[%s0 + $0x221] sm:$0xff]
    %2996 = vset.pattern.permute.xlu0 8
    %2997 = vperm.xlu0 %2996, %v116
    %v2998 = vpop.permute.xlu0 %2997
    %3000 = vset.pattern.permute.xlu0 8
    %3001 = vperm.xlu0 %3000, %v117
    %v3002 = vpop.permute.xlu0 %3001
    %3004 = vset.pattern.permute.xlu0 8
    %3005 = vperm.xlu0 %3004, %v118
    %v3006 = vpop.permute.xlu0 %3005
    %3008 = vset.pattern.permute.xlu0 8
    %3009 = vperm.xlu0 %3008, %v119
    %v3010 = vpop.permute.xlu0 %3009
    %3012 = vset.pattern.permute.xlu0 8
    %3013 = vperm.xlu0 %3012, %v120
    %v3014 = vpop.permute.xlu0 %3013
    %3016 = vset.pattern.permute.xlu0 8
    %3017 = vperm.xlu0 %3016, %v121
    %v3018 = vpop.permute.xlu0 %3017
    %3020 = vset.pattern.permute.xlu0 8
    %3021 = vperm.xlu0 %3020, %v122
    %v3022 = vpop.permute.xlu0 %3021
    %3024 = vset.pattern.permute.xlu0 8
    %3025 = vperm.xlu0 %3024, %v123
    %v3026 = vpop.permute.xlu0 %3025
    %3028 = vset.pattern.permute.xlu0 8
    %3029 = vperm.xlu0 %3028, %v124
    %v3030 = vpop.permute.xlu0 %3029
    %3032 = vset.pattern.permute.xlu0 8
    %3033 = vperm.xlu0 %3032, %v125
    %v3034 = vpop.permute.xlu0 %3033
    %3036 = vset.pattern.permute.xlu0 8
    %3037 = vperm.xlu0 %3036, %v126
    %v3038 = vpop.permute.xlu0 %3037
    %3040 = vset.pattern.permute.xlu0 8
    %3041 = vperm.xlu0 %3040, %v127
    %v3042 = vpop.permute.xlu0 %3041
    %3044 = vset.pattern.permute.xlu0 8
    %3045 = vperm.xlu0 %3044, %v128
    %v3046 = vpop.permute.xlu0 %3045
    %3048 = vset.pattern.permute.xlu0 8
    %3049 = vperm.xlu0 %3048, %v129
    %v3050 = vpop.permute.xlu0 %3049
    %3052 = vset.pattern.permute.xlu0 8
    %3053 = vperm.xlu0 %3052, %v130
    %v3054 = vpop.permute.xlu0 %3053
    %3056 = vset.pattern.permute.xlu0 8
    %3057 = vperm.xlu0 %3056, %v131
    %v3058 = vpop.permute.xlu0 %3057
    %3060 = vset.pattern.permute.xlu0 8
    %3061 = vperm.xlu0 %3060, %v132
    %v3062 = vpop.permute.xlu0 %3061
    %3064 = vset.pattern.permute.xlu0 8
    %3065 = vperm.xlu0 %3064, %v133
    %v3066 = vpop.permute.xlu0 %3065
    %3068 = vset.pattern.permute.xlu0 8
    %3069 = vperm.xlu0 %3068, %v134
    %v3070 = vpop.permute.xlu0 %3069
    %3072 = vset.pattern.permute.xlu0 8
    %3073 = vperm.xlu0 %3072, %v135
    %v3074 = vpop.permute.xlu0 %3073
    %3076 = vset.pattern.permute.xlu0 8
    %3077 = vperm.xlu0 %3076, %v136
    %v3078 = vpop.permute.xlu0 %3077
    %3080 = vset.pattern.permute.xlu0 8
    %3081 = vperm.xlu0 %3080, %v137
    %v3082 = vpop.permute.xlu0 %3081
    %3084 = vset.pattern.permute.xlu0 8
    %3085 = vperm.xlu0 %3084, %v138
    %v3086 = vpop.permute.xlu0 %3085
    %3088 = vset.pattern.permute.xlu0 8
    %3089 = vperm.xlu0 %3088, %v139
    %v3090 = vpop.permute.xlu0 %3089
    %3092 = vset.pattern.permute.xlu0 8
    %3093 = vperm.xlu0 %3092, %v140
    %v3094 = vpop.permute.xlu0 %3093
    %3096 = vset.pattern.permute.xlu0 8
    %3097 = vperm.xlu0 %3096, %v141
    %v3098 = vpop.permute.xlu0 %3097
    %3100 = vset.pattern.permute.xlu0 8
    %3101 = vperm.xlu0 %3100, %v142
    %v3102 = vpop.permute.xlu0 %3101
    %3104 = vset.pattern.permute.xlu0 8
    %3105 = vperm.xlu0 %3104, %v143
    %v3106 = vpop.permute.xlu0 %3105
    %3108 = vset.pattern.permute.xlu0 8
    %3109 = vperm.xlu0 %3108, %v144
    %v3110 = vpop.permute.xlu0 %3109
    %3112 = vset.pattern.permute.xlu0 8
    %3113 = vperm.xlu0 %3112, %v145
    %v3114 = vpop.permute.xlu0 %3113
    %3116 = vset.pattern.permute.xlu0 8
    %3117 = vperm.xlu0 %3116, %v146
    %v3118 = vpop.permute.xlu0 %3117
    %3120 = vset.pattern.permute.xlu0 8
    %3121 = vperm.xlu0 %3120, %v147
    %v3122 = vpop.permute.xlu0 %3121
    %3124 = vset.pattern.permute.xlu0 8
    %3125 = vperm.xlu0 %3124, %v148
    %v3126 = vpop.permute.xlu0 %3125
    %3128 = vset.pattern.permute.xlu0 8
    %3129 = vperm.xlu0 %3128, %v149
    %v3130 = vpop.permute.xlu0 %3129
    %3132 = vset.pattern.permute.xlu0 8
    %3133 = vperm.xlu0 %3132, %v150
    %v3134 = vpop.permute.xlu0 %3133
    %3136 = vset.pattern.permute.xlu0 8
    %3137 = vperm.xlu0 %3136, %v151
    %v3138 = vpop.permute.xlu0 %3137
    %3140 = vset.pattern.permute.xlu0 8
    %3141 = vperm.xlu0 %3140, %v152
    %v3142 = vpop.permute.xlu0 %3141
    %3144 = vset.pattern.permute.xlu0 8
    %3145 = vperm.xlu0 %3144, %v153
    %v3146 = vpop.permute.xlu0 %3145
    %3148 = vset.pattern.permute.xlu0 8
    %3149 = vperm.xlu0 %3148, %v154
    %v3150 = vpop.permute.xlu0 %3149
    %3152 = vset.pattern.permute.xlu0 8
    %3153 = vperm.xlu0 %3152, %v155
    %v3154 = vpop.permute.xlu0 %3153
    %3156 = vset.pattern.permute.xlu0 8
    %3157 = vperm.xlu0 %3156, %v156
    %v3158 = vpop.permute.xlu0 %3157
    %3160 = vset.pattern.permute.xlu0 8
    %3161 = vperm.xlu0 %3160, %v157
    %v3162 = vpop.permute.xlu0 %3161
    %3164 = vset.pattern.permute.xlu0 8
    %3165 = vperm.xlu0 %3164, %v158
    %v3166 = vpop.permute.xlu0 %3165
    %3168 = vset.pattern.permute.xlu0 8
    %3169 = vperm.xlu0 %3168, %v159
    %v3170 = vpop.permute.xlu0 %3169
    %3172 = vset.pattern.permute.xlu0 8
    %3173 = vperm.xlu0 %3172, %v160
    %v3174 = vpop.permute.xlu0 %3173
    %3176 = vset.pattern.permute.xlu0 8
    %3177 = vperm.xlu0 %3176, %v161
    %v3178 = vpop.permute.xlu0 %3177
    %3180 = vset.pattern.permute.xlu0 8
    %3181 = vperm.xlu0 %3180, %v162
    %v3182 = vpop.permute.xlu0 %3181
    %3184 = vset.pattern.permute.xlu0 8
    %3185 = vperm.xlu0 %3184, %v163
    %v3186 = vpop.permute.xlu0 %3185
    %3188 = vset.pattern.permute.xlu0 8
    %3189 = vperm.xlu0 %3188, %v164
    %v3190 = vpop.permute.xlu0 %3189
    %3192 = vset.pattern.permute.xlu0 8
    %3193 = vperm.xlu0 %3192, %v165
    %v3194 = vpop.permute.xlu0 %3193
    %3196 = vset.pattern.permute.xlu0 8
    %3197 = vperm.xlu0 %3196, %v166
    %v3198 = vpop.permute.xlu0 %3197
    %3200 = vset.pattern.permute.xlu0 8
    %3201 = vperm.xlu0 %3200, %v167
    %v3202 = vpop.permute.xlu0 %3201
    %3204 = vset.pattern.permute.xlu0 8
    %3205 = vperm.xlu0 %3204, %v168
    %v3206 = vpop.permute.xlu0 %3205
    %3208 = vset.pattern.permute.xlu0 8
    %3209 = vperm.xlu0 %3208, %v169
    %v3210 = vpop.permute.xlu0 %3209
    %3212 = vset.pattern.permute.xlu0 8
    %3213 = vperm.xlu0 %3212, %v170
    %v3214 = vpop.permute.xlu0 %3213
    %3216 = vset.pattern.permute.xlu0 8
    %3217 = vperm.xlu0 %3216, %v171
    %v3218 = vpop.permute.xlu0 %3217
    %3220 = vset.pattern.permute.xlu0 8
    %3221 = vperm.xlu0 %3220, %v172
    %v3222 = vpop.permute.xlu0 %3221
    %3224 = vset.pattern.permute.xlu0 8
    %3225 = vperm.xlu0 %3224, %v173
    %v3226 = vpop.permute.xlu0 %3225
    %3228 = vset.pattern.permute.xlu0 8
    %3229 = vperm.xlu0 %3228, %v174
    %v3230 = vpop.permute.xlu0 %3229
    %3232 = vset.pattern.permute.xlu0 8
    %3233 = vperm.xlu0 %3232, %v175
    %v3234 = vpop.permute.xlu0 %3233
    %3236 = vset.pattern.permute.xlu0 8
    %3237 = vperm.xlu0 %3236, %v176
    %v3238 = vpop.permute.xlu0 %3237
    %3240 = vset.pattern.permute.xlu0 8
    %3241 = vperm.xlu0 %3240, %v177
    %v3242 = vpop.permute.xlu0 %3241
    %3244 = vset.pattern.permute.xlu0 8
    %3245 = vperm.xlu0 %3244, %v178
    %v3246 = vpop.permute.xlu0 %3245
    %3248 = vset.pattern.permute.xlu0 8
    %3249 = vperm.xlu0 %3248, %v179
    %v3250 = vpop.permute.xlu0 %3249
    %v3252 = vmul.f32 %v2932, %v2998
    %v3253 = vmul.f32 %v2933, %v3002
    %v3254 = vmul.f32 %v2934, %v3006
    %v3255 = vmul.f32 %v2935, %v3010
    %v3256 = vmul.f32 %v2936, %v3014
    %v3257 = vmul.f32 %v2937, %v3018
    %v3258 = vmul.f32 %v2938, %v3022
    %v3259 = vmul.f32 %v2939, %v3026
    %v3260 = vmul.f32 %v2940, %v3030
    %v3261 = vmul.f32 %v2941, %v3034
    %v3262 = vmul.f32 %v2942, %v3038
    %v3263 = vmul.f32 %v2943, %v3042
    %v3264 = vmul.f32 %v2944, %v3046
    %v3265 = vmul.f32 %v2945, %v3050
    %v3266 = vmul.f32 %v2946, %v3054
    %v3267 = vmul.f32 %v2947, %v3058
    %v3268 = vmul.f32 %v2948, %v3062
    %v3269 = vmul.f32 %v2949, %v3066
    %v3270 = vmul.f32 %v2950, %v3070
    %v3271 = vmul.f32 %v2951, %v3074
    %v3272 = vmul.f32 %v2952, %v3078
    %v3273 = vmul.f32 %v2953, %v3082
    %v3274 = vmul.f32 %v2954, %v3086
    %v3275 = vmul.f32 %v2955, %v3090
    %v3276 = vmul.f32 %v2956, %v3094
    %v3277 = vmul.f32 %v2957, %v3098
    %v3278 = vmul.f32 %v2958, %v3102
    %v3279 = vmul.f32 %v2959, %v3106
    %v3280 = vmul.f32 %v2960, %v3110
    %v3281 = vmul.f32 %v2961, %v3114
    %v3282 = vmul.f32 %v2962, %v3118
    %v3283 = vmul.f32 %v2963, %v3122
    %v3284 = vmul.f32 %v2964, %v3126
    %v3285 = vmul.f32 %v2965, %v3130
    %v3286 = vmul.f32 %v2966, %v3134
    %v3287 = vmul.f32 %v2967, %v3138
    %v3288 = vmul.f32 %v2968, %v3142
    %v3289 = vmul.f32 %v2969, %v3146
    %v3290 = vmul.f32 %v2970, %v3150
    %v3291 = vmul.f32 %v2971, %v3154
    %v3292 = vmul.f32 %v2972, %v3158
    %v3293 = vmul.f32 %v2973, %v3162
    %v3294 = vmul.f32 %v2974, %v3166
    %v3295 = vmul.f32 %v2975, %v3170
    %v3296 = vmul.f32 %v2976, %v3174
    %v3297 = vmul.f32 %v2977, %v3178
    %v3298 = vmul.f32 %v2978, %v3182
    %v3299 = vmul.f32 %v2979, %v3186
    %v3300 = vmul.f32 %v2980, %v3190
    %v3301 = vmul.f32 %v2981, %v3194
    %v3302 = vmul.f32 %v2982, %v3198
    %v3303 = vmul.f32 %v2983, %v3202
    %v3304 = vmul.f32 %v2984, %v3206
    %v3305 = vmul.f32 %v2985, %v3210
    %v3306 = vmul.f32 %v2986, %v3214
    %v3307 = vmul.f32 %v2987, %v3218
    %v3308 = vmul.f32 %v2988, %v3222
    %v3309 = vmul.f32 %v2989, %v3226
    %v3310 = vmul.f32 %v2990, %v3230
    %v3311 = vmul.f32 %v2991, %v3234
    %v3312 = vmul.f32 %v2992, %v3238
    %v3313 = vmul.f32 %v2993, %v3242
    %v3314 = vmul.f32 %v2994, %v3246
    %v3315 = vmul.f32 %v2995, %v3250
    %3380 = vrot.lane.b32.xlu0 %v884, 3
    %v3381 = vpop.permute.xlu0 %3380
    %3382 = vrot.lane.b32.xlu0 %v885, 3
    %v3383 = vpop.permute.xlu0 %3382
    %3384 = vrot.lane.b32.xlu0 %v886, 3
    %v3385 = vpop.permute.xlu0 %3384
    %3386 = vrot.lane.b32.xlu0 %v887, 3
    %v3387 = vpop.permute.xlu0 %3386
    %3388 = vrot.lane.b32.xlu0 %v888, 3
    %v3389 = vpop.permute.xlu0 %3388
    %3390 = vrot.lane.b32.xlu0 %v889, 3
    %v3391 = vpop.permute.xlu0 %3390
    %3392 = vrot.lane.b32.xlu0 %v890, 3
    %v3393 = vpop.permute.xlu0 %3392
    %3394 = vrot.lane.b32.xlu0 %v891, 3
    %v3395 = vpop.permute.xlu0 %3394
    %3396 = vrot.lane.b32.xlu0 %v892, 3
    %v3397 = vpop.permute.xlu0 %3396
    %3398 = vrot.lane.b32.xlu0 %v893, 3
    %v3399 = vpop.permute.xlu0 %3398
    %3400 = vrot.lane.b32.xlu0 %v894, 3
    %v3401 = vpop.permute.xlu0 %3400
    %3402 = vrot.lane.b32.xlu0 %v895, 3
    %v3403 = vpop.permute.xlu0 %3402
    %3404 = vrot.lane.b32.xlu0 %v896, 3
    %v3405 = vpop.permute.xlu0 %3404
    %3406 = vrot.lane.b32.xlu0 %v897, 3
    %v3407 = vpop.permute.xlu0 %3406
    %3408 = vrot.lane.b32.xlu0 %v898, 3
    %v3409 = vpop.permute.xlu0 %3408
    %3410 = vrot.lane.b32.xlu0 %v899, 3
    %v3411 = vpop.permute.xlu0 %3410
    %3412 = vrot.lane.b32.xlu0 %v900, 3
    %v3413 = vpop.permute.xlu0 %3412
    %3414 = vrot.lane.b32.xlu0 %v901, 3
    %v3415 = vpop.permute.xlu0 %3414
    %3416 = vrot.lane.b32.xlu0 %v902, 3
    %v3417 = vpop.permute.xlu0 %3416
    %3418 = vrot.lane.b32.xlu0 %v903, 3
    %v3419 = vpop.permute.xlu0 %3418
    %3420 = vrot.lane.b32.xlu0 %v904, 3
    %v3421 = vpop.permute.xlu0 %3420
    %3422 = vrot.lane.b32.xlu0 %v905, 3
    %v3423 = vpop.permute.xlu0 %3422
    %3424 = vrot.lane.b32.xlu0 %v906, 3
    %v3425 = vpop.permute.xlu0 %3424
    %3426 = vrot.lane.b32.xlu0 %v907, 3
    %v3427 = vpop.permute.xlu0 %3426
    %3428 = vrot.lane.b32.xlu0 %v908, 3
    %v3429 = vpop.permute.xlu0 %3428
    %3430 = vrot.lane.b32.xlu0 %v909, 3
    %v3431 = vpop.permute.xlu0 %3430
    %3432 = vrot.lane.b32.xlu0 %v910, 3
    %v3433 = vpop.permute.xlu0 %3432
    %3434 = vrot.lane.b32.xlu0 %v911, 3
    %v3435 = vpop.permute.xlu0 %3434
    %3436 = vrot.lane.b32.xlu0 %v912, 3
    %v3437 = vpop.permute.xlu0 %3436
    %3438 = vrot.lane.b32.xlu0 %v913, 3
    %v3439 = vpop.permute.xlu0 %3438
    %3440 = vrot.lane.b32.xlu0 %v914, 3
    %v3441 = vpop.permute.xlu0 %3440
    %3442 = vrot.lane.b32.xlu0 %v915, 3
    %v3443 = vpop.permute.xlu0 %3442
    %3444 = vrot.lane.b32.xlu0 %v916, 3
    %v3445 = vpop.permute.xlu0 %3444
    %3446 = vrot.lane.b32.xlu0 %v917, 3
    %v3447 = vpop.permute.xlu0 %3446
    %3448 = vrot.lane.b32.xlu0 %v918, 3
    %v3449 = vpop.permute.xlu0 %3448
    %3450 = vrot.lane.b32.xlu0 %v919, 3
    %v3451 = vpop.permute.xlu0 %3450
    %3452 = vrot.lane.b32.xlu0 %v920, 3
    %v3453 = vpop.permute.xlu0 %3452
    %3454 = vrot.lane.b32.xlu0 %v921, 3
    %v3455 = vpop.permute.xlu0 %3454
    %3456 = vrot.lane.b32.xlu0 %v922, 3
    %v3457 = vpop.permute.xlu0 %3456
    %3458 = vrot.lane.b32.xlu0 %v923, 3
    %v3459 = vpop.permute.xlu0 %3458
    %3460 = vrot.lane.b32.xlu0 %v924, 3
    %v3461 = vpop.permute.xlu0 %3460
    %3462 = vrot.lane.b32.xlu0 %v925, 3
    %v3463 = vpop.permute.xlu0 %3462
    %3464 = vrot.lane.b32.xlu0 %v926, 3
    %v3465 = vpop.permute.xlu0 %3464
    %3466 = vrot.lane.b32.xlu0 %v927, 3
    %v3467 = vpop.permute.xlu0 %3466
    %3468 = vrot.lane.b32.xlu0 %v928, 3
    %v3469 = vpop.permute.xlu0 %3468
    %3470 = vrot.lane.b32.xlu0 %v929, 3
    %v3471 = vpop.permute.xlu0 %3470
    %3472 = vrot.lane.b32.xlu0 %v930, 3
    %v3473 = vpop.permute.xlu0 %3472
    %3474 = vrot.lane.b32.xlu0 %v931, 3
    %v3475 = vpop.permute.xlu0 %3474
    %3476 = vrot.lane.b32.xlu0 %v932, 3
    %v3477 = vpop.permute.xlu0 %3476
    %3478 = vrot.lane.b32.xlu0 %v933, 3
    %v3479 = vpop.permute.xlu0 %3478
    %3480 = vrot.lane.b32.xlu0 %v934, 3
    %v3481 = vpop.permute.xlu0 %3480
    %3482 = vrot.lane.b32.xlu0 %v935, 3
    %v3483 = vpop.permute.xlu0 %3482
    %3484 = vrot.lane.b32.xlu0 %v936, 3
    %v3485 = vpop.permute.xlu0 %3484
    %3486 = vrot.lane.b32.xlu0 %v937, 3
    %v3487 = vpop.permute.xlu0 %3486
    %3488 = vrot.lane.b32.xlu0 %v938, 3
    %v3489 = vpop.permute.xlu0 %3488
    %3490 = vrot.lane.b32.xlu0 %v939, 3
    %v3491 = vpop.permute.xlu0 %3490
    %3492 = vrot.lane.b32.xlu0 %v940, 3
    %v3493 = vpop.permute.xlu0 %3492
    %3494 = vrot.lane.b32.xlu0 %v941, 3
    %v3495 = vpop.permute.xlu0 %3494
    %3496 = vrot.lane.b32.xlu0 %v942, 3
    %v3497 = vpop.permute.xlu0 %3496
    %3498 = vrot.lane.b32.xlu0 %v943, 3
    %v3499 = vpop.permute.xlu0 %3498
    %3500 = vrot.lane.b32.xlu0 %v944, 3
    %v3501 = vpop.permute.xlu0 %3500
    %3502 = vrot.lane.b32.xlu0 %v945, 3
    %v3503 = vpop.permute.xlu0 %3502
    %3504 = vrot.lane.b32.xlu0 %v946, 3
    %v3505 = vpop.permute.xlu0 %3504
    %3506 = vrot.lane.b32.xlu0 %v947, 3
    %v3507 = vpop.permute.xlu0 %3506
    %3636 = vrot.lane.b32.xlu0 %v1268, 6
    %v3637 = vpop.permute.xlu0 %3636
    %3638 = vrot.lane.b32.xlu0 %v1269, 6
    %v3639 = vpop.permute.xlu0 %3638
    %3640 = vrot.lane.b32.xlu0 %v1270, 6
    %v3641 = vpop.permute.xlu0 %3640
    %3642 = vrot.lane.b32.xlu0 %v1271, 6
    %v3643 = vpop.permute.xlu0 %3642
    %3644 = vrot.lane.b32.xlu0 %v1272, 6
    %v3645 = vpop.permute.xlu0 %3644
    %3646 = vrot.lane.b32.xlu0 %v1273, 6
    %v3647 = vpop.permute.xlu0 %3646
    %3648 = vrot.lane.b32.xlu0 %v1274, 6
    %v3649 = vpop.permute.xlu0 %3648
    %3650 = vrot.lane.b32.xlu0 %v1275, 6
    %v3651 = vpop.permute.xlu0 %3650
    %3652 = vrot.lane.b32.xlu0 %v1276, 6
    %v3653 = vpop.permute.xlu0 %3652
    %3654 = vrot.lane.b32.xlu0 %v1277, 6
    %v3655 = vpop.permute.xlu0 %3654
    %3656 = vrot.lane.b32.xlu0 %v1278, 6
    %v3657 = vpop.permute.xlu0 %3656
    %3658 = vrot.lane.b32.xlu0 %v1279, 6
    %v3659 = vpop.permute.xlu0 %3658
    %3660 = vrot.lane.b32.xlu0 %v1280, 6
    %v3661 = vpop.permute.xlu0 %3660
    %3662 = vrot.lane.b32.xlu0 %v1281, 6
    %v3663 = vpop.permute.xlu0 %3662
    %3664 = vrot.lane.b32.xlu0 %v1282, 6
    %v3665 = vpop.permute.xlu0 %3664
    %3666 = vrot.lane.b32.xlu0 %v1283, 6
    %v3667 = vpop.permute.xlu0 %3666
    %3668 = vrot.lane.b32.xlu0 %v1284, 6
    %v3669 = vpop.permute.xlu0 %3668
    %3670 = vrot.lane.b32.xlu0 %v1285, 6
    %v3671 = vpop.permute.xlu0 %3670
    %3672 = vrot.lane.b32.xlu0 %v1286, 6
    %v3673 = vpop.permute.xlu0 %3672
    %3674 = vrot.lane.b32.xlu0 %v1287, 6
    %v3675 = vpop.permute.xlu0 %3674
    %3676 = vrot.lane.b32.xlu0 %v1288, 6
    %v3677 = vpop.permute.xlu0 %3676
    %3678 = vrot.lane.b32.xlu0 %v1289, 6
    %v3679 = vpop.permute.xlu0 %3678
    %3680 = vrot.lane.b32.xlu0 %v1290, 6
    %v3681 = vpop.permute.xlu0 %3680
    %3682 = vrot.lane.b32.xlu0 %v1291, 6
    %v3683 = vpop.permute.xlu0 %3682
    %3684 = vrot.lane.b32.xlu0 %v1292, 6
    %v3685 = vpop.permute.xlu0 %3684
    %3686 = vrot.lane.b32.xlu0 %v1293, 6
    %v3687 = vpop.permute.xlu0 %3686
    %3688 = vrot.lane.b32.xlu0 %v1294, 6
    %v3689 = vpop.permute.xlu0 %3688
    %3690 = vrot.lane.b32.xlu0 %v1295, 6
    %v3691 = vpop.permute.xlu0 %3690
    %3692 = vrot.lane.b32.xlu0 %v1296, 6
    %v3693 = vpop.permute.xlu0 %3692
    %3694 = vrot.lane.b32.xlu0 %v1297, 6
    %v3695 = vpop.permute.xlu0 %3694
    %3696 = vrot.lane.b32.xlu0 %v1298, 6
    %v3697 = vpop.permute.xlu0 %3696
    %3698 = vrot.lane.b32.xlu0 %v1299, 6
    %v3699 = vpop.permute.xlu0 %3698
    %3700 = vrot.lane.b32.xlu0 %v1300, 6
    %v3701 = vpop.permute.xlu0 %3700
    %3702 = vrot.lane.b32.xlu0 %v1301, 6
    %v3703 = vpop.permute.xlu0 %3702
    %3704 = vrot.lane.b32.xlu0 %v1302, 6
    %v3705 = vpop.permute.xlu0 %3704
    %3706 = vrot.lane.b32.xlu0 %v1303, 6
    %v3707 = vpop.permute.xlu0 %3706
    %3708 = vrot.lane.b32.xlu0 %v1304, 6
    %v3709 = vpop.permute.xlu0 %3708
    %3710 = vrot.lane.b32.xlu0 %v1305, 6
    %v3711 = vpop.permute.xlu0 %3710
    %3712 = vrot.lane.b32.xlu0 %v1306, 6
    %v3713 = vpop.permute.xlu0 %3712
    %3714 = vrot.lane.b32.xlu0 %v1307, 6
    %v3715 = vpop.permute.xlu0 %3714
    %3716 = vrot.lane.b32.xlu0 %v1308, 6
    %v3717 = vpop.permute.xlu0 %3716
    %3718 = vrot.lane.b32.xlu0 %v1309, 6
    %v3719 = vpop.permute.xlu0 %3718
    %3720 = vrot.lane.b32.xlu0 %v1310, 6
    %v3721 = vpop.permute.xlu0 %3720
    %3722 = vrot.lane.b32.xlu0 %v1311, 6
    %v3723 = vpop.permute.xlu0 %3722
    %3724 = vrot.lane.b32.xlu0 %v1312, 6
    %v3725 = vpop.permute.xlu0 %3724
    %3726 = vrot.lane.b32.xlu0 %v1313, 6
    %v3727 = vpop.permute.xlu0 %3726
    %3728 = vrot.lane.b32.xlu0 %v1314, 6
    %v3729 = vpop.permute.xlu0 %3728
    %3730 = vrot.lane.b32.xlu0 %v1315, 6
    %v3731 = vpop.permute.xlu0 %3730
    %3732 = vrot.lane.b32.xlu0 %v1316, 6
    %v3733 = vpop.permute.xlu0 %3732
    %3734 = vrot.lane.b32.xlu0 %v1317, 6
    %v3735 = vpop.permute.xlu0 %3734
    %3736 = vrot.lane.b32.xlu0 %v1318, 6
    %v3737 = vpop.permute.xlu0 %3736
    %3738 = vrot.lane.b32.xlu0 %v1319, 6
    %v3739 = vpop.permute.xlu0 %3738
    %3740 = vrot.lane.b32.xlu0 %v1320, 6
    %v3741 = vpop.permute.xlu0 %3740
    %3742 = vrot.lane.b32.xlu0 %v1321, 6
    %v3743 = vpop.permute.xlu0 %3742
    %3744 = vrot.lane.b32.xlu0 %v1322, 6
    %v3745 = vpop.permute.xlu0 %3744
    %3746 = vrot.lane.b32.xlu0 %v1323, 6
    %v3747 = vpop.permute.xlu0 %3746
    %3748 = vrot.lane.b32.xlu0 %v1324, 6
    %v3749 = vpop.permute.xlu0 %3748
    %3750 = vrot.lane.b32.xlu0 %v1325, 6
    %v3751 = vpop.permute.xlu0 %3750
    %3752 = vrot.lane.b32.xlu0 %v1326, 6
    %v3753 = vpop.permute.xlu0 %3752
    %3754 = vrot.lane.b32.xlu0 %v1327, 6
    %v3755 = vpop.permute.xlu0 %3754
    %3756 = vrot.lane.b32.xlu0 %v1328, 6
    %v3757 = vpop.permute.xlu0 %3756
    %3758 = vrot.lane.b32.xlu0 %v1329, 6
    %v3759 = vpop.permute.xlu0 %3758
    %3760 = vrot.lane.b32.xlu0 %v1330, 6
    %v3761 = vpop.permute.xlu0 %3760
    %3762 = vrot.lane.b32.xlu0 %v1331, 6
    %v3763 = vpop.permute.xlu0 %3762
    %3892 = vrot.lane.b32.xlu0 %v1652, 9
    %v3893 = vpop.permute.xlu0 %3892
    %3894 = vrot.lane.b32.xlu0 %v1653, 9
    %v3895 = vpop.permute.xlu0 %3894
    %3896 = vrot.lane.b32.xlu0 %v1654, 9
    %v3897 = vpop.permute.xlu0 %3896
    %3898 = vrot.lane.b32.xlu0 %v1655, 9
    %v3899 = vpop.permute.xlu0 %3898
    %3900 = vrot.lane.b32.xlu0 %v1656, 9
    %v3901 = vpop.permute.xlu0 %3900
    %3902 = vrot.lane.b32.xlu0 %v1657, 9
    %v3903 = vpop.permute.xlu0 %3902
    %3904 = vrot.lane.b32.xlu0 %v1658, 9
    %v3905 = vpop.permute.xlu0 %3904
    %3906 = vrot.lane.b32.xlu0 %v1659, 9
    %v3907 = vpop.permute.xlu0 %3906
    %3908 = vrot.lane.b32.xlu0 %v1660, 9
    %v3909 = vpop.permute.xlu0 %3908
    %3910 = vrot.lane.b32.xlu0 %v1661, 9
    %v3911 = vpop.permute.xlu0 %3910
    %3912 = vrot.lane.b32.xlu0 %v1662, 9
    %v3913 = vpop.permute.xlu0 %3912
    %3914 = vrot.lane.b32.xlu0 %v1663, 9
    %v3915 = vpop.permute.xlu0 %3914
    %3916 = vrot.lane.b32.xlu0 %v1664, 9
    %v3917 = vpop.permute.xlu0 %3916
    %3918 = vrot.lane.b32.xlu0 %v1665, 9
    %v3919 = vpop.permute.xlu0 %3918
    %3920 = vrot.lane.b32.xlu0 %v1666, 9
    %v3921 = vpop.permute.xlu0 %3920
    %3922 = vrot.lane.b32.xlu0 %v1667, 9
    %v3923 = vpop.permute.xlu0 %3922
    %3924 = vrot.lane.b32.xlu0 %v1668, 9
    %v3925 = vpop.permute.xlu0 %3924
    %3926 = vrot.lane.b32.xlu0 %v1669, 9
    %v3927 = vpop.permute.xlu0 %3926
    %3928 = vrot.lane.b32.xlu0 %v1670, 9
    %v3929 = vpop.permute.xlu0 %3928
    %3930 = vrot.lane.b32.xlu0 %v1671, 9
    %v3931 = vpop.permute.xlu0 %3930
    %3932 = vrot.lane.b32.xlu0 %v1672, 9
    %v3933 = vpop.permute.xlu0 %3932
    %3934 = vrot.lane.b32.xlu0 %v1673, 9
    %v3935 = vpop.permute.xlu0 %3934
    %3936 = vrot.lane.b32.xlu0 %v1674, 9
    %v3937 = vpop.permute.xlu0 %3936
    %3938 = vrot.lane.b32.xlu0 %v1675, 9
    %v3939 = vpop.permute.xlu0 %3938
    %3940 = vrot.lane.b32.xlu0 %v1676, 9
    %v3941 = vpop.permute.xlu0 %3940
    %3942 = vrot.lane.b32.xlu0 %v1677, 9
    %v3943 = vpop.permute.xlu0 %3942
    %3944 = vrot.lane.b32.xlu0 %v1678, 9
    %v3945 = vpop.permute.xlu0 %3944
    %3946 = vrot.lane.b32.xlu0 %v1679, 9
    %v3947 = vpop.permute.xlu0 %3946
    %3948 = vrot.lane.b32.xlu0 %v1680, 9
    %v3949 = vpop.permute.xlu0 %3948
    %3950 = vrot.lane.b32.xlu0 %v1681, 9
    %v3951 = vpop.permute.xlu0 %3950
    %3952 = vrot.lane.b32.xlu0 %v1682, 9
    %v3953 = vpop.permute.xlu0 %3952
    %3954 = vrot.lane.b32.xlu0 %v1683, 9
    %v3955 = vpop.permute.xlu0 %3954
    %3956 = vrot.lane.b32.xlu0 %v1684, 9
    %v3957 = vpop.permute.xlu0 %3956
    %3958 = vrot.lane.b32.xlu0 %v1685, 9
    %v3959 = vpop.permute.xlu0 %3958
    %3960 = vrot.lane.b32.xlu0 %v1686, 9
    %v3961 = vpop.permute.xlu0 %3960
    %3962 = vrot.lane.b32.xlu0 %v1687, 9
    %v3963 = vpop.permute.xlu0 %3962
    %3964 = vrot.lane.b32.xlu0 %v1688, 9
    %v3965 = vpop.permute.xlu0 %3964
    %3966 = vrot.lane.b32.xlu0 %v1689, 9
    %v3967 = vpop.permute.xlu0 %3966
    %3968 = vrot.lane.b32.xlu0 %v1690, 9
    %v3969 = vpop.permute.xlu0 %3968
    %3970 = vrot.lane.b32.xlu0 %v1691, 9
    %v3971 = vpop.permute.xlu0 %3970
    %3972 = vrot.lane.b32.xlu0 %v1692, 9
    %v3973 = vpop.permute.xlu0 %3972
    %3974 = vrot.lane.b32.xlu0 %v1693, 9
    %v3975 = vpop.permute.xlu0 %3974
    %3976 = vrot.lane.b32.xlu0 %v1694, 9
    %v3977 = vpop.permute.xlu0 %3976
    %3978 = vrot.lane.b32.xlu0 %v1695, 9
    %v3979 = vpop.permute.xlu0 %3978
    %3980 = vrot.lane.b32.xlu0 %v1696, 9
    %v3981 = vpop.permute.xlu0 %3980
    %3982 = vrot.lane.b32.xlu0 %v1697, 9
    %v3983 = vpop.permute.xlu0 %3982
    %3984 = vrot.lane.b32.xlu0 %v1698, 9
    %v3985 = vpop.permute.xlu0 %3984
    %3986 = vrot.lane.b32.xlu0 %v1699, 9
    %v3987 = vpop.permute.xlu0 %3986
    %3988 = vrot.lane.b32.xlu0 %v1700, 9
    %v3989 = vpop.permute.xlu0 %3988
    %3990 = vrot.lane.b32.xlu0 %v1701, 9
    %v3991 = vpop.permute.xlu0 %3990
    %3992 = vrot.lane.b32.xlu0 %v1702, 9
    %v3993 = vpop.permute.xlu0 %3992
    %3994 = vrot.lane.b32.xlu0 %v1703, 9
    %v3995 = vpop.permute.xlu0 %3994
    %3996 = vrot.lane.b32.xlu0 %v1704, 9
    %v3997 = vpop.permute.xlu0 %3996
    %3998 = vrot.lane.b32.xlu0 %v1705, 9
    %v3999 = vpop.permute.xlu0 %3998
    %4000 = vrot.lane.b32.xlu0 %v1706, 9
    %v4001 = vpop.permute.xlu0 %4000
    %4002 = vrot.lane.b32.xlu0 %v1707, 9
    %v4003 = vpop.permute.xlu0 %4002
    %4004 = vrot.lane.b32.xlu0 %v1708, 9
    %v4005 = vpop.permute.xlu0 %4004
    %4006 = vrot.lane.b32.xlu0 %v1709, 9
    %v4007 = vpop.permute.xlu0 %4006
    %4008 = vrot.lane.b32.xlu0 %v1710, 9
    %v4009 = vpop.permute.xlu0 %4008
    %4010 = vrot.lane.b32.xlu0 %v1711, 9
    %v4011 = vpop.permute.xlu0 %4010
    %4012 = vrot.lane.b32.xlu0 %v1712, 9
    %v4013 = vpop.permute.xlu0 %4012
    %4014 = vrot.lane.b32.xlu0 %v1713, 9
    %v4015 = vpop.permute.xlu0 %4014
    %4016 = vrot.lane.b32.xlu0 %v1714, 9
    %v4017 = vpop.permute.xlu0 %4016
    %4018 = vrot.lane.b32.xlu0 %v1715, 9
    %v4019 = vpop.permute.xlu0 %4018
    %4148 = vrot.lane.b32.xlu0 %v1716, 12
    %v4149 = vpop.permute.xlu0 %4148
    %4150 = vrot.lane.b32.xlu0 %v1717, 12
    %v4151 = vpop.permute.xlu0 %4150
    %4152 = vrot.lane.b32.xlu0 %v1718, 12
    %v4153 = vpop.permute.xlu0 %4152
    %4154 = vrot.lane.b32.xlu0 %v1719, 12
    %v4155 = vpop.permute.xlu0 %4154
    %4156 = vrot.lane.b32.xlu0 %v1720, 12
    %v4157 = vpop.permute.xlu0 %4156
    %4158 = vrot.lane.b32.xlu0 %v1721, 12
    %v4159 = vpop.permute.xlu0 %4158
    %4160 = vrot.lane.b32.xlu0 %v1722, 12
    %v4161 = vpop.permute.xlu0 %4160
    %4162 = vrot.lane.b32.xlu0 %v1723, 12
    %v4163 = vpop.permute.xlu0 %4162
    %4164 = vrot.lane.b32.xlu0 %v1724, 12
    %v4165 = vpop.permute.xlu0 %4164
    %4166 = vrot.lane.b32.xlu0 %v1725, 12
    %v4167 = vpop.permute.xlu0 %4166
    %4168 = vrot.lane.b32.xlu0 %v1726, 12
    %v4169 = vpop.permute.xlu0 %4168
    %4170 = vrot.lane.b32.xlu0 %v1727, 12
    %v4171 = vpop.permute.xlu0 %4170
    %4172 = vrot.lane.b32.xlu0 %v1728, 12
    %v4173 = vpop.permute.xlu0 %4172
    %4174 = vrot.lane.b32.xlu0 %v1729, 12
    %v4175 = vpop.permute.xlu0 %4174
    %4176 = vrot.lane.b32.xlu0 %v1730, 12
    %v4177 = vpop.permute.xlu0 %4176
    %4178 = vrot.lane.b32.xlu0 %v1731, 12
    %v4179 = vpop.permute.xlu0 %4178
    %4180 = vrot.lane.b32.xlu0 %v1732, 12
    %v4181 = vpop.permute.xlu0 %4180
    %4182 = vrot.lane.b32.xlu0 %v1733, 12
    %v4183 = vpop.permute.xlu0 %4182
    %4184 = vrot.lane.b32.xlu0 %v1734, 12
    %v4185 = vpop.permute.xlu0 %4184
    %4186 = vrot.lane.b32.xlu0 %v1735, 12
    %v4187 = vpop.permute.xlu0 %4186
    %4188 = vrot.lane.b32.xlu0 %v1736, 12
    %v4189 = vpop.permute.xlu0 %4188
    %4190 = vrot.lane.b32.xlu0 %v1737, 12
    %v4191 = vpop.permute.xlu0 %4190
    %4192 = vrot.lane.b32.xlu0 %v1738, 12
    %v4193 = vpop.permute.xlu0 %4192
    %4194 = vrot.lane.b32.xlu0 %v1739, 12
    %v4195 = vpop.permute.xlu0 %4194
    %4196 = vrot.lane.b32.xlu0 %v1740, 12
    %v4197 = vpop.permute.xlu0 %4196
    %4198 = vrot.lane.b32.xlu0 %v1741, 12
    %v4199 = vpop.permute.xlu0 %4198
    %4200 = vrot.lane.b32.xlu0 %v1742, 12
    %v4201 = vpop.permute.xlu0 %4200
    %4202 = vrot.lane.b32.xlu0 %v1743, 12
    %v4203 = vpop.permute.xlu0 %4202
    %4204 = vrot.lane.b32.xlu0 %v1744, 12
    %v4205 = vpop.permute.xlu0 %4204
    %4206 = vrot.lane.b32.xlu0 %v1745, 12
    %v4207 = vpop.permute.xlu0 %4206
    %4208 = vrot.lane.b32.xlu0 %v1746, 12
    %v4209 = vpop.permute.xlu0 %4208
    %4210 = vrot.lane.b32.xlu0 %v1747, 12
    %v4211 = vpop.permute.xlu0 %4210
    %4212 = vrot.lane.b32.xlu0 %v1748, 12
    %v4213 = vpop.permute.xlu0 %4212
    %4214 = vrot.lane.b32.xlu0 %v1749, 12
    %v4215 = vpop.permute.xlu0 %4214
    %4216 = vrot.lane.b32.xlu0 %v1750, 12
    %v4217 = vpop.permute.xlu0 %4216
    %4218 = vrot.lane.b32.xlu0 %v1751, 12
    %v4219 = vpop.permute.xlu0 %4218
    %4220 = vrot.lane.b32.xlu0 %v1752, 12
    %v4221 = vpop.permute.xlu0 %4220
    %4222 = vrot.lane.b32.xlu0 %v1753, 12
    %v4223 = vpop.permute.xlu0 %4222
    %4224 = vrot.lane.b32.xlu0 %v1754, 12
    %v4225 = vpop.permute.xlu0 %4224
    %4226 = vrot.lane.b32.xlu0 %v1755, 12
    %v4227 = vpop.permute.xlu0 %4226
    %4228 = vrot.lane.b32.xlu0 %v1756, 12
    %v4229 = vpop.permute.xlu0 %4228
    %4230 = vrot.lane.b32.xlu0 %v1757, 12
    %v4231 = vpop.permute.xlu0 %4230
    %4232 = vrot.lane.b32.xlu0 %v1758, 12
    %v4233 = vpop.permute.xlu0 %4232
    %4234 = vrot.lane.b32.xlu0 %v1759, 12
    %v4235 = vpop.permute.xlu0 %4234
    %4236 = vrot.lane.b32.xlu0 %v1760, 12
    %v4237 = vpop.permute.xlu0 %4236
    %4238 = vrot.lane.b32.xlu0 %v1761, 12
    %v4239 = vpop.permute.xlu0 %4238
    %4240 = vrot.lane.b32.xlu0 %v1762, 12
    %v4241 = vpop.permute.xlu0 %4240
    %4242 = vrot.lane.b32.xlu0 %v1763, 12
    %v4243 = vpop.permute.xlu0 %4242
    %4244 = vrot.lane.b32.xlu0 %v1764, 12
    %v4245 = vpop.permute.xlu0 %4244
    %4246 = vrot.lane.b32.xlu0 %v1765, 12
    %v4247 = vpop.permute.xlu0 %4246
    %4248 = vrot.lane.b32.xlu0 %v1766, 12
    %v4249 = vpop.permute.xlu0 %4248
    %4250 = vrot.lane.b32.xlu0 %v1767, 12
    %v4251 = vpop.permute.xlu0 %4250
    %4252 = vrot.lane.b32.xlu0 %v1768, 12
    %v4253 = vpop.permute.xlu0 %4252
    %4254 = vrot.lane.b32.xlu0 %v1769, 12
    %v4255 = vpop.permute.xlu0 %4254
    %4256 = vrot.lane.b32.xlu0 %v1770, 12
    %v4257 = vpop.permute.xlu0 %4256
    %4258 = vrot.lane.b32.xlu0 %v1771, 12
    %v4259 = vpop.permute.xlu0 %4258
    %4260 = vrot.lane.b32.xlu0 %v1772, 12
    %v4261 = vpop.permute.xlu0 %4260
    %4262 = vrot.lane.b32.xlu0 %v1773, 12
    %v4263 = vpop.permute.xlu0 %4262
    %4264 = vrot.lane.b32.xlu0 %v1774, 12
    %v4265 = vpop.permute.xlu0 %4264
    %4266 = vrot.lane.b32.xlu0 %v1775, 12
    %v4267 = vpop.permute.xlu0 %4266
    %4268 = vrot.lane.b32.xlu0 %v1776, 12
    %v4269 = vpop.permute.xlu0 %4268
    %4270 = vrot.lane.b32.xlu0 %v1777, 12
    %v4271 = vpop.permute.xlu0 %4270
    %4272 = vrot.lane.b32.xlu0 %v1778, 12
    %v4273 = vpop.permute.xlu0 %4272
    %4274 = vrot.lane.b32.xlu0 %v1779, 12
    %v4275 = vpop.permute.xlu0 %4274
    %4404 = vrot.lane.b32.xlu0 %v2100, 15
    %v4405 = vpop.permute.xlu0 %4404
    %4406 = vrot.lane.b32.xlu0 %v2101, 15
    %v4407 = vpop.permute.xlu0 %4406
    %4408 = vrot.lane.b32.xlu0 %v2102, 15
    %v4409 = vpop.permute.xlu0 %4408
    %4410 = vrot.lane.b32.xlu0 %v2103, 15
    %v4411 = vpop.permute.xlu0 %4410
    %4412 = vrot.lane.b32.xlu0 %v2104, 15
    %v4413 = vpop.permute.xlu0 %4412
    %4414 = vrot.lane.b32.xlu0 %v2105, 15
    %v4415 = vpop.permute.xlu0 %4414
    %4416 = vrot.lane.b32.xlu0 %v2106, 15
    %v4417 = vpop.permute.xlu0 %4416
    %4418 = vrot.lane.b32.xlu0 %v2107, 15
    %v4419 = vpop.permute.xlu0 %4418
    %4420 = vrot.lane.b32.xlu0 %v2108, 15
    %v4421 = vpop.permute.xlu0 %4420
    %4422 = vrot.lane.b32.xlu0 %v2109, 15
    %v4423 = vpop.permute.xlu0 %4422
    %4424 = vrot.lane.b32.xlu0 %v2110, 15
    %v4425 = vpop.permute.xlu0 %4424
    %4426 = vrot.lane.b32.xlu0 %v2111, 15
    %v4427 = vpop.permute.xlu0 %4426
    %4428 = vrot.lane.b32.xlu0 %v2112, 15
    %v4429 = vpop.permute.xlu0 %4428
    %4430 = vrot.lane.b32.xlu0 %v2113, 15
    %v4431 = vpop.permute.xlu0 %4430
    %4432 = vrot.lane.b32.xlu0 %v2114, 15
    %v4433 = vpop.permute.xlu0 %4432
    %4434 = vrot.lane.b32.xlu0 %v2115, 15
    %v4435 = vpop.permute.xlu0 %4434
    %4436 = vrot.lane.b32.xlu0 %v2116, 15
    %v4437 = vpop.permute.xlu0 %4436
    %4438 = vrot.lane.b32.xlu0 %v2117, 15
    %v4439 = vpop.permute.xlu0 %4438
    %4440 = vrot.lane.b32.xlu0 %v2118, 15
    %v4441 = vpop.permute.xlu0 %4440
    %4442 = vrot.lane.b32.xlu0 %v2119, 15
    %v4443 = vpop.permute.xlu0 %4442
    %4444 = vrot.lane.b32.xlu0 %v2120, 15
    %v4445 = vpop.permute.xlu0 %4444
    %4446 = vrot.lane.b32.xlu0 %v2121, 15
    %v4447 = vpop.permute.xlu0 %4446
    %4448 = vrot.lane.b32.xlu0 %v2122, 15
    %v4449 = vpop.permute.xlu0 %4448
    %4450 = vrot.lane.b32.xlu0 %v2123, 15
    %v4451 = vpop.permute.xlu0 %4450
    %4452 = vrot.lane.b32.xlu0 %v2124, 15
    %v4453 = vpop.permute.xlu0 %4452
    %4454 = vrot.lane.b32.xlu0 %v2125, 15
    %v4455 = vpop.permute.xlu0 %4454
    %4456 = vrot.lane.b32.xlu0 %v2126, 15
    %v4457 = vpop.permute.xlu0 %4456
    %4458 = vrot.lane.b32.xlu0 %v2127, 15
    %v4459 = vpop.permute.xlu0 %4458
    %4460 = vrot.lane.b32.xlu0 %v2128, 15
    %v4461 = vpop.permute.xlu0 %4460
    %4462 = vrot.lane.b32.xlu0 %v2129, 15
    %v4463 = vpop.permute.xlu0 %4462
    %4464 = vrot.lane.b32.xlu0 %v2130, 15
    %v4465 = vpop.permute.xlu0 %4464
    %4466 = vrot.lane.b32.xlu0 %v2131, 15
    %v4467 = vpop.permute.xlu0 %4466
    %4468 = vrot.lane.b32.xlu0 %v2132, 15
    %v4469 = vpop.permute.xlu0 %4468
    %4470 = vrot.lane.b32.xlu0 %v2133, 15
    %v4471 = vpop.permute.xlu0 %4470
    %4472 = vrot.lane.b32.xlu0 %v2134, 15
    %v4473 = vpop.permute.xlu0 %4472
    %4474 = vrot.lane.b32.xlu0 %v2135, 15
    %v4475 = vpop.permute.xlu0 %4474
    %4476 = vrot.lane.b32.xlu0 %v2136, 15
    %v4477 = vpop.permute.xlu0 %4476
    %4478 = vrot.lane.b32.xlu0 %v2137, 15
    %v4479 = vpop.permute.xlu0 %4478
    %4480 = vrot.lane.b32.xlu0 %v2138, 15
    %v4481 = vpop.permute.xlu0 %4480
    %4482 = vrot.lane.b32.xlu0 %v2139, 15
    %v4483 = vpop.permute.xlu0 %4482
    %4484 = vrot.lane.b32.xlu0 %v2140, 15
    %v4485 = vpop.permute.xlu0 %4484
    %4486 = vrot.lane.b32.xlu0 %v2141, 15
    %v4487 = vpop.permute.xlu0 %4486
    %4488 = vrot.lane.b32.xlu0 %v2142, 15
    %v4489 = vpop.permute.xlu0 %4488
    %4490 = vrot.lane.b32.xlu0 %v2143, 15
    %v4491 = vpop.permute.xlu0 %4490
    %4492 = vrot.lane.b32.xlu0 %v2144, 15
    %v4493 = vpop.permute.xlu0 %4492
    %4494 = vrot.lane.b32.xlu0 %v2145, 15
    %v4495 = vpop.permute.xlu0 %4494
    %4496 = vrot.lane.b32.xlu0 %v2146, 15
    %v4497 = vpop.permute.xlu0 %4496
    %4498 = vrot.lane.b32.xlu0 %v2147, 15
    %v4499 = vpop.permute.xlu0 %4498
    %4500 = vrot.lane.b32.xlu0 %v2148, 15
    %v4501 = vpop.permute.xlu0 %4500
    %4502 = vrot.lane.b32.xlu0 %v2149, 15
    %v4503 = vpop.permute.xlu0 %4502
    %4504 = vrot.lane.b32.xlu0 %v2150, 15
    %v4505 = vpop.permute.xlu0 %4504
    %4506 = vrot.lane.b32.xlu0 %v2151, 15
    %v4507 = vpop.permute.xlu0 %4506
    %4508 = vrot.lane.b32.xlu0 %v2152, 15
    %v4509 = vpop.permute.xlu0 %4508
    %4510 = vrot.lane.b32.xlu0 %v2153, 15
    %v4511 = vpop.permute.xlu0 %4510
    %4512 = vrot.lane.b32.xlu0 %v2154, 15
    %v4513 = vpop.permute.xlu0 %4512
    %4514 = vrot.lane.b32.xlu0 %v2155, 15
    %v4515 = vpop.permute.xlu0 %4514
    %4516 = vrot.lane.b32.xlu0 %v2156, 15
    %v4517 = vpop.permute.xlu0 %4516
    %4518 = vrot.lane.b32.xlu0 %v2157, 15
    %v4519 = vpop.permute.xlu0 %4518
    %4520 = vrot.lane.b32.xlu0 %v2158, 15
    %v4521 = vpop.permute.xlu0 %4520
    %4522 = vrot.lane.b32.xlu0 %v2159, 15
    %v4523 = vpop.permute.xlu0 %4522
    %4524 = vrot.lane.b32.xlu0 %v2160, 15
    %v4525 = vpop.permute.xlu0 %4524
    %4526 = vrot.lane.b32.xlu0 %v2161, 15
    %v4527 = vpop.permute.xlu0 %4526
    %4528 = vrot.lane.b32.xlu0 %v2162, 15
    %v4529 = vpop.permute.xlu0 %4528
    %4530 = vrot.lane.b32.xlu0 %v2163, 15
    %v4531 = vpop.permute.xlu0 %4530
    %4660 = vrot.lane.b32.xlu0 %v2484, 18
    %v4661 = vpop.permute.xlu0 %4660
    %4662 = vrot.lane.b32.xlu0 %v2485, 18
    %v4663 = vpop.permute.xlu0 %4662
    %4664 = vrot.lane.b32.xlu0 %v2486, 18
    %v4665 = vpop.permute.xlu0 %4664
    %4666 = vrot.lane.b32.xlu0 %v2487, 18
    %v4667 = vpop.permute.xlu0 %4666
    %4668 = vrot.lane.b32.xlu0 %v2488, 18
    %v4669 = vpop.permute.xlu0 %4668
    %4670 = vrot.lane.b32.xlu0 %v2489, 18
    %v4671 = vpop.permute.xlu0 %4670
    %4672 = vrot.lane.b32.xlu0 %v2490, 18
    %v4673 = vpop.permute.xlu0 %4672
    %4674 = vrot.lane.b32.xlu0 %v2491, 18
    %v4675 = vpop.permute.xlu0 %4674
    %4676 = vrot.lane.b32.xlu0 %v2492, 18
    %v4677 = vpop.permute.xlu0 %4676
    %4678 = vrot.lane.b32.xlu0 %v2493, 18
    %v4679 = vpop.permute.xlu0 %4678
    %4680 = vrot.lane.b32.xlu0 %v2494, 18
    %v4681 = vpop.permute.xlu0 %4680
    %4682 = vrot.lane.b32.xlu0 %v2495, 18
    %v4683 = vpop.permute.xlu0 %4682
    %4684 = vrot.lane.b32.xlu0 %v2496, 18
    %v4685 = vpop.permute.xlu0 %4684
    %4686 = vrot.lane.b32.xlu0 %v2497, 18
    %v4687 = vpop.permute.xlu0 %4686
    %4688 = vrot.lane.b32.xlu0 %v2498, 18
    %v4689 = vpop.permute.xlu0 %4688
    %4690 = vrot.lane.b32.xlu0 %v2499, 18
    %v4691 = vpop.permute.xlu0 %4690
    %4692 = vrot.lane.b32.xlu0 %v2500, 18
    %v4693 = vpop.permute.xlu0 %4692
    %4694 = vrot.lane.b32.xlu0 %v2501, 18
    %v4695 = vpop.permute.xlu0 %4694
    %4696 = vrot.lane.b32.xlu0 %v2502, 18
    %v4697 = vpop.permute.xlu0 %4696
    %4698 = vrot.lane.b32.xlu0 %v2503, 18
    %v4699 = vpop.permute.xlu0 %4698
    %4700 = vrot.lane.b32.xlu0 %v2504, 18
    %v4701 = vpop.permute.xlu0 %4700
    %4702 = vrot.lane.b32.xlu0 %v2505, 18
    %v4703 = vpop.permute.xlu0 %4702
    %4704 = vrot.lane.b32.xlu0 %v2506, 18
    %v4705 = vpop.permute.xlu0 %4704
    %4706 = vrot.lane.b32.xlu0 %v2507, 18
    %v4707 = vpop.permute.xlu0 %4706
    %4708 = vrot.lane.b32.xlu0 %v2508, 18
    %v4709 = vpop.permute.xlu0 %4708
    %4710 = vrot.lane.b32.xlu0 %v2509, 18
    %v4711 = vpop.permute.xlu0 %4710
    %4712 = vrot.lane.b32.xlu0 %v2510, 18
    %v4713 = vpop.permute.xlu0 %4712
    %4714 = vrot.lane.b32.xlu0 %v2511, 18
    %v4715 = vpop.permute.xlu0 %4714
    %4716 = vrot.lane.b32.xlu0 %v2512, 18
    %v4717 = vpop.permute.xlu0 %4716
    %4718 = vrot.lane.b32.xlu0 %v2513, 18
    %v4719 = vpop.permute.xlu0 %4718
    %4720 = vrot.lane.b32.xlu0 %v2514, 18
    %v4721 = vpop.permute.xlu0 %4720
    %4722 = vrot.lane.b32.xlu0 %v2515, 18
    %v4723 = vpop.permute.xlu0 %4722
    %4724 = vrot.lane.b32.xlu0 %v2516, 18
    %v4725 = vpop.permute.xlu0 %4724
    %4726 = vrot.lane.b32.xlu0 %v2517, 18
    %v4727 = vpop.permute.xlu0 %4726
    %4728 = vrot.lane.b32.xlu0 %v2518, 18
    %v4729 = vpop.permute.xlu0 %4728
    %4730 = vrot.lane.b32.xlu0 %v2519, 18
    %v4731 = vpop.permute.xlu0 %4730
    %4732 = vrot.lane.b32.xlu0 %v2520, 18
    %v4733 = vpop.permute.xlu0 %4732
    %4734 = vrot.lane.b32.xlu0 %v2521, 18
    %v4735 = vpop.permute.xlu0 %4734
    %4736 = vrot.lane.b32.xlu0 %v2522, 18
    %v4737 = vpop.permute.xlu0 %4736
    %4738 = vrot.lane.b32.xlu0 %v2523, 18
    %v4739 = vpop.permute.xlu0 %4738
    %4740 = vrot.lane.b32.xlu0 %v2524, 18
    %v4741 = vpop.permute.xlu0 %4740
    %4742 = vrot.lane.b32.xlu0 %v2525, 18
    %v4743 = vpop.permute.xlu0 %4742
    %4744 = vrot.lane.b32.xlu0 %v2526, 18
    %v4745 = vpop.permute.xlu0 %4744
    %4746 = vrot.lane.b32.xlu0 %v2527, 18
    %v4747 = vpop.permute.xlu0 %4746
    %4748 = vrot.lane.b32.xlu0 %v2528, 18
    %v4749 = vpop.permute.xlu0 %4748
    %4750 = vrot.lane.b32.xlu0 %v2529, 18
    %v4751 = vpop.permute.xlu0 %4750
    %4752 = vrot.lane.b32.xlu0 %v2530, 18
    %v4753 = vpop.permute.xlu0 %4752
    %4754 = vrot.lane.b32.xlu0 %v2531, 18
    %v4755 = vpop.permute.xlu0 %4754
    %4756 = vrot.lane.b32.xlu0 %v2532, 18
    %v4757 = vpop.permute.xlu0 %4756
    %4758 = vrot.lane.b32.xlu0 %v2533, 18
    %v4759 = vpop.permute.xlu0 %4758
    %4760 = vrot.lane.b32.xlu0 %v2534, 18
    %v4761 = vpop.permute.xlu0 %4760
    %4762 = vrot.lane.b32.xlu0 %v2535, 18
    %v4763 = vpop.permute.xlu0 %4762
    %4764 = vrot.lane.b32.xlu0 %v2536, 18
    %v4765 = vpop.permute.xlu0 %4764
    %4766 = vrot.lane.b32.xlu0 %v2537, 18
    %v4767 = vpop.permute.xlu0 %4766
    %4768 = vrot.lane.b32.xlu0 %v2538, 18
    %v4769 = vpop.permute.xlu0 %4768
    %4770 = vrot.lane.b32.xlu0 %v2539, 18
    %v4771 = vpop.permute.xlu0 %4770
    %4772 = vrot.lane.b32.xlu0 %v2540, 18
    %v4773 = vpop.permute.xlu0 %4772
    %4774 = vrot.lane.b32.xlu0 %v2541, 18
    %v4775 = vpop.permute.xlu0 %4774
    %4776 = vrot.lane.b32.xlu0 %v2542, 18
    %v4777 = vpop.permute.xlu0 %4776
    %4778 = vrot.lane.b32.xlu0 %v2543, 18
    %v4779 = vpop.permute.xlu0 %4778
    %4780 = vrot.lane.b32.xlu0 %v2544, 18
    %v4781 = vpop.permute.xlu0 %4780
    %4782 = vrot.lane.b32.xlu0 %v2545, 18
    %v4783 = vpop.permute.xlu0 %4782
    %4784 = vrot.lane.b32.xlu0 %v2546, 18
    %v4785 = vpop.permute.xlu0 %4784
    %4786 = vrot.lane.b32.xlu0 %v2547, 18
    %v4787 = vpop.permute.xlu0 %4786
    %4916 = vrot.lane.b32.xlu0 %v2868, 21
    %v4917 = vpop.permute.xlu0 %4916
    %4918 = vrot.lane.b32.xlu0 %v2869, 21
    %v4919 = vpop.permute.xlu0 %4918
    %4920 = vrot.lane.b32.xlu0 %v2870, 21
    %v4921 = vpop.permute.xlu0 %4920
    %4922 = vrot.lane.b32.xlu0 %v2871, 21
    %v4923 = vpop.permute.xlu0 %4922
    %4924 = vrot.lane.b32.xlu0 %v2872, 21
    %v4925 = vpop.permute.xlu0 %4924
    %4926 = vrot.lane.b32.xlu0 %v2873, 21
    %v4927 = vpop.permute.xlu0 %4926
    %4928 = vrot.lane.b32.xlu0 %v2874, 21
    %v4929 = vpop.permute.xlu0 %4928
    %4930 = vrot.lane.b32.xlu0 %v2875, 21
    %v4931 = vpop.permute.xlu0 %4930
    %4932 = vrot.lane.b32.xlu0 %v2876, 21
    %v4933 = vpop.permute.xlu0 %4932
    %4934 = vrot.lane.b32.xlu0 %v2877, 21
    %v4935 = vpop.permute.xlu0 %4934
    %4936 = vrot.lane.b32.xlu0 %v2878, 21
    %v4937 = vpop.permute.xlu0 %4936
    %4938 = vrot.lane.b32.xlu0 %v2879, 21
    %v4939 = vpop.permute.xlu0 %4938
    %4940 = vrot.lane.b32.xlu0 %v2880, 21
    %v4941 = vpop.permute.xlu0 %4940
    %4942 = vrot.lane.b32.xlu0 %v2881, 21
    %v4943 = vpop.permute.xlu0 %4942
    %4944 = vrot.lane.b32.xlu0 %v2882, 21
    %v4945 = vpop.permute.xlu0 %4944
    %4946 = vrot.lane.b32.xlu0 %v2883, 21
    %v4947 = vpop.permute.xlu0 %4946
    %4948 = vrot.lane.b32.xlu0 %v2884, 21
    %v4949 = vpop.permute.xlu0 %4948
    %4950 = vrot.lane.b32.xlu0 %v2885, 21
    %v4951 = vpop.permute.xlu0 %4950
    %4952 = vrot.lane.b32.xlu0 %v2886, 21
    %v4953 = vpop.permute.xlu0 %4952
    %4954 = vrot.lane.b32.xlu0 %v2887, 21
    %v4955 = vpop.permute.xlu0 %4954
    %4956 = vrot.lane.b32.xlu0 %v2888, 21
    %v4957 = vpop.permute.xlu0 %4956
    %4958 = vrot.lane.b32.xlu0 %v2889, 21
    %v4959 = vpop.permute.xlu0 %4958
    %4960 = vrot.lane.b32.xlu0 %v2890, 21
    %v4961 = vpop.permute.xlu0 %4960
    %4962 = vrot.lane.b32.xlu0 %v2891, 21
    %v4963 = vpop.permute.xlu0 %4962
    %4964 = vrot.lane.b32.xlu0 %v2892, 21
    %v4965 = vpop.permute.xlu0 %4964
    %4966 = vrot.lane.b32.xlu0 %v2893, 21
    %v4967 = vpop.permute.xlu0 %4966
    %4968 = vrot.lane.b32.xlu0 %v2894, 21
    %v4969 = vpop.permute.xlu0 %4968
    %4970 = vrot.lane.b32.xlu0 %v2895, 21
    %v4971 = vpop.permute.xlu0 %4970
    %4972 = vrot.lane.b32.xlu0 %v2896, 21
    %v4973 = vpop.permute.xlu0 %4972
    %4974 = vrot.lane.b32.xlu0 %v2897, 21
    %v4975 = vpop.permute.xlu0 %4974
    %4976 = vrot.lane.b32.xlu0 %v2898, 21
    %v4977 = vpop.permute.xlu0 %4976
    %4978 = vrot.lane.b32.xlu0 %v2899, 21
    %v4979 = vpop.permute.xlu0 %4978
    %4980 = vrot.lane.b32.xlu0 %v2900, 21
    %v4981 = vpop.permute.xlu0 %4980
    %4982 = vrot.lane.b32.xlu0 %v2901, 21
    %v4983 = vpop.permute.xlu0 %4982
    %4984 = vrot.lane.b32.xlu0 %v2902, 21
    %v4985 = vpop.permute.xlu0 %4984
    %4986 = vrot.lane.b32.xlu0 %v2903, 21
    %v4987 = vpop.permute.xlu0 %4986
    %4988 = vrot.lane.b32.xlu0 %v2904, 21
    %v4989 = vpop.permute.xlu0 %4988
    %4990 = vrot.lane.b32.xlu0 %v2905, 21
    %v4991 = vpop.permute.xlu0 %4990
    %4992 = vrot.lane.b32.xlu0 %v2906, 21
    %v4993 = vpop.permute.xlu0 %4992
    %4994 = vrot.lane.b32.xlu0 %v2907, 21
    %v4995 = vpop.permute.xlu0 %4994
    %4996 = vrot.lane.b32.xlu0 %v2908, 21
    %v4997 = vpop.permute.xlu0 %4996
    %4998 = vrot.lane.b32.xlu0 %v2909, 21
    %v4999 = vpop.permute.xlu0 %4998
    %5000 = vrot.lane.b32.xlu0 %v2910, 21
    %v5001 = vpop.permute.xlu0 %5000
    %5002 = vrot.lane.b32.xlu0 %v2911, 21
    %v5003 = vpop.permute.xlu0 %5002
    %5004 = vrot.lane.b32.xlu0 %v2912, 21
    %v5005 = vpop.permute.xlu0 %5004
    %5006 = vrot.lane.b32.xlu0 %v2913, 21
    %v5007 = vpop.permute.xlu0 %5006
    %5008 = vrot.lane.b32.xlu0 %v2914, 21
    %v5009 = vpop.permute.xlu0 %5008
    %5010 = vrot.lane.b32.xlu0 %v2915, 21
    %v5011 = vpop.permute.xlu0 %5010
    %5012 = vrot.lane.b32.xlu0 %v2916, 21
    %v5013 = vpop.permute.xlu0 %5012
    %5014 = vrot.lane.b32.xlu0 %v2917, 21
    %v5015 = vpop.permute.xlu0 %5014
    %5016 = vrot.lane.b32.xlu0 %v2918, 21
    %v5017 = vpop.permute.xlu0 %5016
    %5018 = vrot.lane.b32.xlu0 %v2919, 21
    %v5019 = vpop.permute.xlu0 %5018
    %5020 = vrot.lane.b32.xlu0 %v2920, 21
    %v5021 = vpop.permute.xlu0 %5020
    %5022 = vrot.lane.b32.xlu0 %v2921, 21
    %v5023 = vpop.permute.xlu0 %5022
    %5024 = vrot.lane.b32.xlu0 %v2922, 21
    %v5025 = vpop.permute.xlu0 %5024
    %5026 = vrot.lane.b32.xlu0 %v2923, 21
    %v5027 = vpop.permute.xlu0 %5026
    %5028 = vrot.lane.b32.xlu0 %v2924, 21
    %v5029 = vpop.permute.xlu0 %5028
    %5030 = vrot.lane.b32.xlu0 %v2925, 21
    %v5031 = vpop.permute.xlu0 %5030
    %5032 = vrot.lane.b32.xlu0 %v2926, 21
    %v5033 = vpop.permute.xlu0 %5032
    %5034 = vrot.lane.b32.xlu0 %v2927, 21
    %v5035 = vpop.permute.xlu0 %5034
    %5036 = vrot.lane.b32.xlu0 %v2928, 21
    %v5037 = vpop.permute.xlu0 %5036
    %5038 = vrot.lane.b32.xlu0 %v2929, 21
    %v5039 = vpop.permute.xlu0 %5038
    %5040 = vrot.lane.b32.xlu0 %v2930, 21
    %v5041 = vpop.permute.xlu0 %5040
    %5042 = vrot.lane.b32.xlu0 %v2931, 21
    %v5043 = vpop.permute.xlu0 %5042
    %5172 = vrot.lane.b32.xlu0 %v3252, 24
    %v5173 = vpop.permute.xlu0 %5172
    %5174 = vrot.lane.b32.xlu0 %v3253, 24
    %v5175 = vpop.permute.xlu0 %5174
    %5176 = vrot.lane.b32.xlu0 %v3254, 24
    %v5177 = vpop.permute.xlu0 %5176
    %5178 = vrot.lane.b32.xlu0 %v3255, 24
    %v5179 = vpop.permute.xlu0 %5178
    %5180 = vrot.lane.b32.xlu0 %v3256, 24
    %v5181 = vpop.permute.xlu0 %5180
    %5182 = vrot.lane.b32.xlu0 %v3257, 24
    %v5183 = vpop.permute.xlu0 %5182
    %5184 = vrot.lane.b32.xlu0 %v3258, 24
    %v5185 = vpop.permute.xlu0 %5184
    %5186 = vrot.lane.b32.xlu0 %v3259, 24
    %v5187 = vpop.permute.xlu0 %5186
    %5188 = vrot.lane.b32.xlu0 %v3260, 24
    %v5189 = vpop.permute.xlu0 %5188
    %5190 = vrot.lane.b32.xlu0 %v3261, 24
    %v5191 = vpop.permute.xlu0 %5190
    %5192 = vrot.lane.b32.xlu0 %v3262, 24
    %v5193 = vpop.permute.xlu0 %5192
    %5194 = vrot.lane.b32.xlu0 %v3263, 24
    %v5195 = vpop.permute.xlu0 %5194
    %5196 = vrot.lane.b32.xlu0 %v3264, 24
    %v5197 = vpop.permute.xlu0 %5196
    %5198 = vrot.lane.b32.xlu0 %v3265, 24
    %v5199 = vpop.permute.xlu0 %5198
    %5200 = vrot.lane.b32.xlu0 %v3266, 24
    %v5201 = vpop.permute.xlu0 %5200
    %5202 = vrot.lane.b32.xlu0 %v3267, 24
    %v5203 = vpop.permute.xlu0 %5202
    %5204 = vrot.lane.b32.xlu0 %v3268, 24
    %v5205 = vpop.permute.xlu0 %5204
    %5206 = vrot.lane.b32.xlu0 %v3269, 24
    %v5207 = vpop.permute.xlu0 %5206
    %5208 = vrot.lane.b32.xlu0 %v3270, 24
    %v5209 = vpop.permute.xlu0 %5208
    %5210 = vrot.lane.b32.xlu0 %v3271, 24
    %v5211 = vpop.permute.xlu0 %5210
    %5212 = vrot.lane.b32.xlu0 %v3272, 24
    %v5213 = vpop.permute.xlu0 %5212
    %5214 = vrot.lane.b32.xlu0 %v3273, 24
    %v5215 = vpop.permute.xlu0 %5214
    %5216 = vrot.lane.b32.xlu0 %v3274, 24
    %v5217 = vpop.permute.xlu0 %5216
    %5218 = vrot.lane.b32.xlu0 %v3275, 24
    %v5219 = vpop.permute.xlu0 %5218
    %5220 = vrot.lane.b32.xlu0 %v3276, 24
    %v5221 = vpop.permute.xlu0 %5220
    %5222 = vrot.lane.b32.xlu0 %v3277, 24
    %v5223 = vpop.permute.xlu0 %5222
    %5224 = vrot.lane.b32.xlu0 %v3278, 24
    %v5225 = vpop.permute.xlu0 %5224
    %5226 = vrot.lane.b32.xlu0 %v3279, 24
    %v5227 = vpop.permute.xlu0 %5226
    %5228 = vrot.lane.b32.xlu0 %v3280, 24
    %v5229 = vpop.permute.xlu0 %5228
    %5230 = vrot.lane.b32.xlu0 %v3281, 24
    %v5231 = vpop.permute.xlu0 %5230
    %5232 = vrot.lane.b32.xlu0 %v3282, 24
    %v5233 = vpop.permute.xlu0 %5232
    %5234 = vrot.lane.b32.xlu0 %v3283, 24
    %v5235 = vpop.permute.xlu0 %5234
    %5236 = vrot.lane.b32.xlu0 %v3284, 24
    %v5237 = vpop.permute.xlu0 %5236
    %5238 = vrot.lane.b32.xlu0 %v3285, 24
    %v5239 = vpop.permute.xlu0 %5238
    %5240 = vrot.lane.b32.xlu0 %v3286, 24
    %v5241 = vpop.permute.xlu0 %5240
    %5242 = vrot.lane.b32.xlu0 %v3287, 24
    %v5243 = vpop.permute.xlu0 %5242
    %5244 = vrot.lane.b32.xlu0 %v3288, 24
    %v5245 = vpop.permute.xlu0 %5244
    %5246 = vrot.lane.b32.xlu0 %v3289, 24
    %v5247 = vpop.permute.xlu0 %5246
    %5248 = vrot.lane.b32.xlu0 %v3290, 24
    %v5249 = vpop.permute.xlu0 %5248
    %5250 = vrot.lane.b32.xlu0 %v3291, 24
    %v5251 = vpop.permute.xlu0 %5250
    %5252 = vrot.lane.b32.xlu0 %v3292, 24
    %v5253 = vpop.permute.xlu0 %5252
    %5254 = vrot.lane.b32.xlu0 %v3293, 24
    %v5255 = vpop.permute.xlu0 %5254
    %5256 = vrot.lane.b32.xlu0 %v3294, 24
    %v5257 = vpop.permute.xlu0 %5256
    %5258 = vrot.lane.b32.xlu0 %v3295, 24
    %v5259 = vpop.permute.xlu0 %5258
    %5260 = vrot.lane.b32.xlu0 %v3296, 24
    %v5261 = vpop.permute.xlu0 %5260
    %5262 = vrot.lane.b32.xlu0 %v3297, 24
    %v5263 = vpop.permute.xlu0 %5262
    %5264 = vrot.lane.b32.xlu0 %v3298, 24
    %v5265 = vpop.permute.xlu0 %5264
    %5266 = vrot.lane.b32.xlu0 %v3299, 24
    %v5267 = vpop.permute.xlu0 %5266
    %5268 = vrot.lane.b32.xlu0 %v3300, 24
    %v5269 = vpop.permute.xlu0 %5268
    %5270 = vrot.lane.b32.xlu0 %v3301, 24
    %v5271 = vpop.permute.xlu0 %5270
    %5272 = vrot.lane.b32.xlu0 %v3302, 24
    %v5273 = vpop.permute.xlu0 %5272
    %5274 = vrot.lane.b32.xlu0 %v3303, 24
    %v5275 = vpop.permute.xlu0 %5274
    %5276 = vrot.lane.b32.xlu0 %v3304, 24
    %v5277 = vpop.permute.xlu0 %5276
    %5278 = vrot.lane.b32.xlu0 %v3305, 24
    %v5279 = vpop.permute.xlu0 %5278
    %5280 = vrot.lane.b32.xlu0 %v3306, 24
    %v5281 = vpop.permute.xlu0 %5280
    %5282 = vrot.lane.b32.xlu0 %v3307, 24
    %v5283 = vpop.permute.xlu0 %5282
    %5284 = vrot.lane.b32.xlu0 %v3308, 24
    %v5285 = vpop.permute.xlu0 %5284
    %5286 = vrot.lane.b32.xlu0 %v3309, 24
    %v5287 = vpop.permute.xlu0 %5286
    %5288 = vrot.lane.b32.xlu0 %v3310, 24
    %v5289 = vpop.permute.xlu0 %5288
    %5290 = vrot.lane.b32.xlu0 %v3311, 24
    %v5291 = vpop.permute.xlu0 %5290
    %5292 = vrot.lane.b32.xlu0 %v3312, 24
    %v5293 = vpop.permute.xlu0 %5292
    %5294 = vrot.lane.b32.xlu0 %v3313, 24
    %v5295 = vpop.permute.xlu0 %5294
    %5296 = vrot.lane.b32.xlu0 %v3314, 24
    %v5297 = vpop.permute.xlu0 %5296
    %5298 = vrot.lane.b32.xlu0 %v3315, 24
    %v5299 = vpop.permute.xlu0 %5298
    %vm5364 = vcmask 23552
    %v5365 = vsel %vm5364, %v500, %v3381
    %v5366 = vsel %vm5364, %v501, %v3383
    %v5367 = vsel %vm5364, %v502, %v3385
    %v5368 = vsel %vm5364, %v503, %v3387
    %v5369 = vsel %vm5364, %v504, %v3389
    %v5370 = vsel %vm5364, %v505, %v3391
    %v5371 = vsel %vm5364, %v506, %v3393
    %v5372 = vsel %vm5364, %v507, %v3395
    %v5373 = vsel %vm5364, %v508, %v3397
    %v5374 = vsel %vm5364, %v509, %v3399
    %v5375 = vsel %vm5364, %v510, %v3401
    %v5376 = vsel %vm5364, %v511, %v3403
    %v5377 = vsel %vm5364, %v512, %v3405
    %v5378 = vsel %vm5364, %v513, %v3407
    %v5379 = vsel %vm5364, %v514, %v3409
    %v5380 = vsel %vm5364, %v515, %v3411
    %v5381 = vsel %vm5364, %v516, %v3413
    %v5382 = vsel %vm5364, %v517, %v3415
    %v5383 = vsel %vm5364, %v518, %v3417
    %v5384 = vsel %vm5364, %v519, %v3419
    %v5385 = vsel %vm5364, %v520, %v3421
    %v5386 = vsel %vm5364, %v521, %v3423
    %v5387 = vsel %vm5364, %v522, %v3425
    %v5388 = vsel %vm5364, %v523, %v3427
    %v5389 = vsel %vm5364, %v524, %v3429
    %v5390 = vsel %vm5364, %v525, %v3431
    %v5391 = vsel %vm5364, %v526, %v3433
    %v5392 = vsel %vm5364, %v527, %v3435
    %v5393 = vsel %vm5364, %v528, %v3437
    %v5394 = vsel %vm5364, %v529, %v3439
    %v5395 = vsel %vm5364, %v530, %v3441
    %v5396 = vsel %vm5364, %v531, %v3443
    %v5397 = vsel %vm5364, %v532, %v3445
    %v5398 = vsel %vm5364, %v533, %v3447
    %v5399 = vsel %vm5364, %v534, %v3449
    %v5400 = vsel %vm5364, %v535, %v3451
    %v5401 = vsel %vm5364, %v536, %v3453
    %v5402 = vsel %vm5364, %v537, %v3455
    %v5403 = vsel %vm5364, %v538, %v3457
    %v5404 = vsel %vm5364, %v539, %v3459
    %v5405 = vsel %vm5364, %v540, %v3461
    %v5406 = vsel %vm5364, %v541, %v3463
    %v5407 = vsel %vm5364, %v542, %v3465
    %v5408 = vsel %vm5364, %v543, %v3467
    %v5409 = vsel %vm5364, %v544, %v3469
    %v5410 = vsel %vm5364, %v545, %v3471
    %v5411 = vsel %vm5364, %v546, %v3473
    %v5412 = vsel %vm5364, %v547, %v3475
    %v5413 = vsel %vm5364, %v548, %v3477
    %v5414 = vsel %vm5364, %v549, %v3479
    %v5415 = vsel %vm5364, %v550, %v3481
    %v5416 = vsel %vm5364, %v551, %v3483
    %v5417 = vsel %vm5364, %v552, %v3485
    %v5418 = vsel %vm5364, %v553, %v3487
    %v5419 = vsel %vm5364, %v554, %v3489
    %v5420 = vsel %vm5364, %v555, %v3491
    %v5421 = vsel %vm5364, %v556, %v3493
    %v5422 = vsel %vm5364, %v557, %v3495
    %v5423 = vsel %vm5364, %v558, %v3497
    %v5424 = vsel %vm5364, %v559, %v3499
    %v5425 = vsel %vm5364, %v560, %v3501
    %v5426 = vsel %vm5364, %v561, %v3503
    %v5427 = vsel %vm5364, %v562, %v3505
    %v5428 = vsel %vm5364, %v563, %v3507
    %vm5429 = vcmask 48128
    %v5430 = vsel %vm5429, %v5365, %v3637
    %v5431 = vsel %vm5429, %v5366, %v3639
    %v5432 = vsel %vm5429, %v5367, %v3641
    %v5433 = vsel %vm5429, %v5368, %v3643
    %v5434 = vsel %vm5429, %v5369, %v3645
    %v5435 = vsel %vm5429, %v5370, %v3647
    %v5436 = vsel %vm5429, %v5371, %v3649
    %v5437 = vsel %vm5429, %v5372, %v3651
    %v5438 = vsel %vm5429, %v5373, %v3653
    %v5439 = vsel %vm5429, %v5374, %v3655
    %v5440 = vsel %vm5429, %v5375, %v3657
    %v5441 = vsel %vm5429, %v5376, %v3659
    %v5442 = vsel %vm5429, %v5377, %v3661
    %v5443 = vsel %vm5429, %v5378, %v3663
    %v5444 = vsel %vm5429, %v5379, %v3665
    %v5445 = vsel %vm5429, %v5380, %v3667
    %v5446 = vsel %vm5429, %v5381, %v3669
    %v5447 = vsel %vm5429, %v5382, %v3671
    %v5448 = vsel %vm5429, %v5383, %v3673
    %v5449 = vsel %vm5429, %v5384, %v3675
    %v5450 = vsel %vm5429, %v5385, %v3677
    %v5451 = vsel %vm5429, %v5386, %v3679
    %v5452 = vsel %vm5429, %v5387, %v3681
    %v5453 = vsel %vm5429, %v5388, %v3683
    %v5454 = vsel %vm5429, %v5389, %v3685
    %v5455 = vsel %vm5429, %v5390, %v3687
    %v5456 = vsel %vm5429, %v5391, %v3689
    %v5457 = vsel %vm5429, %v5392, %v3691
    %v5458 = vsel %vm5429, %v5393, %v3693
    %v5459 = vsel %vm5429, %v5394, %v3695
    %v5460 = vsel %vm5429, %v5395, %v3697
    %v5461 = vsel %vm5429, %v5396, %v3699
    %v5462 = vsel %vm5429, %v5397, %v3701
    %v5463 = vsel %vm5429, %v5398, %v3703
    %v5464 = vsel %vm5429, %v5399, %v3705
    %v5465 = vsel %vm5429, %v5400, %v3707
    %v5466 = vsel %vm5429, %v5401, %v3709
    %v5467 = vsel %vm5429, %v5402, %v3711
    %v5468 = vsel %vm5429, %v5403, %v3713
    %v5469 = vsel %vm5429, %v5404, %v3715
    %v5470 = vsel %vm5429, %v5405, %v3717
    %v5471 = vsel %vm5429, %v5406, %v3719
    %v5472 = vsel %vm5429, %v5407, %v3721
    %v5473 = vsel %vm5429, %v5408, %v3723
    %v5474 = vsel %vm5429, %v5409, %v3725
    %v5475 = vsel %vm5429, %v5410, %v3727
    %v5476 = vsel %vm5429, %v5411, %v3729
    %v5477 = vsel %vm5429, %v5412, %v3731
    %v5478 = vsel %vm5429, %v5413, %v3733
    %v5479 = vsel %vm5429, %v5414, %v3735
    %v5480 = vsel %vm5429, %v5415, %v3737
    %v5481 = vsel %vm5429, %v5416, %v3739
    %v5482 = vsel %vm5429, %v5417, %v3741
    %v5483 = vsel %vm5429, %v5418, %v3743
    %v5484 = vsel %vm5429, %v5419, %v3745
    %v5485 = vsel %vm5429, %v5420, %v3747
    %v5486 = vsel %vm5429, %v5421, %v3749
    %v5487 = vsel %vm5429, %v5422, %v3751
    %v5488 = vsel %vm5429, %v5423, %v3753
    %v5489 = vsel %vm5429, %v5424, %v3755
    %v5490 = vsel %vm5429, %v5425, %v3757
    %v5491 = vsel %vm5429, %v5426, %v3759
    %v5492 = vsel %vm5429, %v5427, %v3761
    %v5493 = vsel %vm5429, %v5428, %v3763
    %vm5494 = vcmask 72704
    %v5495 = vsel %vm5494, %v5430, %v3893
    %v5496 = vsel %vm5494, %v5431, %v3895
    %v5497 = vsel %vm5494, %v5432, %v3897
    %v5498 = vsel %vm5494, %v5433, %v3899
    %v5499 = vsel %vm5494, %v5434, %v3901
    %v5500 = vsel %vm5494, %v5435, %v3903
    %v5501 = vsel %vm5494, %v5436, %v3905
    %v5502 = vsel %vm5494, %v5437, %v3907
    %v5503 = vsel %vm5494, %v5438, %v3909
    %v5504 = vsel %vm5494, %v5439, %v3911
    %v5505 = vsel %vm5494, %v5440, %v3913
    %v5506 = vsel %vm5494, %v5441, %v3915
    %v5507 = vsel %vm5494, %v5442, %v3917
    %v5508 = vsel %vm5494, %v5443, %v3919
    %v5509 = vsel %vm5494, %v5444, %v3921
    %v5510 = vsel %vm5494, %v5445, %v3923
    %v5511 = vsel %vm5494, %v5446, %v3925
    %v5512 = vsel %vm5494, %v5447, %v3927
    %v5513 = vsel %vm5494, %v5448, %v3929
    %v5514 = vsel %vm5494, %v5449, %v3931
    %v5515 = vsel %vm5494, %v5450, %v3933
    %v5516 = vsel %vm5494, %v5451, %v3935
    %v5517 = vsel %vm5494, %v5452, %v3937
    %v5518 = vsel %vm5494, %v5453, %v3939
    %v5519 = vsel %vm5494, %v5454, %v3941
    %v5520 = vsel %vm5494, %v5455, %v3943
    %v5521 = vsel %vm5494, %v5456, %v3945
    %v5522 = vsel %vm5494, %v5457, %v3947
    %v5523 = vsel %vm5494, %v5458, %v3949
    %v5524 = vsel %vm5494, %v5459, %v3951
    %v5525 = vsel %vm5494, %v5460, %v3953
    %v5526 = vsel %vm5494, %v5461, %v3955
    %v5527 = vsel %vm5494, %v5462, %v3957
    %v5528 = vsel %vm5494, %v5463, %v3959
    %v5529 = vsel %vm5494, %v5464, %v3961
    %v5530 = vsel %vm5494, %v5465, %v3963
    %v5531 = vsel %vm5494, %v5466, %v3965
    %v5532 = vsel %vm5494, %v5467, %v3967
    %v5533 = vsel %vm5494, %v5468, %v3969
    %v5534 = vsel %vm5494, %v5469, %v3971
    %v5535 = vsel %vm5494, %v5470, %v3973
    %v5536 = vsel %vm5494, %v5471, %v3975
    %v5537 = vsel %vm5494, %v5472, %v3977
    %v5538 = vsel %vm5494, %v5473, %v3979
    %v5539 = vsel %vm5494, %v5474, %v3981
    %v5540 = vsel %vm5494, %v5475, %v3983
    %v5541 = vsel %vm5494, %v5476, %v3985
    %v5542 = vsel %vm5494, %v5477, %v3987
    %v5543 = vsel %vm5494, %v5478, %v3989
    %v5544 = vsel %vm5494, %v5479, %v3991
    %v5545 = vsel %vm5494, %v5480, %v3993
    %v5546 = vsel %vm5494, %v5481, %v3995
    %v5547 = vsel %vm5494, %v5482, %v3997
    %v5548 = vsel %vm5494, %v5483, %v3999
    %v5549 = vsel %vm5494, %v5484, %v4001
    %v5550 = vsel %vm5494, %v5485, %v4003
    %v5551 = vsel %vm5494, %v5486, %v4005
    %v5552 = vsel %vm5494, %v5487, %v4007
    %v5553 = vsel %vm5494, %v5488, %v4009
    %v5554 = vsel %vm5494, %v5489, %v4011
    %v5555 = vsel %vm5494, %v5490, %v4013
    %v5556 = vsel %vm5494, %v5491, %v4015
    %v5557 = vsel %vm5494, %v5492, %v4017
    %v5558 = vsel %vm5494, %v5493, %v4019
    %vm5559 = vcmask 97280
    %v5560 = vsel %vm5559, %v5495, %v4149
    %v5561 = vsel %vm5559, %v5496, %v4151
    %v5562 = vsel %vm5559, %v5497, %v4153
    %v5563 = vsel %vm5559, %v5498, %v4155
    %v5564 = vsel %vm5559, %v5499, %v4157
    %v5565 = vsel %vm5559, %v5500, %v4159
    %v5566 = vsel %vm5559, %v5501, %v4161
    %v5567 = vsel %vm5559, %v5502, %v4163
    %v5568 = vsel %vm5559, %v5503, %v4165
    %v5569 = vsel %vm5559, %v5504, %v4167
    %v5570 = vsel %vm5559, %v5505, %v4169
    %v5571 = vsel %vm5559, %v5506, %v4171
    %v5572 = vsel %vm5559, %v5507, %v4173
    %v5573 = vsel %vm5559, %v5508, %v4175
    %v5574 = vsel %vm5559, %v5509, %v4177
    %v5575 = vsel %vm5559, %v5510, %v4179
    %v5576 = vsel %vm5559, %v5511, %v4181
    %v5577 = vsel %vm5559, %v5512, %v4183
    %v5578 = vsel %vm5559, %v5513, %v4185
    %v5579 = vsel %vm5559, %v5514, %v4187
    %v5580 = vsel %vm5559, %v5515, %v4189
    %v5581 = vsel %vm5559, %v5516, %v4191
    %v5582 = vsel %vm5559, %v5517, %v4193
    %v5583 = vsel %vm5559, %v5518, %v4195
    %v5584 = vsel %vm5559, %v5519, %v4197
    %v5585 = vsel %vm5559, %v5520, %v4199
    %v5586 = vsel %vm5559, %v5521, %v4201
    %v5587 = vsel %vm5559, %v5522, %v4203
    %v5588 = vsel %vm5559, %v5523, %v4205
    %v5589 = vsel %vm5559, %v5524, %v4207
    %v5590 = vsel %vm5559, %v5525, %v4209
    %v5591 = vsel %vm5559, %v5526, %v4211
    %v5592 = vsel %vm5559, %v5527, %v4213
    %v5593 = vsel %vm5559, %v5528, %v4215
    %v5594 = vsel %vm5559, %v5529, %v4217
    %v5595 = vsel %vm5559, %v5530, %v4219
    %v5596 = vsel %vm5559, %v5531, %v4221
    %v5597 = vsel %vm5559, %v5532, %v4223
    %v5598 = vsel %vm5559, %v5533, %v4225
    %v5599 = vsel %vm5559, %v5534, %v4227
    %v5600 = vsel %vm5559, %v5535, %v4229
    %v5601 = vsel %vm5559, %v5536, %v4231
    %v5602 = vsel %vm5559, %v5537, %v4233
    %v5603 = vsel %vm5559, %v5538, %v4235
    %v5604 = vsel %vm5559, %v5539, %v4237
    %v5605 = vsel %vm5559, %v5540, %v4239
    %v5606 = vsel %vm5559, %v5541, %v4241
    %v5607 = vsel %vm5559, %v5542, %v4243
    %v5608 = vsel %vm5559, %v5543, %v4245
    %v5609 = vsel %vm5559, %v5544, %v4247
    %v5610 = vsel %vm5559, %v5545, %v4249
    %v5611 = vsel %vm5559, %v5546, %v4251
    %v5612 = vsel %vm5559, %v5547, %v4253
    %v5613 = vsel %vm5559, %v5548, %v4255
    %v5614 = vsel %vm5559, %v5549, %v4257
    %v5615 = vsel %vm5559, %v5550, %v4259
    %v5616 = vsel %vm5559, %v5551, %v4261
    %v5617 = vsel %vm5559, %v5552, %v4263
    %v5618 = vsel %vm5559, %v5553, %v4265
    %v5619 = vsel %vm5559, %v5554, %v4267
    %v5620 = vsel %vm5559, %v5555, %v4269
    %v5621 = vsel %vm5559, %v5556, %v4271
    %v5622 = vsel %vm5559, %v5557, %v4273
    %v5623 = vsel %vm5559, %v5558, %v4275
    %vm5624 = vcmask 121856
    %v5625 = vsel %vm5624, %v5560, %v4405
    %v5626 = vsel %vm5624, %v5561, %v4407
    %v5627 = vsel %vm5624, %v5562, %v4409
    %v5628 = vsel %vm5624, %v5563, %v4411
    %v5629 = vsel %vm5624, %v5564, %v4413
    %v5630 = vsel %vm5624, %v5565, %v4415
    %v5631 = vsel %vm5624, %v5566, %v4417
    %v5632 = vsel %vm5624, %v5567, %v4419
    %v5633 = vsel %vm5624, %v5568, %v4421
    %v5634 = vsel %vm5624, %v5569, %v4423
    %v5635 = vsel %vm5624, %v5570, %v4425
    %v5636 = vsel %vm5624, %v5571, %v4427
    %v5637 = vsel %vm5624, %v5572, %v4429
    %v5638 = vsel %vm5624, %v5573, %v4431
    %v5639 = vsel %vm5624, %v5574, %v4433
    %v5640 = vsel %vm5624, %v5575, %v4435
    %v5641 = vsel %vm5624, %v5576, %v4437
    %v5642 = vsel %vm5624, %v5577, %v4439
    %v5643 = vsel %vm5624, %v5578, %v4441
    %v5644 = vsel %vm5624, %v5579, %v4443
    %v5645 = vsel %vm5624, %v5580, %v4445
    %v5646 = vsel %vm5624, %v5581, %v4447
    %v5647 = vsel %vm5624, %v5582, %v4449
    %v5648 = vsel %vm5624, %v5583, %v4451
    %v5649 = vsel %vm5624, %v5584, %v4453
    %v5650 = vsel %vm5624, %v5585, %v4455
    %v5651 = vsel %vm5624, %v5586, %v4457
    %v5652 = vsel %vm5624, %v5587, %v4459
    %v5653 = vsel %vm5624, %v5588, %v4461
    %v5654 = vsel %vm5624, %v5589, %v4463
    %v5655 = vsel %vm5624, %v5590, %v4465
    %v5656 = vsel %vm5624, %v5591, %v4467
    %v5657 = vsel %vm5624, %v5592, %v4469
    %v5658 = vsel %vm5624, %v5593, %v4471
    %v5659 = vsel %vm5624, %v5594, %v4473
    %v5660 = vsel %vm5624, %v5595, %v4475
    %v5661 = vsel %vm5624, %v5596, %v4477
    %v5662 = vsel %vm5624, %v5597, %v4479
    %v5663 = vsel %vm5624, %v5598, %v4481
    %v5664 = vsel %vm5624, %v5599, %v4483
    %v5665 = vsel %vm5624, %v5600, %v4485
    %v5666 = vsel %vm5624, %v5601, %v4487
    %v5667 = vsel %vm5624, %v5602, %v4489
    %v5668 = vsel %vm5624, %v5603, %v4491
    %v5669 = vsel %vm5624, %v5604, %v4493
    %v5670 = vsel %vm5624, %v5605, %v4495
    %v5671 = vsel %vm5624, %v5606, %v4497
    %v5672 = vsel %vm5624, %v5607, %v4499
    %v5673 = vsel %vm5624, %v5608, %v4501
    %v5674 = vsel %vm5624, %v5609, %v4503
    %v5675 = vsel %vm5624, %v5610, %v4505
    %v5676 = vsel %vm5624, %v5611, %v4507
    %v5677 = vsel %vm5624, %v5612, %v4509
    %v5678 = vsel %vm5624, %v5613, %v4511
    %v5679 = vsel %vm5624, %v5614, %v4513
    %v5680 = vsel %vm5624, %v5615, %v4515
    %v5681 = vsel %vm5624, %v5616, %v4517
    %v5682 = vsel %vm5624, %v5617, %v4519
    %v5683 = vsel %vm5624, %v5618, %v4521
    %v5684 = vsel %vm5624, %v5619, %v4523
    %v5685 = vsel %vm5624, %v5620, %v4525
    %v5686 = vsel %vm5624, %v5621, %v4527
    %v5687 = vsel %vm5624, %v5622, %v4529
    %v5688 = vsel %vm5624, %v5623, %v4531
    %vm5689 = vcmask 146432
    %v5690 = vsel %vm5689, %v5625, %v4661
    %v5691 = vsel %vm5689, %v5626, %v4663
    %v5692 = vsel %vm5689, %v5627, %v4665
    %v5693 = vsel %vm5689, %v5628, %v4667
    %v5694 = vsel %vm5689, %v5629, %v4669
    %v5695 = vsel %vm5689, %v5630, %v4671
    %v5696 = vsel %vm5689, %v5631, %v4673
    %v5697 = vsel %vm5689, %v5632, %v4675
    %v5698 = vsel %vm5689, %v5633, %v4677
    %v5699 = vsel %vm5689, %v5634, %v4679
    %v5700 = vsel %vm5689, %v5635, %v4681
    %v5701 = vsel %vm5689, %v5636, %v4683
    %v5702 = vsel %vm5689, %v5637, %v4685
    %v5703 = vsel %vm5689, %v5638, %v4687
    %v5704 = vsel %vm5689, %v5639, %v4689
    %v5705 = vsel %vm5689, %v5640, %v4691
    %v5706 = vsel %vm5689, %v5641, %v4693
    %v5707 = vsel %vm5689, %v5642, %v4695
    %v5708 = vsel %vm5689, %v5643, %v4697
    %v5709 = vsel %vm5689, %v5644, %v4699
    %v5710 = vsel %vm5689, %v5645, %v4701
    %v5711 = vsel %vm5689, %v5646, %v4703
    %v5712 = vsel %vm5689, %v5647, %v4705
    %v5713 = vsel %vm5689, %v5648, %v4707
    %v5714 = vsel %vm5689, %v5649, %v4709
    %v5715 = vsel %vm5689, %v5650, %v4711
    %v5716 = vsel %vm5689, %v5651, %v4713
    %v5717 = vsel %vm5689, %v5652, %v4715
    %v5718 = vsel %vm5689, %v5653, %v4717
    %v5719 = vsel %vm5689, %v5654, %v4719
    %v5720 = vsel %vm5689, %v5655, %v4721
    %v5721 = vsel %vm5689, %v5656, %v4723
    %v5722 = vsel %vm5689, %v5657, %v4725
    %v5723 = vsel %vm5689, %v5658, %v4727
    %v5724 = vsel %vm5689, %v5659, %v4729
    %v5725 = vsel %vm5689, %v5660, %v4731
    %v5726 = vsel %vm5689, %v5661, %v4733
    %v5727 = vsel %vm5689, %v5662, %v4735
    %v5728 = vsel %vm5689, %v5663, %v4737
    %v5729 = vsel %vm5689, %v5664, %v4739
    %v5730 = vsel %vm5689, %v5665, %v4741
    %v5731 = vsel %vm5689, %v5666, %v4743
    %v5732 = vsel %vm5689, %v5667, %v4745
    %v5733 = vsel %vm5689, %v5668, %v4747
    %v5734 = vsel %vm5689, %v5669, %v4749
    %v5735 = vsel %vm5689, %v5670, %v4751
    %v5736 = vsel %vm5689, %v5671, %v4753
    %v5737 = vsel %vm5689, %v5672, %v4755
    %v5738 = vsel %vm5689, %v5673, %v4757
    %v5739 = vsel %vm5689, %v5674, %v4759
    %v5740 = vsel %vm5689, %v5675, %v4761
    %v5741 = vsel %vm5689, %v5676, %v4763
    %v5742 = vsel %vm5689, %v5677, %v4765
    %v5743 = vsel %vm5689, %v5678, %v4767
    %v5744 = vsel %vm5689, %v5679, %v4769
    %v5745 = vsel %vm5689, %v5680, %v4771
    %v5746 = vsel %vm5689, %v5681, %v4773
    %v5747 = vsel %vm5689, %v5682, %v4775
    %v5748 = vsel %vm5689, %v5683, %v4777
    %v5749 = vsel %vm5689, %v5684, %v4779
    %v5750 = vsel %vm5689, %v5685, %v4781
    %v5751 = vsel %vm5689, %v5686, %v4783
    %v5752 = vsel %vm5689, %v5687, %v4785
    %v5753 = vsel %vm5689, %v5688, %v4787
    %vm5754 = vcmask 171008
    %v5755 = vsel %vm5754, %v5690, %v4917
    %v5756 = vsel %vm5754, %v5691, %v4919
    %v5757 = vsel %vm5754, %v5692, %v4921
    %v5758 = vsel %vm5754, %v5693, %v4923
    %v5759 = vsel %vm5754, %v5694, %v4925
    %v5760 = vsel %vm5754, %v5695, %v4927
    %v5761 = vsel %vm5754, %v5696, %v4929
    %v5762 = vsel %vm5754, %v5697, %v4931
    %v5763 = vsel %vm5754, %v5698, %v4933
    %v5764 = vsel %vm5754, %v5699, %v4935
    %v5765 = vsel %vm5754, %v5700, %v4937
    %v5766 = vsel %vm5754, %v5701, %v4939
    %v5767 = vsel %vm5754, %v5702, %v4941
    %v5768 = vsel %vm5754, %v5703, %v4943
    %v5769 = vsel %vm5754, %v5704, %v4945
    %v5770 = vsel %vm5754, %v5705, %v4947
    %v5771 = vsel %vm5754, %v5706, %v4949
    %v5772 = vsel %vm5754, %v5707, %v4951
    %v5773 = vsel %vm5754, %v5708, %v4953
    %v5774 = vsel %vm5754, %v5709, %v4955
    %v5775 = vsel %vm5754, %v5710, %v4957
    %v5776 = vsel %vm5754, %v5711, %v4959
    %v5777 = vsel %vm5754, %v5712, %v4961
    %v5778 = vsel %vm5754, %v5713, %v4963
    %v5779 = vsel %vm5754, %v5714, %v4965
    %v5780 = vsel %vm5754, %v5715, %v4967
    %v5781 = vsel %vm5754, %v5716, %v4969
    %v5782 = vsel %vm5754, %v5717, %v4971
    %v5783 = vsel %vm5754, %v5718, %v4973
    %v5784 = vsel %vm5754, %v5719, %v4975
    %v5785 = vsel %vm5754, %v5720, %v4977
    %v5786 = vsel %vm5754, %v5721, %v4979
    %v5787 = vsel %vm5754, %v5722, %v4981
    %v5788 = vsel %vm5754, %v5723, %v4983
    %v5789 = vsel %vm5754, %v5724, %v4985
    %v5790 = vsel %vm5754, %v5725, %v4987
    %v5791 = vsel %vm5754, %v5726, %v4989
    %v5792 = vsel %vm5754, %v5727, %v4991
    %v5793 = vsel %vm5754, %v5728, %v4993
    %v5794 = vsel %vm5754, %v5729, %v4995
    %v5795 = vsel %vm5754, %v5730, %v4997
    %v5796 = vsel %vm5754, %v5731, %v4999
    %v5797 = vsel %vm5754, %v5732, %v5001
    %v5798 = vsel %vm5754, %v5733, %v5003
    %v5799 = vsel %vm5754, %v5734, %v5005
    %v5800 = vsel %vm5754, %v5735, %v5007
    %v5801 = vsel %vm5754, %v5736, %v5009
    %v5802 = vsel %vm5754, %v5737, %v5011
    %v5803 = vsel %vm5754, %v5738, %v5013
    %v5804 = vsel %vm5754, %v5739, %v5015
    %v5805 = vsel %vm5754, %v5740, %v5017
    %v5806 = vsel %vm5754, %v5741, %v5019
    %v5807 = vsel %vm5754, %v5742, %v5021
    %v5808 = vsel %vm5754, %v5743, %v5023
    %v5809 = vsel %vm5754, %v5744, %v5025
    %v5810 = vsel %vm5754, %v5745, %v5027
    %v5811 = vsel %vm5754, %v5746, %v5029
    %v5812 = vsel %vm5754, %v5747, %v5031
    %v5813 = vsel %vm5754, %v5748, %v5033
    %v5814 = vsel %vm5754, %v5749, %v5035
    %v5815 = vsel %vm5754, %v5750, %v5037
    %v5816 = vsel %vm5754, %v5751, %v5039
    %v5817 = vsel %vm5754, %v5752, %v5041
    %v5818 = vsel %vm5754, %v5753, %v5043
    %vm5819 = vcmask 195584
    %v5820 = vsel %vm5819, %v5755, %v5173
    %v5821 = vsel %vm5819, %v5756, %v5175
    %v5822 = vsel %vm5819, %v5757, %v5177
    %v5823 = vsel %vm5819, %v5758, %v5179
    %v5824 = vsel %vm5819, %v5759, %v5181
    %v5825 = vsel %vm5819, %v5760, %v5183
    %v5826 = vsel %vm5819, %v5761, %v5185
    %v5827 = vsel %vm5819, %v5762, %v5187
    %v5828 = vsel %vm5819, %v5763, %v5189
    %v5829 = vsel %vm5819, %v5764, %v5191
    %v5830 = vsel %vm5819, %v5765, %v5193
    %v5831 = vsel %vm5819, %v5766, %v5195
    %v5832 = vsel %vm5819, %v5767, %v5197
    %v5833 = vsel %vm5819, %v5768, %v5199
    %v5834 = vsel %vm5819, %v5769, %v5201
    %v5835 = vsel %vm5819, %v5770, %v5203
    %v5836 = vsel %vm5819, %v5771, %v5205
    %v5837 = vsel %vm5819, %v5772, %v5207
    %v5838 = vsel %vm5819, %v5773, %v5209
    %v5839 = vsel %vm5819, %v5774, %v5211
    %v5840 = vsel %vm5819, %v5775, %v5213
    %v5841 = vsel %vm5819, %v5776, %v5215
    %v5842 = vsel %vm5819, %v5777, %v5217
    %v5843 = vsel %vm5819, %v5778, %v5219
    %v5844 = vsel %vm5819, %v5779, %v5221
    %v5845 = vsel %vm5819, %v5780, %v5223
    %v5846 = vsel %vm5819, %v5781, %v5225
    %v5847 = vsel %vm5819, %v5782, %v5227
    %v5848 = vsel %vm5819, %v5783, %v5229
    %v5849 = vsel %vm5819, %v5784, %v5231
    %v5850 = vsel %vm5819, %v5785, %v5233
    %v5851 = vsel %vm5819, %v5786, %v5235
    %v5852 = vsel %vm5819, %v5787, %v5237
    %v5853 = vsel %vm5819, %v5788, %v5239
    %v5854 = vsel %vm5819, %v5789, %v5241
    %v5855 = vsel %vm5819, %v5790, %v5243
    %v5856 = vsel %vm5819, %v5791, %v5245
    %v5857 = vsel %vm5819, %v5792, %v5247
    %v5858 = vsel %vm5819, %v5793, %v5249
    %v5859 = vsel %vm5819, %v5794, %v5251
    %v5860 = vsel %vm5819, %v5795, %v5253
    %v5861 = vsel %vm5819, %v5796, %v5255
    %v5862 = vsel %vm5819, %v5797, %v5257
    %v5863 = vsel %vm5819, %v5798, %v5259
    %v5864 = vsel %vm5819, %v5799, %v5261
    %v5865 = vsel %vm5819, %v5800, %v5263
    %v5866 = vsel %vm5819, %v5801, %v5265
    %v5867 = vsel %vm5819, %v5802, %v5267
    %v5868 = vsel %vm5819, %v5803, %v5269
    %v5869 = vsel %vm5819, %v5804, %v5271
    %v5870 = vsel %vm5819, %v5805, %v5273
    %v5871 = vsel %vm5819, %v5806, %v5275
    %v5872 = vsel %vm5819, %v5807, %v5277
    %v5873 = vsel %vm5819, %v5808, %v5279
    %v5874 = vsel %vm5819, %v5809, %v5281
    %v5875 = vsel %vm5819, %v5810, %v5283
    %v5876 = vsel %vm5819, %v5811, %v5285
    %v5877 = vsel %vm5819, %v5812, %v5287
    %v5878 = vsel %vm5819, %v5813, %v5289
    %v5879 = vsel %vm5819, %v5814, %v5291
    %v5880 = vsel %vm5819, %v5815, %v5293
    %v5881 = vsel %vm5819, %v5816, %v5295
    %v5882 = vsel %vm5819, %v5817, %v5297
    %v5883 = vsel %vm5819, %v5818, %v5299
    %v5884 = vpack.c.bf16 %v5821, %v5820
    %v5885 = vpack.c.bf16 %v5823, %v5822
    %v5886 = vpack.c.bf16 %v5825, %v5824
    %v5887 = vpack.c.bf16 %v5827, %v5826
    %v5888 = vpack.c.bf16 %v5829, %v5828
    %v5889 = vpack.c.bf16 %v5831, %v5830
    %v5890 = vpack.c.bf16 %v5833, %v5832
    %v5891 = vpack.c.bf16 %v5835, %v5834
    %v5892 = vpack.c.bf16 %v5837, %v5836
    %v5893 = vpack.c.bf16 %v5839, %v5838
    %v5894 = vpack.c.bf16 %v5841, %v5840
    %v5895 = vpack.c.bf16 %v5843, %v5842
    %v5896 = vpack.c.bf16 %v5845, %v5844
    %v5897 = vpack.c.bf16 %v5847, %v5846
    %v5898 = vpack.c.bf16 %v5849, %v5848
    %v5899 = vpack.c.bf16 %v5851, %v5850
    %v5900 = vpack.c.bf16 %v5853, %v5852
    %v5901 = vpack.c.bf16 %v5855, %v5854
    %v5902 = vpack.c.bf16 %v5857, %v5856
    %v5903 = vpack.c.bf16 %v5859, %v5858
    %v5904 = vpack.c.bf16 %v5861, %v5860
    %v5905 = vpack.c.bf16 %v5863, %v5862
    %v5906 = vpack.c.bf16 %v5865, %v5864
    %v5907 = vpack.c.bf16 %v5867, %v5866
    %v5908 = vpack.c.bf16 %v5869, %v5868
    %v5909 = vpack.c.bf16 %v5871, %v5870
    %v5910 = vpack.c.bf16 %v5873, %v5872
    %v5911 = vpack.c.bf16 %v5875, %v5874
    %v5912 = vpack.c.bf16 %v5877, %v5876
    %v5913 = vpack.c.bf16 %v5879, %v5878
    %v5914 = vpack.c.bf16 %v5881, %v5880
    %v5915 = vpack.c.bf16 %v5883, %v5882
    %v5916 = vld [vmem:[%s2] sm:$0xf]
    %v5917 = vld [vmem:[%s2 + $0x4] sm:$0xf]
    %v5918 = vld [vmem:[%s2 + $0x8] sm:$0xf]
    %v5919 = vld [vmem:[%s2 + $0xc] sm:$0x3]
    %v5920 = vld [vmem:[%s3] sm:$0x1]
    %v5922 = vlaneseq
    %v5923 = vshrl.u32 %v5922, 7
    %v5924 = vsub.s32 0, %v5923
    %v5925 = vrot.slane %v5920, %v5924
    %v5931 = vunpack.c.l.b16 %v5916
    %v5932 = vunpack.c.l.b16 %v5917
    %v5933 = vunpack.c.l.b16 %v5918
    %v5934 = vunpack.c.l.b16 %v5919
    %v5935 = vpack.c.b16 %v5932, %v5931
    %v5936 = vpack.c.b16 %v5934, %v5933
    %vm5938 = vcmask 220160
    %v5940 = vsel %vm5938, %v5884, 0
    %v5943 = vsel %vm5938, %v5885, 0
    %v5946 = vsel %vm5938, %v5886, 0
    %v5949 = vsel %vm5938, %v5887, 0
    %v5952 = vsel %vm5938, %v5888, 0
    %v5955 = vsel %vm5938, %v5889, 0
    %v5958 = vsel %vm5938, %v5890, 0
    %v5961 = vsel %vm5938, %v5891, 0
    %v5964 = vsel %vm5938, %v5892, 0
    %v5967 = vsel %vm5938, %v5893, 0
    %v5970 = vsel %vm5938, %v5894, 0
    %v5973 = vsel %vm5938, %v5895, 0
    %v5976 = vsel %vm5938, %v5896, 0
    %v5979 = vsel %vm5938, %v5897, 0
    %v5982 = vsel %vm5938, %v5898, 0
    %v5985 = vsel %vm5938, %v5899, 0
    %v5988 = vsel %vm5938, %v5900, 0
    %v5991 = vsel %vm5938, %v5901, 0
    %v5994 = vsel %vm5938, %v5902, 0
    %v5997 = vsel %vm5938, %v5903, 0
    %v6000 = vsel %vm5938, %v5904, 0
    %v6003 = vsel %vm5938, %v5905, 0
    %v6006 = vsel %vm5938, %v5906, 0
    %v6009 = vsel %vm5938, %v5907, 0
    %v6012 = vsel %vm5938, %v5908, 0
    %v6015 = vsel %vm5938, %v5909, 0
    %v6018 = vsel %vm5938, %v5910, 0
    %v6021 = vsel %vm5938, %v5911, 0
    %v6024 = vsel %vm5938, %v5912, 0
    %v6027 = vsel %vm5938, %v5913, 0
    %v6030 = vsel %vm5938, %v5914, 0
    %v6033 = vsel %vm5938, %v5915, 0
    %vm6035 = vcmask 1044480
    %vm6036 = vcmask 1045504
    %v6037 = vsel %vm6035, 4294967295, 65535
    %v6038 = vsel %vm6036, %v6037, 0
    %v6040 = vand.u32 %v5936, %v6038
    %6042 = vmatprep.subr.bf16.mxu0 0
    %6043 = vmatpush1.bf16.msra.mxu0 %v5935
    %6044 = vmatprep.subr.bf16.mxu0 0
    %6045 = vmatpush1.bf16.msra.mxu0 %v6040
    %6046 = vmatprep.subr.bf16.mxu0 0
    %6047 = vmatpush1.bf16.msra.mxu0 0
    %6048 = vmatprep.subr.bf16.mxu0 0
    %6049 = vmatpush1.bf16.msra.mxu0 0
    %6050 = vmatprep.subr.bf16.mxu0 0
    %6051 = vmatpush1.bf16.msra.mxu0 0
    %6052 = vmatprep.subr.bf16.mxu0 0
    %6053 = vmatpush1.bf16.msra.mxu0 0
    %6054 = vmatprep.subr.bf16.mxu0 0
    %6055 = vmatpush1.bf16.msra.mxu0 0
    %6056 = vmatprep.subr.bf16.mxu0 0
    %6057 = vmatpush1.bf16.msra.mxu0 0
    %6058 = vmatprep.subr.bf16.mxu0 0
    %6059 = vmatpush1.bf16.msra.mxu0 0
    %6060 = vmatprep.subr.bf16.mxu0 0
    %6061 = vmatpush1.bf16.msra.mxu0 0
    %6062 = vmatprep.subr.bf16.mxu0 0
    %6063 = vmatpush1.bf16.msra.mxu0 0
    %6064 = vmatprep.subr.bf16.mxu0 0
    %6065 = vmatpush1.bf16.msra.mxu0 0
    %6066 = vmatprep.subr.bf16.mxu0 0
    %6067 = vmatpush1.bf16.msra.mxu0 0
    %6068 = vmatprep.subr.bf16.mxu0 0
    %6069 = vmatpush1.bf16.msra.mxu0 0
    %6070 = vmatprep.subr.bf16.mxu0 0
    %6071 = vmatpush1.bf16.msra.mxu0 0
    %6072 = vmatprep.subr.bf16.mxu0 0
    %6073 = vmatpush1.bf16.msra.mxu0 0
    %6074 = vmatprep.mubr.bf16.mxu0 0
    %6075 = vmatmul.mubr.bf16.gmra.mrb[0].mxu0 %v5940
    %v6076 = vpop.f32.mrb[0].mxu0
    %v6077 = vadd.f32 %v5925, %v6076
    %v6078 = vpop.f32.mrb[0].mxu0
    %v6079 = vpop.f32.mrb[0].mxu0
    %v6080 = vadd.f32 %v5925, %v6079
    %v6081 = vpop.f32.mrb[0].mxu0
    %6082 = vmatprep.mubr.bf16.mxu0 0
    %6083 = vmatmul.mubr.bf16.gmra.mrb[0].mxu0 %v5943
    %v6084 = vpop.f32.mrb[0].mxu0
    %v6085 = vadd.f32 %v5925, %v6084
    %v6086 = vpop.f32.mrb[0].mxu0
    %v6087 = vpop.f32.mrb[0].mxu0
    %v6088 = vadd.f32 %v5925, %v6087
    %v6089 = vpop.f32.mrb[0].mxu0
    %6090 = vmatprep.mubr.bf16.mxu0 0
    %6091 = vmatmul.mubr.bf16.gmra.mrb[0].mxu0 %v5946
    %v6092 = vpop.f32.mrb[0].mxu0
    %v6093 = vadd.f32 %v5925, %v6092
    %v6094 = vpop.f32.mrb[0].mxu0
    %v6095 = vpop.f32.mrb[0].mxu0
    %v6096 = vadd.f32 %v5925, %v6095
    %v6097 = vpop.f32.mrb[0].mxu0
    %6098 = vmatprep.mubr.bf16.mxu0 0
    %6099 = vmatmul.mubr.bf16.gmra.mrb[0].mxu0 %v5949
    %v6100 = vpop.f32.mrb[0].mxu0
    %v6101 = vadd.f32 %v5925, %v6100
    %v6102 = vpop.f32.mrb[0].mxu0
    %v6103 = vpop.f32.mrb[0].mxu0
    %v6104 = vadd.f32 %v5925, %v6103
    %v6105 = vpop.f32.mrb[0].mxu0
    %6106 = vmatprep.mubr.bf16.mxu0 0
    %6107 = vmatmul.mubr.bf16.gmra.mrb[0].mxu0 %v5952
    %v6108 = vpop.f32.mrb[0].mxu0
    %v6109 = vadd.f32 %v5925, %v6108
    %v6110 = vpop.f32.mrb[0].mxu0
    %v6111 = vpop.f32.mrb[0].mxu0
    %v6112 = vadd.f32 %v5925, %v6111
    %v6113 = vpop.f32.mrb[0].mxu0
    %6114 = vmatprep.mubr.bf16.mxu0 0
    %6115 = vmatmul.mubr.bf16.gmra.mrb[0].mxu0 %v5955
    %v6116 = vpop.f32.mrb[0].mxu0
    %v6117 = vadd.f32 %v5925, %v6116
    %v6118 = vpop.f32.mrb[0].mxu0
    %v6119 = vpop.f32.mrb[0].mxu0
    %v6120 = vadd.f32 %v5925, %v6119
    %v6121 = vpop.f32.mrb[0].mxu0
    %6122 = vmatprep.mubr.bf16.mxu0 0
    %6123 = vmatmul.mubr.bf16.gmra.mrb[0].mxu0 %v5958
    %v6124 = vpop.f32.mrb[0].mxu0
    %v6125 = vadd.f32 %v5925, %v6124
    %v6126 = vpop.f32.mrb[0].mxu0
    %v6127 = vpop.f32.mrb[0].mxu0
    %v6128 = vadd.f32 %v5925, %v6127
    %v6129 = vpop.f32.mrb[0].mxu0
    %6130 = vmatprep.mubr.bf16.mxu0 0
    %6131 = vmatmul.mubr.bf16.gmra.mrb[0].mxu0 %v5961
    %v6132 = vpop.f32.mrb[0].mxu0
    %v6133 = vadd.f32 %v5925, %v6132
    %v6134 = vpop.f32.mrb[0].mxu0
    %v6135 = vpop.f32.mrb[0].mxu0
    %v6136 = vadd.f32 %v5925, %v6135
    %v6137 = vpop.f32.mrb[0].mxu0
    %6138 = vmatprep.mubr.bf16.mxu0 0
    %6139 = vmatmul.mubr.bf16.gmra.mrb[0].mxu0 %v5964
    %v6140 = vpop.f32.mrb[0].mxu0
    %v6141 = vadd.f32 %v5925, %v6140
    %v6142 = vpop.f32.mrb[0].mxu0
    %v6143 = vpop.f32.mrb[0].mxu0
    %v6144 = vadd.f32 %v5925, %v6143
    %v6145 = vpop.f32.mrb[0].mxu0
    %6146 = vmatprep.mubr.bf16.mxu0 0
    %6147 = vmatmul.mubr.bf16.gmra.mrb[0].mxu0 %v5967
    %v6148 = vpop.f32.mrb[0].mxu0
    %v6149 = vadd.f32 %v5925, %v6148
    %v6150 = vpop.f32.mrb[0].mxu0
    %v6151 = vpop.f32.mrb[0].mxu0
    %v6152 = vadd.f32 %v5925, %v6151
    %v6153 = vpop.f32.mrb[0].mxu0
    %6154 = vmatprep.mubr.bf16.mxu0 0
    %6155 = vmatmul.mubr.bf16.gmra.mrb[0].mxu0 %v5970
    %v6156 = vpop.f32.mrb[0].mxu0
    %v6157 = vadd.f32 %v5925, %v6156
    %v6158 = vpop.f32.mrb[0].mxu0
    %v6159 = vpop.f32.mrb[0].mxu0
    %v6160 = vadd.f32 %v5925, %v6159
    %v6161 = vpop.f32.mrb[0].mxu0
    %6162 = vmatprep.mubr.bf16.mxu0 0
    %6163 = vmatmul.mubr.bf16.gmra.mrb[0].mxu0 %v5973
    %v6164 = vpop.f32.mrb[0].mxu0
    %v6165 = vadd.f32 %v5925, %v6164
    %v6166 = vpop.f32.mrb[0].mxu0
    %v6167 = vpop.f32.mrb[0].mxu0
    %v6168 = vadd.f32 %v5925, %v6167
    %v6169 = vpop.f32.mrb[0].mxu0
    %6170 = vmatprep.mubr.bf16.mxu0 0
    %6171 = vmatmul.mubr.bf16.gmra.mrb[0].mxu0 %v5976
    %v6172 = vpop.f32.mrb[0].mxu0
    %v6173 = vadd.f32 %v5925, %v6172
    %v6174 = vpop.f32.mrb[0].mxu0
    %v6175 = vpop.f32.mrb[0].mxu0
    %v6176 = vadd.f32 %v5925, %v6175
    %v6177 = vpop.f32.mrb[0].mxu0
    %6178 = vmatprep.mubr.bf16.mxu0 0
    %6179 = vmatmul.mubr.bf16.gmra.mrb[0].mxu0 %v5979
    %v6180 = vpop.f32.mrb[0].mxu0
    %v6181 = vadd.f32 %v5925, %v6180
    %v6182 = vpop.f32.mrb[0].mxu0
    %v6183 = vpop.f32.mrb[0].mxu0
    %v6184 = vadd.f32 %v5925, %v6183
    %v6185 = vpop.f32.mrb[0].mxu0
    %6186 = vmatprep.mubr.bf16.mxu0 0
    %6187 = vmatmul.mubr.bf16.gmra.mrb[0].mxu0 %v5982
    %v6188 = vpop.f32.mrb[0].mxu0
    %v6189 = vadd.f32 %v5925, %v6188
    %v6190 = vpop.f32.mrb[0].mxu0
    %v6191 = vpop.f32.mrb[0].mxu0
    %v6192 = vadd.f32 %v5925, %v6191
    %v6193 = vpop.f32.mrb[0].mxu0
    %6194 = vmatprep.mubr.bf16.mxu0 0
    %6195 = vmatmul.mubr.bf16.gmra.mrb[0].mxu0 %v5985
    %v6196 = vpop.f32.mrb[0].mxu0
    %v6197 = vadd.f32 %v5925, %v6196
    %v6198 = vpop.f32.mrb[0].mxu0
    %v6199 = vpop.f32.mrb[0].mxu0
    %v6200 = vadd.f32 %v5925, %v6199
    %v6201 = vpop.f32.mrb[0].mxu0
    %6202 = vmatprep.mubr.bf16.mxu0 0
    %6203 = vmatmul.mubr.bf16.gmra.mrb[0].mxu0 %v5988
    %v6204 = vpop.f32.mrb[0].mxu0
    %v6205 = vadd.f32 %v5925, %v6204
    %v6206 = vpop.f32.mrb[0].mxu0
    %v6207 = vpop.f32.mrb[0].mxu0
    %v6208 = vadd.f32 %v5925, %v6207
    %v6209 = vpop.f32.mrb[0].mxu0
    %6210 = vmatprep.mubr.bf16.mxu0 0
    %6211 = vmatmul.mubr.bf16.gmra.mrb[0].mxu0 %v5991
    %v6212 = vpop.f32.mrb[0].mxu0
    %v6213 = vadd.f32 %v5925, %v6212
    %v6214 = vpop.f32.mrb[0].mxu0
    %v6215 = vpop.f32.mrb[0].mxu0
    %v6216 = vadd.f32 %v5925, %v6215
    %v6217 = vpop.f32.mrb[0].mxu0
    %6218 = vmatprep.mubr.bf16.mxu0 0
    %6219 = vmatmul.mubr.bf16.gmra.mrb[0].mxu0 %v5994
    %v6220 = vpop.f32.mrb[0].mxu0
    %v6221 = vadd.f32 %v5925, %v6220
    %v6222 = vpop.f32.mrb[0].mxu0
    %v6223 = vpop.f32.mrb[0].mxu0
    %v6224 = vadd.f32 %v5925, %v6223
    %v6225 = vpop.f32.mrb[0].mxu0
    %6226 = vmatprep.mubr.bf16.mxu0 0
    %6227 = vmatmul.mubr.bf16.gmra.mrb[0].mxu0 %v5997
    %v6228 = vpop.f32.mrb[0].mxu0
    %v6229 = vadd.f32 %v5925, %v6228
    %v6230 = vpop.f32.mrb[0].mxu0
    %v6231 = vpop.f32.mrb[0].mxu0
    %v6232 = vadd.f32 %v5925, %v6231
    %v6233 = vpop.f32.mrb[0].mxu0
    %6234 = vmatprep.mubr.bf16.mxu0 0
    %6235 = vmatmul.mubr.bf16.gmra.mrb[0].mxu0 %v6000
    %v6236 = vpop.f32.mrb[0].mxu0
    %v6237 = vadd.f32 %v5925, %v6236
    %v6238 = vpop.f32.mrb[0].mxu0
    %v6239 = vpop.f32.mrb[0].mxu0
    %v6240 = vadd.f32 %v5925, %v6239
    %v6241 = vpop.f32.mrb[0].mxu0
    %6242 = vmatprep.mubr.bf16.mxu0 0
    %6243 = vmatmul.mubr.bf16.gmra.mrb[0].mxu0 %v6003
    %v6244 = vpop.f32.mrb[0].mxu0
    %v6245 = vadd.f32 %v5925, %v6244
    %v6246 = vpop.f32.mrb[0].mxu0
    %v6247 = vpop.f32.mrb[0].mxu0
    %v6248 = vadd.f32 %v5925, %v6247
    %v6249 = vpop.f32.mrb[0].mxu0
    %6250 = vmatprep.mubr.bf16.mxu0 0
    %6251 = vmatmul.mubr.bf16.gmra.mrb[0].mxu0 %v6006
    %v6252 = vpop.f32.mrb[0].mxu0
    %v6253 = vadd.f32 %v5925, %v6252
    %v6254 = vpop.f32.mrb[0].mxu0
    %v6255 = vpop.f32.mrb[0].mxu0
    %v6256 = vadd.f32 %v5925, %v6255
    %v6257 = vpop.f32.mrb[0].mxu0
    %6258 = vmatprep.mubr.bf16.mxu0 0
    %6259 = vmatmul.mubr.bf16.gmra.mrb[0].mxu0 %v6009
    %v6260 = vpop.f32.mrb[0].mxu0
    %v6261 = vadd.f32 %v5925, %v6260
    %v6262 = vpop.f32.mrb[0].mxu0
    %v6263 = vpop.f32.mrb[0].mxu0
    %v6264 = vadd.f32 %v5925, %v6263
    %v6265 = vpop.f32.mrb[0].mxu0
    %6266 = vmatprep.mubr.bf16.mxu0 0
    %6267 = vmatmul.mubr.bf16.gmra.mrb[0].mxu0 %v6012
    %v6268 = vpop.f32.mrb[0].mxu0
    %v6269 = vadd.f32 %v5925, %v6268
    %v6270 = vpop.f32.mrb[0].mxu0
    %v6271 = vpop.f32.mrb[0].mxu0
    %v6272 = vadd.f32 %v5925, %v6271
    %v6273 = vpop.f32.mrb[0].mxu0
    %6274 = vmatprep.mubr.bf16.mxu0 0
    %6275 = vmatmul.mubr.bf16.gmra.mrb[0].mxu0 %v6015
    %v6276 = vpop.f32.mrb[0].mxu0
    %v6277 = vadd.f32 %v5925, %v6276
    %v6278 = vpop.f32.mrb[0].mxu0
    %v6279 = vpop.f32.mrb[0].mxu0
    %v6280 = vadd.f32 %v5925, %v6279
    %v6281 = vpop.f32.mrb[0].mxu0
    %6282 = vmatprep.mubr.bf16.mxu0 0
    %6283 = vmatmul.mubr.bf16.gmra.mrb[0].mxu0 %v6018
    %v6284 = vpop.f32.mrb[0].mxu0
    %v6285 = vadd.f32 %v5925, %v6284
    %v6286 = vpop.f32.mrb[0].mxu0
    %v6287 = vpop.f32.mrb[0].mxu0
    %v6288 = vadd.f32 %v5925, %v6287
    %v6289 = vpop.f32.mrb[0].mxu0
    %6290 = vmatprep.mubr.bf16.mxu0 0
    %6291 = vmatmul.mubr.bf16.gmra.mrb[0].mxu0 %v6021
    %v6292 = vpop.f32.mrb[0].mxu0
    %v6293 = vadd.f32 %v5925, %v6292
    %v6294 = vpop.f32.mrb[0].mxu0
    %v6295 = vpop.f32.mrb[0].mxu0
    %v6296 = vadd.f32 %v5925, %v6295
    %v6297 = vpop.f32.mrb[0].mxu0
    %6298 = vmatprep.mubr.bf16.mxu0 0
    %6299 = vmatmul.mubr.bf16.gmra.mrb[0].mxu0 %v6024
    %v6300 = vpop.f32.mrb[0].mxu0
    %v6301 = vadd.f32 %v5925, %v6300
    %v6302 = vpop.f32.mrb[0].mxu0
    %v6303 = vpop.f32.mrb[0].mxu0
    %v6304 = vadd.f32 %v5925, %v6303
    %v6305 = vpop.f32.mrb[0].mxu0
    %6306 = vmatprep.mubr.bf16.mxu0 0
    %6307 = vmatmul.mubr.bf16.gmra.mrb[0].mxu0 %v6027
    %v6308 = vpop.f32.mrb[0].mxu0
    %v6309 = vadd.f32 %v5925, %v6308
    %v6310 = vpop.f32.mrb[0].mxu0
    %v6311 = vpop.f32.mrb[0].mxu0
    %v6312 = vadd.f32 %v5925, %v6311
    %v6313 = vpop.f32.mrb[0].mxu0
    %6314 = vmatprep.mubr.bf16.mxu0 0
    %6315 = vmatmul.mubr.bf16.gmra.mrb[0].mxu0 %v6030
    %v6316 = vpop.f32.mrb[0].mxu0
    %v6317 = vadd.f32 %v5925, %v6316
    %v6318 = vpop.f32.mrb[0].mxu0
    %v6319 = vpop.f32.mrb[0].mxu0
    %v6320 = vadd.f32 %v5925, %v6319
    %v6321 = vpop.f32.mrb[0].mxu0
    %6322 = vmatprep.mubr.bf16.mxu0 0
    %6323 = vmatmul.mubr.bf16.gmra.mrb[0].mxu0 %v6033
    %v6324 = vpop.f32.mrb[0].mxu0
    %v6325 = vadd.f32 %v5925, %v6324
    %v6326 = vpop.f32.mrb[0].mxu0
    %v6327 = vpop.f32.mrb[0].mxu0
    %v6328 = vadd.f32 %v5925, %v6327
    %v6329 = vpop.f32.mrb[0].mxu0
    %6330 = vdwg.mxu0
    %v6331 = vmax.f32 %v6077, 0.0
    %v6332 = vmax.f32 %v6080, 0.0
    %v6333 = vmax.f32 %v6085, 0.0
    %v6334 = vmax.f32 %v6088, 0.0
    %v6335 = vmax.f32 %v6093, 0.0
    %v6336 = vmax.f32 %v6096, 0.0
    %v6337 = vmax.f32 %v6101, 0.0
    %v6338 = vmax.f32 %v6104, 0.0
    %v6339 = vmax.f32 %v6109, 0.0
    %v6340 = vmax.f32 %v6112, 0.0
    %v6341 = vmax.f32 %v6117, 0.0
    %v6342 = vmax.f32 %v6120, 0.0
    %v6343 = vmax.f32 %v6125, 0.0
    %v6344 = vmax.f32 %v6128, 0.0
    %v6345 = vmax.f32 %v6133, 0.0
    %v6346 = vmax.f32 %v6136, 0.0
    %v6347 = vmax.f32 %v6141, 0.0
    %v6348 = vmax.f32 %v6144, 0.0
    %v6349 = vmax.f32 %v6149, 0.0
    %v6350 = vmax.f32 %v6152, 0.0
    %v6351 = vmax.f32 %v6157, 0.0
    %v6352 = vmax.f32 %v6160, 0.0
    %v6353 = vmax.f32 %v6165, 0.0
    %v6354 = vmax.f32 %v6168, 0.0
    %v6355 = vmax.f32 %v6173, 0.0
    %v6356 = vmax.f32 %v6176, 0.0
    %v6357 = vmax.f32 %v6181, 0.0
    %v6358 = vmax.f32 %v6184, 0.0
    %v6359 = vmax.f32 %v6189, 0.0
    %v6360 = vmax.f32 %v6192, 0.0
    %v6361 = vmax.f32 %v6197, 0.0
    %v6362 = vmax.f32 %v6200, 0.0
    %v6363 = vmax.f32 %v6205, 0.0
    %v6364 = vmax.f32 %v6208, 0.0
    %v6365 = vmax.f32 %v6213, 0.0
    %v6366 = vmax.f32 %v6216, 0.0
    %v6367 = vmax.f32 %v6221, 0.0
    %v6368 = vmax.f32 %v6224, 0.0
    %v6369 = vmax.f32 %v6229, 0.0
    %v6370 = vmax.f32 %v6232, 0.0
    %v6371 = vmax.f32 %v6237, 0.0
    %v6372 = vmax.f32 %v6240, 0.0
    %v6373 = vmax.f32 %v6245, 0.0
    %v6374 = vmax.f32 %v6248, 0.0
    %v6375 = vmax.f32 %v6253, 0.0
    %v6376 = vmax.f32 %v6256, 0.0
    %v6377 = vmax.f32 %v6261, 0.0
    %v6378 = vmax.f32 %v6264, 0.0
    %v6379 = vmax.f32 %v6269, 0.0
    %v6380 = vmax.f32 %v6272, 0.0
    %v6381 = vmax.f32 %v6277, 0.0
    %v6382 = vmax.f32 %v6280, 0.0
    %v6383 = vmax.f32 %v6285, 0.0
    %v6384 = vmax.f32 %v6288, 0.0
    %v6385 = vmax.f32 %v6293, 0.0
    %v6386 = vmax.f32 %v6296, 0.0
    %v6387 = vmax.f32 %v6301, 0.0
    %v6388 = vmax.f32 %v6304, 0.0
    %v6389 = vmax.f32 %v6309, 0.0
    %v6390 = vmax.f32 %v6312, 0.0
    %v6391 = vmax.f32 %v6317, 0.0
    %v6392 = vmax.f32 %v6320, 0.0
    %v6393 = vmax.f32 %v6325, 0.0
    %v6394 = vmax.f32 %v6328, 0.0
    %v6395 = vld [vmem:[%s4] sm:$0xff]
    %v6396 = vld [vmem:[%s4 + $0x8] sm:$0xff]
    %v6397 = vld [vmem:[%s4 + $0x10] sm:$0xff]
    %v6398 = vld [vmem:[%s4 + $0x18] sm:$0xff]
    %v6399 = vld [vmem:[%s4 + $0x20] sm:$0xff]
    %v6400 = vld [vmem:[%s4 + $0x28] sm:$0xff]
    %v6401 = vld [vmem:[%s4 + $0x30] sm:$0xff]
    %v6402 = vld [vmem:[%s4 + $0x38] sm:$0xff]
    %v6403 = vld [vmem:[%s4 + $0x40] sm:$0xff]
    %v6404 = vld [vmem:[%s4 + $0x48] sm:$0xff]
    %v6405 = vld [vmem:[%s4 + $0x50] sm:$0xff]
    %v6406 = vld [vmem:[%s4 + $0x58] sm:$0xff]
    %v6407 = vld [vmem:[%s4 + $0x60] sm:$0xff]
    %v6408 = vld [vmem:[%s4 + $0x68] sm:$0xff]
    %v6409 = vld [vmem:[%s4 + $0x70] sm:$0xff]
    %v6410 = vld [vmem:[%s4 + $0x78] sm:$0xff]
    %v6411 = vld [vmem:[%s4 + $0x80] sm:$0xff]
    %v6412 = vld [vmem:[%s4 + $0x88] sm:$0xff]
    %v6413 = vld [vmem:[%s4 + $0x90] sm:$0xff]
    %v6414 = vld [vmem:[%s4 + $0x98] sm:$0xff]
    %v6415 = vld [vmem:[%s4 + $0xa0] sm:$0xff]
    %v6416 = vld [vmem:[%s4 + $0xa8] sm:$0xff]
    %v6417 = vld [vmem:[%s4 + $0xb0] sm:$0xff]
    %v6418 = vld [vmem:[%s4 + $0xb8] sm:$0xff]
    %v6419 = vld [vmem:[%s4 + $0xc0] sm:$0xff]
    %v6420 = vld [vmem:[%s4 + $0xc8] sm:$0xff]
    %v6421 = vld [vmem:[%s4 + $0xd0] sm:$0xff]
    %v6422 = vld [vmem:[%s4 + $0xd8] sm:$0xff]
    %v6423 = vld [vmem:[%s4 + $0xe0] sm:$0xff]
    %v6424 = vld [vmem:[%s4 + $0xe8] sm:$0xff]
    %v6425 = vld [vmem:[%s4 + $0xf0] sm:$0xff]
    %v6426 = vld [vmem:[%s4 + $0xf8] sm:$0xff]
    %v6427 = vld [vmem:[%s4 + $0x100] sm:$0xff]
    %v6428 = vld [vmem:[%s4 + $0x108] sm:$0xff]
    %v6429 = vld [vmem:[%s4 + $0x110] sm:$0xff]
    %v6430 = vld [vmem:[%s4 + $0x118] sm:$0xff]
    %v6431 = vld [vmem:[%s4 + $0x120] sm:$0xff]
    %v6432 = vld [vmem:[%s4 + $0x128] sm:$0xff]
    %v6433 = vld [vmem:[%s4 + $0x130] sm:$0xff]
    %v6434 = vld [vmem:[%s4 + $0x138] sm:$0xff]
    %v6435 = vld [vmem:[%s4 + $0x140] sm:$0xff]
    %v6436 = vld [vmem:[%s4 + $0x148] sm:$0xff]
    %v6437 = vld [vmem:[%s4 + $0x150] sm:$0xff]
    %v6438 = vld [vmem:[%s4 + $0x158] sm:$0xff]
    %v6439 = vld [vmem:[%s4 + $0x160] sm:$0xff]
    %v6440 = vld [vmem:[%s4 + $0x168] sm:$0xff]
    %v6441 = vld [vmem:[%s4 + $0x170] sm:$0xff]
    %v6442 = vld [vmem:[%s4 + $0x178] sm:$0xff]
    %v6443 = vld [vmem:[%s4 + $0x180] sm:$0xff]
    %v6444 = vld [vmem:[%s4 + $0x188] sm:$0xff]
    %v6445 = vld [vmem:[%s4 + $0x190] sm:$0xff]
    %v6446 = vld [vmem:[%s4 + $0x198] sm:$0xff]
    %v6447 = vld [vmem:[%s4 + $0x1a0] sm:$0xff]
    %v6448 = vld [vmem:[%s4 + $0x1a8] sm:$0xff]
    %v6449 = vld [vmem:[%s4 + $0x1b0] sm:$0xff]
    %v6450 = vld [vmem:[%s4 + $0x1b8] sm:$0xff]
    %v6451 = vld [vmem:[%s4 + $0x1c0] sm:$0xff]
    %v6452 = vld [vmem:[%s4 + $0x1c8] sm:$0xff]
    %v6453 = vld [vmem:[%s4 + $0x1d0] sm:$0xff]
    %v6454 = vld [vmem:[%s4 + $0x1d8] sm:$0xff]
    %v6455 = vld [vmem:[%s4 + $0x1e0] sm:$0xff]
    %v6456 = vld [vmem:[%s4 + $0x1e8] sm:$0xff]
    %v6457 = vld [vmem:[%s4 + $0x1f0] sm:$0xff]
    %v6458 = vld [vmem:[%s4 + $0x1f8] sm:$0xff]
    %v6459 = vld [vmem:[%s4 + $0x200] sm:$0xff]
    %v6460 = vld [vmem:[%s4 + $0x208] sm:$0xff]
    %v6461 = vld [vmem:[%s4 + $0x210] sm:$0xff]
    %v6462 = vld [vmem:[%s4 + $0x218] sm:$0xff]
    %v6463 = vld [vmem:[%s4 + $0x220] sm:$0xff]
    %v6464 = vld [vmem:[%s4 + $0x228] sm:$0xff]
    %v6465 = vld [vmem:[%s4 + $0x230] sm:$0xff]
    %v6466 = vld [vmem:[%s4 + $0x238] sm:$0xff]
    %v6467 = vld [vmem:[%s4 + $0x240] sm:$0xff]
    %v6468 = vld [vmem:[%s4 + $0x248] sm:$0xff]
    %v6469 = vld [vmem:[%s4 + $0x250] sm:$0xff]
    %v6470 = vld [vmem:[%s4 + $0x258] sm:$0xff]
    %v6471 = vld [vmem:[%s4 + $0x260] sm:$0xff]
    %v6472 = vld [vmem:[%s4 + $0x268] sm:$0xff]
    %v6473 = vld [vmem:[%s4 + $0x270] sm:$0xff]
    %v6474 = vld [vmem:[%s4 + $0x278] sm:$0xff]
    %v6475 = vld [vmem:[%s4 + $0x280] sm:$0xff]
    %v6476 = vld [vmem:[%s4 + $0x288] sm:$0xff]
    %v6477 = vld [vmem:[%s4 + $0x290] sm:$0xff]
    %v6478 = vld [vmem:[%s4 + $0x298] sm:$0xff]
    %v6479 = vld [vmem:[%s4 + $0x2a0] sm:$0xff]
    %v6480 = vld [vmem:[%s4 + $0x2a8] sm:$0xff]
    %v6481 = vld [vmem:[%s4 + $0x2b0] sm:$0xff]
    %v6482 = vld [vmem:[%s4 + $0x2b8] sm:$0xff]
    %v6483 = vld [vmem:[%s4 + $0x2c0] sm:$0xff]
    %v6484 = vld [vmem:[%s4 + $0x2c8] sm:$0xff]
    %v6485 = vld [vmem:[%s4 + $0x2d0] sm:$0xff]
    %v6486 = vld [vmem:[%s4 + $0x2d8] sm:$0xff]
    %v6487 = vld [vmem:[%s4 + $0x2e0] sm:$0xff]
    %v6488 = vld [vmem:[%s4 + $0x2e8] sm:$0xff]
    %v6489 = vld [vmem:[%s4 + $0x2f0] sm:$0xff]
    %v6490 = vld [vmem:[%s4 + $0x2f8] sm:$0xff]
    %v6491 = vld [vmem:[%s4 + $0x300] sm:$0xff]
    %v6492 = vld [vmem:[%s4 + $0x308] sm:$0xff]
    %v6493 = vld [vmem:[%s4 + $0x310] sm:$0xff]
    %v6494 = vld [vmem:[%s4 + $0x318] sm:$0xff]
    %v6495 = vld [vmem:[%s4 + $0x320] sm:$0xff]
    %v6496 = vld [vmem:[%s4 + $0x328] sm:$0xff]
    %v6497 = vld [vmem:[%s4 + $0x330] sm:$0xff]
    %v6498 = vld [vmem:[%s4 + $0x338] sm:$0xff]
    %v6499 = vld [vmem:[%s4 + $0x340] sm:$0xff]
    %v6500 = vld [vmem:[%s4 + $0x348] sm:$0xff]
    %v6501 = vld [vmem:[%s4 + $0x350] sm:$0xff]
    %v6502 = vld [vmem:[%s4 + $0x358] sm:$0xff]
    %v6503 = vld [vmem:[%s4 + $0x360] sm:$0xff]
    %v6504 = vld [vmem:[%s4 + $0x368] sm:$0xff]
    %v6505 = vld [vmem:[%s4 + $0x370] sm:$0xff]
    %v6506 = vld [vmem:[%s4 + $0x378] sm:$0xff]
    %v6507 = vld [vmem:[%s4 + $0x380] sm:$0xff]
    %v6508 = vld [vmem:[%s4 + $0x388] sm:$0xff]
    %v6509 = vld [vmem:[%s4 + $0x390] sm:$0xff]
    %v6510 = vld [vmem:[%s4 + $0x398] sm:$0xff]
    %v6511 = vld [vmem:[%s4 + $0x3a0] sm:$0xff]
    %v6512 = vld [vmem:[%s4 + $0x3a8] sm:$0xff]
    %v6513 = vld [vmem:[%s4 + $0x3b0] sm:$0xff]
    %v6514 = vld [vmem:[%s4 + $0x3b8] sm:$0xff]
    %v6515 = vld [vmem:[%s4 + $0x3c0] sm:$0xff]
    %v6516 = vld [vmem:[%s4 + $0x3c8] sm:$0xff]
    %v6517 = vld [vmem:[%s4 + $0x3d0] sm:$0xff]
    %v6518 = vld [vmem:[%s4 + $0x3d8] sm:$0xff]
    %v6519 = vld [vmem:[%s4 + $0x3e0] sm:$0xff]
    %v6520 = vld [vmem:[%s4 + $0x3e8] sm:$0xff]
    %v6521 = vld [vmem:[%s4 + $0x3f0] sm:$0xff]
    %v6522 = vld [vmem:[%s4 + $0x3f8] sm:$0xff]
    %v6523 = vpack.c.bf16 %v6332, %v6331
    %v6524 = vpack.c.bf16 %v6334, %v6333
    %v6525 = vpack.c.bf16 %v6336, %v6335
    %v6526 = vpack.c.bf16 %v6338, %v6337
    %v6527 = vpack.c.bf16 %v6340, %v6339
    %v6528 = vpack.c.bf16 %v6342, %v6341
    %v6529 = vpack.c.bf16 %v6344, %v6343
    %v6530 = vpack.c.bf16 %v6346, %v6345
    %v6531 = vpack.c.bf16 %v6348, %v6347
    %v6532 = vpack.c.bf16 %v6350, %v6349
    %v6533 = vpack.c.bf16 %v6352, %v6351
    %v6534 = vpack.c.bf16 %v6354, %v6353
    %v6535 = vpack.c.bf16 %v6356, %v6355
    %v6536 = vpack.c.bf16 %v6358, %v6357
    %v6537 = vpack.c.bf16 %v6360, %v6359
    %v6538 = vpack.c.bf16 %v6362, %v6361
    %v6539 = vpack.c.bf16 %v6364, %v6363
    %v6540 = vpack.c.bf16 %v6366, %v6365
    %v6541 = vpack.c.bf16 %v6368, %v6367
    %v6542 = vpack.c.bf16 %v6370, %v6369
    %v6543 = vpack.c.bf16 %v6372, %v6371
    %v6544 = vpack.c.bf16 %v6374, %v6373
    %v6545 = vpack.c.bf16 %v6376, %v6375
    %v6546 = vpack.c.bf16 %v6378, %v6377
    %v6547 = vpack.c.bf16 %v6380, %v6379
    %v6548 = vpack.c.bf16 %v6382, %v6381
    %v6549 = vpack.c.bf16 %v6384, %v6383
    %v6550 = vpack.c.bf16 %v6386, %v6385
    %v6551 = vpack.c.bf16 %v6388, %v6387
    %v6552 = vpack.c.bf16 %v6390, %v6389
    %v6553 = vpack.c.bf16 %v6392, %v6391
    %v6554 = vpack.c.bf16 %v6394, %v6393
    %v6683 = vunpack.c.l.b16 %v6395
    %v6684 = vunpack.c.h.b16 %v6395
    %v6685 = vunpack.c.l.b16 %v6396
    %v6686 = vunpack.c.h.b16 %v6396
    %v6687 = vunpack.c.l.b16 %v6397
    %v6688 = vunpack.c.h.b16 %v6397
    %v6689 = vunpack.c.l.b16 %v6398
    %v6690 = vunpack.c.h.b16 %v6398
    %v6691 = vunpack.c.l.b16 %v6399
    %v6692 = vunpack.c.h.b16 %v6399
    %v6693 = vunpack.c.l.b16 %v6400
    %v6694 = vunpack.c.h.b16 %v6400
    %v6695 = vunpack.c.l.b16 %v6401
    %v6696 = vunpack.c.h.b16 %v6401
    %v6697 = vunpack.c.l.b16 %v6402
    %v6698 = vunpack.c.h.b16 %v6402
    %v6699 = vunpack.c.l.b16 %v6403
    %v6700 = vunpack.c.h.b16 %v6403
    %v6701 = vunpack.c.l.b16 %v6404
    %v6702 = vunpack.c.h.b16 %v6404
    %v6703 = vunpack.c.l.b16 %v6405
    %v6704 = vunpack.c.h.b16 %v6405
    %v6705 = vunpack.c.l.b16 %v6406
    %v6706 = vunpack.c.h.b16 %v6406
    %v6707 = vunpack.c.l.b16 %v6407
    %v6708 = vunpack.c.h.b16 %v6407
    %v6709 = vunpack.c.l.b16 %v6408
    %v6710 = vunpack.c.h.b16 %v6408
    %v6711 = vunpack.c.l.b16 %v6409
    %v6712 = vunpack.c.h.b16 %v6409
    %v6713 = vunpack.c.l.b16 %v6410
    %v6714 = vunpack.c.h.b16 %v6410
    %v6715 = vunpack.c.l.b16 %v6411
    %v6716 = vunpack.c.h.b16 %v6411
    %v6717 = vunpack.c.l.b16 %v6412
    %v6718 = vunpack.c.h.b16 %v6412
    %v6719 = vunpack.c.l.b16 %v6413
    %v6720 = vunpack.c.h.b16 %v6413
    %v6721 = vunpack.c.l.b16 %v6414
    %v6722 = vunpack.c.h.b16 %v6414
    %v6723 = vunpack.c.l.b16 %v6415
    %v6724 = vunpack.c.h.b16 %v6415
    %v6725 = vunpack.c.l.b16 %v6416
    %v6726 = vunpack.c.h.b16 %v6416
    %v6727 = vunpack.c.l.b16 %v6417
    %v6728 = vunpack.c.h.b16 %v6417
    %v6729 = vunpack.c.l.b16 %v6418
    %v6730 = vunpack.c.h.b16 %v6418
    %v6731 = vunpack.c.l.b16 %v6419
    %v6732 = vunpack.c.h.b16 %v6419
    %v6733 = vunpack.c.l.b16 %v6420
    %v6734 = vunpack.c.h.b16 %v6420
    %v6735 = vunpack.c.l.b16 %v6421
    %v6736 = vunpack.c.h.b16 %v6421
    %v6737 = vunpack.c.l.b16 %v6422
    %v6738 = vunpack.c.h.b16 %v6422
    %v6739 = vunpack.c.l.b16 %v6423
    %v6740 = vunpack.c.h.b16 %v6423
    %v6741 = vunpack.c.l.b16 %v6424
    %v6742 = vunpack.c.h.b16 %v6424
    %v6743 = vunpack.c.l.b16 %v6425
    %v6744 = vunpack.c.h.b16 %v6425
    %v6745 = vunpack.c.l.b16 %v6426
    %v6746 = vunpack.c.h.b16 %v6426
    %v6747 = vunpack.c.l.b16 %v6427
    %v6748 = vunpack.c.h.b16 %v6427
    %v6749 = vunpack.c.l.b16 %v6428
    %v6750 = vunpack.c.h.b16 %v6428
    %v6751 = vunpack.c.l.b16 %v6429
    %v6752 = vunpack.c.h.b16 %v6429
    %v6753 = vunpack.c.l.b16 %v6430
    %v6754 = vunpack.c.h.b16 %v6430
    %v6755 = vunpack.c.l.b16 %v6431
    %v6756 = vunpack.c.h.b16 %v6431
    %v6757 = vunpack.c.l.b16 %v6432
    %v6758 = vunpack.c.h.b16 %v6432
    %v6759 = vunpack.c.l.b16 %v6433
    %v6760 = vunpack.c.h.b16 %v6433
    %v6761 = vunpack.c.l.b16 %v6434
    %v6762 = vunpack.c.h.b16 %v6434
    %v6763 = vunpack.c.l.b16 %v6435
    %v6764 = vunpack.c.h.b16 %v6435
    %v6765 = vunpack.c.l.b16 %v6436
    %v6766 = vunpack.c.h.b16 %v6436
    %v6767 = vunpack.c.l.b16 %v6437
    %v6768 = vunpack.c.h.b16 %v6437
    %v6769 = vunpack.c.l.b16 %v6438
    %v6770 = vunpack.c.h.b16 %v6438
    %v6771 = vunpack.c.l.b16 %v6439
    %v6772 = vunpack.c.h.b16 %v6439
    %v6773 = vunpack.c.l.b16 %v6440
    %v6774 = vunpack.c.h.b16 %v6440
    %v6775 = vunpack.c.l.b16 %v6441
    %v6776 = vunpack.c.h.b16 %v6441
    %v6777 = vunpack.c.l.b16 %v6442
    %v6778 = vunpack.c.h.b16 %v6442
    %v6779 = vunpack.c.l.b16 %v6443
    %v6780 = vunpack.c.h.b16 %v6443
    %v6781 = vunpack.c.l.b16 %v6444
    %v6782 = vunpack.c.h.b16 %v6444
    %v6783 = vunpack.c.l.b16 %v6445
    %v6784 = vunpack.c.h.b16 %v6445
    %v6785 = vunpack.c.l.b16 %v6446
    %v6786 = vunpack.c.h.b16 %v6446
    %v6787 = vunpack.c.l.b16 %v6447
    %v6788 = vunpack.c.h.b16 %v6447
    %v6789 = vunpack.c.l.b16 %v6448
    %v6790 = vunpack.c.h.b16 %v6448
    %v6791 = vunpack.c.l.b16 %v6449
    %v6792 = vunpack.c.h.b16 %v6449
    %v6793 = vunpack.c.l.b16 %v6450
    %v6794 = vunpack.c.h.b16 %v6450
    %v6795 = vunpack.c.l.b16 %v6451
    %v6796 = vunpack.c.h.b16 %v6451
    %v6797 = vunpack.c.l.b16 %v6452
    %v6798 = vunpack.c.h.b16 %v6452
    %v6799 = vunpack.c.l.b16 %v6453
    %v6800 = vunpack.c.h.b16 %v6453
    %v6801 = vunpack.c.l.b16 %v6454
    %v6802 = vunpack.c.h.b16 %v6454
    %v6803 = vunpack.c.l.b16 %v6455
    %v6804 = vunpack.c.h.b16 %v6455
    %v6805 = vunpack.c.l.b16 %v6456
    %v6806 = vunpack.c.h.b16 %v6456
    %v6807 = vunpack.c.l.b16 %v6457
    %v6808 = vunpack.c.h.b16 %v6457
    %v6809 = vunpack.c.l.b16 %v6458
    %v6810 = vunpack.c.h.b16 %v6458
    %v6811 = vunpack.c.l.b16 %v6459
    %v6812 = vunpack.c.h.b16 %v6459
    %v6813 = vunpack.c.l.b16 %v6460
    %v6814 = vunpack.c.h.b16 %v6460
    %v6815 = vunpack.c.l.b16 %v6461
    %v6816 = vunpack.c.h.b16 %v6461
    %v6817 = vunpack.c.l.b16 %v6462
    %v6818 = vunpack.c.h.b16 %v6462
    %v6819 = vunpack.c.l.b16 %v6463
    %v6820 = vunpack.c.h.b16 %v6463
    %v6821 = vunpack.c.l.b16 %v6464
    %v6822 = vunpack.c.h.b16 %v6464
    %v6823 = vunpack.c.l.b16 %v6465
    %v6824 = vunpack.c.h.b16 %v6465
    %v6825 = vunpack.c.l.b16 %v6466
    %v6826 = vunpack.c.h.b16 %v6466
    %v6827 = vunpack.c.l.b16 %v6467
    %v6828 = vunpack.c.h.b16 %v6467
    %v6829 = vunpack.c.l.b16 %v6468
    %v6830 = vunpack.c.h.b16 %v6468
    %v6831 = vunpack.c.l.b16 %v6469
    %v6832 = vunpack.c.h.b16 %v6469
    %v6833 = vunpack.c.l.b16 %v6470
    %v6834 = vunpack.c.h.b16 %v6470
    %v6835 = vunpack.c.l.b16 %v6471
    %v6836 = vunpack.c.h.b16 %v6471
    %v6837 = vunpack.c.l.b16 %v6472
    %v6838 = vunpack.c.h.b16 %v6472
    %v6839 = vunpack.c.l.b16 %v6473
    %v6840 = vunpack.c.h.b16 %v6473
    %v6841 = vunpack.c.l.b16 %v6474
    %v6842 = vunpack.c.h.b16 %v6474
    %v6843 = vunpack.c.l.b16 %v6475
    %v6844 = vunpack.c.h.b16 %v6475
    %v6845 = vunpack.c.l.b16 %v6476
    %v6846 = vunpack.c.h.b16 %v6476
    %v6847 = vunpack.c.l.b16 %v6477
    %v6848 = vunpack.c.h.b16 %v6477
    %v6849 = vunpack.c.l.b16 %v6478
    %v6850 = vunpack.c.h.b16 %v6478
    %v6851 = vunpack.c.l.b16 %v6479
    %v6852 = vunpack.c.h.b16 %v6479
    %v6853 = vunpack.c.l.b16 %v6480
    %v6854 = vunpack.c.h.b16 %v6480
    %v6855 = vunpack.c.l.b16 %v6481
    %v6856 = vunpack.c.h.b16 %v6481
    %v6857 = vunpack.c.l.b16 %v6482
    %v6858 = vunpack.c.h.b16 %v6482
    %v6859 = vunpack.c.l.b16 %v6483
    %v6860 = vunpack.c.h.b16 %v6483
    %v6861 = vunpack.c.l.b16 %v6484
    %v6862 = vunpack.c.h.b16 %v6484
    %v6863 = vunpack.c.l.b16 %v6485
    %v6864 = vunpack.c.h.b16 %v6485
    %v6865 = vunpack.c.l.b16 %v6486
    %v6866 = vunpack.c.h.b16 %v6486
    %v6867 = vunpack.c.l.b16 %v6487
    %v6868 = vunpack.c.h.b16 %v6487
    %v6869 = vunpack.c.l.b16 %v6488
    %v6870 = vunpack.c.h.b16 %v6488
    %v6871 = vunpack.c.l.b16 %v6489
    %v6872 = vunpack.c.h.b16 %v6489
    %v6873 = vunpack.c.l.b16 %v6490
    %v6874 = vunpack.c.h.b16 %v6490
    %v6875 = vunpack.c.l.b16 %v6491
    %v6876 = vunpack.c.h.b16 %v6491
    %v6877 = vunpack.c.l.b16 %v6492
    %v6878 = vunpack.c.h.b16 %v6492
    %v6879 = vunpack.c.l.b16 %v6493
    %v6880 = vunpack.c.h.b16 %v6493
    %v6881 = vunpack.c.l.b16 %v6494
    %v6882 = vunpack.c.h.b16 %v6494
    %v6883 = vunpack.c.l.b16 %v6495
    %v6884 = vunpack.c.h.b16 %v6495
    %v6885 = vunpack.c.l.b16 %v6496
    %v6886 = vunpack.c.h.b16 %v6496
    %v6887 = vunpack.c.l.b16 %v6497
    %v6888 = vunpack.c.h.b16 %v6497
    %v6889 = vunpack.c.l.b16 %v6498
    %v6890 = vunpack.c.h.b16 %v6498
    %v6891 = vunpack.c.l.b16 %v6499
    %v6892 = vunpack.c.h.b16 %v6499
    %v6893 = vunpack.c.l.b16 %v6500
    %v6894 = vunpack.c.h.b16 %v6500
    %v6895 = vunpack.c.l.b16 %v6501
    %v6896 = vunpack.c.h.b16 %v6501
    %v6897 = vunpack.c.l.b16 %v6502
    %v6898 = vunpack.c.h.b16 %v6502
    %v6899 = vunpack.c.l.b16 %v6503
    %v6900 = vunpack.c.h.b16 %v6503
    %v6901 = vunpack.c.l.b16 %v6504
    %v6902 = vunpack.c.h.b16 %v6504
    %v6903 = vunpack.c.l.b16 %v6505
    %v6904 = vunpack.c.h.b16 %v6505
    %v6905 = vunpack.c.l.b16 %v6506
    %v6906 = vunpack.c.h.b16 %v6506
    %v6907 = vunpack.c.l.b16 %v6507
    %v6908 = vunpack.c.h.b16 %v6507
    %v6909 = vunpack.c.l.b16 %v6508
    %v6910 = vunpack.c.h.b16 %v6508
    %v6911 = vunpack.c.l.b16 %v6509
    %v6912 = vunpack.c.h.b16 %v6509
    %v6913 = vunpack.c.l.b16 %v6510
    %v6914 = vunpack.c.h.b16 %v6510
    %v6915 = vunpack.c.l.b16 %v6511
    %v6916 = vunpack.c.h.b16 %v6511
    %v6917 = vunpack.c.l.b16 %v6512
    %v6918 = vunpack.c.h.b16 %v6512
    %v6919 = vunpack.c.l.b16 %v6513
    %v6920 = vunpack.c.h.b16 %v6513
    %v6921 = vunpack.c.l.b16 %v6514
    %v6922 = vunpack.c.h.b16 %v6514
    %v6923 = vunpack.c.l.b16 %v6515
    %v6924 = vunpack.c.h.b16 %v6515
    %v6925 = vunpack.c.l.b16 %v6516
    %v6926 = vunpack.c.h.b16 %v6516
    %v6927 = vunpack.c.l.b16 %v6517
    %v6928 = vunpack.c.h.b16 %v6517
    %v6929 = vunpack.c.l.b16 %v6518
    %v6930 = vunpack.c.h.b16 %v6518
    %v6931 = vunpack.c.l.b16 %v6519
    %v6932 = vunpack.c.h.b16 %v6519
    %v6933 = vunpack.c.l.b16 %v6520
    %v6934 = vunpack.c.h.b16 %v6520
    %v6935 = vunpack.c.l.b16 %v6521
    %v6936 = vunpack.c.h.b16 %v6521
    %v6937 = vunpack.c.l.b16 %v6522
    %v6938 = vunpack.c.h.b16 %v6522
    %v6939 = vpack.c.b16 %v6687, %v6683
    %v6940 = vpack.c.b16 %v6688, %v6684
    %v6941 = vpack.c.b16 %v6689, %v6685
    %v6942 = vpack.c.b16 %v6690, %v6686
    %v6943 = vpack.c.b16 %v6695, %v6691
    %v6944 = vpack.c.b16 %v6696, %v6692
    %v6945 = vpack.c.b16 %v6697, %v6693
    %v6946 = vpack.c.b16 %v6698, %v6694
    %v6947 = vpack.c.b16 %v6703, %v6699
    %v6948 = vpack.c.b16 %v6704, %v6700
    %v6949 = vpack.c.b16 %v6705, %v6701
    %v6950 = vpack.c.b16 %v6706, %v6702
    %v6951 = vpack.c.b16 %v6711, %v6707
    %v6952 = vpack.c.b16 %v6712, %v6708
    %v6953 = vpack.c.b16 %v6713, %v6709
    %v6954 = vpack.c.b16 %v6714, %v6710
    %v6955 = vpack.c.b16 %v6719, %v6715
    %v6956 = vpack.c.b16 %v6720, %v6716
    %v6957 = vpack.c.b16 %v6721, %v6717
    %v6958 = vpack.c.b16 %v6722, %v6718
    %v6959 = vpack.c.b16 %v6727, %v6723
    %v6960 = vpack.c.b16 %v6728, %v6724
    %v6961 = vpack.c.b16 %v6729, %v6725
    %v6962 = vpack.c.b16 %v6730, %v6726
    %v6963 = vpack.c.b16 %v6735, %v6731
    %v6964 = vpack.c.b16 %v6736, %v6732
    %v6965 = vpack.c.b16 %v6737, %v6733
    %v6966 = vpack.c.b16 %v6738, %v6734
    %v6967 = vpack.c.b16 %v6743, %v6739
    %v6968 = vpack.c.b16 %v6744, %v6740
    %v6969 = vpack.c.b16 %v6745, %v6741
    %v6970 = vpack.c.b16 %v6746, %v6742
    %v6971 = vpack.c.b16 %v6751, %v6747
    %v6972 = vpack.c.b16 %v6752, %v6748
    %v6973 = vpack.c.b16 %v6753, %v6749
    %v6974 = vpack.c.b16 %v6754, %v6750
    %v6975 = vpack.c.b16 %v6759, %v6755
    %v6976 = vpack.c.b16 %v6760, %v6756
    %v6977 = vpack.c.b16 %v6761, %v6757
    %v6978 = vpack.c.b16 %v6762, %v6758
    %v6979 = vpack.c.b16 %v6767, %v6763
    %v6980 = vpack.c.b16 %v6768, %v6764
    %v6981 = vpack.c.b16 %v6769, %v6765
    %v6982 = vpack.c.b16 %v6770, %v6766
    %v6983 = vpack.c.b16 %v6775, %v6771
    %v6984 = vpack.c.b16 %v6776, %v6772
    %v6985 = vpack.c.b16 %v6777, %v6773
    %v6986 = vpack.c.b16 %v6778, %v6774
    %v6987 = vpack.c.b16 %v6783, %v6779
    %v6988 = vpack.c.b16 %v6784, %v6780
    %v6989 = vpack.c.b16 %v6785, %v6781
    %v6990 = vpack.c.b16 %v6786, %v6782
    %v6991 = vpack.c.b16 %v6791, %v6787
    %v6992 = vpack.c.b16 %v6792, %v6788
    %v6993 = vpack.c.b16 %v6793, %v6789
    %v6994 = vpack.c.b16 %v6794, %v6790
    %v6995 = vpack.c.b16 %v6799, %v6795
    %v6996 = vpack.c.b16 %v6800, %v6796
    %v6997 = vpack.c.b16 %v6801, %v6797
    %v6998 = vpack.c.b16 %v6802, %v6798
    %v6999 = vpack.c.b16 %v6807, %v6803
    %v7000 = vpack.c.b16 %v6808, %v6804
    %v7001 = vpack.c.b16 %v6809, %v6805
    %v7002 = vpack.c.b16 %v6810, %v6806
    %v7003 = vpack.c.b16 %v6815, %v6811
    %v7004 = vpack.c.b16 %v6816, %v6812
    %v7005 = vpack.c.b16 %v6817, %v6813
    %v7006 = vpack.c.b16 %v6818, %v6814
    %v7007 = vpack.c.b16 %v6823, %v6819
    %v7008 = vpack.c.b16 %v6824, %v6820
    %v7009 = vpack.c.b16 %v6825, %v6821
    %v7010 = vpack.c.b16 %v6826, %v6822
    %v7011 = vpack.c.b16 %v6831, %v6827
    %v7012 = vpack.c.b16 %v6832, %v6828
    %v7013 = vpack.c.b16 %v6833, %v6829
    %v7014 = vpack.c.b16 %v6834, %v6830
    %v7015 = vpack.c.b16 %v6839, %v6835
    %v7016 = vpack.c.b16 %v6840, %v6836
    %v7017 = vpack.c.b16 %v6841, %v6837
    %v7018 = vpack.c.b16 %v6842, %v6838
    %v7019 = vpack.c.b16 %v6847, %v6843
    %v7020 = vpack.c.b16 %v6848, %v6844
    %v7021 = vpack.c.b16 %v6849, %v6845
    %v7022 = vpack.c.b16 %v6850, %v6846
    %v7023 = vpack.c.b16 %v6855, %v6851
    %v7024 = vpack.c.b16 %v6856, %v6852
    %v7025 = vpack.c.b16 %v6857, %v6853
    %v7026 = vpack.c.b16 %v6858, %v6854
    %v7027 = vpack.c.b16 %v6863, %v6859
    %v7028 = vpack.c.b16 %v6864, %v6860
    %v7029 = vpack.c.b16 %v6865, %v6861
    %v7030 = vpack.c.b16 %v6866, %v6862
    %v7031 = vpack.c.b16 %v6871, %v6867
    %v7032 = vpack.c.b16 %v6872, %v6868
    %v7033 = vpack.c.b16 %v6873, %v6869
    %v7034 = vpack.c.b16 %v6874, %v6870
    %v7035 = vpack.c.b16 %v6879, %v6875
    %v7036 = vpack.c.b16 %v6880, %v6876
    %v7037 = vpack.c.b16 %v6881, %v6877
    %v7038 = vpack.c.b16 %v6882, %v6878
    %v7039 = vpack.c.b16 %v6887, %v6883
    %v7040 = vpack.c.b16 %v6888, %v6884
    %v7041 = vpack.c.b16 %v6889, %v6885
    %v7042 = vpack.c.b16 %v6890, %v6886
    %v7043 = vpack.c.b16 %v6895, %v6891
    %v7044 = vpack.c.b16 %v6896, %v6892
    %v7045 = vpack.c.b16 %v6897, %v6893
    %v7046 = vpack.c.b16 %v6898, %v6894
    %v7047 = vpack.c.b16 %v6903, %v6899
    %v7048 = vpack.c.b16 %v6904, %v6900
    %v7049 = vpack.c.b16 %v6905, %v6901
    %v7050 = vpack.c.b16 %v6906, %v6902
    %v7051 = vpack.c.b16 %v6911, %v6907
    %v7052 = vpack.c.b16 %v6912, %v6908
    %v7053 = vpack.c.b16 %v6913, %v6909
    %v7054 = vpack.c.b16 %v6914, %v6910
    %v7055 = vpack.c.b16 %v6919, %v6915
    %v7056 = vpack.c.b16 %v6920, %v6916
    %v7057 = vpack.c.b16 %v6921, %v6917
    %v7058 = vpack.c.b16 %v6922, %v6918
    %v7059 = vpack.c.b16 %v6927, %v6923
    %v7060 = vpack.c.b16 %v6928, %v6924
    %v7061 = vpack.c.b16 %v6929, %v6925
    %v7062 = vpack.c.b16 %v6930, %v6926
    %v7063 = vpack.c.b16 %v6935, %v6931
    %v7064 = vpack.c.b16 %v6936, %v6932
    %v7065 = vpack.c.b16 %v6937, %v6933
    %v7066 = vpack.c.b16 %v6938, %v6934
    %7195 = vmatprep.subr.bf16.mxu0 0
    %7196 = vmatpush1.bf16.msra.mxu0 %v6523
    %7197 = vmatprep.subr.bf16.mxu0 0
    %7198 = vmatpush1.bf16.msra.mxu0 %v6524
    %7199 = vmatprep.subr.bf16.mxu0 0
    %7200 = vmatpush1.bf16.msra.mxu0 %v6525
    %7201 = vmatprep.subr.bf16.mxu0 0
    %7202 = vmatpush1.bf16.msra.mxu0 %v6526
    %7203 = vmatprep.subr.bf16.mxu0 0
    %7204 = vmatpush1.bf16.msra.mxu0 %v6527
    %7205 = vmatprep.subr.bf16.mxu0 0
    %7206 = vmatpush1.bf16.msra.mxu0 %v6528
    %7207 = vmatprep.subr.bf16.mxu0 0
    %7208 = vmatpush1.bf16.msra.mxu0 %v6529
    %7209 = vmatprep.subr.bf16.mxu0 0
    %7210 = vmatpush1.bf16.msra.mxu0 %v6530
    %7211 = vmatprep.subr.bf16.mxu0 0
    %7212 = vmatpush1.bf16.msra.mxu0 %v6531
    %7213 = vmatprep.subr.bf16.mxu0 0
    %7214 = vmatpush1.bf16.msra.mxu0 %v6532
    %7215 = vmatprep.subr.bf16.mxu0 0
    %7216 = vmatpush1.bf16.msra.mxu0 %v6533
    %7217 = vmatprep.subr.bf16.mxu0 0
    %7218 = vmatpush1.bf16.msra.mxu0 %v6534
    %7219 = vmatprep.subr.bf16.mxu0 0
    %7220 = vmatpush1.bf16.msra.mxu0 %v6535
    %7221 = vmatprep.subr.bf16.mxu0 0
    %7222 = vmatpush1.bf16.msra.mxu0 %v6536
    %7223 = vmatprep.subr.bf16.mxu0 0
    %7224 = vmatpush1.bf16.msra.mxu0 %v6537
    %7225 = vmatprep.subr.bf16.mxu0 0
    %7226 = vmatpush1.bf16.msra.mxu0 %v6538
    %7227 = vmatprep.mubr.bf16.mxu0 %v6940
    %7228 = vmatmul.mubr.bf16.gmra.mrb[0].mxu0 %v6939
    %v7229 = vpop.f32.mrb[0].mxu0
    %v7230 = vadd.f32 0.0, %v7229
    %v7231 = vpop.f32.mrb[0].mxu0
    %v7232 = vpop.f32.mrb[0].mxu0
    %v7233 = vadd.f32 0.0, %v7232
    %v7234 = vpop.f32.mrb[0].mxu0
    %7235 = vmatprep.mubr.bf16.mxu0 %v6944
    %7236 = vmatmul.mubr.bf16.gmra.mrb[0].mxu0 %v6943
    %v7237 = vpop.f32.mrb[0].mxu0
    %v7238 = vadd.f32 0.0, %v7237
    %v7239 = vpop.f32.mrb[0].mxu0
    %v7240 = vpop.f32.mrb[0].mxu0
    %v7241 = vadd.f32 0.0, %v7240
    %v7242 = vpop.f32.mrb[0].mxu0
    %7243 = vmatprep.mubr.bf16.mxu0 %v6948
    %7244 = vmatmul.mubr.bf16.gmra.mrb[0].mxu0 %v6947
    %v7245 = vpop.f32.mrb[0].mxu0
    %v7246 = vadd.f32 0.0, %v7245
    %v7247 = vpop.f32.mrb[0].mxu0
    %v7248 = vpop.f32.mrb[0].mxu0
    %v7249 = vadd.f32 0.0, %v7248
    %v7250 = vpop.f32.mrb[0].mxu0
    %7251 = vmatprep.mubr.bf16.mxu0 %v6952
    %7252 = vmatmul.mubr.bf16.gmra.mrb[0].mxu0 %v6951
    %v7253 = vpop.f32.mrb[0].mxu0
    %v7254 = vadd.f32 0.0, %v7253
    %v7255 = vpop.f32.mrb[0].mxu0
    %v7256 = vpop.f32.mrb[0].mxu0
    %v7257 = vadd.f32 0.0, %v7256
    %v7258 = vpop.f32.mrb[0].mxu0
    %7259 = vmatprep.mubr.bf16.mxu0 %v6956
    %7260 = vmatmul.mubr.bf16.gmra.mrb[0].mxu0 %v6955
    %v7261 = vpop.f32.mrb[0].mxu0
    %v7262 = vadd.f32 0.0, %v7261
    %v7263 = vpop.f32.mrb[0].mxu0
    %v7264 = vpop.f32.mrb[0].mxu0
    %v7265 = vadd.f32 0.0, %v7264
    %v7266 = vpop.f32.mrb[0].mxu0
    %7267 = vmatprep.mubr.bf16.mxu0 %v6960
    %7268 = vmatmul.mubr.bf16.gmra.mrb[0].mxu0 %v6959
    %v7269 = vpop.f32.mrb[0].mxu0
    %v7270 = vadd.f32 0.0, %v7269
    %v7271 = vpop.f32.mrb[0].mxu0
    %v7272 = vpop.f32.mrb[0].mxu0
    %v7273 = vadd.f32 0.0, %v7272
    %v7274 = vpop.f32.mrb[0].mxu0
    %7275 = vmatprep.mubr.bf16.mxu0 %v6964
    %7276 = vmatmul.mubr.bf16.gmra.mrb[0].mxu0 %v6963
    %v7277 = vpop.f32.mrb[0].mxu0
    %v7278 = vadd.f32 0.0, %v7277
    %v7279 = vpop.f32.mrb[0].mxu0
    %v7280 = vpop.f32.mrb[0].mxu0
    %v7281 = vadd.f32 0.0, %v7280
    %v7282 = vpop.f32.mrb[0].mxu0
    %7283 = vmatprep.mubr.bf16.mxu0 %v6968
    %7284 = vmatmul.mubr.bf16.gmra.mrb[0].mxu0 %v6967
    %v7285 = vpop.f32.mrb[0].mxu0
    %v7286 = vadd.f32 0.0, %v7285
    %v7287 = vpop.f32.mrb[0].mxu0
    %v7288 = vpop.f32.mrb[0].mxu0
    %v7289 = vadd.f32 0.0, %v7288
    %v7290 = vpop.f32.mrb[0].mxu0
    %7291 = vmatprep.mubr.bf16.mxu0 %v6972
    %7292 = vmatmul.mubr.bf16.gmra.mrb[0].mxu0 %v6971
    %v7293 = vpop.f32.mrb[0].mxu0
    %v7294 = vadd.f32 0.0, %v7293
    %v7295 = vpop.f32.mrb[0].mxu0
    %v7296 = vpop.f32.mrb[0].mxu0
    %v7297 = vadd.f32 0.0, %v7296
    %v7298 = vpop.f32.mrb[0].mxu0
    %7299 = vmatprep.mubr.bf16.mxu0 %v6976
    %7300 = vmatmul.mubr.bf16.gmra.mrb[0].mxu0 %v6975
    %v7301 = vpop.f32.mrb[0].mxu0
    %v7302 = vadd.f32 0.0, %v7301
    %v7303 = vpop.f32.mrb[0].mxu0
    %v7304 = vpop.f32.mrb[0].mxu0
    %v7305 = vadd.f32 0.0, %v7304
    %v7306 = vpop.f32.mrb[0].mxu0
    %7307 = vmatprep.mubr.bf16.mxu0 %v6980
    %7308 = vmatmul.mubr.bf16.gmra.mrb[0].mxu0 %v6979
    %v7309 = vpop.f32.mrb[0].mxu0
    %v7310 = vadd.f32 0.0, %v7309
    %v7311 = vpop.f32.mrb[0].mxu0
    %v7312 = vpop.f32.mrb[0].mxu0
    %v7313 = vadd.f32 0.0, %v7312
    %v7314 = vpop.f32.mrb[0].mxu0
    %7315 = vmatprep.mubr.bf16.mxu0 %v6984
    %7316 = vmatmul.mubr.bf16.gmra.mrb[0].mxu0 %v6983
    %v7317 = vpop.f32.mrb[0].mxu0
    %v7318 = vadd.f32 0.0, %v7317
    %v7319 = vpop.f32.mrb[0].mxu0
    %v7320 = vpop.f32.mrb[0].mxu0
    %v7321 = vadd.f32 0.0, %v7320
    %v7322 = vpop.f32.mrb[0].mxu0
    %7323 = vmatprep.mubr.bf16.mxu0 %v6988
    %7324 = vmatmul.mubr.bf16.gmra.mrb[0].mxu0 %v6987
    %v7325 = vpop.f32.mrb[0].mxu0
    %v7326 = vadd.f32 0.0, %v7325
    %v7327 = vpop.f32.mrb[0].mxu0
    %v7328 = vpop.f32.mrb[0].mxu0
    %v7329 = vadd.f32 0.0, %v7328
    %v7330 = vpop.f32.mrb[0].mxu0
    %7331 = vmatprep.mubr.bf16.mxu0 %v6992
    %7332 = vmatmul.mubr.bf16.gmra.mrb[0].mxu0 %v6991
    %v7333 = vpop.f32.mrb[0].mxu0
    %v7334 = vadd.f32 0.0, %v7333
    %v7335 = vpop.f32.mrb[0].mxu0
    %v7336 = vpop.f32.mrb[0].mxu0
    %v7337 = vadd.f32 0.0, %v7336
    %v7338 = vpop.f32.mrb[0].mxu0
    %7339 = vmatprep.mubr.bf16.mxu0 %v6996
    %7340 = vmatmul.mubr.bf16.gmra.mrb[0].mxu0 %v6995
    %v7341 = vpop.f32.mrb[0].mxu0
    %v7342 = vadd.f32 0.0, %v7341
    %v7343 = vpop.f32.mrb[0].mxu0
    %v7344 = vpop.f32.mrb[0].mxu0
    %v7345 = vadd.f32 0.0, %v7344
    %v7346 = vpop.f32.mrb[0].mxu0
    %7347 = vmatprep.mubr.bf16.mxu0 %v7000
    %7348 = vmatmul.mubr.bf16.gmra.mrb[0].mxu0 %v6999
    %v7349 = vpop.f32.mrb[0].mxu0
    %v7350 = vadd.f32 0.0, %v7349
    %v7351 = vpop.f32.mrb[0].mxu0
    %v7352 = vpop.f32.mrb[0].mxu0
    %v7353 = vadd.f32 0.0, %v7352
    %v7354 = vpop.f32.mrb[0].mxu0
    %7355 = vmatprep.mubr.bf16.mxu0 %v7004
    %7356 = vmatmul.mubr.bf16.gmra.mrb[0].mxu0 %v7003
    %v7357 = vpop.f32.mrb[0].mxu0
    %v7358 = vadd.f32 0.0, %v7357
    %v7359 = vpop.f32.mrb[0].mxu0
    %v7360 = vpop.f32.mrb[0].mxu0
    %v7361 = vadd.f32 0.0, %v7360
    %v7362 = vpop.f32.mrb[0].mxu0
    %7363 = vmatprep.mubr.bf16.mxu0 %v7008
    %7364 = vmatmul.mubr.bf16.gmra.mrb[0].mxu0 %v7007
    %v7365 = vpop.f32.mrb[0].mxu0
    %v7366 = vadd.f32 0.0, %v7365
    %v7367 = vpop.f32.mrb[0].mxu0
    %v7368 = vpop.f32.mrb[0].mxu0
    %v7369 = vadd.f32 0.0, %v7368
    %v7370 = vpop.f32.mrb[0].mxu0
    %7371 = vmatprep.mubr.bf16.mxu0 %v7012
    %7372 = vmatmul.mubr.bf16.gmra.mrb[0].mxu0 %v7011
    %v7373 = vpop.f32.mrb[0].mxu0
    %v7374 = vadd.f32 0.0, %v7373
    %v7375 = vpop.f32.mrb[0].mxu0
    %v7376 = vpop.f32.mrb[0].mxu0
    %v7377 = vadd.f32 0.0, %v7376
    %v7378 = vpop.f32.mrb[0].mxu0
    %7379 = vmatprep.mubr.bf16.mxu0 %v7016
    %7380 = vmatmul.mubr.bf16.gmra.mrb[0].mxu0 %v7015
    %v7381 = vpop.f32.mrb[0].mxu0
    %v7382 = vadd.f32 0.0, %v7381
    %v7383 = vpop.f32.mrb[0].mxu0
    %v7384 = vpop.f32.mrb[0].mxu0
    %v7385 = vadd.f32 0.0, %v7384
    %v7386 = vpop.f32.mrb[0].mxu0
    %7387 = vmatprep.mubr.bf16.mxu0 %v7020
    %7388 = vmatmul.mubr.bf16.gmra.mrb[0].mxu0 %v7019
    %v7389 = vpop.f32.mrb[0].mxu0
    %v7390 = vadd.f32 0.0, %v7389
    %v7391 = vpop.f32.mrb[0].mxu0
    %v7392 = vpop.f32.mrb[0].mxu0
    %v7393 = vadd.f32 0.0, %v7392
    %v7394 = vpop.f32.mrb[0].mxu0
    %7395 = vmatprep.mubr.bf16.mxu0 %v7024
    %7396 = vmatmul.mubr.bf16.gmra.mrb[0].mxu0 %v7023
    %v7397 = vpop.f32.mrb[0].mxu0
    %v7398 = vadd.f32 0.0, %v7397
    %v7399 = vpop.f32.mrb[0].mxu0
    %v7400 = vpop.f32.mrb[0].mxu0
    %v7401 = vadd.f32 0.0, %v7400
    %v7402 = vpop.f32.mrb[0].mxu0
    %7403 = vmatprep.mubr.bf16.mxu0 %v7028
    %7404 = vmatmul.mubr.bf16.gmra.mrb[0].mxu0 %v7027
    %v7405 = vpop.f32.mrb[0].mxu0
    %v7406 = vadd.f32 0.0, %v7405
    %v7407 = vpop.f32.mrb[0].mxu0
    %v7408 = vpop.f32.mrb[0].mxu0
    %v7409 = vadd.f32 0.0, %v7408
    %v7410 = vpop.f32.mrb[0].mxu0
    %7411 = vmatprep.mubr.bf16.mxu0 %v7032
    %7412 = vmatmul.mubr.bf16.gmra.mrb[0].mxu0 %v7031
    %v7413 = vpop.f32.mrb[0].mxu0
    %v7414 = vadd.f32 0.0, %v7413
    %v7415 = vpop.f32.mrb[0].mxu0
    %v7416 = vpop.f32.mrb[0].mxu0
    %v7417 = vadd.f32 0.0, %v7416
    %v7418 = vpop.f32.mrb[0].mxu0
    %7419 = vmatprep.mubr.bf16.mxu0 %v7036
    %7420 = vmatmul.mubr.bf16.gmra.mrb[0].mxu0 %v7035
    %v7421 = vpop.f32.mrb[0].mxu0
    %v7422 = vadd.f32 0.0, %v7421
    %v7423 = vpop.f32.mrb[0].mxu0
    %v7424 = vpop.f32.mrb[0].mxu0
    %v7425 = vadd.f32 0.0, %v7424
    %v7426 = vpop.f32.mrb[0].mxu0
    %7427 = vmatprep.mubr.bf16.mxu0 %v7040
    %7428 = vmatmul.mubr.bf16.gmra.mrb[0].mxu0 %v7039
    %v7429 = vpop.f32.mrb[0].mxu0
    %v7430 = vadd.f32 0.0, %v7429
    %v7431 = vpop.f32.mrb[0].mxu0
    %v7432 = vpop.f32.mrb[0].mxu0
    %v7433 = vadd.f32 0.0, %v7432
    %v7434 = vpop.f32.mrb[0].mxu0
    %7435 = vmatprep.mubr.bf16.mxu0 %v7044
    %7436 = vmatmul.mubr.bf16.gmra.mrb[0].mxu0 %v7043
    %v7437 = vpop.f32.mrb[0].mxu0
    %v7438 = vadd.f32 0.0, %v7437
    %v7439 = vpop.f32.mrb[0].mxu0
    %v7440 = vpop.f32.mrb[0].mxu0
    %v7441 = vadd.f32 0.0, %v7440
    %v7442 = vpop.f32.mrb[0].mxu0
    %7443 = vmatprep.mubr.bf16.mxu0 %v7048
    %7444 = vmatmul.mubr.bf16.gmra.mrb[0].mxu0 %v7047
    %v7445 = vpop.f32.mrb[0].mxu0
    %v7446 = vadd.f32 0.0, %v7445
    %v7447 = vpop.f32.mrb[0].mxu0
    %v7448 = vpop.f32.mrb[0].mxu0
    %v7449 = vadd.f32 0.0, %v7448
    %v7450 = vpop.f32.mrb[0].mxu0
    %7451 = vmatprep.mubr.bf16.mxu0 %v7052
    %7452 = vmatmul.mubr.bf16.gmra.mrb[0].mxu0 %v7051
    %v7453 = vpop.f32.mrb[0].mxu0
    %v7454 = vadd.f32 0.0, %v7453
    %v7455 = vpop.f32.mrb[0].mxu0
    %v7456 = vpop.f32.mrb[0].mxu0
    %v7457 = vadd.f32 0.0, %v7456
    %v7458 = vpop.f32.mrb[0].mxu0
    %7459 = vmatprep.mubr.bf16.mxu0 %v7056
    %7460 = vmatmul.mubr.bf16.gmra.mrb[0].mxu0 %v7055
    %v7461 = vpop.f32.mrb[0].mxu0
    %v7462 = vadd.f32 0.0, %v7461
    %v7463 = vpop.f32.mrb[0].mxu0
    %v7464 = vpop.f32.mrb[0].mxu0
    %v7465 = vadd.f32 0.0, %v7464
    %v7466 = vpop.f32.mrb[0].mxu0
    %7467 = vmatprep.mubr.bf16.mxu0 %v7060
    %7468 = vmatmul.mubr.bf16.gmra.mrb[0].mxu0 %v7059
    %v7469 = vpop.f32.mrb[0].mxu0
    %v7470 = vadd.f32 0.0, %v7469
    %v7471 = vpop.f32.mrb[0].mxu0
    %v7472 = vpop.f32.mrb[0].mxu0
    %v7473 = vadd.f32 0.0, %v7472
    %v7474 = vpop.f32.mrb[0].mxu0
    %7475 = vmatprep.mubr.bf16.mxu0 %v7064
    %7476 = vmatmul.mubr.bf16.gmra.mrb[0].mxu0 %v7063
    %v7477 = vpop.f32.mrb[0].mxu0
    %v7478 = vadd.f32 0.0, %v7477
    %v7479 = vpop.f32.mrb[0].mxu0
    %v7480 = vpop.f32.mrb[0].mxu0
    %v7481 = vadd.f32 0.0, %v7480
    %v7482 = vpop.f32.mrb[0].mxu0
    %7483 = vdwg.mxu0
    %7484 = vmatprep.subr.bf16.mxu0 0
    %7485 = vmatpush1.bf16.msra.mxu0 %v6539
    %7486 = vmatprep.subr.bf16.mxu0 0
    %7487 = vmatpush1.bf16.msra.mxu0 %v6540
    %7488 = vmatprep.subr.bf16.mxu0 0
    %7489 = vmatpush1.bf16.msra.mxu0 %v6541
    %7490 = vmatprep.subr.bf16.mxu0 0
    %7491 = vmatpush1.bf16.msra.mxu0 %v6542
    %7492 = vmatprep.subr.bf16.mxu0 0
    %7493 = vmatpush1.bf16.msra.mxu0 %v6543
    %7494 = vmatprep.subr.bf16.mxu0 0
    %7495 = vmatpush1.bf16.msra.mxu0 %v6544
    %7496 = vmatprep.subr.bf16.mxu0 0
    %7497 = vmatpush1.bf16.msra.mxu0 %v6545
    %7498 = vmatprep.subr.bf16.mxu0 0
    %7499 = vmatpush1.bf16.msra.mxu0 %v6546
    %7500 = vmatprep.subr.bf16.mxu0 0
    %7501 = vmatpush1.bf16.msra.mxu0 %v6547
    %7502 = vmatprep.subr.bf16.mxu0 0
    %7503 = vmatpush1.bf16.msra.mxu0 %v6548
    %7504 = vmatprep.subr.bf16.mxu0 0
    %7505 = vmatpush1.bf16.msra.mxu0 %v6549
    %7506 = vmatprep.subr.bf16.mxu0 0
    %7507 = vmatpush1.bf16.msra.mxu0 %v6550
    %7508 = vmatprep.subr.bf16.mxu0 0
    %7509 = vmatpush1.bf16.msra.mxu0 %v6551
    %7510 = vmatprep.subr.bf16.mxu0 0
    %7511 = vmatpush1.bf16.msra.mxu0 %v6552
    %7512 = vmatprep.subr.bf16.mxu0 0
    %7513 = vmatpush1.bf16.msra.mxu0 %v6553
    %7514 = vmatprep.subr.bf16.mxu0 0
    %7515 = vmatpush1.bf16.msra.mxu0 %v6554
    %7516 = vmatprep.mubr.bf16.mxu0 %v6942
    %7517 = vmatmul.mubr.bf16.gmra.mrb[0].mxu0 %v6941
    %v7518 = vpop.f32.mrb[0].mxu0
    %v7519 = vadd.f32 %v7230, %v7518
    %v7520 = vpop.f32.mrb[0].mxu0
    %v7521 = vpop.f32.mrb[0].mxu0
    %v7522 = vadd.f32 %v7233, %v7521
    %v7523 = vpop.f32.mrb[0].mxu0
    %7524 = vmatprep.mubr.bf16.mxu0 %v6946
    %7525 = vmatmul.mubr.bf16.gmra.mrb[0].mxu0 %v6945
    %v7526 = vpop.f32.mrb[0].mxu0
    %v7527 = vadd.f32 %v7238, %v7526
    %v7528 = vpop.f32.mrb[0].mxu0
    %v7529 = vpop.f32.mrb[0].mxu0
    %v7530 = vadd.f32 %v7241, %v7529
    %v7531 = vpop.f32.mrb[0].mxu0
    %7532 = vmatprep.mubr.bf16.mxu0 %v6950
    %7533 = vmatmul.mubr.bf16.gmra.mrb[0].mxu0 %v6949
    %v7534 = vpop.f32.mrb[0].mxu0
    %v7535 = vadd.f32 %v7246, %v7534
    %v7536 = vpop.f32.mrb[0].mxu0
    %v7537 = vpop.f32.mrb[0].mxu0
    %v7538 = vadd.f32 %v7249, %v7537
    %v7539 = vpop.f32.mrb[0].mxu0
    %7540 = vmatprep.mubr.bf16.mxu0 %v6954
    %7541 = vmatmul.mubr.bf16.gmra.mrb[0].mxu0 %v6953
    %v7542 = vpop.f32.mrb[0].mxu0
    %v7543 = vadd.f32 %v7254, %v7542
    %v7544 = vpop.f32.mrb[0].mxu0
    %v7545 = vpop.f32.mrb[0].mxu0
    %v7546 = vadd.f32 %v7257, %v7545
    %v7547 = vpop.f32.mrb[0].mxu0
    %7548 = vmatprep.mubr.bf16.mxu0 %v6958
    %7549 = vmatmul.mubr.bf16.gmra.mrb[0].mxu0 %v6957
    %v7550 = vpop.f32.mrb[0].mxu0
    %v7551 = vadd.f32 %v7262, %v7550
    %v7552 = vpop.f32.mrb[0].mxu0
    %v7553 = vpop.f32.mrb[0].mxu0
    %v7554 = vadd.f32 %v7265, %v7553
    %v7555 = vpop.f32.mrb[0].mxu0
    %7556 = vmatprep.mubr.bf16.mxu0 %v6962
    %7557 = vmatmul.mubr.bf16.gmra.mrb[0].mxu0 %v6961
    %v7558 = vpop.f32.mrb[0].mxu0
    %v7559 = vadd.f32 %v7270, %v7558
    %v7560 = vpop.f32.mrb[0].mxu0
    %v7561 = vpop.f32.mrb[0].mxu0
    %v7562 = vadd.f32 %v7273, %v7561
    %v7563 = vpop.f32.mrb[0].mxu0
    %7564 = vmatprep.mubr.bf16.mxu0 %v6966
    %7565 = vmatmul.mubr.bf16.gmra.mrb[0].mxu0 %v6965
    %v7566 = vpop.f32.mrb[0].mxu0
    %v7567 = vadd.f32 %v7278, %v7566
    %v7568 = vpop.f32.mrb[0].mxu0
    %v7569 = vpop.f32.mrb[0].mxu0
    %v7570 = vadd.f32 %v7281, %v7569
    %v7571 = vpop.f32.mrb[0].mxu0
    %7572 = vmatprep.mubr.bf16.mxu0 %v6970
    %7573 = vmatmul.mubr.bf16.gmra.mrb[0].mxu0 %v6969
    %v7574 = vpop.f32.mrb[0].mxu0
    %v7575 = vadd.f32 %v7286, %v7574
    %v7576 = vpop.f32.mrb[0].mxu0
    %v7577 = vpop.f32.mrb[0].mxu0
    %v7578 = vadd.f32 %v7289, %v7577
    %v7579 = vpop.f32.mrb[0].mxu0
    %7580 = vmatprep.mubr.bf16.mxu0 %v6974
    %7581 = vmatmul.mubr.bf16.gmra.mrb[0].mxu0 %v6973
    %v7582 = vpop.f32.mrb[0].mxu0
    %v7583 = vadd.f32 %v7294, %v7582
    %v7584 = vpop.f32.mrb[0].mxu0
    %v7585 = vpop.f32.mrb[0].mxu0
    %v7586 = vadd.f32 %v7297, %v7585
    %v7587 = vpop.f32.mrb[0].mxu0
    %7588 = vmatprep.mubr.bf16.mxu0 %v6978
    %7589 = vmatmul.mubr.bf16.gmra.mrb[0].mxu0 %v6977
    %v7590 = vpop.f32.mrb[0].mxu0
    %v7591 = vadd.f32 %v7302, %v7590
    %v7592 = vpop.f32.mrb[0].mxu0
    %v7593 = vpop.f32.mrb[0].mxu0
    %v7594 = vadd.f32 %v7305, %v7593
    %v7595 = vpop.f32.mrb[0].mxu0
    %7596 = vmatprep.mubr.bf16.mxu0 %v6982
    %7597 = vmatmul.mubr.bf16.gmra.mrb[0].mxu0 %v6981
    %v7598 = vpop.f32.mrb[0].mxu0
    %v7599 = vadd.f32 %v7310, %v7598
    %v7600 = vpop.f32.mrb[0].mxu0
    %v7601 = vpop.f32.mrb[0].mxu0
    %v7602 = vadd.f32 %v7313, %v7601
    %v7603 = vpop.f32.mrb[0].mxu0
    %7604 = vmatprep.mubr.bf16.mxu0 %v6986
    %7605 = vmatmul.mubr.bf16.gmra.mrb[0].mxu0 %v6985
    %v7606 = vpop.f32.mrb[0].mxu0
    %v7607 = vadd.f32 %v7318, %v7606
    %v7608 = vpop.f32.mrb[0].mxu0
    %v7609 = vpop.f32.mrb[0].mxu0
    %v7610 = vadd.f32 %v7321, %v7609
    %v7611 = vpop.f32.mrb[0].mxu0
    %7612 = vmatprep.mubr.bf16.mxu0 %v6990
    %7613 = vmatmul.mubr.bf16.gmra.mrb[0].mxu0 %v6989
    %v7614 = vpop.f32.mrb[0].mxu0
    %v7615 = vadd.f32 %v7326, %v7614
    %v7616 = vpop.f32.mrb[0].mxu0
    %v7617 = vpop.f32.mrb[0].mxu0
    %v7618 = vadd.f32 %v7329, %v7617
    %v7619 = vpop.f32.mrb[0].mxu0
    %7620 = vmatprep.mubr.bf16.mxu0 %v6994
    %7621 = vmatmul.mubr.bf16.gmra.mrb[0].mxu0 %v6993
    %v7622 = vpop.f32.mrb[0].mxu0
    %v7623 = vadd.f32 %v7334, %v7622
    %v7624 = vpop.f32.mrb[0].mxu0
    %v7625 = vpop.f32.mrb[0].mxu0
    %v7626 = vadd.f32 %v7337, %v7625
    %v7627 = vpop.f32.mrb[0].mxu0
    %7628 = vmatprep.mubr.bf16.mxu0 %v6998
    %7629 = vmatmul.mubr.bf16.gmra.mrb[0].mxu0 %v6997
    %v7630 = vpop.f32.mrb[0].mxu0
    %v7631 = vadd.f32 %v7342, %v7630
    %v7632 = vpop.f32.mrb[0].mxu0
    %v7633 = vpop.f32.mrb[0].mxu0
    %v7634 = vadd.f32 %v7345, %v7633
    %v7635 = vpop.f32.mrb[0].mxu0
    %7636 = vmatprep.mubr.bf16.mxu0 %v7002
    %7637 = vmatmul.mubr.bf16.gmra.mrb[0].mxu0 %v7001
    %v7638 = vpop.f32.mrb[0].mxu0
    %v7639 = vadd.f32 %v7350, %v7638
    %v7640 = vpop.f32.mrb[0].mxu0
    %v7641 = vpop.f32.mrb[0].mxu0
    %v7642 = vadd.f32 %v7353, %v7641
    %v7643 = vpop.f32.mrb[0].mxu0
    %7644 = vmatprep.mubr.bf16.mxu0 %v7006
    %7645 = vmatmul.mubr.bf16.gmra.mrb[0].mxu0 %v7005
    %v7646 = vpop.f32.mrb[0].mxu0
    %v7647 = vadd.f32 %v7358, %v7646
    %v7648 = vpop.f32.mrb[0].mxu0
    %v7649 = vpop.f32.mrb[0].mxu0
    %v7650 = vadd.f32 %v7361, %v7649
    %v7651 = vpop.f32.mrb[0].mxu0
    %7652 = vmatprep.mubr.bf16.mxu0 %v7010
    %7653 = vmatmul.mubr.bf16.gmra.mrb[0].mxu0 %v7009
    %v7654 = vpop.f32.mrb[0].mxu0
    %v7655 = vadd.f32 %v7366, %v7654
    %v7656 = vpop.f32.mrb[0].mxu0
    %v7657 = vpop.f32.mrb[0].mxu0
    %v7658 = vadd.f32 %v7369, %v7657
    %v7659 = vpop.f32.mrb[0].mxu0
    %7660 = vmatprep.mubr.bf16.mxu0 %v7014
    %7661 = vmatmul.mubr.bf16.gmra.mrb[0].mxu0 %v7013
    %v7662 = vpop.f32.mrb[0].mxu0
    %v7663 = vadd.f32 %v7374, %v7662
    %v7664 = vpop.f32.mrb[0].mxu0
    %v7665 = vpop.f32.mrb[0].mxu0
    %v7666 = vadd.f32 %v7377, %v7665
    %v7667 = vpop.f32.mrb[0].mxu0
    %7668 = vmatprep.mubr.bf16.mxu0 %v7018
    %7669 = vmatmul.mubr.bf16.gmra.mrb[0].mxu0 %v7017
    %v7670 = vpop.f32.mrb[0].mxu0
    %v7671 = vadd.f32 %v7382, %v7670
    %v7672 = vpop.f32.mrb[0].mxu0
    %v7673 = vpop.f32.mrb[0].mxu0
    %v7674 = vadd.f32 %v7385, %v7673
    %v7675 = vpop.f32.mrb[0].mxu0
    %7676 = vmatprep.mubr.bf16.mxu0 %v7022
    %7677 = vmatmul.mubr.bf16.gmra.mrb[0].mxu0 %v7021
    %v7678 = vpop.f32.mrb[0].mxu0
    %v7679 = vadd.f32 %v7390, %v7678
    %v7680 = vpop.f32.mrb[0].mxu0
    %v7681 = vpop.f32.mrb[0].mxu0
    %v7682 = vadd.f32 %v7393, %v7681
    %v7683 = vpop.f32.mrb[0].mxu0
    %7684 = vmatprep.mubr.bf16.mxu0 %v7026
    %7685 = vmatmul.mubr.bf16.gmra.mrb[0].mxu0 %v7025
    %v7686 = vpop.f32.mrb[0].mxu0
    %v7687 = vadd.f32 %v7398, %v7686
    %v7688 = vpop.f32.mrb[0].mxu0
    %v7689 = vpop.f32.mrb[0].mxu0
    %v7690 = vadd.f32 %v7401, %v7689
    %v7691 = vpop.f32.mrb[0].mxu0
    %7692 = vmatprep.mubr.bf16.mxu0 %v7030
    %7693 = vmatmul.mubr.bf16.gmra.mrb[0].mxu0 %v7029
    %v7694 = vpop.f32.mrb[0].mxu0
    %v7695 = vadd.f32 %v7406, %v7694
    %v7696 = vpop.f32.mrb[0].mxu0
    %v7697 = vpop.f32.mrb[0].mxu0
    %v7698 = vadd.f32 %v7409, %v7697
    %v7699 = vpop.f32.mrb[0].mxu0
    %7700 = vmatprep.mubr.bf16.mxu0 %v7034
    %7701 = vmatmul.mubr.bf16.gmra.mrb[0].mxu0 %v7033
    %v7702 = vpop.f32.mrb[0].mxu0
    %v7703 = vadd.f32 %v7414, %v7702
    %v7704 = vpop.f32.mrb[0].mxu0
    %v7705 = vpop.f32.mrb[0].mxu0
    %v7706 = vadd.f32 %v7417, %v7705
    %v7707 = vpop.f32.mrb[0].mxu0
    %7708 = vmatprep.mubr.bf16.mxu0 %v7038
    %7709 = vmatmul.mubr.bf16.gmra.mrb[0].mxu0 %v7037
    %v7710 = vpop.f32.mrb[0].mxu0
    %v7711 = vadd.f32 %v7422, %v7710
    %v7712 = vpop.f32.mrb[0].mxu0
    %v7713 = vpop.f32.mrb[0].mxu0
    %v7714 = vadd.f32 %v7425, %v7713
    %v7715 = vpop.f32.mrb[0].mxu0
    %7716 = vmatprep.mubr.bf16.mxu0 %v7042
    %7717 = vmatmul.mubr.bf16.gmra.mrb[0].mxu0 %v7041
    %v7718 = vpop.f32.mrb[0].mxu0
    %v7719 = vadd.f32 %v7430, %v7718
    %v7720 = vpop.f32.mrb[0].mxu0
    %v7721 = vpop.f32.mrb[0].mxu0
    %v7722 = vadd.f32 %v7433, %v7721
    %v7723 = vpop.f32.mrb[0].mxu0
    %7724 = vmatprep.mubr.bf16.mxu0 %v7046
    %7725 = vmatmul.mubr.bf16.gmra.mrb[0].mxu0 %v7045
    %v7726 = vpop.f32.mrb[0].mxu0
    %v7727 = vadd.f32 %v7438, %v7726
    %v7728 = vpop.f32.mrb[0].mxu0
    %v7729 = vpop.f32.mrb[0].mxu0
    %v7730 = vadd.f32 %v7441, %v7729
    %v7731 = vpop.f32.mrb[0].mxu0
    %7732 = vmatprep.mubr.bf16.mxu0 %v7050
    %7733 = vmatmul.mubr.bf16.gmra.mrb[0].mxu0 %v7049
    %v7734 = vpop.f32.mrb[0].mxu0
    %v7735 = vadd.f32 %v7446, %v7734
    %v7736 = vpop.f32.mrb[0].mxu0
    %v7737 = vpop.f32.mrb[0].mxu0
    %v7738 = vadd.f32 %v7449, %v7737
    %v7739 = vpop.f32.mrb[0].mxu0
    %7740 = vmatprep.mubr.bf16.mxu0 %v7054
    %7741 = vmatmul.mubr.bf16.gmra.mrb[0].mxu0 %v7053
    %v7742 = vpop.f32.mrb[0].mxu0
    %v7743 = vadd.f32 %v7454, %v7742
    %v7744 = vpop.f32.mrb[0].mxu0
    %v7745 = vpop.f32.mrb[0].mxu0
    %v7746 = vadd.f32 %v7457, %v7745
    %v7747 = vpop.f32.mrb[0].mxu0
    %7748 = vmatprep.mubr.bf16.mxu0 %v7058
    %7749 = vmatmul.mubr.bf16.gmra.mrb[0].mxu0 %v7057
    %v7750 = vpop.f32.mrb[0].mxu0
    %v7751 = vadd.f32 %v7462, %v7750
    %v7752 = vpop.f32.mrb[0].mxu0
    %v7753 = vpop.f32.mrb[0].mxu0
    %v7754 = vadd.f32 %v7465, %v7753
    %v7755 = vpop.f32.mrb[0].mxu0
    %7756 = vmatprep.mubr.bf16.mxu0 %v7062
    %7757 = vmatmul.mubr.bf16.gmra.mrb[0].mxu0 %v7061
    %v7758 = vpop.f32.mrb[0].mxu0
    %v7759 = vadd.f32 %v7470, %v7758
    %v7760 = vpop.f32.mrb[0].mxu0
    %v7761 = vpop.f32.mrb[0].mxu0
    %v7762 = vadd.f32 %v7473, %v7761
    %v7763 = vpop.f32.mrb[0].mxu0
    %7764 = vmatprep.mubr.bf16.mxu0 %v7066
    %7765 = vmatmul.mubr.bf16.gmra.mrb[0].mxu0 %v7065
    %v7766 = vpop.f32.mrb[0].mxu0
    %v7767 = vadd.f32 %v7478, %v7766
    %v7768 = vpop.f32.mrb[0].mxu0
    %v7769 = vpop.f32.mrb[0].mxu0
    %v7770 = vadd.f32 %v7481, %v7769
    %v7771 = vpop.f32.mrb[0].mxu0
    %7772 = vdwg.mxu0
    %v7773 = vmax.f32 %v7519, %v7583
    %v7774 = vmax.f32 %v7522, %v7586
    %v7775 = vmax.f32 %v7527, %v7591
    %v7776 = vmax.f32 %v7530, %v7594
    %v7777 = vmax.f32 %v7535, %v7599
    %v7778 = vmax.f32 %v7538, %v7602
    %v7779 = vmax.f32 %v7543, %v7607
    %v7780 = vmax.f32 %v7546, %v7610
    %v7781 = vmax.f32 %v7551, %v7615
    %v7782 = vmax.f32 %v7554, %v7618
    %v7783 = vmax.f32 %v7559, %v7623
    %v7784 = vmax.f32 %v7562, %v7626
    %v7785 = vmax.f32 %v7567, %v7631
    %v7786 = vmax.f32 %v7570, %v7634
    %v7787 = vmax.f32 %v7575, %v7639
    %v7788 = vmax.f32 %v7578, %v7642
    %v7789 = vmax.f32 %v7647, %v7711
    %v7790 = vmax.f32 %v7650, %v7714
    %v7791 = vmax.f32 %v7655, %v7719
    %v7792 = vmax.f32 %v7658, %v7722
    %v7793 = vmax.f32 %v7663, %v7727
    %v7794 = vmax.f32 %v7666, %v7730
    %v7795 = vmax.f32 %v7671, %v7735
    %v7796 = vmax.f32 %v7674, %v7738
    %v7797 = vmax.f32 %v7679, %v7743
    %v7798 = vmax.f32 %v7682, %v7746
    %v7799 = vmax.f32 %v7687, %v7751
    %v7800 = vmax.f32 %v7690, %v7754
    %v7801 = vmax.f32 %v7695, %v7759
    %v7802 = vmax.f32 %v7698, %v7762
    %v7803 = vmax.f32 %v7703, %v7767
    %v7804 = vmax.f32 %v7706, %v7770
    %v7805 = vmax.f32 %v7773, %v7789
    %v7806 = vmax.f32 %v7774, %v7790
    %v7807 = vmax.f32 %v7775, %v7791
    %v7808 = vmax.f32 %v7776, %v7792
    %v7809 = vmax.f32 %v7777, %v7793
    %v7810 = vmax.f32 %v7778, %v7794
    %v7811 = vmax.f32 %v7779, %v7795
    %v7812 = vmax.f32 %v7780, %v7796
    %v7813 = vmax.f32 %v7781, %v7797
    %v7814 = vmax.f32 %v7782, %v7798
    %v7815 = vmax.f32 %v7783, %v7799
    %v7816 = vmax.f32 %v7784, %v7800
    %v7817 = vmax.f32 %v7785, %v7801
    %v7818 = vmax.f32 %v7786, %v7802
    %v7819 = vmax.f32 %v7787, %v7803
    %v7820 = vmax.f32 %v7788, %v7804
    %vm7821 = vcmask 130048
    %7822 = vst.msk [vmem:[#allocation2] sm:$0xff] %vm7821, 0.0
    %7823 = vst.msk [vmem:[#allocation2 + $0x8] sm:$0xff] %vm7821, 0.0
    %7824 = vst.msk [vmem:[#allocation2 + $0x10] sm:$0xff] %vm7821, 0.0
    %7825 = vst.msk [vmem:[#allocation2 + $0x18] sm:$0xff] %vm7821, 0.0
    %7826 = vst.msk [vmem:[#allocation2 + $0x20] sm:$0xff] %vm7821, 0.0
    %7827 = vst.msk [vmem:[#allocation2 + $0x28] sm:$0xff] %vm7821, 0.0
    %7828 = vst.msk [vmem:[#allocation2 + $0x30] sm:$0xff] %vm7821, 0.0
    %7829 = vst.msk [vmem:[#allocation2 + $0x38] sm:$0xff] %vm7821, 0.0
    %7830 = vst.msk [vmem:[#allocation2 + $0x40] sm:$0xff] %vm7821, 0.0
    %7831 = vst.msk [vmem:[#allocation2 + $0x48] sm:$0xff] %vm7821, 0.0
    %7832 = vst.msk [vmem:[#allocation2 + $0x50] sm:$0xff] %vm7821, 0.0
    %7833 = vst.msk [vmem:[#allocation2 + $0x58] sm:$0xff] %vm7821, 0.0
    %7834 = vst.msk [vmem:[#allocation2 + $0x60] sm:$0xff] %vm7821, 0.0
    %7835 = vst.msk [vmem:[#allocation2 + $0x68] sm:$0xff] %vm7821, 0.0
    %7836 = vst.msk [vmem:[#allocation2 + $0x70] sm:$0xff] %vm7821, 0.0
    %7837 = vst.msk [vmem:[#allocation2 + $0x78] sm:$0xff] %vm7821, 0.0
    %7838 = vst.msk [vmem:[#allocation2 + $0x80] sm:$0xff] %vm7821, 0.0
    %7839 = vst.msk [vmem:[#allocation2 + $0x88] sm:$0xff] %vm7821, 0.0
    %7840 = vst.msk [vmem:[#allocation2 + $0x90] sm:$0xff] %vm7821, 0.0
    %7841 = vst.msk [vmem:[#allocation2 + $0x98] sm:$0xff] %vm7821, 0.0
    %7842 = vst.msk [vmem:[#allocation2 + $0x10] sm:$0xff] %vm7821, %v7805
    %7843 = vst.msk [vmem:[#allocation2 + $0x18] sm:$0xff] %vm7821, %v7806
    %7844 = vst.msk [vmem:[#allocation2 + $0x20] sm:$0xff] %vm7821, %v7807
    %7845 = vst.msk [vmem:[#allocation2 + $0x28] sm:$0xff] %vm7821, %v7808
    %7846 = vst.msk [vmem:[#allocation2 + $0x30] sm:$0xff] %vm7821, %v7809
    %7847 = vst.msk [vmem:[#allocation2 + $0x38] sm:$0xff] %vm7821, %v7810
    %7848 = vst.msk [vmem:[#allocation2 + $0x40] sm:$0xff] %vm7821, %v7811
    %7849 = vst.msk [vmem:[#allocation2 + $0x48] sm:$0xff] %vm7821, %v7812
    %7850 = vst.msk [vmem:[#allocation2 + $0x50] sm:$0xff] %vm7821, %v7813
    %7851 = vst.msk [vmem:[#allocation2 + $0x58] sm:$0xff] %vm7821, %v7814
    %7852 = vst.msk [vmem:[#allocation2 + $0x60] sm:$0xff] %vm7821, %v7815
    %7853 = vst.msk [vmem:[#allocation2 + $0x68] sm:$0xff] %vm7821, %v7816
    %7854 = vst.msk [vmem:[#allocation2 + $0x70] sm:$0xff] %vm7821, %v7817
    %7855 = vst.msk [vmem:[#allocation2 + $0x78] sm:$0xff] %vm7821, %v7818
    %7856 = vst.msk [vmem:[#allocation2 + $0x80] sm:$0xff] %vm7821, %v7819
    %7857 = vst.msk [vmem:[#allocation2 + $0x88] sm:$0xff] %vm7821, %v7820
    %v7858 = vld [vmem:[#allocation2 + $0x7] sm:$0xff]
    %v7859 = vld [vmem:[#allocation2 + $0xf] sm:$0xff]
    %v7860 = vld [vmem:[#allocation2 + $0x17] sm:$0xff]
    %v7861 = vld [vmem:[#allocation2 + $0x1f] sm:$0xff]
    %v7862 = vld [vmem:[#allocation2 + $0x27] sm:$0xff]
    %v7863 = vld [vmem:[#allocation2 + $0x2f] sm:$0xff]
    %v7864 = vld [vmem:[#allocation2 + $0x37] sm:$0xff]
    %v7865 = vld [vmem:[#allocation2 + $0x3f] sm:$0xff]
    %v7866 = vld [vmem:[#allocation2 + $0x47] sm:$0xff]
    %v7867 = vld [vmem:[#allocation2 + $0x4f] sm:$0xff]
    %v7868 = vld [vmem:[#allocation2 + $0x57] sm:$0xff]
    %v7869 = vld [vmem:[#allocation2 + $0x5f] sm:$0xff]
    %v7870 = vld [vmem:[#allocation2 + $0x67] sm:$0xff]
    %v7871 = vld [vmem:[#allocation2 + $0x6f] sm:$0xff]
    %v7872 = vld [vmem:[#allocation2 + $0x77] sm:$0xff]
    %v7873 = vld [vmem:[#allocation2 + $0x7f] sm:$0xff]
    %v7874 = vld [vmem:[%s5] sm:$0xff]
    %v7875 = vld [vmem:[%s5 + $0x8] sm:$0xff]
    %v7876 = vld [vmem:[%s5 + $0x10] sm:$0xff]
    %v7877 = vld [vmem:[%s5 + $0x18] sm:$0xff]
    %v7878 = vld [vmem:[%s5 + $0x20] sm:$0xff]
    %v7879 = vld [vmem:[%s5 + $0x28] sm:$0xff]
    %v7880 = vld [vmem:[%s5 + $0x30] sm:$0xff]
    %v7881 = vld [vmem:[%s5 + $0x38] sm:$0xff]
    %v7882 = vld [vmem:[%s5 + $0x40] sm:$0xff]
    %v7883 = vld [vmem:[%s5 + $0x48] sm:$0xff]
    %v7884 = vld [vmem:[%s5 + $0x50] sm:$0xff]
    %v7885 = vld [vmem:[%s5 + $0x58] sm:$0xff]
    %v7886 = vld [vmem:[%s5 + $0x60] sm:$0xff]
    %v7887 = vld [vmem:[%s5 + $0x68] sm:$0xff]
    %v7888 = vld [vmem:[%s5 + $0x70] sm:$0xff]
    %v7889 = vld [vmem:[%s5 + $0x78] sm:$0xff]
    %7891 = vset.pattern.permute.xlu0 0
    %7892 = vperm.xlu0 %7891, %v7874
    %v7893 = vpop.permute.xlu0 %7892
    %7896 = vset.pattern.permute.xlu0 0
    %7897 = vperm.xlu0 %7896, %v7875
    %v7898 = vpop.permute.xlu0 %7897
    %7901 = vset.pattern.permute.xlu0 0
    %7902 = vperm.xlu0 %7901, %v7876
    %v7903 = vpop.permute.xlu0 %7902
    %7906 = vset.pattern.permute.xlu0 0
    %7907 = vperm.xlu0 %7906, %v7877
    %v7908 = vpop.permute.xlu0 %7907
    %7911 = vset.pattern.permute.xlu0 0
    %7912 = vperm.xlu0 %7911, %v7878
    %v7913 = vpop.permute.xlu0 %7912
    %7916 = vset.pattern.permute.xlu0 0
    %7917 = vperm.xlu0 %7916, %v7879
    %v7918 = vpop.permute.xlu0 %7917
    %7921 = vset.pattern.permute.xlu0 0
    %7922 = vperm.xlu0 %7921, %v7880
    %v7923 = vpop.permute.xlu0 %7922
    %7926 = vset.pattern.permute.xlu0 0
    %7927 = vperm.xlu0 %7926, %v7881
    %v7928 = vpop.permute.xlu0 %7927
    %7931 = vset.pattern.permute.xlu0 0
    %7932 = vperm.xlu0 %7931, %v7882
    %v7933 = vpop.permute.xlu0 %7932
    %7936 = vset.pattern.permute.xlu0 0
    %7937 = vperm.xlu0 %7936, %v7883
    %v7938 = vpop.permute.xlu0 %7937
    %7941 = vset.pattern.permute.xlu0 0
    %7942 = vperm.xlu0 %7941, %v7884
    %v7943 = vpop.permute.xlu0 %7942
    %7946 = vset.pattern.permute.xlu0 0
    %7947 = vperm.xlu0 %7946, %v7885
    %v7948 = vpop.permute.xlu0 %7947
    %7951 = vset.pattern.permute.xlu0 0
    %7952 = vperm.xlu0 %7951, %v7886
    %v7953 = vpop.permute.xlu0 %7952
    %7956 = vset.pattern.permute.xlu0 0
    %7957 = vperm.xlu0 %7956, %v7887
    %v7958 = vpop.permute.xlu0 %7957
    %7961 = vset.pattern.permute.xlu0 0
    %7962 = vperm.xlu0 %7961, %v7888
    %v7963 = vpop.permute.xlu0 %7962
    %7966 = vset.pattern.permute.xlu0 0
    %7967 = vperm.xlu0 %7966, %v7889
    %v7968 = vpop.permute.xlu0 %7967
    %v7970 = vmul.f32 %v7858, %v7893
    %v7971 = vmul.f32 %v7859, %v7898
    %v7972 = vmul.f32 %v7860, %v7903
    %v7973 = vmul.f32 %v7861, %v7908
    %v7974 = vmul.f32 %v7862, %v7913
    %v7975 = vmul.f32 %v7863, %v7918
    %v7976 = vmul.f32 %v7864, %v7923
    %v7977 = vmul.f32 %v7865, %v7928
    %v7978 = vmul.f32 %v7866, %v7933
    %v7979 = vmul.f32 %v7867, %v7938
    %v7980 = vmul.f32 %v7868, %v7943
    %v7981 = vmul.f32 %v7869, %v7948
    %v7982 = vmul.f32 %v7870, %v7953
    %v7983 = vmul.f32 %v7871, %v7958
    %v7984 = vmul.f32 %v7872, %v7963
    %v7985 = vmul.f32 %v7873, %v7968
    %v7986 = vld [vmem:[#allocation2 + $0x8] sm:$0xff]
    %v7987 = vld [vmem:[#allocation2 + $0x10] sm:$0xff]
    %v7988 = vld [vmem:[#allocation2 + $0x18] sm:$0xff]
    %v7989 = vld [vmem:[#allocation2 + $0x20] sm:$0xff]
    %v7990 = vld [vmem:[#allocation2 + $0x28] sm:$0xff]
    %v7991 = vld [vmem:[#allocation2 + $0x30] sm:$0xff]
    %v7992 = vld [vmem:[#allocation2 + $0x38] sm:$0xff]
    %v7993 = vld [vmem:[#allocation2 + $0x40] sm:$0xff]
    %v7994 = vld [vmem:[#allocation2 + $0x48] sm:$0xff]
    %v7995 = vld [vmem:[#allocation2 + $0x50] sm:$0xff]
    %v7996 = vld [vmem:[#allocation2 + $0x58] sm:$0xff]
    %v7997 = vld [vmem:[#allocation2 + $0x60] sm:$0xff]
    %v7998 = vld [vmem:[#allocation2 + $0x68] sm:$0xff]
    %v7999 = vld [vmem:[#allocation2 + $0x70] sm:$0xff]
    %v8000 = vld [vmem:[#allocation2 + $0x78] sm:$0xff]
    %v8001 = vld [vmem:[#allocation2 + $0x80] sm:$0xff]
    %8002 = vset.pattern.permute.xlu0 1
    %8003 = vperm.xlu0 %8002, %v7874
    %v8004 = vpop.permute.xlu0 %8003
    %8006 = vset.pattern.permute.xlu0 1
    %8007 = vperm.xlu0 %8006, %v7875
    %v8008 = vpop.permute.xlu0 %8007
    %8010 = vset.pattern.permute.xlu0 1
    %8011 = vperm.xlu0 %8010, %v7876
    %v8012 = vpop.permute.xlu0 %8011
    %8014 = vset.pattern.permute.xlu0 1
    %8015 = vperm.xlu0 %8014, %v7877
    %v8016 = vpop.permute.xlu0 %8015
    %8018 = vset.pattern.permute.xlu0 1
    %8019 = vperm.xlu0 %8018, %v7878
    %v8020 = vpop.permute.xlu0 %8019
    %8022 = vset.pattern.permute.xlu0 1
    %8023 = vperm.xlu0 %8022, %v7879
    %v8024 = vpop.permute.xlu0 %8023
    %8026 = vset.pattern.permute.xlu0 1
    %8027 = vperm.xlu0 %8026, %v7880
    %v8028 = vpop.permute.xlu0 %8027
    %8030 = vset.pattern.permute.xlu0 1
    %8031 = vperm.xlu0 %8030, %v7881
    %v8032 = vpop.permute.xlu0 %8031
    %8034 = vset.pattern.permute.xlu0 1
    %8035 = vperm.xlu0 %8034, %v7882
    %v8036 = vpop.permute.xlu0 %8035
    %8038 = vset.pattern.permute.xlu0 1
    %8039 = vperm.xlu0 %8038, %v7883
    %v8040 = vpop.permute.xlu0 %8039
    %8042 = vset.pattern.permute.xlu0 1
    %8043 = vperm.xlu0 %8042, %v7884
    %v8044 = vpop.permute.xlu0 %8043
    %8046 = vset.pattern.permute.xlu0 1
    %8047 = vperm.xlu0 %8046, %v7885
    %v8048 = vpop.permute.xlu0 %8047
    %8050 = vset.pattern.permute.xlu0 1
    %8051 = vperm.xlu0 %8050, %v7886
    %v8052 = vpop.permute.xlu0 %8051
    %8054 = vset.pattern.permute.xlu0 1
    %8055 = vperm.xlu0 %8054, %v7887
    %v8056 = vpop.permute.xlu0 %8055
    %8058 = vset.pattern.permute.xlu0 1
    %8059 = vperm.xlu0 %8058, %v7888
    %v8060 = vpop.permute.xlu0 %8059
    %8062 = vset.pattern.permute.xlu0 1
    %8063 = vperm.xlu0 %8062, %v7889
    %v8064 = vpop.permute.xlu0 %8063
    %v8066 = vmul.f32 %v7986, %v8004
    %v8067 = vmul.f32 %v7987, %v8008
    %v8068 = vmul.f32 %v7988, %v8012
    %v8069 = vmul.f32 %v7989, %v8016
    %v8070 = vmul.f32 %v7990, %v8020
    %v8071 = vmul.f32 %v7991, %v8024
    %v8072 = vmul.f32 %v7992, %v8028
    %v8073 = vmul.f32 %v7993, %v8032
    %v8074 = vmul.f32 %v7994, %v8036
    %v8075 = vmul.f32 %v7995, %v8040
    %v8076 = vmul.f32 %v7996, %v8044
    %v8077 = vmul.f32 %v7997, %v8048
    %v8078 = vmul.f32 %v7998, %v8052
    %v8079 = vmul.f32 %v7999, %v8056
    %v8080 = vmul.f32 %v8000, %v8060
    %v8081 = vmul.f32 %v8001, %v8064
    %v8082 = vld [vmem:[#allocation2 + $0x9] sm:$0xff]
    %v8083 = vld [vmem:[#allocation2 + $0x11] sm:$0xff]
    %v8084 = vld [vmem:[#allocation2 + $0x19] sm:$0xff]
    %v8085 = vld [vmem:[#allocation2 + $0x21] sm:$0xff]
    %v8086 = vld [vmem:[#allocation2 + $0x29] sm:$0xff]
    %v8087 = vld [vmem:[#allocation2 + $0x31] sm:$0xff]
    %v8088 = vld [vmem:[#allocation2 + $0x39] sm:$0xff]
    %v8089 = vld [vmem:[#allocation2 + $0x41] sm:$0xff]
    %v8090 = vld [vmem:[#allocation2 + $0x49] sm:$0xff]
    %v8091 = vld [vmem:[#allocation2 + $0x51] sm:$0xff]
    %v8092 = vld [vmem:[#allocation2 + $0x59] sm:$0xff]
    %v8093 = vld [vmem:[#allocation2 + $0x61] sm:$0xff]
    %v8094 = vld [vmem:[#allocation2 + $0x69] sm:$0xff]
    %v8095 = vld [vmem:[#allocation2 + $0x71] sm:$0xff]
    %v8096 = vld [vmem:[#allocation2 + $0x79] sm:$0xff]
    %v8097 = vld [vmem:[#allocation2 + $0x81] sm:$0xff]
    %8098 = vset.pattern.permute.xlu0 2
    %8099 = vperm.xlu0 %8098, %v7874
    %v8100 = vpop.permute.xlu0 %8099
    %8102 = vset.pattern.permute.xlu0 2
    %8103 = vperm.xlu0 %8102, %v7875
    %v8104 = vpop.permute.xlu0 %8103
    %8106 = vset.pattern.permute.xlu0 2
    %8107 = vperm.xlu0 %8106, %v7876
    %v8108 = vpop.permute.xlu0 %8107
    %8110 = vset.pattern.permute.xlu0 2
    %8111 = vperm.xlu0 %8110, %v7877
    %v8112 = vpop.permute.xlu0 %8111
    %8114 = vset.pattern.permute.xlu0 2
    %8115 = vperm.xlu0 %8114, %v7878
    %v8116 = vpop.permute.xlu0 %8115
    %8118 = vset.pattern.permute.xlu0 2
    %8119 = vperm.xlu0 %8118, %v7879
    %v8120 = vpop.permute.xlu0 %8119
    %8122 = vset.pattern.permute.xlu0 2
    %8123 = vperm.xlu0 %8122, %v7880
    %v8124 = vpop.permute.xlu0 %8123
    %8126 = vset.pattern.permute.xlu0 2
    %8127 = vperm.xlu0 %8126, %v7881
    %v8128 = vpop.permute.xlu0 %8127
    %8130 = vset.pattern.permute.xlu0 2
    %8131 = vperm.xlu0 %8130, %v7882
    %v8132 = vpop.permute.xlu0 %8131
    %8134 = vset.pattern.permute.xlu0 2
    %8135 = vperm.xlu0 %8134, %v7883
    %v8136 = vpop.permute.xlu0 %8135
    %8138 = vset.pattern.permute.xlu0 2
    %8139 = vperm.xlu0 %8138, %v7884
    %v8140 = vpop.permute.xlu0 %8139
    %8142 = vset.pattern.permute.xlu0 2
    %8143 = vperm.xlu0 %8142, %v7885
    %v8144 = vpop.permute.xlu0 %8143
    %8146 = vset.pattern.permute.xlu0 2
    %8147 = vperm.xlu0 %8146, %v7886
    %v8148 = vpop.permute.xlu0 %8147
    %8150 = vset.pattern.permute.xlu0 2
    %8151 = vperm.xlu0 %8150, %v7887
    %v8152 = vpop.permute.xlu0 %8151
    %8154 = vset.pattern.permute.xlu0 2
    %8155 = vperm.xlu0 %8154, %v7888
    %v8156 = vpop.permute.xlu0 %8155
    %8158 = vset.pattern.permute.xlu0 2
    %8159 = vperm.xlu0 %8158, %v7889
    %v8160 = vpop.permute.xlu0 %8159
    %v8162 = vmul.f32 %v8082, %v8100
    %v8163 = vmul.f32 %v8083, %v8104
    %v8164 = vmul.f32 %v8084, %v8108
    %v8165 = vmul.f32 %v8085, %v8112
    %v8166 = vmul.f32 %v8086, %v8116
    %v8167 = vmul.f32 %v8087, %v8120
    %v8168 = vmul.f32 %v8088, %v8124
    %v8169 = vmul.f32 %v8089, %v8128
    %v8170 = vmul.f32 %v8090, %v8132
    %v8171 = vmul.f32 %v8091, %v8136
    %v8172 = vmul.f32 %v8092, %v8140
    %v8173 = vmul.f32 %v8093, %v8144
    %v8174 = vmul.f32 %v8094, %v8148
    %v8175 = vmul.f32 %v8095, %v8152
    %v8176 = vmul.f32 %v8096, %v8156
    %v8177 = vmul.f32 %v8097, %v8160
    %v8178 = vld [vmem:[#allocation2 + $0xf] sm:$0xff]
    %v8179 = vld [vmem:[#allocation2 + $0x17] sm:$0xff]
    %v8180 = vld [vmem:[#allocation2 + $0x1f] sm:$0xff]
    %v8181 = vld [vmem:[#allocation2 + $0x27] sm:$0xff]
    %v8182 = vld [vmem:[#allocation2 + $0x2f] sm:$0xff]
    %v8183 = vld [vmem:[#allocation2 + $0x37] sm:$0xff]
    %v8184 = vld [vmem:[#allocation2 + $0x3f] sm:$0xff]
    %v8185 = vld [vmem:[#allocation2 + $0x47] sm:$0xff]
    %v8186 = vld [vmem:[#allocation2 + $0x4f] sm:$0xff]
    %v8187 = vld [vmem:[#allocation2 + $0x57] sm:$0xff]
    %v8188 = vld [vmem:[#allocation2 + $0x5f] sm:$0xff]
    %v8189 = vld [vmem:[#allocation2 + $0x67] sm:$0xff]
    %v8190 = vld [vmem:[#allocation2 + $0x6f] sm:$0xff]
    %v8191 = vld [vmem:[#allocation2 + $0x77] sm:$0xff]
    %v8192 = vld [vmem:[#allocation2 + $0x7f] sm:$0xff]
    %v8193 = vld [vmem:[#allocation2 + $0x87] sm:$0xff]
    %8194 = vset.pattern.permute.xlu0 3
    %8195 = vperm.xlu0 %8194, %v7874
    %v8196 = vpop.permute.xlu0 %8195
    %8198 = vset.pattern.permute.xlu0 3
    %8199 = vperm.xlu0 %8198, %v7875
    %v8200 = vpop.permute.xlu0 %8199
    %8202 = vset.pattern.permute.xlu0 3
    %8203 = vperm.xlu0 %8202, %v7876
    %v8204 = vpop.permute.xlu0 %8203
    %8206 = vset.pattern.permute.xlu0 3
    %8207 = vperm.xlu0 %8206, %v7877
    %v8208 = vpop.permute.xlu0 %8207
    %8210 = vset.pattern.permute.xlu0 3
    %8211 = vperm.xlu0 %8210, %v7878
    %v8212 = vpop.permute.xlu0 %8211
    %8214 = vset.pattern.permute.xlu0 3
    %8215 = vperm.xlu0 %8214, %v7879
    %v8216 = vpop.permute.xlu0 %8215
    %8218 = vset.pattern.permute.xlu0 3
    %8219 = vperm.xlu0 %8218, %v7880
    %v8220 = vpop.permute.xlu0 %8219
    %8222 = vset.pattern.permute.xlu0 3
    %8223 = vperm.xlu0 %8222, %v7881
    %v8224 = vpop.permute.xlu0 %8223
    %8226 = vset.pattern.permute.xlu0 3
    %8227 = vperm.xlu0 %8226, %v7882
    %v8228 = vpop.permute.xlu0 %8227
    %8230 = vset.pattern.permute.xlu0 3
    %8231 = vperm.xlu0 %8230, %v7883
    %v8232 = vpop.permute.xlu0 %8231
    %8234 = vset.pattern.permute.xlu0 3
    %8235 = vperm.xlu0 %8234, %v7884
    %v8236 = vpop.permute.xlu0 %8235
    %8238 = vset.pattern.permute.xlu0 3
    %8239 = vperm.xlu0 %8238, %v7885
    %v8240 = vpop.permute.xlu0 %8239
    %8242 = vset.pattern.permute.xlu0 3
    %8243 = vperm.xlu0 %8242, %v7886
    %v8244 = vpop.permute.xlu0 %8243
    %8246 = vset.pattern.permute.xlu0 3
    %8247 = vperm.xlu0 %8246, %v7887
    %v8248 = vpop.permute.xlu0 %8247
    %8250 = vset.pattern.permute.xlu0 3
    %8251 = vperm.xlu0 %8250, %v7888
    %v8252 = vpop.permute.xlu0 %8251
    %8254 = vset.pattern.permute.xlu0 3
    %8255 = vperm.xlu0 %8254, %v7889
    %v8256 = vpop.permute.xlu0 %8255
    %v8258 = vmul.f32 %v8178, %v8196
    %v8259 = vmul.f32 %v8179, %v8200
    %v8260 = vmul.f32 %v8180, %v8204
    %v8261 = vmul.f32 %v8181, %v8208
    %v8262 = vmul.f32 %v8182, %v8212
    %v8263 = vmul.f32 %v8183, %v8216
    %v8264 = vmul.f32 %v8184, %v8220
    %v8265 = vmul.f32 %v8185, %v8224
    %v8266 = vmul.f32 %v8186, %v8228
    %v8267 = vmul.f32 %v8187, %v8232
    %v8268 = vmul.f32 %v8188, %v8236
    %v8269 = vmul.f32 %v8189, %v8240
    %v8270 = vmul.f32 %v8190, %v8244
    %v8271 = vmul.f32 %v8191, %v8248
    %v8272 = vmul.f32 %v8192, %v8252
    %v8273 = vmul.f32 %v8193, %v8256
    %v8274 = vld [vmem:[#allocation2 + $0x10] sm:$0xff]
    %v8275 = vld [vmem:[#allocation2 + $0x18] sm:$0xff]
    %v8276 = vld [vmem:[#allocation2 + $0x20] sm:$0xff]
    %v8277 = vld [vmem:[#allocation2 + $0x28] sm:$0xff]
    %v8278 = vld [vmem:[#allocation2 + $0x30] sm:$0xff]
    %v8279 = vld [vmem:[#allocation2 + $0x38] sm:$0xff]
    %v8280 = vld [vmem:[#allocation2 + $0x40] sm:$0xff]
    %v8281 = vld [vmem:[#allocation2 + $0x48] sm:$0xff]
    %v8282 = vld [vmem:[#allocation2 + $0x50] sm:$0xff]
    %v8283 = vld [vmem:[#allocation2 + $0x58] sm:$0xff]
    %v8284 = vld [vmem:[#allocation2 + $0x60] sm:$0xff]
    %v8285 = vld [vmem:[#allocation2 + $0x68] sm:$0xff]
    %v8286 = vld [vmem:[#allocation2 + $0x70] sm:$0xff]
    %v8287 = vld [vmem:[#allocation2 + $0x78] sm:$0xff]
    %v8288 = vld [vmem:[#allocation2 + $0x80] sm:$0xff]
    %v8289 = vld [vmem:[#allocation2 + $0x88] sm:$0xff]
    %v8290 = vld [vmem:[#allocation2 + $0x11] sm:$0xff]
    %v8291 = vld [vmem:[#allocation2 + $0x19] sm:$0xff]
    %v8292 = vld [vmem:[#allocation2 + $0x21] sm:$0xff]
    %v8293 = vld [vmem:[#allocation2 + $0x29] sm:$0xff]
    %v8294 = vld [vmem:[#allocation2 + $0x31] sm:$0xff]
    %v8295 = vld [vmem:[#allocation2 + $0x39] sm:$0xff]
    %v8296 = vld [vmem:[#allocation2 + $0x41] sm:$0xff]
    %v8297 = vld [vmem:[#allocation2 + $0x49] sm:$0xff]
    %v8298 = vld [vmem:[#allocation2 + $0x51] sm:$0xff]
    %v8299 = vld [vmem:[#allocation2 + $0x59] sm:$0xff]
    %v8300 = vld [vmem:[#allocation2 + $0x61] sm:$0xff]
    %v8301 = vld [vmem:[#allocation2 + $0x69] sm:$0xff]
    %v8302 = vld [vmem:[#allocation2 + $0x71] sm:$0xff]
    %v8303 = vld [vmem:[#allocation2 + $0x79] sm:$0xff]
    %v8304 = vld [vmem:[#allocation2 + $0x81] sm:$0xff]
    %v8305 = vld [vmem:[#allocation2 + $0x89] sm:$0xff]
    %8306 = vset.pattern.permute.xlu0 5
    %8307 = vperm.xlu0 %8306, %v7874
    %v8308 = vpop.permute.xlu0 %8307
    %8310 = vset.pattern.permute.xlu0 5
    %8311 = vperm.xlu0 %8310, %v7875
    %v8312 = vpop.permute.xlu0 %8311
    %8314 = vset.pattern.permute.xlu0 5
    %8315 = vperm.xlu0 %8314, %v7876
    %v8316 = vpop.permute.xlu0 %8315
    %8318 = vset.pattern.permute.xlu0 5
    %8319 = vperm.xlu0 %8318, %v7877
    %v8320 = vpop.permute.xlu0 %8319
    %8322 = vset.pattern.permute.xlu0 5
    %8323 = vperm.xlu0 %8322, %v7878
    %v8324 = vpop.permute.xlu0 %8323
    %8326 = vset.pattern.permute.xlu0 5
    %8327 = vperm.xlu0 %8326, %v7879
    %v8328 = vpop.permute.xlu0 %8327
    %8330 = vset.pattern.permute.xlu0 5
    %8331 = vperm.xlu0 %8330, %v7880
    %v8332 = vpop.permute.xlu0 %8331
    %8334 = vset.pattern.permute.xlu0 5
    %8335 = vperm.xlu0 %8334, %v7881
    %v8336 = vpop.permute.xlu0 %8335
    %8338 = vset.pattern.permute.xlu0 5
    %8339 = vperm.xlu0 %8338, %v7882
    %v8340 = vpop.permute.xlu0 %8339
    %8342 = vset.pattern.permute.xlu0 5
    %8343 = vperm.xlu0 %8342, %v7883
    %v8344 = vpop.permute.xlu0 %8343
    %8346 = vset.pattern.permute.xlu0 5
    %8347 = vperm.xlu0 %8346, %v7884
    %v8348 = vpop.permute.xlu0 %8347
    %8350 = vset.pattern.permute.xlu0 5
    %8351 = vperm.xlu0 %8350, %v7885
    %v8352 = vpop.permute.xlu0 %8351
    %8354 = vset.pattern.permute.xlu0 5
    %8355 = vperm.xlu0 %8354, %v7886
    %v8356 = vpop.permute.xlu0 %8355
    %8358 = vset.pattern.permute.xlu0 5
    %8359 = vperm.xlu0 %8358, %v7887
    %v8360 = vpop.permute.xlu0 %8359
    %8362 = vset.pattern.permute.xlu0 5
    %8363 = vperm.xlu0 %8362, %v7888
    %v8364 = vpop.permute.xlu0 %8363
    %8366 = vset.pattern.permute.xlu0 5
    %8367 = vperm.xlu0 %8366, %v7889
    %v8368 = vpop.permute.xlu0 %8367
    %v8370 = vmul.f32 %v8290, %v8308
    %v8371 = vmul.f32 %v8291, %v8312
    %v8372 = vmul.f32 %v8292, %v8316
    %v8373 = vmul.f32 %v8293, %v8320
    %v8374 = vmul.f32 %v8294, %v8324
    %v8375 = vmul.f32 %v8295, %v8328
    %v8376 = vmul.f32 %v8296, %v8332
    %v8377 = vmul.f32 %v8297, %v8336
    %v8378 = vmul.f32 %v8298, %v8340
    %v8379 = vmul.f32 %v8299, %v8344
    %v8380 = vmul.f32 %v8300, %v8348
    %v8381 = vmul.f32 %v8301, %v8352
    %v8382 = vmul.f32 %v8302, %v8356
    %v8383 = vmul.f32 %v8303, %v8360
    %v8384 = vmul.f32 %v8304, %v8364
    %v8385 = vmul.f32 %v8305, %v8368
    %v8386 = vld [vmem:[#allocation2 + $0x17] sm:$0xff]
    %v8387 = vld [vmem:[#allocation2 + $0x1f] sm:$0xff]
    %v8388 = vld [vmem:[#allocation2 + $0x27] sm:$0xff]
    %v8389 = vld [vmem:[#allocation2 + $0x2f] sm:$0xff]
    %v8390 = vld [vmem:[#allocation2 + $0x37] sm:$0xff]
    %v8391 = vld [vmem:[#allocation2 + $0x3f] sm:$0xff]
    %v8392 = vld [vmem:[#allocation2 + $0x47] sm:$0xff]
    %v8393 = vld [vmem:[#allocation2 + $0x4f] sm:$0xff]
    %v8394 = vld [vmem:[#allocation2 + $0x57] sm:$0xff]
    %v8395 = vld [vmem:[#allocation2 + $0x5f] sm:$0xff]
    %v8396 = vld [vmem:[#allocation2 + $0x67] sm:$0xff]
    %v8397 = vld [vmem:[#allocation2 + $0x6f] sm:$0xff]
    %v8398 = vld [vmem:[#allocation2 + $0x77] sm:$0xff]
    %v8399 = vld [vmem:[#allocation2 + $0x7f] sm:$0xff]
    %v8400 = vld [vmem:[#allocation2 + $0x87] sm:$0xff]
    %v8401 = vld [vmem:[#allocation2 + $0x8f] sm:$0xff]
    %8402 = vset.pattern.permute.xlu0 6
    %8403 = vperm.xlu0 %8402, %v7874
    %v8404 = vpop.permute.xlu0 %8403
    %8406 = vset.pattern.permute.xlu0 6
    %8407 = vperm.xlu0 %8406, %v7875
    %v8408 = vpop.permute.xlu0 %8407
    %8410 = vset.pattern.permute.xlu0 6
    %8411 = vperm.xlu0 %8410, %v7876
    %v8412 = vpop.permute.xlu0 %8411
    %8414 = vset.pattern.permute.xlu0 6
    %8415 = vperm.xlu0 %8414, %v7877
    %v8416 = vpop.permute.xlu0 %8415
    %8418 = vset.pattern.permute.xlu0 6
    %8419 = vperm.xlu0 %8418, %v7878
    %v8420 = vpop.permute.xlu0 %8419
    %8422 = vset.pattern.permute.xlu0 6
    %8423 = vperm.xlu0 %8422, %v7879
    %v8424 = vpop.permute.xlu0 %8423
    %8426 = vset.pattern.permute.xlu0 6
    %8427 = vperm.xlu0 %8426, %v7880
    %v8428 = vpop.permute.xlu0 %8427
    %8430 = vset.pattern.permute.xlu0 6
    %8431 = vperm.xlu0 %8430, %v7881
    %v8432 = vpop.permute.xlu0 %8431
    %8434 = vset.pattern.permute.xlu0 6
    %8435 = vperm.xlu0 %8434, %v7882
    %v8436 = vpop.permute.xlu0 %8435
    %8438 = vset.pattern.permute.xlu0 6
    %8439 = vperm.xlu0 %8438, %v7883
    %v8440 = vpop.permute.xlu0 %8439
    %8442 = vset.pattern.permute.xlu0 6
    %8443 = vperm.xlu0 %8442, %v7884
    %v8444 = vpop.permute.xlu0 %8443
    %8446 = vset.pattern.permute.xlu0 6
    %8447 = vperm.xlu0 %8446, %v7885
    %v8448 = vpop.permute.xlu0 %8447
    %8450 = vset.pattern.permute.xlu0 6
    %8451 = vperm.xlu0 %8450, %v7886
    %v8452 = vpop.permute.xlu0 %8451
    %8454 = vset.pattern.permute.xlu0 6
    %8455 = vperm.xlu0 %8454, %v7887
    %v8456 = vpop.permute.xlu0 %8455
    %8458 = vset.pattern.permute.xlu0 6
    %8459 = vperm.xlu0 %8458, %v7888
    %v8460 = vpop.permute.xlu0 %8459
    %8462 = vset.pattern.permute.xlu0 6
    %8463 = vperm.xlu0 %8462, %v7889
    %v8464 = vpop.permute.xlu0 %8463
    %v8466 = vmul.f32 %v8386, %v8404
    %v8467 = vmul.f32 %v8387, %v8408
    %v8468 = vmul.f32 %v8388, %v8412
    %v8469 = vmul.f32 %v8389, %v8416
    %v8470 = vmul.f32 %v8390, %v8420
    %v8471 = vmul.f32 %v8391, %v8424
    %v8472 = vmul.f32 %v8392, %v8428
    %v8473 = vmul.f32 %v8393, %v8432
    %v8474 = vmul.f32 %v8394, %v8436
    %v8475 = vmul.f32 %v8395, %v8440
    %v8476 = vmul.f32 %v8396, %v8444
    %v8477 = vmul.f32 %v8397, %v8448
    %v8478 = vmul.f32 %v8398, %v8452
    %v8479 = vmul.f32 %v8399, %v8456
    %v8480 = vmul.f32 %v8400, %v8460
    %v8481 = vmul.f32 %v8401, %v8464
    %v8482 = vld [vmem:[#allocation2 + $0x18] sm:$0xff]
    %v8483 = vld [vmem:[#allocation2 + $0x20] sm:$0xff]
    %v8484 = vld [vmem:[#allocation2 + $0x28] sm:$0xff]
    %v8485 = vld [vmem:[#allocation2 + $0x30] sm:$0xff]
    %v8486 = vld [vmem:[#allocation2 + $0x38] sm:$0xff]
    %v8487 = vld [vmem:[#allocation2 + $0x40] sm:$0xff]
    %v8488 = vld [vmem:[#allocation2 + $0x48] sm:$0xff]
    %v8489 = vld [vmem:[#allocation2 + $0x50] sm:$0xff]
    %v8490 = vld [vmem:[#allocation2 + $0x58] sm:$0xff]
    %v8491 = vld [vmem:[#allocation2 + $0x60] sm:$0xff]
    %v8492 = vld [vmem:[#allocation2 + $0x68] sm:$0xff]
    %v8493 = vld [vmem:[#allocation2 + $0x70] sm:$0xff]
    %v8494 = vld [vmem:[#allocation2 + $0x78] sm:$0xff]
    %v8495 = vld [vmem:[#allocation2 + $0x80] sm:$0xff]
    %v8496 = vld [vmem:[#allocation2 + $0x88] sm:$0xff]
    %v8497 = vld [vmem:[#allocation2 + $0x90] sm:$0xff]
    %8498 = vset.pattern.permute.xlu0 7
    %8499 = vperm.xlu0 %8498, %v7874
    %v8500 = vpop.permute.xlu0 %8499
    %8502 = vset.pattern.permute.xlu0 7
    %8503 = vperm.xlu0 %8502, %v7875
    %v8504 = vpop.permute.xlu0 %8503
    %8506 = vset.pattern.permute.xlu0 7
    %8507 = vperm.xlu0 %8506, %v7876
    %v8508 = vpop.permute.xlu0 %8507
    %8510 = vset.pattern.permute.xlu0 7
    %8511 = vperm.xlu0 %8510, %v7877
    %v8512 = vpop.permute.xlu0 %8511
    %8514 = vset.pattern.permute.xlu0 7
    %8515 = vperm.xlu0 %8514, %v7878
    %v8516 = vpop.permute.xlu0 %8515
    %8518 = vset.pattern.permute.xlu0 7
    %8519 = vperm.xlu0 %8518, %v7879
    %v8520 = vpop.permute.xlu0 %8519
    %8522 = vset.pattern.permute.xlu0 7
    %8523 = vperm.xlu0 %8522, %v7880
    %v8524 = vpop.permute.xlu0 %8523
    %8526 = vset.pattern.permute.xlu0 7
    %8527 = vperm.xlu0 %8526, %v7881
    %v8528 = vpop.permute.xlu0 %8527
    %8530 = vset.pattern.permute.xlu0 7
    %8531 = vperm.xlu0 %8530, %v7882
    %v8532 = vpop.permute.xlu0 %8531
    %8534 = vset.pattern.permute.xlu0 7
    %8535 = vperm.xlu0 %8534, %v7883
    %v8536 = vpop.permute.xlu0 %8535
    %8538 = vset.pattern.permute.xlu0 7
    %8539 = vperm.xlu0 %8538, %v7884
    %v8540 = vpop.permute.xlu0 %8539
    %8542 = vset.pattern.permute.xlu0 7
    %8543 = vperm.xlu0 %8542, %v7885
    %v8544 = vpop.permute.xlu0 %8543
    %8546 = vset.pattern.permute.xlu0 7
    %8547 = vperm.xlu0 %8546, %v7886
    %v8548 = vpop.permute.xlu0 %8547
    %8550 = vset.pattern.permute.xlu0 7
    %8551 = vperm.xlu0 %8550, %v7887
    %v8552 = vpop.permute.xlu0 %8551
    %8554 = vset.pattern.permute.xlu0 7
    %8555 = vperm.xlu0 %8554, %v7888
    %v8556 = vpop.permute.xlu0 %8555
    %8558 = vset.pattern.permute.xlu0 7
    %8559 = vperm.xlu0 %8558, %v7889
    %v8560 = vpop.permute.xlu0 %8559
    %v8562 = vmul.f32 %v8482, %v8500
    %v8563 = vmul.f32 %v8483, %v8504
    %v8564 = vmul.f32 %v8484, %v8508
    %v8565 = vmul.f32 %v8485, %v8512
    %v8566 = vmul.f32 %v8486, %v8516
    %v8567 = vmul.f32 %v8487, %v8520
    %v8568 = vmul.f32 %v8488, %v8524
    %v8569 = vmul.f32 %v8489, %v8528
    %v8570 = vmul.f32 %v8490, %v8532
    %v8571 = vmul.f32 %v8491, %v8536
    %v8572 = vmul.f32 %v8492, %v8540
    %v8573 = vmul.f32 %v8493, %v8544
    %v8574 = vmul.f32 %v8494, %v8548
    %v8575 = vmul.f32 %v8495, %v8552
    %v8576 = vmul.f32 %v8496, %v8556
    %v8577 = vmul.f32 %v8497, %v8560
    %v8578 = vld [vmem:[#allocation2 + $0x19] sm:$0xff]
    %v8579 = vld [vmem:[#allocation2 + $0x21] sm:$0xff]
    %v8580 = vld [vmem:[#allocation2 + $0x29] sm:$0xff]
    %v8581 = vld [vmem:[#allocation2 + $0x31] sm:$0xff]
    %v8582 = vld [vmem:[#allocation2 + $0x39] sm:$0xff]
    %v8583 = vld [vmem:[#allocation2 + $0x41] sm:$0xff]
    %v8584 = vld [vmem:[#allocation2 + $0x49] sm:$0xff]
    %v8585 = vld [vmem:[#allocation2 + $0x51] sm:$0xff]
    %v8586 = vld [vmem:[#allocation2 + $0x59] sm:$0xff]
    %v8587 = vld [vmem:[#allocation2 + $0x61] sm:$0xff]
    %v8588 = vld [vmem:[#allocation2 + $0x69] sm:$0xff]
    %v8589 = vld [vmem:[#allocation2 + $0x71] sm:$0xff]
    %v8590 = vld [vmem:[#allocation2 + $0x79] sm:$0xff]
    %v8591 = vld [vmem:[#allocation2 + $0x81] sm:$0xff]
    %v8592 = vld [vmem:[#allocation2 + $0x89] sm:$0xff]
    %v8593 = vld [vmem:[#allocation2 + $0x91] sm:$0xff]
    %8594 = vset.pattern.permute.xlu0 8
    %8595 = vperm.xlu0 %8594, %v7874
    %v8596 = vpop.permute.xlu0 %8595
    %8598 = vset.pattern.permute.xlu0 8
    %8599 = vperm.xlu0 %8598, %v7875
    %v8600 = vpop.permute.xlu0 %8599
    %8602 = vset.pattern.permute.xlu0 8
    %8603 = vperm.xlu0 %8602, %v7876
    %v8604 = vpop.permute.xlu0 %8603
    %8606 = vset.pattern.permute.xlu0 8
    %8607 = vperm.xlu0 %8606, %v7877
    %v8608 = vpop.permute.xlu0 %8607
    %8610 = vset.pattern.permute.xlu0 8
    %8611 = vperm.xlu0 %8610, %v7878
    %v8612 = vpop.permute.xlu0 %8611
    %8614 = vset.pattern.permute.xlu0 8
    %8615 = vperm.xlu0 %8614, %v7879
    %v8616 = vpop.permute.xlu0 %8615
    %8618 = vset.pattern.permute.xlu0 8
    %8619 = vperm.xlu0 %8618, %v7880
    %v8620 = vpop.permute.xlu0 %8619
    %8622 = vset.pattern.permute.xlu0 8
    %8623 = vperm.xlu0 %8622, %v7881
    %v8624 = vpop.permute.xlu0 %8623
    %8626 = vset.pattern.permute.xlu0 8
    %8627 = vperm.xlu0 %8626, %v7882
    %v8628 = vpop.permute.xlu0 %8627
    %8630 = vset.pattern.permute.xlu0 8
    %8631 = vperm.xlu0 %8630, %v7883
    %v8632 = vpop.permute.xlu0 %8631
    %8634 = vset.pattern.permute.xlu0 8
    %8635 = vperm.xlu0 %8634, %v7884
    %v8636 = vpop.permute.xlu0 %8635
    %8638 = vset.pattern.permute.xlu0 8
    %8639 = vperm.xlu0 %8638, %v7885
    %v8640 = vpop.permute.xlu0 %8639
    %8642 = vset.pattern.permute.xlu0 8
    %8643 = vperm.xlu0 %8642, %v7886
    %v8644 = vpop.permute.xlu0 %8643
    %8646 = vset.pattern.permute.xlu0 8
    %8647 = vperm.xlu0 %8646, %v7887
    %v8648 = vpop.permute.xlu0 %8647
    %8650 = vset.pattern.permute.xlu0 8
    %8651 = vperm.xlu0 %8650, %v7888
    %v8652 = vpop.permute.xlu0 %8651
    %8654 = vset.pattern.permute.xlu0 8
    %8655 = vperm.xlu0 %8654, %v7889
    %v8656 = vpop.permute.xlu0 %8655
    %v8658 = vmul.f32 %v8578, %v8596
    %v8659 = vmul.f32 %v8579, %v8600
    %v8660 = vmul.f32 %v8580, %v8604
    %v8661 = vmul.f32 %v8581, %v8608
    %v8662 = vmul.f32 %v8582, %v8612
    %v8663 = vmul.f32 %v8583, %v8616
    %v8664 = vmul.f32 %v8584, %v8620
    %v8665 = vmul.f32 %v8585, %v8624
    %v8666 = vmul.f32 %v8586, %v8628
    %v8667 = vmul.f32 %v8587, %v8632
    %v8668 = vmul.f32 %v8588, %v8636
    %v8669 = vmul.f32 %v8589, %v8640
    %v8670 = vmul.f32 %v8590, %v8644
    %v8671 = vmul.f32 %v8591, %v8648
    %v8672 = vmul.f32 %v8592, %v8652
    %v8673 = vmul.f32 %v8593, %v8656
    %8690 = vrot.lane.b32.xlu0 %v8066, 16
    %v8691 = vpop.permute.xlu0 %8690
    %8692 = vrot.lane.b32.xlu0 %v8067, 16
    %v8693 = vpop.permute.xlu0 %8692
    %8694 = vrot.lane.b32.xlu0 %v8068, 16
    %v8695 = vpop.permute.xlu0 %8694
    %8696 = vrot.lane.b32.xlu0 %v8069, 16
    %v8697 = vpop.permute.xlu0 %8696
    %8698 = vrot.lane.b32.xlu0 %v8070, 16
    %v8699 = vpop.permute.xlu0 %8698
    %8700 = vrot.lane.b32.xlu0 %v8071, 16
    %v8701 = vpop.permute.xlu0 %8700
    %8702 = vrot.lane.b32.xlu0 %v8072, 16
    %v8703 = vpop.permute.xlu0 %8702
    %8704 = vrot.lane.b32.xlu0 %v8073, 16
    %v8705 = vpop.permute.xlu0 %8704
    %8706 = vrot.lane.b32.xlu0 %v8074, 16
    %v8707 = vpop.permute.xlu0 %8706
    %8708 = vrot.lane.b32.xlu0 %v8075, 16
    %v8709 = vpop.permute.xlu0 %8708
    %8710 = vrot.lane.b32.xlu0 %v8076, 16
    %v8711 = vpop.permute.xlu0 %8710
    %8712 = vrot.lane.b32.xlu0 %v8077, 16
    %v8713 = vpop.permute.xlu0 %8712
    %8714 = vrot.lane.b32.xlu0 %v8078, 16
    %v8715 = vpop.permute.xlu0 %8714
    %8716 = vrot.lane.b32.xlu0 %v8079, 16
    %v8717 = vpop.permute.xlu0 %8716
    %8718 = vrot.lane.b32.xlu0 %v8080, 16
    %v8719 = vpop.permute.xlu0 %8718
    %8720 = vrot.lane.b32.xlu0 %v8081, 16
    %v8721 = vpop.permute.xlu0 %8720
    %8754 = vrot.lane.b32.xlu0 %v8162, 32
    %v8755 = vpop.permute.xlu0 %8754
    %8756 = vrot.lane.b32.xlu0 %v8163, 32
    %v8757 = vpop.permute.xlu0 %8756
    %8758 = vrot.lane.b32.xlu0 %v8164, 32
    %v8759 = vpop.permute.xlu0 %8758
    %8760 = vrot.lane.b32.xlu0 %v8165, 32
    %v8761 = vpop.permute.xlu0 %8760
    %8762 = vrot.lane.b32.xlu0 %v8166, 32
    %v8763 = vpop.permute.xlu0 %8762
    %8764 = vrot.lane.b32.xlu0 %v8167, 32
    %v8765 = vpop.permute.xlu0 %8764
    %8766 = vrot.lane.b32.xlu0 %v8168, 32
    %v8767 = vpop.permute.xlu0 %8766
    %8768 = vrot.lane.b32.xlu0 %v8169, 32
    %v8769 = vpop.permute.xlu0 %8768
    %8770 = vrot.lane.b32.xlu0 %v8170, 32
    %v8771 = vpop.permute.xlu0 %8770
    %8772 = vrot.lane.b32.xlu0 %v8171, 32
    %v8773 = vpop.permute.xlu0 %8772
    %8774 = vrot.lane.b32.xlu0 %v8172, 32
    %v8775 = vpop.permute.xlu0 %8774
    %8776 = vrot.lane.b32.xlu0 %v8173, 32
    %v8777 = vpop.permute.xlu0 %8776
    %8778 = vrot.lane.b32.xlu0 %v8174, 32
    %v8779 = vpop.permute.xlu0 %8778
    %8780 = vrot.lane.b32.xlu0 %v8175, 32
    %v8781 = vpop.permute.xlu0 %8780
    %8782 = vrot.lane.b32.xlu0 %v8176, 32
    %v8783 = vpop.permute.xlu0 %8782
    %8784 = vrot.lane.b32.xlu0 %v8177, 32
    %v8785 = vpop.permute.xlu0 %8784
    %8818 = vrot.lane.b32.xlu0 %v8258, 48
    %v8819 = vpop.permute.xlu0 %8818
    %8820 = vrot.lane.b32.xlu0 %v8259, 48
    %v8821 = vpop.permute.xlu0 %8820
    %8822 = vrot.lane.b32.xlu0 %v8260, 48
    %v8823 = vpop.permute.xlu0 %8822
    %8824 = vrot.lane.b32.xlu0 %v8261, 48
    %v8825 = vpop.permute.xlu0 %8824
    %8826 = vrot.lane.b32.xlu0 %v8262, 48
    %v8827 = vpop.permute.xlu0 %8826
    %8828 = vrot.lane.b32.xlu0 %v8263, 48
    %v8829 = vpop.permute.xlu0 %8828
    %8830 = vrot.lane.b32.xlu0 %v8264, 48
    %v8831 = vpop.permute.xlu0 %8830
    %8832 = vrot.lane.b32.xlu0 %v8265, 48
    %v8833 = vpop.permute.xlu0 %8832
    %8834 = vrot.lane.b32.xlu0 %v8266, 48
    %v8835 = vpop.permute.xlu0 %8834
    %8836 = vrot.lane.b32.xlu0 %v8267, 48
    %v8837 = vpop.permute.xlu0 %8836
    %8838 = vrot.lane.b32.xlu0 %v8268, 48
    %v8839 = vpop.permute.xlu0 %8838
    %8840 = vrot.lane.b32.xlu0 %v8269, 48
    %v8841 = vpop.permute.xlu0 %8840
    %8842 = vrot.lane.b32.xlu0 %v8270, 48
    %v8843 = vpop.permute.xlu0 %8842
    %8844 = vrot.lane.b32.xlu0 %v8271, 48
    %v8845 = vpop.permute.xlu0 %8844
    %8846 = vrot.lane.b32.xlu0 %v8272, 48
    %v8847 = vpop.permute.xlu0 %8846
    %8848 = vrot.lane.b32.xlu0 %v8273, 48
    %v8849 = vpop.permute.xlu0 %8848
    %8882 = vrot.lane.b32.xlu0 %v8274, 64
    %v8883 = vpop.permute.xlu0 %8882
    %8884 = vrot.lane.b32.xlu0 %v8275, 64
    %v8885 = vpop.permute.xlu0 %8884
    %8886 = vrot.lane.b32.xlu0 %v8276, 64
    %v8887 = vpop.permute.xlu0 %8886
    %8888 = vrot.lane.b32.xlu0 %v8277, 64
    %v8889 = vpop.permute.xlu0 %8888
    %8890 = vrot.lane.b32.xlu0 %v8278, 64
    %v8891 = vpop.permute.xlu0 %8890
    %8892 = vrot.lane.b32.xlu0 %v8279, 64
    %v8893 = vpop.permute.xlu0 %8892
    %8894 = vrot.lane.b32.xlu0 %v8280, 64
    %v8895 = vpop.permute.xlu0 %8894
    %8896 = vrot.lane.b32.xlu0 %v8281, 64
    %v8897 = vpop.permute.xlu0 %8896
    %8898 = vrot.lane.b32.xlu0 %v8282, 64
    %v8899 = vpop.permute.xlu0 %8898
    %8900 = vrot.lane.b32.xlu0 %v8283, 64
    %v8901 = vpop.permute.xlu0 %8900
    %8902 = vrot.lane.b32.xlu0 %v8284, 64
    %v8903 = vpop.permute.xlu0 %8902
    %8904 = vrot.lane.b32.xlu0 %v8285, 64
    %v8905 = vpop.permute.xlu0 %8904
    %8906 = vrot.lane.b32.xlu0 %v8286, 64
    %v8907 = vpop.permute.xlu0 %8906
    %8908 = vrot.lane.b32.xlu0 %v8287, 64
    %v8909 = vpop.permute.xlu0 %8908
    %8910 = vrot.lane.b32.xlu0 %v8288, 64
    %v8911 = vpop.permute.xlu0 %8910
    %8912 = vrot.lane.b32.xlu0 %v8289, 64
    %v8913 = vpop.permute.xlu0 %8912
    %8946 = vrot.lane.b32.xlu0 %v8370, 80
    %v8947 = vpop.permute.xlu0 %8946
    %8948 = vrot.lane.b32.xlu0 %v8371, 80
    %v8949 = vpop.permute.xlu0 %8948
    %8950 = vrot.lane.b32.xlu0 %v8372, 80
    %v8951 = vpop.permute.xlu0 %8950
    %8952 = vrot.lane.b32.xlu0 %v8373, 80
    %v8953 = vpop.permute.xlu0 %8952
    %8954 = vrot.lane.b32.xlu0 %v8374, 80
    %v8955 = vpop.permute.xlu0 %8954
    %8956 = vrot.lane.b32.xlu0 %v8375, 80
    %v8957 = vpop.permute.xlu0 %8956
    %8958 = vrot.lane.b32.xlu0 %v8376, 80
    %v8959 = vpop.permute.xlu0 %8958
    %8960 = vrot.lane.b32.xlu0 %v8377, 80
    %v8961 = vpop.permute.xlu0 %8960
    %8962 = vrot.lane.b32.xlu0 %v8378, 80
    %v8963 = vpop.permute.xlu0 %8962
    %8964 = vrot.lane.b32.xlu0 %v8379, 80
    %v8965 = vpop.permute.xlu0 %8964
    %8966 = vrot.lane.b32.xlu0 %v8380, 80
    %v8967 = vpop.permute.xlu0 %8966
    %8968 = vrot.lane.b32.xlu0 %v8381, 80
    %v8969 = vpop.permute.xlu0 %8968
    %8970 = vrot.lane.b32.xlu0 %v8382, 80
    %v8971 = vpop.permute.xlu0 %8970
    %8972 = vrot.lane.b32.xlu0 %v8383, 80
    %v8973 = vpop.permute.xlu0 %8972
    %8974 = vrot.lane.b32.xlu0 %v8384, 80
    %v8975 = vpop.permute.xlu0 %8974
    %8976 = vrot.lane.b32.xlu0 %v8385, 80
    %v8977 = vpop.permute.xlu0 %8976
    %9010 = vrot.lane.b32.xlu0 %v8466, 96
    %v9011 = vpop.permute.xlu0 %9010
    %9012 = vrot.lane.b32.xlu0 %v8467, 96
    %v9013 = vpop.permute.xlu0 %9012
    %9014 = vrot.lane.b32.xlu0 %v8468, 96
    %v9015 = vpop.permute.xlu0 %9014
    %9016 = vrot.lane.b32.xlu0 %v8469, 96
    %v9017 = vpop.permute.xlu0 %9016
    %9018 = vrot.lane.b32.xlu0 %v8470, 96
    %v9019 = vpop.permute.xlu0 %9018
    %9020 = vrot.lane.b32.xlu0 %v8471, 96
    %v9021 = vpop.permute.xlu0 %9020
    %9022 = vrot.lane.b32.xlu0 %v8472, 96
    %v9023 = vpop.permute.xlu0 %9022
    %9024 = vrot.lane.b32.xlu0 %v8473, 96
    %v9025 = vpop.permute.xlu0 %9024
    %9026 = vrot.lane.b32.xlu0 %v8474, 96
    %v9027 = vpop.permute.xlu0 %9026
    %9028 = vrot.lane.b32.xlu0 %v8475, 96
    %v9029 = vpop.permute.xlu0 %9028
    %9030 = vrot.lane.b32.xlu0 %v8476, 96
    %v9031 = vpop.permute.xlu0 %9030
    %9032 = vrot.lane.b32.xlu0 %v8477, 96
    %v9033 = vpop.permute.xlu0 %9032
    %9034 = vrot.lane.b32.xlu0 %v8478, 96
    %v9035 = vpop.permute.xlu0 %9034
    %9036 = vrot.lane.b32.xlu0 %v8479, 96
    %v9037 = vpop.permute.xlu0 %9036
    %9038 = vrot.lane.b32.xlu0 %v8480, 96
    %v9039 = vpop.permute.xlu0 %9038
    %9040 = vrot.lane.b32.xlu0 %v8481, 96
    %v9041 = vpop.permute.xlu0 %9040
    %9074 = vrot.lane.b32.xlu0 %v8562, 112
    %v9075 = vpop.permute.xlu0 %9074
    %9076 = vrot.lane.b32.xlu0 %v8563, 112
    %v9077 = vpop.permute.xlu0 %9076
    %9078 = vrot.lane.b32.xlu0 %v8564, 112
    %v9079 = vpop.permute.xlu0 %9078
    %9080 = vrot.lane.b32.xlu0 %v8565, 112
    %v9081 = vpop.permute.xlu0 %9080
    %9082 = vrot.lane.b32.xlu0 %v8566, 112
    %v9083 = vpop.permute.xlu0 %9082
    %9084 = vrot.lane.b32.xlu0 %v8567, 112
    %v9085 = vpop.permute.xlu0 %9084
    %9086 = vrot.lane.b32.xlu0 %v8568, 112
    %v9087 = vpop.permute.xlu0 %9086
    %9088 = vrot.lane.b32.xlu0 %v8569, 112
    %v9089 = vpop.permute.xlu0 %9088
    %9090 = vrot.lane.b32.xlu0 %v8570, 112
    %v9091 = vpop.permute.xlu0 %9090
    %9092 = vrot.lane.b32.xlu0 %v8571, 112
    %v9093 = vpop.permute.xlu0 %9092
    %9094 = vrot.lane.b32.xlu0 %v8572, 112
    %v9095 = vpop.permute.xlu0 %9094
    %9096 = vrot.lane.b32.xlu0 %v8573, 112
    %v9097 = vpop.permute.xlu0 %9096
    %9098 = vrot.lane.b32.xlu0 %v8574, 112
    %v9099 = vpop.permute.xlu0 %9098
    %9100 = vrot.lane.b32.xlu0 %v8575, 112
    %v9101 = vpop.permute.xlu0 %9100
    %9102 = vrot.lane.b32.xlu0 %v8576, 112
    %v9103 = vpop.permute.xlu0 %9102
    %9104 = vrot.lane.b32.xlu0 %v8577, 112
    %v9105 = vpop.permute.xlu0 %9104
    %v9122 = vsel %vm7821, %v7970, %v8691
    %v9123 = vsel %vm7821, %v7971, %v8693
    %v9124 = vsel %vm7821, %v7972, %v8695
    %v9125 = vsel %vm7821, %v7973, %v8697
    %v9126 = vsel %vm7821, %v7974, %v8699
    %v9127 = vsel %vm7821, %v7975, %v8701
    %v9128 = vsel %vm7821, %v7976, %v8703
    %v9129 = vsel %vm7821, %v7977, %v8705
    %v9130 = vsel %vm7821, %v7978, %v8707
    %v9131 = vsel %vm7821, %v7979, %v8709
    %v9132 = vsel %vm7821, %v7980, %v8711
    %v9133 = vsel %vm7821, %v7981, %v8713
    %v9134 = vsel %vm7821, %v7982, %v8715
    %v9135 = vsel %vm7821, %v7983, %v8717
    %v9136 = vsel %vm7821, %v7984, %v8719
    %v9137 = vsel %vm7821, %v7985, %v8721
    %vm9138 = vcmask 261120
    %v9139 = vsel %vm9138, %v9122, %v8755
    %v9140 = vsel %vm9138, %v9123, %v8757
    %v9141 = vsel %vm9138, %v9124, %v8759
    %v9142 = vsel %vm9138, %v9125, %v8761
    %v9143 = vsel %vm9138, %v9126, %v8763
    %v9144 = vsel %vm9138, %v9127, %v8765
    %v9145 = vsel %vm9138, %v9128, %v8767
    %v9146 = vsel %vm9138, %v9129, %v8769
    %v9147 = vsel %vm9138, %v9130, %v8771
    %v9148 = vsel %vm9138, %v9131, %v8773
    %v9149 = vsel %vm9138, %v9132, %v8775
    %v9150 = vsel %vm9138, %v9133, %v8777
    %v9151 = vsel %vm9138, %v9134, %v8779
    %v9152 = vsel %vm9138, %v9135, %v8781
    %v9153 = vsel %vm9138, %v9136, %v8783
    %v9154 = vsel %vm9138, %v9137, %v8785
    %vm9155 = vcmask 392192
    %v9156 = vsel %vm9155, %v9139, %v8819
    %v9157 = vsel %vm9155, %v9140, %v8821
    %v9158 = vsel %vm9155, %v9141, %v8823
    %v9159 = vsel %vm9155, %v9142, %v8825
    %v9160 = vsel %vm9155, %v9143, %v8827
    %v9161 = vsel %vm9155, %v9144, %v8829
    %v9162 = vsel %vm9155, %v9145, %v8831
    %v9163 = vsel %vm9155, %v9146, %v8833
    %v9164 = vsel %vm9155, %v9147, %v8835
    %v9165 = vsel %vm9155, %v9148, %v8837
    %v9166 = vsel %vm9155, %v9149, %v8839
    %v9167 = vsel %vm9155, %v9150, %v8841
    %v9168 = vsel %vm9155, %v9151, %v8843
    %v9169 = vsel %vm9155, %v9152, %v8845
    %v9170 = vsel %vm9155, %v9153, %v8847
    %v9171 = vsel %vm9155, %v9154, %v8849
    %vm9172 = vcmask 523264
    %v9173 = vsel %vm9172, %v9156, %v8883
    %v9174 = vsel %vm9172, %v9157, %v8885
    %v9175 = vsel %vm9172, %v9158, %v8887
    %v9176 = vsel %vm9172, %v9159, %v8889
    %v9177 = vsel %vm9172, %v9160, %v8891
    %v9178 = vsel %vm9172, %v9161, %v8893
    %v9179 = vsel %vm9172, %v9162, %v8895
    %v9180 = vsel %vm9172, %v9163, %v8897
    %v9181 = vsel %vm9172, %v9164, %v8899
    %v9182 = vsel %vm9172, %v9165, %v8901
    %v9183 = vsel %vm9172, %v9166, %v8903
    %v9184 = vsel %vm9172, %v9167, %v8905
    %v9185 = vsel %vm9172, %v9168, %v8907
    %v9186 = vsel %vm9172, %v9169, %v8909
    %v9187 = vsel %vm9172, %v9170, %v8911
    %v9188 = vsel %vm9172, %v9171, %v8913
    %vm9189 = vcmask 654336
    %v9190 = vsel %vm9189, %v9173, %v8947
    %v9191 = vsel %vm9189, %v9174, %v8949
    %v9192 = vsel %vm9189, %v9175, %v8951
    %v9193 = vsel %vm9189, %v9176, %v8953
    %v9194 = vsel %vm9189, %v9177, %v8955
    %v9195 = vsel %vm9189, %v9178, %v8957
    %v9196 = vsel %vm9189, %v9179, %v8959
    %v9197 = vsel %vm9189, %v9180, %v8961
    %v9198 = vsel %vm9189, %v9181, %v8963
    %v9199 = vsel %vm9189, %v9182, %v8965
    %v9200 = vsel %vm9189, %v9183, %v8967
    %v9201 = vsel %vm9189, %v9184, %v8969
    %v9202 = vsel %vm9189, %v9185, %v8971
    %v9203 = vsel %vm9189, %v9186, %v8973
    %v9204 = vsel %vm9189, %v9187, %v8975
    %v9205 = vsel %vm9189, %v9188, %v8977
    %vm9206 = vcmask 785408
    %v9207 = vsel %vm9206, %v9190, %v9011
    %v9208 = vsel %vm9206, %v9191, %v9013
    %v9209 = vsel %vm9206, %v9192, %v9015
    %v9210 = vsel %vm9206, %v9193, %v9017
    %v9211 = vsel %vm9206, %v9194, %v9019
    %v9212 = vsel %vm9206, %v9195, %v9021
    %v9213 = vsel %vm9206, %v9196, %v9023
    %v9214 = vsel %vm9206, %v9197, %v9025
    %v9215 = vsel %vm9206, %v9198, %v9027
    %v9216 = vsel %vm9206, %v9199, %v9029
    %v9217 = vsel %vm9206, %v9200, %v9031
    %v9218 = vsel %vm9206, %v9201, %v9033
    %v9219 = vsel %vm9206, %v9202, %v9035
    %v9220 = vsel %vm9206, %v9203, %v9037
    %v9221 = vsel %vm9206, %v9204, %v9039
    %v9222 = vsel %vm9206, %v9205, %v9041
    %vm9223 = vcmask 916480
    %v9224 = vsel %vm9223, %v9207, %v9075
    %v9225 = vsel %vm9223, %v9208, %v9077
    %v9226 = vsel %vm9223, %v9209, %v9079
    %v9227 = vsel %vm9223, %v9210, %v9081
    %v9228 = vsel %vm9223, %v9211, %v9083
    %v9229 = vsel %vm9223, %v9212, %v9085
    %v9230 = vsel %vm9223, %v9213, %v9087
    %v9231 = vsel %vm9223, %v9214, %v9089
    %v9232 = vsel %vm9223, %v9215, %v9091
    %v9233 = vsel %vm9223, %v9216, %v9093
    %v9234 = vsel %vm9223, %v9217, %v9095
    %v9235 = vsel %vm9223, %v9218, %v9097
    %v9236 = vsel %vm9223, %v9219, %v9099
    %v9237 = vsel %vm9223, %v9220, %v9101
    %v9238 = vsel %vm9223, %v9221, %v9103
    %v9239 = vsel %vm9223, %v9222, %v9105
    %v9240 = vpack.c.bf16 %v9225, %v9224
    %v9241 = vpack.c.bf16 %v8659, %v8658
    %v9242 = vpack.c.bf16 %v9227, %v9226
    %v9243 = vpack.c.bf16 %v8661, %v8660
    %v9244 = vpack.c.bf16 %v9229, %v9228
    %v9245 = vpack.c.bf16 %v8663, %v8662
    %v9246 = vpack.c.bf16 %v9231, %v9230
    %v9247 = vpack.c.bf16 %v8665, %v8664
    %v9248 = vpack.c.bf16 %v9233, %v9232
    %v9249 = vpack.c.bf16 %v8667, %v8666
    %v9250 = vpack.c.bf16 %v9235, %v9234
    %v9251 = vpack.c.bf16 %v8669, %v8668
    %v9252 = vpack.c.bf16 %v9237, %v9236
    %v9253 = vpack.c.bf16 %v8671, %v8670
    %v9254 = vpack.c.bf16 %v9239, %v9238
    %v9255 = vpack.c.bf16 %v8673, %v8672
    %v9256 = vld [vmem:[%s6] sm:$0xf]
    %v9257 = vld [vmem:[%s6 + $0x4] sm:$0xf]
    %v9258 = vld [vmem:[%s6 + $0x8] sm:$0xf]
    %v9259 = vld [vmem:[%s6 + $0xc] sm:$0xf]
    %v9260 = vld [vmem:[%s6 + $0x10] sm:$0xf]
    %v9261 = vld [vmem:[%s6 + $0x14] sm:$0xf]
    %v9262 = vld [vmem:[%s6 + $0x18] sm:$0xf]
    %v9263 = vld [vmem:[%s6 + $0x1c] sm:$0xf]
    %v9264 = vld [vmem:[%s6 + $0x20] sm:$0xf]
    %v9265 = vld [vmem:[%s6 + $0x24] sm:$0xf]
    %v9266 = vld [vmem:[%s6 + $0x28] sm:$0xf]
    %v9267 = vld [vmem:[%s6 + $0x2c] sm:$0xf]
    %v9268 = vld [vmem:[%s6 + $0x30] sm:$0xf]
    %v9269 = vld [vmem:[%s6 + $0x34] sm:$0xf]
    %v9270 = vld [vmem:[%s6 + $0x38] sm:$0xf]
    %v9271 = vld [vmem:[%s6 + $0x3c] sm:$0xf]
    %v9272 = vld [vmem:[%s6 + $0x40] sm:$0xf]
    %v9273 = vld [vmem:[%s6 + $0x44] sm:$0xf]
    %v9274 = vld [vmem:[%s7] sm:$0x1]
    %v9276 = vlaneseq
    %v9277 = vshrl.u32 %v9276, 7
    %v9278 = vsub.s32 0, %v9277
    %v9279 = vrot.slane %v9274, %v9278
    %v9299 = vunpack.c.l.b16 %v9256
    %v9300 = vunpack.c.l.b16 %v9257
    %v9301 = vunpack.c.l.b16 %v9258
    %v9302 = vunpack.c.l.b16 %v9259
    %v9303 = vunpack.c.l.b16 %v9260
    %v9304 = vunpack.c.l.b16 %v9261
    %v9305 = vunpack.c.l.b16 %v9262
    %v9306 = vunpack.c.l.b16 %v9263
    %v9307 = vunpack.c.l.b16 %v9264
    %v9308 = vunpack.c.l.b16 %v9265
    %v9309 = vunpack.c.l.b16 %v9266
    %v9310 = vunpack.c.l.b16 %v9267
    %v9311 = vunpack.c.l.b16 %v9268
    %v9312 = vunpack.c.l.b16 %v9269
    %v9313 = vunpack.c.l.b16 %v9270
    %v9314 = vunpack.c.l.b16 %v9271
    %v9315 = vunpack.c.l.b16 %v9272
    %v9316 = vunpack.c.l.b16 %v9273
    %v9317 = vpack.c.b16 %v9300, %v9299
    %v9318 = vpack.c.b16 %v9302, %v9301
    %v9319 = vpack.c.b16 %v9304, %v9303
    %v9320 = vpack.c.b16 %v9306, %v9305
    %v9321 = vpack.c.b16 %v9308, %v9307
    %v9322 = vpack.c.b16 %v9310, %v9309
    %v9323 = vpack.c.b16 %v9312, %v9311
    %v9324 = vpack.c.b16 %v9314, %v9313
    %v9325 = vpack.c.b16 %v9316, %v9315
    %v9336 = vsel %vm7821, %v9241, 0
    %v9339 = vsel %vm7821, %v9243, 0
    %v9342 = vsel %vm7821, %v9245, 0
    %v9345 = vsel %vm7821, %v9247, 0
    %v9348 = vsel %vm7821, %v9249, 0
    %v9351 = vsel %vm7821, %v9251, 0
    %v9354 = vsel %vm7821, %v9253, 0
    %v9357 = vsel %vm7821, %v9255, 0
    %9359 = vmatprep.subr.bf16.mxu0 0
    %9360 = vmatpush1.bf16.msra.mxu0 %v9317
    %9361 = vmatprep.subr.bf16.mxu0 0
    %9362 = vmatpush1.bf16.msra.mxu0 %v9318
    %9363 = vmatprep.subr.bf16.mxu0 0
    %9364 = vmatpush1.bf16.msra.mxu0 %v9319
    %9365 = vmatprep.subr.bf16.mxu0 0
    %9366 = vmatpush1.bf16.msra.mxu0 %v9320
    %9367 = vmatprep.subr.bf16.mxu0 0
    %9368 = vmatpush1.bf16.msra.mxu0 %v9321
    %9369 = vmatprep.subr.bf16.mxu0 0
    %9370 = vmatpush1.bf16.msra.mxu0 %v9322
    %9371 = vmatprep.subr.bf16.mxu0 0
    %9372 = vmatpush1.bf16.msra.mxu0 %v9323
    %9373 = vmatprep.subr.bf16.mxu0 0
    %9374 = vmatpush1.bf16.msra.mxu0 %v9324
    %9375 = vmatprep.subr.bf16.mxu0 0
    %9376 = vmatpush1.bf16.msra.mxu0 %v9325
    %9377 = vmatprep.subr.bf16.mxu0 0
    %9378 = vmatpush1.bf16.msra.mxu0 0
    %9379 = vmatprep.subr.bf16.mxu0 0
    %9380 = vmatpush1.bf16.msra.mxu0 0
    %9381 = vmatprep.subr.bf16.mxu0 0
    %9382 = vmatpush1.bf16.msra.mxu0 0
    %9383 = vmatprep.subr.bf16.mxu0 0
    %9384 = vmatpush1.bf16.msra.mxu0 0
    %9385 = vmatprep.subr.bf16.mxu0 0
    %9386 = vmatpush1.bf16.msra.mxu0 0
    %9387 = vmatprep.subr.bf16.mxu0 0
    %9388 = vmatpush1.bf16.msra.mxu0 0
    %9389 = vmatprep.subr.bf16.mxu0 0
    %9390 = vmatpush1.bf16.msra.mxu0 0
    %9391 = vmatprep.mubr.bf16.mxu0 %v9336
    %9392 = vmatmul.mubr.bf16.gmra.mrb[0].mxu0 %v9240
    %v9393 = vpop.f32.mrb[0].mxu0
    %v9394 = vadd.f32 %v9279, %v9393
    %v9395 = vpop.f32.mrb[0].mxu0
    %v9396 = vpop.f32.mrb[0].mxu0
    %v9397 = vadd.f32 %v9279, %v9396
    %v9398 = vpop.f32.mrb[0].mxu0
    %9399 = vmatprep.mubr.bf16.mxu0 %v9339
    %9400 = vmatmul.mubr.bf16.gmra.mrb[0].mxu0 %v9242
    %v9401 = vpop.f32.mrb[0].mxu0
    %v9402 = vadd.f32 %v9279, %v9401
    %v9403 = vpop.f32.mrb[0].mxu0
    %v9404 = vpop.f32.mrb[0].mxu0
    %v9405 = vadd.f32 %v9279, %v9404
    %v9406 = vpop.f32.mrb[0].mxu0
    %9407 = vmatprep.mubr.bf16.mxu0 %v9342
    %9408 = vmatmul.mubr.bf16.gmra.mrb[0].mxu0 %v9244
    %v9409 = vpop.f32.mrb[0].mxu0
    %v9410 = vadd.f32 %v9279, %v9409
    %v9411 = vpop.f32.mrb[0].mxu0
    %v9412 = vpop.f32.mrb[0].mxu0
    %v9413 = vadd.f32 %v9279, %v9412
    %v9414 = vpop.f32.mrb[0].mxu0
    %9415 = vmatprep.mubr.bf16.mxu0 %v9345
    %9416 = vmatmul.mubr.bf16.gmra.mrb[0].mxu0 %v9246
    %v9417 = vpop.f32.mrb[0].mxu0
    %v9418 = vadd.f32 %v9279, %v9417
    %v9419 = vpop.f32.mrb[0].mxu0
    %v9420 = vpop.f32.mrb[0].mxu0
    %v9421 = vadd.f32 %v9279, %v9420
    %v9422 = vpop.f32.mrb[0].mxu0
    %9423 = vmatprep.mubr.bf16.mxu0 %v9348
    %9424 = vmatmul.mubr.bf16.gmra.mrb[0].mxu0 %v9248
    %v9425 = vpop.f32.mrb[0].mxu0
    %v9426 = vadd.f32 %v9279, %v9425
    %v9427 = vpop.f32.mrb[0].mxu0
    %v9428 = vpop.f32.mrb[0].mxu0
    %v9429 = vadd.f32 %v9279, %v9428
    %v9430 = vpop.f32.mrb[0].mxu0
    %9431 = vmatprep.mubr.bf16.mxu0 %v9351
    %9432 = vmatmul.mubr.bf16.gmra.mrb[0].mxu0 %v9250
    %v9433 = vpop.f32.mrb[0].mxu0
    %v9434 = vadd.f32 %v9279, %v9433
    %v9435 = vpop.f32.mrb[0].mxu0
    %v9436 = vpop.f32.mrb[0].mxu0
    %v9437 = vadd.f32 %v9279, %v9436
    %v9438 = vpop.f32.mrb[0].mxu0
    %9439 = vmatprep.mubr.bf16.mxu0 %v9354
    %9440 = vmatmul.mubr.bf16.gmra.mrb[0].mxu0 %v9252
    %v9441 = vpop.f32.mrb[0].mxu0
    %v9442 = vadd.f32 %v9279, %v9441
    %v9443 = vpop.f32.mrb[0].mxu0
    %v9444 = vpop.f32.mrb[0].mxu0
    %v9445 = vadd.f32 %v9279, %v9444
    %v9446 = vpop.f32.mrb[0].mxu0
    %9447 = vmatprep.mubr.bf16.mxu0 %v9357
    %9448 = vmatmul.mubr.bf16.gmra.mrb[0].mxu0 %v9254
    %v9449 = vpop.f32.mrb[0].mxu0
    %v9450 = vadd.f32 %v9279, %v9449
    %v9451 = vpop.f32.mrb[0].mxu0
    %v9452 = vpop.f32.mrb[0].mxu0
    %v9453 = vadd.f32 %v9279, %v9452
    %v9454 = vpop.f32.mrb[0].mxu0
    %9455 = vdwg.mxu0
    %v9456 = vmax.f32 %v9394, 0.0
    %v9457 = vmax.f32 %v9397, 0.0
    %v9458 = vmax.f32 %v9402, 0.0
    %v9459 = vmax.f32 %v9405, 0.0
    %v9460 = vmax.f32 %v9410, 0.0
    %v9461 = vmax.f32 %v9413, 0.0
    %v9462 = vmax.f32 %v9418, 0.0
    %v9463 = vmax.f32 %v9421, 0.0
    %v9464 = vmax.f32 %v9426, 0.0
    %v9465 = vmax.f32 %v9429, 0.0
    %v9466 = vmax.f32 %v9434, 0.0
    %v9467 = vmax.f32 %v9437, 0.0
    %v9468 = vmax.f32 %v9442, 0.0
    %v9469 = vmax.f32 %v9445, 0.0
    %v9470 = vmax.f32 %v9450, 0.0
    %v9471 = vmax.f32 %v9453, 0.0
    %v9472 = vld [vmem:[%s8] sm:$0xf]
    %v9473 = vld [vmem:[%s8 + $0x4] sm:$0xf]
    %v9474 = vld [vmem:[%s8 + $0x8] sm:$0xf]
    %v9475 = vld [vmem:[%s8 + $0xc] sm:$0xf]
    %v9476 = vld [vmem:[%s8 + $0x10] sm:$0xf]
    %v9477 = vld [vmem:[%s8 + $0x14] sm:$0xf]
    %v9478 = vld [vmem:[%s8 + $0x18] sm:$0xf]
    %v9479 = vld [vmem:[%s8 + $0x1c] sm:$0xf]
    %v9480 = vld [vmem:[%s8 + $0x20] sm:$0xf]
    %v9481 = vld [vmem:[%s8 + $0x24] sm:$0xf]
    %v9482 = vld [vmem:[%s8 + $0x28] sm:$0xf]
    %v9483 = vld [vmem:[%s8 + $0x2c] sm:$0xf]
    %v9484 = vld [vmem:[%s8 + $0x30] sm:$0xf]
    %v9485 = vld [vmem:[%s8 + $0x34] sm:$0xf]
    %v9486 = vld [vmem:[%s8 + $0x38] sm:$0xf]
    %v9487 = vld [vmem:[%s8 + $0x3c] sm:$0xf]
    %v9488 = vpack.c.bf16 %v9457, %v9456
    %v9489 = vpack.c.bf16 %v9459, %v9458
    %v9490 = vpack.c.bf16 %v9461, %v9460
    %v9491 = vpack.c.bf16 %v9463, %v9462
    %v9492 = vpack.c.bf16 %v9465, %v9464
    %v9493 = vpack.c.bf16 %v9467, %v9466
    %v9494 = vpack.c.bf16 %v9469, %v9468
    %v9495 = vpack.c.bf16 %v9471, %v9470
    %v9512 = vunpack.c.l.b16 %v9472
    %v9513 = vunpack.c.l.b16 %v9473
    %v9514 = vunpack.c.l.b16 %v9474
    %v9515 = vunpack.c.l.b16 %v9475
    %v9516 = vunpack.c.l.b16 %v9476
    %v9517 = vunpack.c.l.b16 %v9477
    %v9518 = vunpack.c.l.b16 %v9478
    %v9519 = vunpack.c.l.b16 %v9479
    %v9520 = vunpack.c.l.b16 %v9480
    %v9521 = vunpack.c.l.b16 %v9481
    %v9522 = vunpack.c.l.b16 %v9482
    %v9523 = vunpack.c.l.b16 %v9483
    %v9524 = vunpack.c.l.b16 %v9484
    %v9525 = vunpack.c.l.b16 %v9485
    %v9526 = vunpack.c.l.b16 %v9486
    %v9527 = vunpack.c.l.b16 %v9487
    %v9528 = vpack.c.b16 %v9513, %v9512
    %v9529 = vpack.c.b16 %v9515, %v9514
    %v9530 = vpack.c.b16 %v9517, %v9516
    %v9531 = vpack.c.b16 %v9519, %v9518
    %v9532 = vpack.c.b16 %v9521, %v9520
    %v9533 = vpack.c.b16 %v9523, %v9522
    %v9534 = vpack.c.b16 %v9525, %v9524
    %v9535 = vpack.c.b16 %v9527, %v9526
    %9544 = vmatprep.subr.bf16.mxu0 0
    %9545 = vmatpush1.bf16.msra.mxu0 %v9488
    %9546 = vmatprep.subr.bf16.mxu0 0
    %9547 = vmatpush1.bf16.msra.mxu0 %v9489
    %9548 = vmatprep.subr.bf16.mxu0 0
    %9549 = vmatpush1.bf16.msra.mxu0 %v9490
    %9550 = vmatprep.subr.bf16.mxu0 0
    %9551 = vmatpush1.bf16.msra.mxu0 %v9491
    %9552 = vmatprep.subr.bf16.mxu0 0
    %9553 = vmatpush1.bf16.msra.mxu0 %v9492
    %9554 = vmatprep.subr.bf16.mxu0 0
    %9555 = vmatpush1.bf16.msra.mxu0 %v9493
    %9556 = vmatprep.subr.bf16.mxu0 0
    %9557 = vmatpush1.bf16.msra.mxu0 %v9494
    %9558 = vmatprep.subr.bf16.mxu0 0
    %9559 = vmatpush1.bf16.msra.mxu0 %v9495
    %9560 = vmatprep.subr.bf16.mxu0 0
    %9561 = vmatpush1.bf16.msra.mxu0 0
    %9562 = vmatprep.subr.bf16.mxu0 0
    %9563 = vmatpush1.bf16.msra.mxu0 0
    %9564 = vmatprep.subr.bf16.mxu0 0
    %9565 = vmatpush1.bf16.msra.mxu0 0
    %9566 = vmatprep.subr.bf16.mxu0 0
    %9567 = vmatpush1.bf16.msra.mxu0 0
    %9568 = vmatprep.subr.bf16.mxu0 0
    %9569 = vmatpush1.bf16.msra.mxu0 0
    %9570 = vmatprep.subr.bf16.mxu0 0
    %9571 = vmatpush1.bf16.msra.mxu0 0
    %9572 = vmatprep.subr.bf16.mxu0 0
    %9573 = vmatpush1.bf16.msra.mxu0 0
    %9574 = vmatprep.subr.bf16.mxu0 0
    %9575 = vmatpush1.bf16.msra.mxu0 0
    %9576 = vmatprep.mubr.bf16.mxu0 0
    %9577 = vmatmul.mubr.bf16.gmra.mrb[0].mxu0 %v9528
    %v9578 = vpop.f32.mrb[0].mxu0
    %v9579 = vadd.f32 0.0, %v9578
    %v9580 = vpop.f32.mrb[0].mxu0
    %v9581 = vpop.f32.mrb[0].mxu0
    %v9582 = vadd.f32 0.0, %v9581
    %v9583 = vpop.f32.mrb[0].mxu0
    %9584 = vmatprep.mubr.bf16.mxu0 0
    %9585 = vmatmul.mubr.bf16.gmra.mrb[0].mxu0 %v9529
    %v9586 = vpop.f32.mrb[0].mxu0
    %v9587 = vadd.f32 0.0, %v9586
    %v9588 = vpop.f32.mrb[0].mxu0
    %v9589 = vpop.f32.mrb[0].mxu0
    %v9590 = vadd.f32 0.0, %v9589
    %v9591 = vpop.f32.mrb[0].mxu0
    %9592 = vmatprep.mubr.bf16.mxu0 0
    %9593 = vmatmul.mubr.bf16.gmra.mrb[0].mxu0 %v9530
    %v9594 = vpop.f32.mrb[0].mxu0
    %v9595 = vadd.f32 0.0, %v9594
    %v9596 = vpop.f32.mrb[0].mxu0
    %v9597 = vpop.f32.mrb[0].mxu0
    %v9598 = vadd.f32 0.0, %v9597
    %v9599 = vpop.f32.mrb[0].mxu0
    %9600 = vmatprep.mubr.bf16.mxu0 0
    %9601 = vmatmul.mubr.bf16.gmra.mrb[0].mxu0 %v9531
    %v9602 = vpop.f32.mrb[0].mxu0
    %v9603 = vadd.f32 0.0, %v9602
    %v9604 = vpop.f32.mrb[0].mxu0
    %v9605 = vpop.f32.mrb[0].mxu0
    %v9606 = vadd.f32 0.0, %v9605
    %v9607 = vpop.f32.mrb[0].mxu0
    %9608 = vmatprep.mubr.bf16.mxu0 0
    %9609 = vmatmul.mubr.bf16.gmra.mrb[0].mxu0 %v9532
    %v9610 = vpop.f32.mrb[0].mxu0
    %v9611 = vadd.f32 0.0, %v9610
    %v9612 = vpop.f32.mrb[0].mxu0
    %v9613 = vpop.f32.mrb[0].mxu0
    %v9614 = vadd.f32 0.0, %v9613
    %v9615 = vpop.f32.mrb[0].mxu0
    %9616 = vmatprep.mubr.bf16.mxu0 0
    %9617 = vmatmul.mubr.bf16.gmra.mrb[0].mxu0 %v9533
    %v9618 = vpop.f32.mrb[0].mxu0
    %v9619 = vadd.f32 0.0, %v9618
    %v9620 = vpop.f32.mrb[0].mxu0
    %v9621 = vpop.f32.mrb[0].mxu0
    %v9622 = vadd.f32 0.0, %v9621
    %v9623 = vpop.f32.mrb[0].mxu0
    %9624 = vmatprep.mubr.bf16.mxu0 0
    %9625 = vmatmul.mubr.bf16.gmra.mrb[0].mxu0 %v9534
    %v9626 = vpop.f32.mrb[0].mxu0
    %v9627 = vadd.f32 0.0, %v9626
    %v9628 = vpop.f32.mrb[0].mxu0
    %v9629 = vpop.f32.mrb[0].mxu0
    %v9630 = vadd.f32 0.0, %v9629
    %v9631 = vpop.f32.mrb[0].mxu0
    %9632 = vmatprep.mubr.bf16.mxu0 0
    %9633 = vmatmul.mubr.bf16.gmra.mrb[0].mxu0 %v9535
    %v9634 = vpop.f32.mrb[0].mxu0
    %v9635 = vadd.f32 0.0, %v9634
    %v9636 = vpop.f32.mrb[0].mxu0
    %v9637 = vpop.f32.mrb[0].mxu0
    %v9638 = vadd.f32 0.0, %v9637
    %v9639 = vpop.f32.mrb[0].mxu0
    %9640 = vdwg.mxu0
    %v9641 = vmax.f32 %v9579, %v9595
    %v9642 = vmax.f32 %v9582, %v9598
    %v9643 = vmax.f32 %v9587, %v9603
    %v9644 = vmax.f32 %v9590, %v9606
    %v9645 = vmax.f32 %v9611, %v9627
    %v9646 = vmax.f32 %v9614, %v9630
    %v9647 = vmax.f32 %v9619, %v9635
    %v9648 = vmax.f32 %v9622, %v9638
    %v9649 = vmax.f32 %v9641, %v9645
    %v9650 = vmax.f32 %v9642, %v9646
    %v9651 = vmax.f32 %v9643, %v9647
    %v9652 = vmax.f32 %v9644, %v9648
    %9657 = vrot.lane.b32.xlu0 %v9649, 32
    %v9658 = vpop.permute.xlu0 %9657
    %9659 = vrot.lane.b32.xlu0 %v9650, 32
    %v9660 = vpop.permute.xlu0 %9659
    %9661 = vrot.lane.b32.xlu0 %v9651, 32
    %v9662 = vpop.permute.xlu0 %9661
    %9663 = vrot.lane.b32.xlu0 %v9652, 32
    %v9664 = vpop.permute.xlu0 %9663
    %9669 = vrot.lane.b32.xlu0 %v9649, 64
    %v9670 = vpop.permute.xlu0 %9669
    %9671 = vrot.lane.b32.xlu0 %v9650, 64
    %v9672 = vpop.permute.xlu0 %9671
    %9673 = vrot.lane.b32.xlu0 %v9651, 64
    %v9674 = vpop.permute.xlu0 %9673
    %9675 = vrot.lane.b32.xlu0 %v9652, 64
    %v9676 = vpop.permute.xlu0 %9675
    %9681 = vrot.lane.b32.xlu0 %v9649, 96
    %v9682 = vpop.permute.xlu0 %9681
    %9683 = vrot.lane.b32.xlu0 %v9650, 96
    %v9684 = vpop.permute.xlu0 %9683
    %9685 = vrot.lane.b32.xlu0 %v9651, 96
    %v9686 = vpop.permute.xlu0 %9685
    %9687 = vrot.lane.b32.xlu0 %v9652, 96
    %v9688 = vpop.permute.xlu0 %9687
    %v9693 = vsel %vm9138, %v9649, %v9658
    %v9694 = vsel %vm9138, %v9650, %v9660
    %v9695 = vsel %vm9138, %v9651, %v9662
    %v9696 = vsel %vm9138, %v9652, %v9664
    %v9697 = vsel %vm9172, %v9693, %v9670
    %v9698 = vsel %vm9172, %v9694, %v9672
    %v9699 = vsel %vm9172, %v9695, %v9674
    %v9700 = vsel %vm9172, %v9696, %v9676
    %v9701 = vsel %vm9206, %v9697, %v9682
    %v9702 = vsel %vm9206, %v9698, %v9684
    %v9703 = vsel %vm9206, %v9699, %v9686
    %v9704 = vsel %vm9206, %v9700, %v9688
    %v9705 = vld [vmem:[%s9] sm:$0xff]
    %v9706 = vld [vmem:[%s9 + $0x8] sm:$0xff]
    %v9707 = vld [vmem:[%s9 + $0x10] sm:$0xff]
    %v9708 = vld [vmem:[%s9 + $0x18] sm:$0xff]
    %v9709 = vld [vmem:[%s9 + $0x20] sm:$0xff]
    %v9710 = vld [vmem:[%s9 + $0x28] sm:$0xff]
    %v9711 = vld [vmem:[%s9 + $0x30] sm:$0xff]
    %v9712 = vld [vmem:[%s9 + $0x38] sm:$0xff]
    %v9713 = vld [vmem:[%s9 + $0x40] sm:$0xff]
    %v9714 = vld [vmem:[%s9 + $0x48] sm:$0xff]
    %v9715 = vld [vmem:[%s9 + $0x50] sm:$0xff]
    %v9716 = vld [vmem:[%s9 + $0x58] sm:$0xff]
    %v9717 = vld [vmem:[%s9 + $0x60] sm:$0xff]
    %v9718 = vld [vmem:[%s9 + $0x68] sm:$0xff]
    %v9719 = vld [vmem:[%s9 + $0x70] sm:$0xff]
    %v9720 = vld [vmem:[%s9 + $0x78] sm:$0xff]
    %v9721 = vmul.f32 %v9701, %v9705
    %v9722 = vmul.f32 %v9701, %v9706
    %v9723 = vmul.f32 %v9701, %v9707
    %v9724 = vmul.f32 %v9701, %v9708
    %v9725 = vmul.f32 %v9702, %v9709
    %v9726 = vmul.f32 %v9702, %v9710
    %v9727 = vmul.f32 %v9702, %v9711
    %v9728 = vmul.f32 %v9702, %v9712
    %v9729 = vmul.f32 %v9703, %v9713
    %v9730 = vmul.f32 %v9703, %v9714
    %v9731 = vmul.f32 %v9703, %v9715
    %v9732 = vmul.f32 %v9703, %v9716
    %v9733 = vmul.f32 %v9704, %v9717
    %v9734 = vmul.f32 %v9704, %v9718
    %v9735 = vmul.f32 %v9704, %v9719
    %v9736 = vmul.f32 %v9704, %v9720
    %v9737 = vld [vmem:[%s10] sm:$0x3]
    %v9739 = vsel %vm9138, %v9737, 0
    %9741 = vmatprep.subr.mxu0 %v9722
    %9742 = vmatpush1.msra.mxu0 %v9721
    %9743 = vmatprep.subr.mxu0 %v9726
    %9744 = vmatpush1.msra.mxu0 %v9725
    %9745 = vmatprep.subr.mxu0 %v9730
    %9746 = vmatpush1.msra.mxu0 %v9729
    %9747 = vmatprep.subr.mxu0 %v9734
    %9748 = vmatpush1.msra.mxu0 %v9733
    %9749 = vmatprep.subr.mxu0 0.0
    %9750 = vmatpush1.msra.mxu0 0.0
    %9751 = vmatprep.subr.mxu0 0.0
    %9752 = vmatpush1.msra.mxu0 0.0
    %9753 = vmatprep.subr.mxu0 0.0
    %9754 = vmatpush1.msra.mxu0 0.0
    %9755 = vmatprep.subr.mxu0 0.0
    %9756 = vmatpush1.msra.mxu0 0.0
    %9757 = vmatprep.subr.mxu0 0.0
    %9758 = vmatpush1.msra.mxu0 0.0
    %9759 = vmatprep.subr.mxu0 0.0
    %9760 = vmatpush1.msra.mxu0 0.0
    %9761 = vmatprep.subr.mxu0 0.0
    %9762 = vmatpush1.msra.mxu0 0.0
    %9763 = vmatprep.subr.mxu0 0.0
    %9764 = vmatpush1.msra.mxu0 0.0
    %9765 = vmatprep.subr.mxu0 0.0
    %9766 = vmatpush1.msra.mxu0 0.0
    %9767 = vmatprep.subr.mxu0 0.0
    %9768 = vmatpush1.msra.mxu0 0.0
    %9769 = vmatprep.subr.mxu0 0.0
    %9770 = vmatpush1.msra.mxu0 0.0
    %9771 = vmatprep.subr.mxu0 0.0
    %9772 = vmatpush1.msra.mxu0 0.0
    %9773 = vmatprep.subr.mxu0 0.0
    %9774 = vmatpush1.msra.mxu0 0.0
    %9775 = vmatprep.subr.mxu0 0.0
    %9776 = vmatpush1.msra.mxu0 0.0
    %9777 = vmatprep.subr.mxu0 0.0
    %9778 = vmatpush1.msra.mxu0 0.0
    %9779 = vmatprep.subr.mxu0 0.0
    %9780 = vmatpush1.msra.mxu0 0.0
    %9781 = vmatprep.subr.mxu0 0.0
    %9782 = vmatpush1.msra.mxu0 0.0
    %9783 = vmatprep.subr.mxu0 0.0
    %9784 = vmatpush1.msra.mxu0 0.0
    %9785 = vmatprep.subr.mxu0 0.0
    %9786 = vmatpush1.msra.mxu0 0.0
    %9787 = vmatprep.subr.mxu0 0.0
    %9788 = vmatpush1.msra.mxu0 0.0
    %9789 = vmatprep.subr.mxu0 0.0
    %9790 = vmatpush1.msra.mxu0 0.0
    %9791 = vmatprep.subr.mxu0 0.0
    %9792 = vmatpush1.msra.mxu0 0.0
    %9793 = vmatprep.subr.mxu0 0.0
    %9794 = vmatpush1.msra.mxu0 0.0
    %9795 = vmatprep.subr.mxu0 0.0
    %9796 = vmatpush1.msra.mxu0 0.0
    %9797 = vmatprep.subr.mxu0 0.0
    %9798 = vmatpush1.msra.mxu0 0.0
    %9799 = vmatprep.subr.mxu0 0.0
    %9800 = vmatpush1.msra.mxu0 0.0
    %9801 = vmatprep.subr.mxu0 0.0
    %9802 = vmatpush1.msra.mxu0 0.0
    %9803 = vmatprep.subr.mxu0 0.0
    %9804 = vmatpush1.msra.mxu0 0.0
    %9805 = vmatprep.mubr.f32.mxu0 0.0
    %9806 = vmatmul.mubr.f32.gmra.mrb[0].mxu0 %v9739
    %v9807 = vpop.f32.mrb[0].mxu0
    %v9808 = vadd.f32 0.0, %v9807
    %v9809 = vpop.f32.mrb[0].mxu0
    %v9810 = vadd.f32 0.0, %v9809
    %9811 = vdwg.mxu0
    %9812 = vmatprep.subr.mxu0 %v9724
    %9813 = vmatpush1.msra.mxu0 %v9723
    %9814 = vmatprep.subr.mxu0 %v9728
    %9815 = vmatpush1.msra.mxu0 %v9727
    %9816 = vmatprep.subr.mxu0 %v9732
    %9817 = vmatpush1.msra.mxu0 %v9731
    %9818 = vmatprep.subr.mxu0 %v9736
    %9819 = vmatpush1.msra.mxu0 %v9735
    %9820 = vmatprep.subr.mxu0 0.0
    %9821 = vmatpush1.msra.mxu0 0.0
    %9822 = vmatprep.subr.mxu0 0.0
    %9823 = vmatpush1.msra.mxu0 0.0
    %9824 = vmatprep.subr.mxu0 0.0
    %9825 = vmatpush1.msra.mxu0 0.0
    %9826 = vmatprep.subr.mxu0 0.0
    %9827 = vmatpush1.msra.mxu0 0.0
    %9828 = vmatprep.subr.mxu0 0.0
    %9829 = vmatpush1.msra.mxu0 0.0
    %9830 = vmatprep.subr.mxu0 0.0
    %9831 = vmatpush1.msra.mxu0 0.0
    %9832 = vmatprep.subr.mxu0 0.0
    %9833 = vmatpush1.msra.mxu0 0.0
    %9834 = vmatprep.subr.mxu0 0.0
    %9835 = vmatpush1.msra.mxu0 0.0
    %9836 = vmatprep.subr.mxu0 0.0
    %9837 = vmatpush1.msra.mxu0 0.0
    %9838 = vmatprep.subr.mxu0 0.0
    %9839 = vmatpush1.msra.mxu0 0.0
    %9840 = vmatprep.subr.mxu0 0.0
    %9841 = vmatpush1.msra.mxu0 0.0
    %9842 = vmatprep.subr.mxu0 0.0
    %9843 = vmatpush1.msra.mxu0 0.0
    %9844 = vmatprep.subr.mxu0 0.0
    %9845 = vmatpush1.msra.mxu0 0.0
    %9846 = vmatprep.subr.mxu0 0.0
    %9847 = vmatpush1.msra.mxu0 0.0
    %9848 = vmatprep.subr.mxu0 0.0
    %9849 = vmatpush1.msra.mxu0 0.0
    %9850 = vmatprep.subr.mxu0 0.0
    %9851 = vmatpush1.msra.mxu0 0.0
    %9852 = vmatprep.subr.mxu0 0.0
    %9853 = vmatpush1.msra.mxu0 0.0
    %9854 = vmatprep.subr.mxu0 0.0
    %9855 = vmatpush1.msra.mxu0 0.0
    %9856 = vmatprep.subr.mxu0 0.0
    %9857 = vmatpush1.msra.mxu0 0.0
    %9858 = vmatprep.subr.mxu0 0.0
    %9859 = vmatpush1.msra.mxu0 0.0
    %9860 = vmatprep.subr.mxu0 0.0
    %9861 = vmatpush1.msra.mxu0 0.0
    %9862 = vmatprep.subr.mxu0 0.0
    %9863 = vmatpush1.msra.mxu0 0.0
    %9864 = vmatprep.subr.mxu0 0.0
    %9865 = vmatpush1.msra.mxu0 0.0
    %9866 = vmatprep.subr.mxu0 0.0
    %9867 = vmatpush1.msra.mxu0 0.0
    %9868 = vmatprep.subr.mxu0 0.0
    %9869 = vmatpush1.msra.mxu0 0.0
    %9870 = vmatprep.subr.mxu0 0.0
    %9871 = vmatpush1.msra.mxu0 0.0
    %9872 = vmatprep.subr.mxu0 0.0
    %9873 = vmatpush1.msra.mxu0 0.0
    %9874 = vmatprep.subr.mxu0 0.0
    %9875 = vmatpush1.msra.mxu0 0.0
    %9876 = vmatprep.mubr.f32.mxu0 0.0
    %9877 = vmatmul.mubr.f32.gmra.mrb[0].mxu0 %v9739
    %v9878 = vpop.f32.mrb[0].mxu0
    %v9879 = vadd.f32 0.0, %v9878
    %v9880 = vpop.f32.mrb[0].mxu0
    %v9881 = vadd.f32 0.0, %v9880
    %9882 = vdwg.mxu0
    %v9883 = vpack.c.bf16 %v9808, %v9808
    %v9884 = vpack.c.bf16 %v9810, %v9810
    %v9885 = vpack.c.bf16 %v9879, %v9879
    %v9886 = vpack.c.bf16 %v9881, %v9881
    %v9887 = vld [vmem:[%s11] sm:$0xf]
    %v9888 = vld [vmem:[%s11 + $0x4] sm:$0xf]
    %v9889 = vld [vmem:[%s11 + $0x8] sm:$0xf]
    %v9890 = vld [vmem:[%s11 + $0xc] sm:$0xf]
    %v9891 = vld [vmem:[%s11 + $0x10] sm:$0xf]
    %v9892 = vld [vmem:[%s11 + $0x14] sm:$0xf]
    %v9893 = vld [vmem:[%s11 + $0x18] sm:$0xf]
    %v9894 = vld [vmem:[%s11 + $0x1c] sm:$0xf]
    %v9895 = vld [vmem:[%s11 + $0x20] sm:$0xf]
    %v9896 = vld [vmem:[%s11 + $0x24] sm:$0xf]
    %v9897 = vld [vmem:[%s11 + $0x28] sm:$0xf]
    %v9898 = vld [vmem:[%s11 + $0x2c] sm:$0xf]
    %v9899 = vld [vmem:[%s11 + $0x30] sm:$0xf]
    %v9900 = vld [vmem:[%s11 + $0x34] sm:$0xf]
    %v9901 = vld [vmem:[%s11 + $0x38] sm:$0xf]
    %v9902 = vld [vmem:[%s11 + $0x3c] sm:$0xf]
    %v9903 = vld [vmem:[%s11 + $0x40] sm:$0xf]
    %v9904 = vld [vmem:[%s11 + $0x44] sm:$0xf]
    %v9905 = vld [vmem:[%s11 + $0x48] sm:$0xf]
    %v9906 = vld [vmem:[%s11 + $0x4c] sm:$0xf]
    %v9907 = vld [vmem:[%s11 + $0x50] sm:$0xf]
    %v9908 = vld [vmem:[%s11 + $0x54] sm:$0xf]
    %v9909 = vld [vmem:[%s11 + $0x58] sm:$0xf]
    %v9910 = vld [vmem:[%s11 + $0x5c] sm:$0xf]
    %v9911 = vld [vmem:[%s11 + $0x60] sm:$0xf]
    %v9912 = vld [vmem:[%s11 + $0x64] sm:$0xf]
    %v9913 = vld [vmem:[%s11 + $0x68] sm:$0xf]
    %v9914 = vld [vmem:[%s11 + $0x6c] sm:$0xf]
    %v9915 = vld [vmem:[%s11 + $0x70] sm:$0xf]
    %v9916 = vld [vmem:[%s11 + $0x74] sm:$0xf]
    %v9917 = vld [vmem:[%s11 + $0x78] sm:$0xf]
    %v9918 = vld [vmem:[%s11 + $0x7c] sm:$0xf]
    %v9919 = vld [vmem:[%s11 + $0x80] sm:$0xf]
    %v9920 = vld [vmem:[%s11 + $0x84] sm:$0xf]
    %v9921 = vld [vmem:[%s11 + $0x88] sm:$0xf]
    %v9922 = vld [vmem:[%s11 + $0x8c] sm:$0xf]
    %v9923 = vld [vmem:[%s11 + $0x90] sm:$0xf]
    %v9924 = vld [vmem:[%s11 + $0x94] sm:$0xf]
    %v9925 = vld [vmem:[%s11 + $0x98] sm:$0xf]
    %v9926 = vld [vmem:[%s11 + $0x9c] sm:$0xf]
    %v9927 = vld [vmem:[%s11 + $0xa0] sm:$0xf]
    %v9928 = vld [vmem:[%s11 + $0xa4] sm:$0xf]
    %v9929 = vld [vmem:[%s11 + $0xa8] sm:$0xf]
    %v9930 = vld [vmem:[%s11 + $0xac] sm:$0xf]
    %v9931 = vld [vmem:[%s11 + $0xb0] sm:$0xf]
    %v9932 = vld [vmem:[%s11 + $0xb4] sm:$0xf]
    %v9933 = vld [vmem:[%s11 + $0xb8] sm:$0xf]
    %v9934 = vld [vmem:[%s11 + $0xbc] sm:$0xf]
    %v9935 = vld [vmem:[%s11 + $0xc0] sm:$0xf]
    %v9936 = vld [vmem:[%s11 + $0xc4] sm:$0xf]
    %v9937 = vld [vmem:[%s11 + $0xc8] sm:$0xf]
    %v9938 = vld [vmem:[%s11 + $0xcc] sm:$0xf]
    %v9939 = vld [vmem:[%s11 + $0xd0] sm:$0xf]
    %v9940 = vld [vmem:[%s11 + $0xd4] sm:$0xf]
    %v9941 = vld [vmem:[%s11 + $0xd8] sm:$0xf]
    %v9942 = vld [vmem:[%s11 + $0xdc] sm:$0xf]
    %v9943 = vld [vmem:[%s11 + $0xe0] sm:$0xf]
    %v9944 = vld [vmem:[%s11 + $0xe4] sm:$0xf]
    %v9945 = vld [vmem:[%s11 + $0xe8] sm:$0xf]
    %v9946 = vld [vmem:[%s11 + $0xec] sm:$0xf]
    %v9947 = vld [vmem:[%s11 + $0xf0] sm:$0xf]
    %v9948 = vld [vmem:[%s11 + $0xf4] sm:$0xf]
    %v9949 = vld [vmem:[%s11 + $0xf8] sm:$0xf]
    %v9950 = vld [vmem:[%s11 + $0xfc] sm:$0xf]
    %v9951 = vld [vmem:[%s12] sm:$0x1]
    %v9953 = vlaneseq
    %v9954 = vshrl.u32 %v9953, 7
    %v9955 = vsub.s32 0, %v9954
    %v9956 = vrot.slane %v9951, %v9955
    %v10022 = vunpack.c.l.b16 %v9887
    %v10023 = vunpack.c.l.b16 %v9888
    %v10024 = vunpack.c.l.b16 %v9889
    %v10025 = vunpack.c.l.b16 %v9890
    %v10026 = vunpack.c.l.b16 %v9891
    %v10027 = vunpack.c.l.b16 %v9892
    %v10028 = vunpack.c.l.b16 %v9893
    %v10029 = vunpack.c.l.b16 %v9894
    %v10030 = vunpack.c.l.b16 %v9895
    %v10031 = vunpack.c.l.b16 %v9896
    %v10032 = vunpack.c.l.b16 %v9897
    %v10033 = vunpack.c.l.b16 %v9898
    %v10034 = vunpack.c.l.b16 %v9899
    %v10035 = vunpack.c.l.b16 %v9900
    %v10036 = vunpack.c.l.b16 %v9901
    %v10037 = vunpack.c.l.b16 %v9902
    %v10038 = vunpack.c.l.b16 %v9903
    %v10039 = vunpack.c.l.b16 %v9904
    %v10040 = vunpack.c.l.b16 %v9905
    %v10041 = vunpack.c.l.b16 %v9906
    %v10042 = vunpack.c.l.b16 %v9907
    %v10043 = vunpack.c.l.b16 %v9908
    %v10044 = vunpack.c.l.b16 %v9909
    %v10045 = vunpack.c.l.b16 %v9910
    %v10046 = vunpack.c.l.b16 %v9911
    %v10047 = vunpack.c.l.b16 %v9912
    %v10048 = vunpack.c.l.b16 %v9913
    %v10049 = vunpack.c.l.b16 %v9914
    %v10050 = vunpack.c.l.b16 %v9915
    %v10051 = vunpack.c.l.b16 %v9916
    %v10052 = vunpack.c.l.b16 %v9917
    %v10053 = vunpack.c.l.b16 %v9918
    %v10054 = vunpack.c.l.b16 %v9919
    %v10055 = vunpack.c.l.b16 %v9920
    %v10056 = vunpack.c.l.b16 %v9921
    %v10057 = vunpack.c.l.b16 %v9922
    %v10058 = vunpack.c.l.b16 %v9923
    %v10059 = vunpack.c.l.b16 %v9924
    %v10060 = vunpack.c.l.b16 %v9925
    %v10061 = vunpack.c.l.b16 %v9926
    %v10062 = vunpack.c.l.b16 %v9927
    %v10063 = vunpack.c.l.b16 %v9928
    %v10064 = vunpack.c.l.b16 %v9929
    %v10065 = vunpack.c.l.b16 %v9930
    %v10066 = vunpack.c.l.b16 %v9931
    %v10067 = vunpack.c.l.b16 %v9932
    %v10068 = vunpack.c.l.b16 %v9933
    %v10069 = vunpack.c.l.b16 %v9934
    %v10070 = vunpack.c.l.b16 %v9935
    %v10071 = vunpack.c.l.b16 %v9936
    %v10072 = vunpack.c.l.b16 %v9937
    %v10073 = vunpack.c.l.b16 %v9938
    %v10074 = vunpack.c.l.b16 %v9939
    %v10075 = vunpack.c.l.b16 %v9940
    %v10076 = vunpack.c.l.b16 %v9941
    %v10077 = vunpack.c.l.b16 %v9942
    %v10078 = vunpack.c.l.b16 %v9943
    %v10079 = vunpack.c.l.b16 %v9944
    %v10080 = vunpack.c.l.b16 %v9945
    %v10081 = vunpack.c.l.b16 %v9946
    %v10082 = vunpack.c.l.b16 %v9947
    %v10083 = vunpack.c.l.b16 %v9948
    %v10084 = vunpack.c.l.b16 %v9949
    %v10085 = vunpack.c.l.b16 %v9950
    %v10086 = vpack.c.b16 %v10023, %v10022
    %v10087 = vpack.c.b16 %v10025, %v10024
    %v10088 = vpack.c.b16 %v10027, %v10026
    %v10089 = vpack.c.b16 %v10029, %v10028
    %v10090 = vpack.c.b16 %v10031, %v10030
    %v10091 = vpack.c.b16 %v10033, %v10032
    %v10092 = vpack.c.b16 %v10035, %v10034
    %v10093 = vpack.c.b16 %v10037, %v10036
    %v10094 = vpack.c.b16 %v10039, %v10038
    %v10095 = vpack.c.b16 %v10041, %v10040
    %v10096 = vpack.c.b16 %v10043, %v10042
    %v10097 = vpack.c.b16 %v10045, %v10044
    %v10098 = vpack.c.b16 %v10047, %v10046
    %v10099 = vpack.c.b16 %v10049, %v10048
    %v10100 = vpack.c.b16 %v10051, %v10050
    %v10101 = vpack.c.b16 %v10053, %v10052
    %v10102 = vpack.c.b16 %v10055, %v10054
    %v10103 = vpack.c.b16 %v10057, %v10056
    %v10104 = vpack.c.b16 %v10059, %v10058
    %v10105 = vpack.c.b16 %v10061, %v10060
    %v10106 = vpack.c.b16 %v10063, %v10062
    %v10107 = vpack.c.b16 %v10065, %v10064
    %v10108 = vpack.c.b16 %v10067, %v10066
    %v10109 = vpack.c.b16 %v10069, %v10068
    %v10110 = vpack.c.b16 %v10071, %v10070
    %v10111 = vpack.c.b16 %v10073, %v10072
    %v10112 = vpack.c.b16 %v10075, %v10074
    %v10113 = vpack.c.b16 %v10077, %v10076
    %v10114 = vpack.c.b16 %v10079, %v10078
    %v10115 = vpack.c.b16 %v10081, %v10080
    %v10116 = vpack.c.b16 %v10083, %v10082
    %v10117 = vpack.c.b16 %v10085, %v10084
    %10150 = vmatprep.subr.bf16.mxu0 0
    %10151 = vmatpush1.bf16.msra.mxu0 %v10086
    %10152 = vmatprep.subr.bf16.mxu0 0
    %10153 = vmatpush1.bf16.msra.mxu0 %v10087
    %10154 = vmatprep.subr.bf16.mxu0 0
    %10155 = vmatpush1.bf16.msra.mxu0 %v10088
    %10156 = vmatprep.subr.bf16.mxu0 0
    %10157 = vmatpush1.bf16.msra.mxu0 %v10089
    %10158 = vmatprep.subr.bf16.mxu0 0
    %10159 = vmatpush1.bf16.msra.mxu0 %v10090
    %10160 = vmatprep.subr.bf16.mxu0 0
    %10161 = vmatpush1.bf16.msra.mxu0 %v10091
    %10162 = vmatprep.subr.bf16.mxu0 0
    %10163 = vmatpush1.bf16.msra.mxu0 %v10092
    %10164 = vmatprep.subr.bf16.mxu0 0
    %10165 = vmatpush1.bf16.msra.mxu0 %v10093
    %10166 = vmatprep.subr.bf16.mxu0 0
    %10167 = vmatpush1.bf16.msra.mxu0 %v10094
    %10168 = vmatprep.subr.bf16.mxu0 0
    %10169 = vmatpush1.bf16.msra.mxu0 %v10095
    %10170 = vmatprep.subr.bf16.mxu0 0
    %10171 = vmatpush1.bf16.msra.mxu0 %v10096
    %10172 = vmatprep.subr.bf16.mxu0 0
    %10173 = vmatpush1.bf16.msra.mxu0 %v10097
    %10174 = vmatprep.subr.bf16.mxu0 0
    %10175 = vmatpush1.bf16.msra.mxu0 %v10098
    %10176 = vmatprep.subr.bf16.mxu0 0
    %10177 = vmatpush1.bf16.msra.mxu0 %v10099
    %10178 = vmatprep.subr.bf16.mxu0 0
    %10179 = vmatpush1.bf16.msra.mxu0 %v10100
    %10180 = vmatprep.subr.bf16.mxu0 0
    %10181 = vmatpush1.bf16.msra.mxu0 %v10101
    %10182 = vmatprep.mubr.bf16.mxu0 %v9884
    %10183 = vmatmul.mubr.bf16.gmra.mrb[0].mxu0 %v9883
    %v10184 = vpop.f32.mrb[0].mxu0
    %v10185 = vadd.f32 %v9956, %v10184
    %v10186 = vpop.f32.mrb[0].mxu0
    %v10187 = vpop.f32.mrb[0].mxu0
    %v10188 = vpop.f32.mrb[0].mxu0
    %10189 = vdwg.mxu0
    %10190 = vmatprep.subr.bf16.mxu0 0
    %10191 = vmatpush1.bf16.msra.mxu0 %v10102
    %10192 = vmatprep.subr.bf16.mxu0 0
    %10193 = vmatpush1.bf16.msra.mxu0 %v10103
    %10194 = vmatprep.subr.bf16.mxu0 0
    %10195 = vmatpush1.bf16.msra.mxu0 %v10104
    %10196 = vmatprep.subr.bf16.mxu0 0
    %10197 = vmatpush1.bf16.msra.mxu0 %v10105
    %10198 = vmatprep.subr.bf16.mxu0 0
    %10199 = vmatpush1.bf16.msra.mxu0 %v10106
    %10200 = vmatprep.subr.bf16.mxu0 0
    %10201 = vmatpush1.bf16.msra.mxu0 %v10107
    %10202 = vmatprep.subr.bf16.mxu0 0
    %10203 = vmatpush1.bf16.msra.mxu0 %v10108
    %10204 = vmatprep.subr.bf16.mxu0 0
    %10205 = vmatpush1.bf16.msra.mxu0 %v10109
    %10206 = vmatprep.subr.bf16.mxu0 0
    %10207 = vmatpush1.bf16.msra.mxu0 %v10110
    %10208 = vmatprep.subr.bf16.mxu0 0
    %10209 = vmatpush1.bf16.msra.mxu0 %v10111
    %10210 = vmatprep.subr.bf16.mxu0 0
    %10211 = vmatpush1.bf16.msra.mxu0 %v10112
    %10212 = vmatprep.subr.bf16.mxu0 0
    %10213 = vmatpush1.bf16.msra.mxu0 %v10113
    %10214 = vmatprep.subr.bf16.mxu0 0
    %10215 = vmatpush1.bf16.msra.mxu0 %v10114
    %10216 = vmatprep.subr.bf16.mxu0 0
    %10217 = vmatpush1.bf16.msra.mxu0 %v10115
    %10218 = vmatprep.subr.bf16.mxu0 0
    %10219 = vmatpush1.bf16.msra.mxu0 %v10116
    %10220 = vmatprep.subr.bf16.mxu0 0
    %10221 = vmatpush1.bf16.msra.mxu0 %v10117
    %10222 = vmatprep.mubr.bf16.mxu0 %v9886
    %10223 = vmatmul.mubr.bf16.gmra.mrb[0].mxu0 %v9885
    %v10224 = vpop.f32.mrb[0].mxu0
    %v10225 = vadd.f32 %v10185, %v10224
    %v10226 = vpop.f32.mrb[0].mxu0
    %v10227 = vpop.f32.mrb[0].mxu0
    %v10228 = vpop.f32.mrb[0].mxu0
    %10229 = vdwg.mxu0
    %v10230 = vmax.f32 %v10225, 0.0
    %v10231 = vld [vmem:[%s13] sm:$0xff]
    %v10232 = vld [vmem:[%s13 + $0x8] sm:$0xff]
    %v10233 = vld [vmem:[%s13 + $0x10] sm:$0xff]
    %v10234 = vld [vmem:[%s13 + $0x18] sm:$0xff]
    %v10235 = vld [vmem:[%s13 + $0x20] sm:$0xff]
    %v10236 = vld [vmem:[%s13 + $0x28] sm:$0xff]
    %v10237 = vld [vmem:[%s13 + $0x30] sm:$0xff]
    %v10238 = vld [vmem:[%s13 + $0x38] sm:$0xff]
    %v10239 = vld [vmem:[%s14] sm:$0x1]
    %v10241 = vlaneseq
    %v10242 = vshrl.u32 %v10241, 7
    %v10243 = vsub.s32 0, %v10242
    %v10244 = vrot.slane %v10239, %v10243
    %v10247 = vsel %vm9172, %v10230, 0
    %10249 = vmatprep.subr.mxu0 0.0
    %10250 = vmatpush1.msra.mxu0 %v10231
    %10251 = vmatprep.subr.mxu0 0.0
    %10252 = vmatpush1.msra.mxu0 %v10232
    %10253 = vmatprep.subr.mxu0 0.0
    %10254 = vmatpush1.msra.mxu0 %v10233
    %10255 = vmatprep.subr.mxu0 0.0
    %10256 = vmatpush1.msra.mxu0 %v10234
    %10257 = vmatprep.subr.mxu0 0.0
    %10258 = vmatpush1.msra.mxu0 %v10235
    %10259 = vmatprep.subr.mxu0 0.0
    %10260 = vmatpush1.msra.mxu0 %v10236
    %10261 = vmatprep.subr.mxu0 0.0
    %10262 = vmatpush1.msra.mxu0 %v10237
    %10263 = vmatprep.subr.mxu0 0.0
    %10264 = vmatpush1.msra.mxu0 %v10238
    %10265 = vmatprep.subr.mxu0 0.0
    %10266 = vmatpush1.msra.mxu0 0.0
    %10267 = vmatprep.subr.mxu0 0.0
    %10268 = vmatpush1.msra.mxu0 0.0
    %10269 = vmatprep.subr.mxu0 0.0
    %10270 = vmatpush1.msra.mxu0 0.0
    %10271 = vmatprep.subr.mxu0 0.0
    %10272 = vmatpush1.msra.mxu0 0.0
    %10273 = vmatprep.subr.mxu0 0.0
    %10274 = vmatpush1.msra.mxu0 0.0
    %10275 = vmatprep.subr.mxu0 0.0
    %10276 = vmatpush1.msra.mxu0 0.0
    %10277 = vmatprep.subr.mxu0 0.0
    %10278 = vmatpush1.msra.mxu0 0.0
    %10279 = vmatprep.subr.mxu0 0.0
    %10280 = vmatpush1.msra.mxu0 0.0
    %10281 = vmatprep.subr.mxu0 0.0
    %10282 = vmatpush1.msra.mxu0 0.0
    %10283 = vmatprep.subr.mxu0 0.0
    %10284 = vmatpush1.msra.mxu0 0.0
    %10285 = vmatprep.subr.mxu0 0.0
    %10286 = vmatpush1.msra.mxu0 0.0
    %10287 = vmatprep.subr.mxu0 0.0
    %10288 = vmatpush1.msra.mxu0 0.0
    %10289 = vmatprep.subr.mxu0 0.0
    %10290 = vmatpush1.msra.mxu0 0.0
    %10291 = vmatprep.subr.mxu0 0.0
    %10292 = vmatpush1.msra.mxu0 0.0
    %10293 = vmatprep.subr.mxu0 0.0
    %10294 = vmatpush1.msra.mxu0 0.0
    %10295 = vmatprep.subr.mxu0 0.0
    %10296 = vmatpush1.msra.mxu0 0.0
    %10297 = vmatprep.subr.mxu0 0.0
    %10298 = vmatpush1.msra.mxu0 0.0
    %10299 = vmatprep.subr.mxu0 0.0
    %10300 = vmatpush1.msra.mxu0 0.0
    %10301 = vmatprep.subr.mxu0 0.0
    %10302 = vmatpush1.msra.mxu0 0.0
    %10303 = vmatprep.subr.mxu0 0.0
    %10304 = vmatpush1.msra.mxu0 0.0
    %10305 = vmatprep.subr.mxu0 0.0
    %10306 = vmatpush1.msra.mxu0 0.0
    %10307 = vmatprep.subr.mxu0 0.0
    %10308 = vmatpush1.msra.mxu0 0.0
    %10309 = vmatprep.subr.mxu0 0.0
    %10310 = vmatpush1.msra.mxu0 0.0
    %10311 = vmatprep.subr.mxu0 0.0
    %10312 = vmatpush1.msra.mxu0 0.0
    %10313 = vmatprep.mubr.f32.mxu0 0.0
    %10314 = vmatmul.mubr.f32.gmra.mrb[0].mxu0 %v10247
    %v10315 = vpop.f32.mrb[0].mxu0
    %v10316 = vadd.f32 %v10244, %v10315
    %v10317 = vpop.f32.mrb[0].mxu0
    %10318 = vdwg.mxu0
    %vm10319 = vcmask 17408
    %10320 = vst.msk [vmem:[#allocation3] sm:$0x3] %vm10319, %v10316
    // Predicated region
    $region62: #{covidnet_forward.1} parent=1 // pred_check
      _
    $region63: #{covidnet_forward.1} parent=1 // pred_check_branch
      %10322 = sbr.rel (0) target = $region65
    $region64: #{covidnet_forward.1} parent=1 // pred_region
      %s10324 = ssub.s32 32, 32
      %10325 = vsyncadd [#allocation4], %s10324
      %s10327 = sshll.u32 [#allocation3], 4
      %s10328 = int_to_ptr.vmem [resolvable:$true] %s10327
      %10330 = dma.vmem_to_hbm [thread:$0]  %s10328, 32, %s15, [#allocation4]
    $region65: #{covidnet_forward.1} parent=1 // pred_fallthru
      _
    // Predicated region
    $region66: #{covidnet_forward.1} parent=1 // pred_check
      _
    $region67: #{covidnet_forward.1} parent=1 // pred_check_branch
      %10332 = sbr.rel (0) target = $region69
    $region68: #{covidnet_forward.1} parent=1 // pred_region
      %10333 = dma.done [#allocation4], 32
    $region69: #{covidnet_forward.1} parent=1 // pred_fallthru
      _
    %10334 = vsyncpa [#allocation4], 1

</llo_original>
